<compile_context>
chip_gen: v7x
topology: tpu7x:2x2x1
jax: 0.10.0
libtpu: 0.0.40
codegen_flags: <defaults>
</compile_context>

<pallas_src>
import jax
import jax.numpy as jnp
from jax import lax
from jax.experimental import pallas as pl
from jax.experimental.pallas import tpu as pltpu


# ------------------------------ in-kernel layers -----------------------------

def _conv_relu_pool(u_ref, w_ref, b_ref, dst_ref, *, wi, wo, cout, taps):
    """Fused VALID 5x5 conv + bias + ReLU + 2x2 max-pool on a row-flattened
    activation.

    u_ref:   (S_in, K) VMEM ref; row r = flattened spatial index h*wi + w, the
             K lanes hold the input channels (conv2/3) or the 5 pre-packed kw
             taps (conv1).
    w_ref:   (n_taps, K, cout) weights, one (K, cout) matrix per tap.
    b_ref:   (1, cout) bias.
    dst_ref: (Po*Qo, cout) pooled output, row = pooled index h*Qo + w.
    taps:    list of (tap_index, flattened_row_offset).

    Each loop step computes TWO adjacent conv rows (= one pooled row) in a
    single (wi+wo, cout) register accumulator: per tap one contiguous slice of
    u_ref and one MXU matmul.  Rows whose flattened index wraps across an image
    row are garbage and are never read.  Pooling = max over the two row bands,
    then a 0/1 even/odd column-selection matmul compacts stride-2 columns.
    """
    qo = wo // 2                 # pooled width
    n_po = (wi - 4) // 2         # pooled height (= Ho // 2)
    lc = wi + wo                 # accumulator rows per step

    rows = lax.broadcasted_iota(jnp.int32, (qo, 2 * qo), 0)
    cols = lax.broadcasted_iota(jnp.int32, (qo, 2 * qo), 1)
    sel_even = (cols == 2 * rows).astype(jnp.float32)
    sel_odd = (cols == 2 * rows + 1).astype(jnp.float32)
    bias = b_ref[...]            # (1, cout)

    def body(po, carry):
        base = 2 * po * wi
        acc = jnp.zeros((lc, cout), jnp.float32)
        for t, off in taps:                              # static unroll
            s = u_ref[pl.ds(base + off, lc), :]          # (lc, K) contiguous
            acc = acc + jnp.dot(s, w_ref[t],
                                preferred_element_type=jnp.float32)
        a = jnp.maximum(acc + bias, 0.0)                 # bias + ReLU
        # 2x2 max-pool: max over the two conv rows, then even/odd columns.
        m = jnp.maximum(a[0:2 * qo, :], a[wi:wi + 2 * qo, :])
        pooled = jnp.maximum(
            jnp.dot(sel_even, m, preferred_element_type=jnp.float32),
            jnp.dot(sel_odd, m, preferred_element_type=jnp.float32))
        dst_ref[pl.ds(po * qo, qo), :] = pooled
        return carry

    lax.fori_loop(0, n_po, body, 0)


def _net_kernel(xp_ref, w1_ref, b1_ref, w2_ref, b2_ref, w3_ref, b3_ref,
                fc1w_ref, fc1b_ref, fc2w_ref, fc2b_ref,
                out_ref, u2_ref, u3_ref, u4_ref):
    # conv1: 50x50x1 -> pooled 23x23x32 (kw taps pre-packed into lanes, K=5).
    _conv_relu_pool(xp_ref, w1_ref, b1_ref, u2_ref,
                    wi=50, wo=46, cout=32,
                    taps=[(kh, kh * 50) for kh in range(5)])
    # conv2: 23x23x32 -> pooled 9x9x64 (full 25-tap in-kernel accumulation).
    _conv_relu_pool(u2_ref, w2_ref, b2_ref, u3_ref,
                    wi=23, wo=19, cout=64,
                    taps=[(kh * 5 + kw, kh * 23 + kw)
                          for kh in range(5) for kw in range(5)])
    # conv3: 9x9x64 -> pooled 2x2x128.
    _conv_relu_pool(u3_ref, w3_ref, b3_ref, u4_ref,
                    wi=9, wo=5, cout=128,
                    taps=[(kh * 5 + kw, kh * 9 + kw)
                          for kh in range(5) for kw in range(5)])
    # fc head: h = relu(sum_r x_r @ W1[r] + b1); logits = h @ W2pad + b2pad.
    x4 = u4_ref[...]                                   # (4, 128), row = h*2+w
    h = fc1b_ref[...]                                  # (1, 512)
    for r in range(4):
        h = h + jnp.dot(x4[r:r + 1, :], fc1w_ref[r],
                        preferred_element_type=jnp.float32)
    h = jnp.maximum(h, 0.0)
    logits = jnp.dot(h, fc2w_ref[...], preferred_element_type=jnp.float32)
    out_ref[...] = logits + fc2b_ref[...]              # (1, 128), lane-dense


# --------------------------------- wrapper -----------------------------------

def net_forward(x, p):
    """x: (N, 1, 50, 50) float32 NCHW (same interface as the PyTorch module)."""
    n = x.shape[0]
    xflat = x.reshape(n, 2500)
    # Pack conv1's 5 horizontal taps into lanes (40 KB/img; not a full im2col).
    xp = jnp.stack([xflat[:, i:i + 2496] for i in range(5)], axis=-1)  # (N,2496,5)

    out = pl.pallas_call(
        _net_kernel,
        out_shape=jax.ShapeDtypeStruct((n, 1, 128), jnp.float32),
        grid=(n,),
        in_specs=[
            pl.BlockSpec((None, 2496, 5), lambda i: (i, 0, 0)),   # packed image
            pl.BlockSpec((5, 5, 32), lambda i: (0, 0, 0)),        # w1 (kh,kw,co)
            pl.BlockSpec((1, 32), lambda i: (0, 0)),              # b1
            pl.BlockSpec((25, 32, 64), lambda i: (0, 0, 0)),      # w2 (t,ci,co)
            pl.BlockSpec((1, 64), lambda i: (0, 0)),              # b2
            pl.BlockSpec((25, 64, 128), lambda i: (0, 0, 0)),     # w3 (t,ci,co)
            pl.BlockSpec((1, 128), lambda i: (0, 0)),             # b3
            pl.BlockSpec((4, 128, 512), lambda i: (0, 0, 0)),     # fc1 (r,c,out)
            pl.BlockSpec((1, 512), lambda i: (0, 0)),             # fc1 bias
            pl.BlockSpec((512, 128), lambda i: (0, 0)),           # fc2 (padded)
            pl.BlockSpec((1, 128), lambda i: (0, 0)),             # fc2 bias (padded)
        ],
        out_specs=pl.BlockSpec((None, 1, 128), lambda i: (i, 0, 0)),
        scratch_shapes=[
            pltpu.VMEM((23 * 23, 32), jnp.float32),   # pooled1, flattened
            pltpu.VMEM((9 * 9, 64), jnp.float32),     # pooled2, flattened
            pltpu.VMEM((4, 128), jnp.float32),        # pooled3, flattened
        ],
        compiler_params=pltpu.CompilerParams(
            dimension_semantics=("parallel",),
            vmem_limit_bytes=32 * 1024 * 1024),
    )(xp, p['w1'], p['b1'], p['w2'], p['b2'], p['w3'], p['b3'],
      p['fc1_w'], p['fc1_b'], p['fc2_w'], p['fc2_b'])
    return out.reshape(n, 128)[:, :2]


# ----------------------------- params / reference ----------------------------

def init_raw_params(key):
    """Random params in PyTorch layout (Conv: (Cout,Cin,kh,kw); Linear: (out,in))."""
    ks = jax.random.split(key, 10)
    s = 0.05
    return {
        'w1': s * jax.random.normal(ks[0], (32, 1, 5, 5), jnp.float32),
        'b1': s * jax.random.normal(ks[1], (32,), jnp.float32),
        'w2': s * jax.random.normal(ks[2], (64, 32, 5, 5), jnp.float32),
        'b2': s * jax.random.normal(ks[3], (64,), jnp.float32),
        'w3': s * jax.random.normal(ks[4], (128, 64, 5, 5), jnp.float32),
        'b3': s * jax.random.normal(ks[5], (128,), jnp.float32),
        'fc1_w': s * jax.random.normal(ks[6], (512, 512), jnp.float32),
        'fc1_b': s * jax.random.normal(ks[7], (512,), jnp.float32),
        'fc2_w': s * jax.random.normal(ks[8], (2, 512), jnp.float32),
        'fc2_b': s * jax.random.normal(ks[9], (2,), jnp.float32),
    }


def convert_params(rp):
    """One-time conversion of PyTorch-layout weights into the kernel layout."""
    # fc1 rows permuted from PyTorch's (C,H,W) flatten to the kernel's
    # (h*2+w, c) order -> no runtime transpose before the fc head.
    fc1 = rp['fc1_w'].reshape(512, 128, 2, 2).transpose(2, 3, 1, 0).reshape(4, 128, 512)
    fc2 = jnp.zeros((512, 128), jnp.float32).at[:, :2].set(rp['fc2_w'].T)
    fc2_b = jnp.zeros((1, 128), jnp.float32).at[:, :2].set(rp['fc2_b'][None, :])
    return {
        'w1': jnp.transpose(rp['w1'][:, 0], (1, 2, 0)),                     # (5,5,32)
        'b1': rp['b1'].reshape(1, 32),
        'w2': jnp.transpose(rp['w2'], (2, 3, 1, 0)).reshape(25, 32, 64),    # (25,32,64)
        'b2': rp['b2'].reshape(1, 64),
        'w3': jnp.transpose(rp['w3'], (2, 3, 1, 0)).reshape(25, 64, 128),   # (25,64,128)
        'b3': rp['b3'].reshape(1, 128),
        'fc1_w': fc1,
        'fc1_b': rp['fc1_b'].reshape(1, 512),
        'fc2_w': fc2,
        'fc2_b': fc2_b,
    }


def reference_forward(x, rp):
    """Pure-JAX/XLA reference with PyTorch semantics (for a numerics check)."""
    def conv(v, w, b):
        y = lax.conv_general_dilated(v, w, (1, 1), 'VALID',
                                     dimension_numbers=('NCHW', 'OIHW', 'NCHW'))
        return jax.nn.relu(y + b[None, :, None, None])

    def pool(v):
        return lax.reduce_window(v, -jnp.inf, lax.max,
                                 (1, 1, 2, 2), (1, 1, 2, 2), 'VALID')

    v = pool(conv(x, rp['w1'], rp['b1']))
    v = pool(conv(v, rp['w2'], rp['b2']))
    v = pool(conv(v, rp['w3'], rp['b3']))
    v = v.reshape(v.shape[0], -1)                       # NCHW flatten (C,H,W)
    h = jax.nn.relu(v @ rp['fc1_w'].T + rp['fc1_b'])
    return h @ rp['fc2_w'].T + rp['fc2_b']


if __name__ == "__main__":
    key = jax.random.PRNGKey(0)
    kx, kp = jax.random.split(key)
    # Input must be 50x50: the module's _to_linear=512 is derived from 50x50.
    x = jax.random.normal(kx, (2, 1, 50, 50), jnp.float32)
    raw = init_raw_params(kp)
    params = convert_params(raw)

    out = jax.block_until_ready(jax.jit(net_forward)(x, params))
    assert out.shape == (2, 2) and out.dtype == jnp.float32, (out.shape, out.dtype)

    ref = jax.block_until_ready(jax.jit(reference_forward)(x, raw))
    err = float(jnp.max(jnp.abs(out - ref)))
    assert err < 5e-2, f"kernel/reference mismatch: max abs err = {err}"
    print("KERNEL_OK")
</pallas_src>

<mosaic_0001>
module attributes {stable_mosaic.version = 11 : i64} {
  func.func @_net_kernel(%arg0: i32, %arg1: memref<1x2496x5xf32, #tpu.memory_space<vmem>>, %arg2: memref<5x5x32xf32, #tpu.memory_space<vmem>>, %arg3: memref<1x32xf32, #tpu.memory_space<vmem>>, %arg4: memref<25x32x64xf32, #tpu.memory_space<vmem>>, %arg5: memref<1x64xf32, #tpu.memory_space<vmem>>, %arg6: memref<25x64x128xf32, #tpu.memory_space<vmem>>, %arg7: memref<1x128xf32, #tpu.memory_space<vmem>>, %arg8: memref<4x128x512xf32, #tpu.memory_space<vmem>>, %arg9: memref<1x512xf32, #tpu.memory_space<vmem>>, %arg10: memref<512x128xf32, #tpu.memory_space<vmem>>, %arg11: memref<1x128xf32, #tpu.memory_space<vmem>>, %arg12: memref<1x1x128xf32, #tpu.memory_space<vmem>>, %arg13: memref<529x32xf32, #tpu.memory_space<vmem>>, %arg14: memref<81x64xf32, #tpu.memory_space<vmem>>, %arg15: memref<4x128xf32, #tpu.memory_space<vmem>>) attributes {dimension_semantics = [#tpu.dimension_semantics<parallel>], iteration_bounds = array<i64: 2>, scalar_prefetch = 0 : i64, scratch_operands = 3 : i64, tpu.core_type = #tpu.core_type<tc>, window_params = [{transform_indices = @transform_0, window_bounds = array<i64: 1, 2496, 5>}, {pipeline_mode = #tpu.pipeline_mode<synchronous>, transform_indices = @transform_1, window_bounds = array<i64: 5, 5, 32>}, {pipeline_mode = #tpu.pipeline_mode<synchronous>, transform_indices = @transform_2, window_bounds = array<i64: 1, 32>}, {pipeline_mode = #tpu.pipeline_mode<synchronous>, transform_indices = @transform_3, window_bounds = array<i64: 25, 32, 64>}, {pipeline_mode = #tpu.pipeline_mode<synchronous>, transform_indices = @transform_4, window_bounds = array<i64: 1, 64>}, {pipeline_mode = #tpu.pipeline_mode<synchronous>, transform_indices = @transform_5, window_bounds = array<i64: 25, 64, 128>}, {pipeline_mode = #tpu.pipeline_mode<synchronous>, transform_indices = @transform_6, window_bounds = array<i64: 1, 128>}, {pipeline_mode = #tpu.pipeline_mode<synchronous>, transform_indices = @transform_7, window_bounds = array<i64: 4, 128, 512>}, {pipeline_mode = #tpu.pipeline_mode<synchronous>, transform_indices = @transform_8, window_bounds = array<i64: 1, 512>}, {pipeline_mode = #tpu.pipeline_mode<synchronous>, transform_indices = @transform_9, window_bounds = array<i64: 512, 128>}, {pipeline_mode = #tpu.pipeline_mode<synchronous>, transform_indices = @transform_10, window_bounds = array<i64: 1, 128>}, {transform_indices = @transform_11, window_bounds = array<i64: 1, 1, 128>}]} {
    %0 = tpu.iota {dimensions = array<i32: 0>} : vector<23x46xi32>
    %1 = tpu.iota {dimensions = array<i32: 1>} : vector<23x46xi32>
    %c2_i32 = arith.constant 2 : i32
    %2 = vector.broadcast %c2_i32 : i32 to vector<23x46xi32>
    %3 = arith.muli %2, %0 : vector<23x46xi32>
    %4 = arith.cmpi eq, %1, %3 : vector<23x46xi32>
    %5 = arith.extui %4 : vector<23x46xi1> to vector<23x46xi32>
    %6 = arith.sitofp %5 : vector<23x46xi32> to vector<23x46xf32>
    %c2_i32_0 = arith.constant 2 : i32
    %7 = vector.broadcast %c2_i32_0 : i32 to vector<23x46xi32>
    %8 = arith.muli %7, %0 : vector<23x46xi32>
    %c1_i32 = arith.constant 1 : i32
    %9 = vector.broadcast %c1_i32 : i32 to vector<23x46xi32>
    %10 = arith.addi %8, %9 : vector<23x46xi32>
    %11 = arith.cmpi eq, %1, %10 : vector<23x46xi32>
    %12 = arith.extui %11 : vector<23x46xi1> to vector<23x46xi32>
    %13 = arith.sitofp %12 : vector<23x46xi32> to vector<23x46xf32>
    %c0 = arith.constant 0 : index
    %c0_1 = arith.constant 0 : index
    %14 = vector.load %arg3[%c0, %c0_1] : memref<1x32xf32, #tpu.memory_space<vmem>>, vector<1x32xf32>
    %c0_i32 = arith.constant 0 : i32
    %c23_i32 = arith.constant 23 : i32
    %15 = arith.addi %c0_i32, %c23_i32 : i32
    %c1_i32_2 = arith.constant 1 : i32
    scf.for %arg16 = %c0_i32 to %15 step %c1_i32_2  : i32 {
      %c2_i32_46 = arith.constant 2 : i32
      %79 = arith.muli %c2_i32_46, %arg16 : i32
      %c50_i32 = arith.constant 50 : i32
      %80 = arith.muli %79, %c50_i32 : i32
      %cst_47 = arith.constant 0.000000e+00 : f32
      %81 = vector.broadcast %cst_47 : f32 to vector<96x32xf32>
      %c0_i32_48 = arith.constant 0 : i32
      %82 = arith.addi %80, %c0_i32_48 : i32
      %c0_49 = arith.constant 0 : index
      %83 = arith.index_cast %82 : i32 to index
      %c0_50 = arith.constant 0 : index
      %84 = vector.load %arg1[%c0_49, %83, %c0_50] : memref<1x2496x5xf32, #tpu.memory_space<vmem>>, vector<1x96x5xf32>
      %85 = vector.shape_cast %84 : vector<1x96x5xf32> to vector<96x5xf32>
      %c0_51 = arith.constant 0 : index
      %c0_52 = arith.constant 0 : index
      %c0_53 = arith.constant 0 : index
      %86 = vector.load %arg2[%c0_51, %c0_52, %c0_53] : memref<5x5x32xf32, #tpu.memory_space<vmem>>, vector<1x5x32xf32>
      %87 = vector.shape_cast %86 : vector<1x5x32xf32> to vector<5x32xf32>
      %cst_54 = arith.constant dense<0.000000e+00> : vector<96x32xf32>
      %88 = tpu.matmul %85, %87, %cst_54 {dimension_numbers = #tpu.dot_dimension_numbers<[1], [0], [0], [1], [0, 0, 1, 1], [], []>} : vector<96x5xf32>, vector<5x32xf32>, vector<96x32xf32> -> vector<96x32xf32>
      %89 = arith.addf %81, %88 : vector<96x32xf32>
      %c50_i32_55 = arith.constant 50 : i32
      %90 = arith.addi %80, %c50_i32_55 : i32
      %c0_56 = arith.constant 0 : index
      %91 = arith.index_cast %90 : i32 to index
      %c0_57 = arith.constant 0 : index
      %92 = vector.load %arg1[%c0_56, %91, %c0_57] : memref<1x2496x5xf32, #tpu.memory_space<vmem>>, vector<1x96x5xf32>
      %93 = vector.shape_cast %92 : vector<1x96x5xf32> to vector<96x5xf32>
      %c1_58 = arith.constant 1 : index
      %c0_59 = arith.constant 0 : index
      %c0_60 = arith.constant 0 : index
      %94 = vector.load %arg2[%c1_58, %c0_59, %c0_60] : memref<5x5x32xf32, #tpu.memory_space<vmem>>, vector<1x5x32xf32>
      %95 = vector.shape_cast %94 : vector<1x5x32xf32> to vector<5x32xf32>
      %cst_61 = arith.constant dense<0.000000e+00> : vector<96x32xf32>
      %96 = tpu.matmul %93, %95, %cst_61 {dimension_numbers = #tpu.dot_dimension_numbers<[1], [0], [0], [1], [0, 0, 1, 1], [], []>} : vector<96x5xf32>, vector<5x32xf32>, vector<96x32xf32> -> vector<96x32xf32>
      %97 = arith.addf %89, %96 : vector<96x32xf32>
      %c100_i32 = arith.constant 100 : i32
      %98 = arith.addi %80, %c100_i32 : i32
      %c0_62 = arith.constant 0 : index
      %99 = arith.index_cast %98 : i32 to index
      %c0_63 = arith.constant 0 : index
      %100 = vector.load %arg1[%c0_62, %99, %c0_63] : memref<1x2496x5xf32, #tpu.memory_space<vmem>>, vector<1x96x5xf32>
      %101 = vector.shape_cast %100 : vector<1x96x5xf32> to vector<96x5xf32>
      %c2_64 = arith.constant 2 : index
      %c0_65 = arith.constant 0 : index
      %c0_66 = arith.constant 0 : index
      %102 = vector.load %arg2[%c2_64, %c0_65, %c0_66] : memref<5x5x32xf32, #tpu.memory_space<vmem>>, vector<1x5x32xf32>
      %103 = vector.shape_cast %102 : vector<1x5x32xf32> to vector<5x32xf32>
      %cst_67 = arith.constant dense<0.000000e+00> : vector<96x32xf32>
      %104 = tpu.matmul %101, %103, %cst_67 {dimension_numbers = #tpu.dot_dimension_numbers<[1], [0], [0], [1], [0, 0, 1, 1], [], []>} : vector<96x5xf32>, vector<5x32xf32>, vector<96x32xf32> -> vector<96x32xf32>
      %105 = arith.addf %97, %104 : vector<96x32xf32>
      %c150_i32 = arith.constant 150 : i32
      %106 = arith.addi %80, %c150_i32 : i32
      %c0_68 = arith.constant 0 : index
      %107 = arith.index_cast %106 : i32 to index
      %c0_69 = arith.constant 0 : index
      %108 = vector.load %arg1[%c0_68, %107, %c0_69] : memref<1x2496x5xf32, #tpu.memory_space<vmem>>, vector<1x96x5xf32>
      %109 = vector.shape_cast %108 : vector<1x96x5xf32> to vector<96x5xf32>
      %c3_70 = arith.constant 3 : index
      %c0_71 = arith.constant 0 : index
      %c0_72 = arith.constant 0 : index
      %110 = vector.load %arg2[%c3_70, %c0_71, %c0_72] : memref<5x5x32xf32, #tpu.memory_space<vmem>>, vector<1x5x32xf32>
      %111 = vector.shape_cast %110 : vector<1x5x32xf32> to vector<5x32xf32>
      %cst_73 = arith.constant dense<0.000000e+00> : vector<96x32xf32>
      %112 = tpu.matmul %109, %111, %cst_73 {dimension_numbers = #tpu.dot_dimension_numbers<[1], [0], [0], [1], [0, 0, 1, 1], [], []>} : vector<96x5xf32>, vector<5x32xf32>, vector<96x32xf32> -> vector<96x32xf32>
      %113 = arith.addf %105, %112 : vector<96x32xf32>
      %c200_i32 = arith.constant 200 : i32
      %114 = arith.addi %80, %c200_i32 : i32
      %c0_74 = arith.constant 0 : index
      %115 = arith.index_cast %114 : i32 to index
      %c0_75 = arith.constant 0 : index
      %116 = vector.load %arg1[%c0_74, %115, %c0_75] : memref<1x2496x5xf32, #tpu.memory_space<vmem>>, vector<1x96x5xf32>
      %117 = vector.shape_cast %116 : vector<1x96x5xf32> to vector<96x5xf32>
      %c4 = arith.constant 4 : index
      %c0_76 = arith.constant 0 : index
      %c0_77 = arith.constant 0 : index
      %118 = vector.load %arg2[%c4, %c0_76, %c0_77] : memref<5x5x32xf32, #tpu.memory_space<vmem>>, vector<1x5x32xf32>
      %119 = vector.shape_cast %118 : vector<1x5x32xf32> to vector<5x32xf32>
      %cst_78 = arith.constant dense<0.000000e+00> : vector<96x32xf32>
      %120 = tpu.matmul %117, %119, %cst_78 {dimension_numbers = #tpu.dot_dimension_numbers<[1], [0], [0], [1], [0, 0, 1, 1], [], []>} : vector<96x5xf32>, vector<5x32xf32>, vector<96x32xf32> -> vector<96x32xf32>
      %121 = arith.addf %113, %120 : vector<96x32xf32>
      %122 = vector.broadcast %14 : vector<1x32xf32> to vector<96x32xf32>
      %123 = arith.addf %121, %122 : vector<96x32xf32>
      %cst_79 = arith.constant 0.000000e+00 : f32
      %124 = vector.broadcast %cst_79 : f32 to vector<96x32xf32>
      %125 = arith.maximumf %123, %124 : vector<96x32xf32>
      %126 = vector.extract_strided_slice %125 {offsets = [0, 0], sizes = [46, 32], strides = [1, 1]} : vector<96x32xf32> to vector<46x32xf32>
      %127 = vector.extract_strided_slice %125 {offsets = [50, 0], sizes = [46, 32], strides = [1, 1]} : vector<96x32xf32> to vector<46x32xf32>
      %128 = arith.maximumf %126, %127 : vector<46x32xf32>
      %cst_80 = arith.constant dense<0.000000e+00> : vector<23x32xf32>
      %129 = tpu.matmul %6, %128, %cst_80 {dimension_numbers = #tpu.dot_dimension_numbers<[1], [0], [0], [1], [0, 0, 1, 1], [], []>} : vector<23x46xf32>, vector<46x32xf32>, vector<23x32xf32> -> vector<23x32xf32>
      %cst_81 = arith.constant dense<0.000000e+00> : vector<23x32xf32>
      %130 = tpu.matmul %13, %128, %cst_81 {dimension_numbers = #tpu.dot_dimension_numbers<[1], [0], [0], [1], [0, 0, 1, 1], [], []>} : vector<23x46xf32>, vector<46x32xf32>, vector<23x32xf32> -> vector<23x32xf32>
      %131 = arith.maximumf %129, %130 : vector<23x32xf32>
      %c23_i32_82 = arith.constant 23 : i32
      %132 = arith.muli %arg16, %c23_i32_82 : i32
      %133 = arith.index_cast %132 : i32 to index
      %c0_83 = arith.constant 0 : index
      %134 = vector.load %arg13[%133, %c0_83] : memref<529x32xf32, #tpu.memory_space<vmem>>, vector<23x32xf32>
      tpu.vector_store %arg13[%133, %c0_83], %131 {strides = array<i32>} : memref<529x32xf32, #tpu.memory_space<vmem>>, vector<23x32xf32>,
    }
    %c23_i32_3 = arith.constant 23 : i32
    %16 = tpu.iota {dimensions = array<i32: 0>} : vector<9x18xi32>
    %17 = tpu.iota {dimensions = array<i32: 1>} : vector<9x18xi32>
    %c2_i32_4 = arith.constant 2 : i32
    %18 = vector.broadcast %c2_i32_4 : i32 to vector<9x18xi32>
    %19 = arith.muli %18, %16 : vector<9x18xi32>
    %20 = arith.cmpi eq, %17, %19 : vector<9x18xi32>
    %21 = arith.extui %20 : vector<9x18xi1> to vector<9x18xi32>
    %22 = arith.sitofp %21 : vector<9x18xi32> to vector<9x18xf32>
    %c2_i32_5 = arith.constant 2 : i32
    %23 = vector.broadcast %c2_i32_5 : i32 to vector<9x18xi32>
    %24 = arith.muli %23, %16 : vector<9x18xi32>
    %c1_i32_6 = arith.constant 1 : i32
    %25 = vector.broadcast %c1_i32_6 : i32 to vector<9x18xi32>
    %26 = arith.addi %24, %25 : vector<9x18xi32>
    %27 = arith.cmpi eq, %17, %26 : vector<9x18xi32>
    %28 = arith.extui %27 : vector<9x18xi1> to vector<9x18xi32>
    %29 = arith.sitofp %28 : vector<9x18xi32> to vector<9x18xf32>
    %c0_7 = arith.constant 0 : index
    %c0_8 = arith.constant 0 : index
    %30 = vector.load %arg5[%c0_7, %c0_8] : memref<1x64xf32, #tpu.memory_space<vmem>>, vector<1x64xf32>
    %c0_i32_9 = arith.constant 0 : i32
    %c9_i32 = arith.constant 9 : i32
    %31 = arith.addi %c0_i32_9, %c9_i32 : i32
    %c1_i32_10 = arith.constant 1 : i32
    scf.for %arg16 = %c0_i32_9 to %31 step %c1_i32_10  : i32 {
      %c2_i32_46 = arith.constant 2 : i32
      %79 = arith.muli %c2_i32_46, %arg16 : i32
      %c23_i32_47 = arith.constant 23 : i32
      %80 = arith.muli %79, %c23_i32_47 : i32
      %cst_48 = arith.constant 0.000000e+00 : f32
      %81 = vector.broadcast %cst_48 : f32 to vector<42x64xf32>
      %c0_i32_49 = arith.constant 0 : i32
      %82 = arith.addi %80, %c0_i32_49 : i32
      %83 = arith.index_cast %82 : i32 to index
      %c0_50 = arith.constant 0 : index
      %84 = vector.load %arg13[%83, %c0_50] : memref<529x32xf32, #tpu.memory_space<vmem>>, vector<42x32xf32>
      %c0_51 = arith.constant 0 : index
      %c0_52 = arith.constant 0 : index
      %c0_53 = arith.constant 0 : index
      %85 = vector.load %arg4[%c0_51, %c0_52, %c0_53] : memref<25x32x64xf32, #tpu.memory_space<vmem>>, vector<1x32x64xf32>
      %86 = vector.shape_cast %85 : vector<1x32x64xf32> to vector<32x64xf32>
      %cst_54 = arith.constant dense<0.000000e+00> : vector<42x64xf32>
      %87 = tpu.matmul %84, %86, %cst_54 {dimension_numbers = #tpu.dot_dimension_numbers<[1], [0], [0], [1], [0, 0, 1, 1], [], []>} : vector<42x32xf32>, vector<32x64xf32>, vector<42x64xf32> -> vector<42x64xf32>
      %88 = arith.addf %81, %87 : vector<42x64xf32>
      %c1_i32_55 = arith.constant 1 : i32
      %89 = arith.addi %80, %c1_i32_55 : i32
      %90 = arith.index_cast %89 : i32 to index
      %c0_56 = arith.constant 0 : index
      %91 = vector.load %arg13[%90, %c0_56] : memref<529x32xf32, #tpu.memory_space<vmem>>, vector<42x32xf32>
      %c1_57 = arith.constant 1 : index
      %c0_58 = arith.constant 0 : index
      %c0_59 = arith.constant 0 : index
      %92 = vector.load %arg4[%c1_57, %c0_58, %c0_59] : memref<25x32x64xf32, #tpu.memory_space<vmem>>, vector<1x32x64xf32>
      %93 = vector.shape_cast %92 : vector<1x32x64xf32> to vector<32x64xf32>
      %cst_60 = arith.constant dense<0.000000e+00> : vector<42x64xf32>
      %94 = tpu.matmul %91, %93, %cst_60 {dimension_numbers = #tpu.dot_dimension_numbers<[1], [0], [0], [1], [0, 0, 1, 1], [], []>} : vector<42x32xf32>, vector<32x64xf32>, vector<42x64xf32> -> vector<42x64xf32>
      %95 = arith.addf %88, %94 : vector<42x64xf32>
      %c2_i32_61 = arith.constant 2 : i32
      %96 = arith.addi %80, %c2_i32_61 : i32
      %97 = arith.index_cast %96 : i32 to index
      %c0_62 = arith.constant 0 : index
      %98 = vector.load %arg13[%97, %c0_62] : memref<529x32xf32, #tpu.memory_space<vmem>>, vector<42x32xf32>
      %c2_63 = arith.constant 2 : index
      %c0_64 = arith.constant 0 : index
      %c0_65 = arith.constant 0 : index
      %99 = vector.load %arg4[%c2_63, %c0_64, %c0_65] : memref<25x32x64xf32, #tpu.memory_space<vmem>>, vector<1x32x64xf32>
      %100 = vector.shape_cast %99 : vector<1x32x64xf32> to vector<32x64xf32>
      %cst_66 = arith.constant dense<0.000000e+00> : vector<42x64xf32>
      %101 = tpu.matmul %98, %100, %cst_66 {dimension_numbers = #tpu.dot_dimension_numbers<[1], [0], [0], [1], [0, 0, 1, 1], [], []>} : vector<42x32xf32>, vector<32x64xf32>, vector<42x64xf32> -> vector<42x64xf32>
      %102 = arith.addf %95, %101 : vector<42x64xf32>
      %c3_i32 = arith.constant 3 : i32
      %103 = arith.addi %80, %c3_i32 : i32
      %104 = arith.index_cast %103 : i32 to index
      %c0_67 = arith.constant 0 : index
      %105 = vector.load %arg13[%104, %c0_67] : memref<529x32xf32, #tpu.memory_space<vmem>>, vector<42x32xf32>
      %c3_68 = arith.constant 3 : index
      %c0_69 = arith.constant 0 : index
      %c0_70 = arith.constant 0 : index
      %106 = vector.load %arg4[%c3_68, %c0_69, %c0_70] : memref<25x32x64xf32, #tpu.memory_space<vmem>>, vector<1x32x64xf32>
      %107 = vector.shape_cast %106 : vector<1x32x64xf32> to vector<32x64xf32>
      %cst_71 = arith.constant dense<0.000000e+00> : vector<42x64xf32>
      %108 = tpu.matmul %105, %107, %cst_71 {dimension_numbers = #tpu.dot_dimension_numbers<[1], [0], [0], [1], [0, 0, 1, 1], [], []>} : vector<42x32xf32>, vector<32x64xf32>, vector<42x64xf32> -> vector<42x64xf32>
      %109 = arith.addf %102, %108 : vector<42x64xf32>
      %c4_i32 = arith.constant 4 : i32
      %110 = arith.addi %80, %c4_i32 : i32
      %111 = arith.index_cast %110 : i32 to index
      %c0_72 = arith.constant 0 : index
      %112 = vector.load %arg13[%111, %c0_72] : memref<529x32xf32, #tpu.memory_space<vmem>>, vector<42x32xf32>
      %c4 = arith.constant 4 : index
      %c0_73 = arith.constant 0 : index
      %c0_74 = arith.constant 0 : index
      %113 = vector.load %arg4[%c4, %c0_73, %c0_74] : memref<25x32x64xf32, #tpu.memory_space<vmem>>, vector<1x32x64xf32>
      %114 = vector.shape_cast %113 : vector<1x32x64xf32> to vector<32x64xf32>
      %cst_75 = arith.constant dense<0.000000e+00> : vector<42x64xf32>
      %115 = tpu.matmul %112, %114, %cst_75 {dimension_numbers = #tpu.dot_dimension_numbers<[1], [0], [0], [1], [0, 0, 1, 1], [], []>} : vector<42x32xf32>, vector<32x64xf32>, vector<42x64xf32> -> vector<42x64xf32>
      %116 = arith.addf %109, %115 : vector<42x64xf32>
      %c23_i32_76 = arith.constant 23 : i32
      %117 = arith.addi %80, %c23_i32_76 : i32
      %118 = arith.index_cast %117 : i32 to index
      %c0_77 = arith.constant 0 : index
      %119 = vector.load %arg13[%118, %c0_77] : memref<529x32xf32, #tpu.memory_space<vmem>>, vector<42x32xf32>
      %c5 = arith.constant 5 : index
      %c0_78 = arith.constant 0 : index
      %c0_79 = arith.constant 0 : index
      %120 = vector.load %arg4[%c5, %c0_78, %c0_79] : memref<25x32x64xf32, #tpu.memory_space<vmem>>, vector<1x32x64xf32>
      %121 = vector.shape_cast %120 : vector<1x32x64xf32> to vector<32x64xf32>
      %cst_80 = arith.constant dense<0.000000e+00> : vector<42x64xf32>
      %122 = tpu.matmul %119, %121, %cst_80 {dimension_numbers = #tpu.dot_dimension_numbers<[1], [0], [0], [1], [0, 0, 1, 1], [], []>} : vector<42x32xf32>, vector<32x64xf32>, vector<42x64xf32> -> vector<42x64xf32>
      %123 = arith.addf %116, %122 : vector<42x64xf32>
      %c24_i32 = arith.constant 24 : i32
      %124 = arith.addi %80, %c24_i32 : i32
      %125 = arith.index_cast %124 : i32 to index
      %c0_81 = arith.constant 0 : index
      %126 = vector.load %arg13[%125, %c0_81] : memref<529x32xf32, #tpu.memory_space<vmem>>, vector<42x32xf32>
      %c6 = arith.constant 6 : index
      %c0_82 = arith.constant 0 : index
      %c0_83 = arith.constant 0 : index
      %127 = vector.load %arg4[%c6, %c0_82, %c0_83] : memref<25x32x64xf32, #tpu.memory_space<vmem>>, vector<1x32x64xf32>
      %128 = vector.shape_cast %127 : vector<1x32x64xf32> to vector<32x64xf32>
      %cst_84 = arith.constant dense<0.000000e+00> : vector<42x64xf32>
      %129 = tpu.matmul %126, %128, %cst_84 {dimension_numbers = #tpu.dot_dimension_numbers<[1], [0], [0], [1], [0, 0, 1, 1], [], []>} : vector<42x32xf32>, vector<32x64xf32>, vector<42x64xf32> -> vector<42x64xf32>
      %130 = arith.addf %123, %129 : vector<42x64xf32>
      %c25_i32 = arith.constant 25 : i32
      %131 = arith.addi %80, %c25_i32 : i32
      %132 = arith.index_cast %131 : i32 to index
      %c0_85 = arith.constant 0 : index
      %133 = vector.load %arg13[%132, %c0_85] : memref<529x32xf32, #tpu.memory_space<vmem>>, vector<42x32xf32>
      %c7 = arith.constant 7 : index
      %c0_86 = arith.constant 0 : index
      %c0_87 = arith.constant 0 : index
      %134 = vector.load %arg4[%c7, %c0_86, %c0_87] : memref<25x32x64xf32, #tpu.memory_space<vmem>>, vector<1x32x64xf32>
      %135 = vector.shape_cast %134 : vector<1x32x64xf32> to vector<32x64xf32>
      %cst_88 = arith.constant dense<0.000000e+00> : vector<42x64xf32>
      %136 = tpu.matmul %133, %135, %cst_88 {dimension_numbers = #tpu.dot_dimension_numbers<[1], [0], [0], [1], [0, 0, 1, 1], [], []>} : vector<42x32xf32>, vector<32x64xf32>, vector<42x64xf32> -> vector<42x64xf32>
      %137 = arith.addf %130, %136 : vector<42x64xf32>
      %c26_i32 = arith.constant 26 : i32
      %138 = arith.addi %80, %c26_i32 : i32
      %139 = arith.index_cast %138 : i32 to index
      %c0_89 = arith.constant 0 : index
      %140 = vector.load %arg13[%139, %c0_89] : memref<529x32xf32, #tpu.memory_space<vmem>>, vector<42x32xf32>
      %c8 = arith.constant 8 : index
      %c0_90 = arith.constant 0 : index
      %c0_91 = arith.constant 0 : index
      %141 = vector.load %arg4[%c8, %c0_90, %c0_91] : memref<25x32x64xf32, #tpu.memory_space<vmem>>, vector<1x32x64xf32>
      %142 = vector.shape_cast %141 : vector<1x32x64xf32> to vector<32x64xf32>
      %cst_92 = arith.constant dense<0.000000e+00> : vector<42x64xf32>
      %143 = tpu.matmul %140, %142, %cst_92 {dimension_numbers = #tpu.dot_dimension_numbers<[1], [0], [0], [1], [0, 0, 1, 1], [], []>} : vector<42x32xf32>, vector<32x64xf32>, vector<42x64xf32> -> vector<42x64xf32>
      %144 = arith.addf %137, %143 : vector<42x64xf32>
      %c27_i32 = arith.constant 27 : i32
      %145 = arith.addi %80, %c27_i32 : i32
      %146 = arith.index_cast %145 : i32 to index
      %c0_93 = arith.constant 0 : index
      %147 = vector.load %arg13[%146, %c0_93] : memref<529x32xf32, #tpu.memory_space<vmem>>, vector<42x32xf32>
      %c9 = arith.constant 9 : index
      %c0_94 = arith.constant 0 : index
      %c0_95 = arith.constant 0 : index
      %148 = vector.load %arg4[%c9, %c0_94, %c0_95] : memref<25x32x64xf32, #tpu.memory_space<vmem>>, vector<1x32x64xf32>
      %149 = vector.shape_cast %148 : vector<1x32x64xf32> to vector<32x64xf32>
      %cst_96 = arith.constant dense<0.000000e+00> : vector<42x64xf32>
      %150 = tpu.matmul %147, %149, %cst_96 {dimension_numbers = #tpu.dot_dimension_numbers<[1], [0], [0], [1], [0, 0, 1, 1], [], []>} : vector<42x32xf32>, vector<32x64xf32>, vector<42x64xf32> -> vector<42x64xf32>
      %151 = arith.addf %144, %150 : vector<42x64xf32>
      %c46_i32 = arith.constant 46 : i32
      %152 = arith.addi %80, %c46_i32 : i32
      %153 = arith.index_cast %152 : i32 to index
      %c0_97 = arith.constant 0 : index
      %154 = vector.load %arg13[%153, %c0_97] : memref<529x32xf32, #tpu.memory_space<vmem>>, vector<42x32xf32>
      %c10 = arith.constant 10 : index
      %c0_98 = arith.constant 0 : index
      %c0_99 = arith.constant 0 : index
      %155 = vector.load %arg4[%c10, %c0_98, %c0_99] : memref<25x32x64xf32, #tpu.memory_space<vmem>>, vector<1x32x64xf32>
      %156 = vector.shape_cast %155 : vector<1x32x64xf32> to vector<32x64xf32>
      %cst_100 = arith.constant dense<0.000000e+00> : vector<42x64xf32>
      %157 = tpu.matmul %154, %156, %cst_100 {dimension_numbers = #tpu.dot_dimension_numbers<[1], [0], [0], [1], [0, 0, 1, 1], [], []>} : vector<42x32xf32>, vector<32x64xf32>, vector<42x64xf32> -> vector<42x64xf32>
      %158 = arith.addf %151, %157 : vector<42x64xf32>
      %c47_i32 = arith.constant 47 : i32
      %159 = arith.addi %80, %c47_i32 : i32
      %160 = arith.index_cast %159 : i32 to index
      %c0_101 = arith.constant 0 : index
      %161 = vector.load %arg13[%160, %c0_101] : memref<529x32xf32, #tpu.memory_space<vmem>>, vector<42x32xf32>
      %c11 = arith.constant 11 : index
      %c0_102 = arith.constant 0 : index
      %c0_103 = arith.constant 0 : index
      %162 = vector.load %arg4[%c11, %c0_102, %c0_103] : memref<25x32x64xf32, #tpu.memory_space<vmem>>, vector<1x32x64xf32>
      %163 = vector.shape_cast %162 : vector<1x32x64xf32> to vector<32x64xf32>
      %cst_104 = arith.constant dense<0.000000e+00> : vector<42x64xf32>
      %164 = tpu.matmul %161, %163, %cst_104 {dimension_numbers = #tpu.dot_dimension_numbers<[1], [0], [0], [1], [0, 0, 1, 1], [], []>} : vector<42x32xf32>, vector<32x64xf32>, vector<42x64xf32> -> vector<42x64xf32>
      %165 = arith.addf %158, %164 : vector<42x64xf32>
      %c48_i32 = arith.constant 48 : i32
      %166 = arith.addi %80, %c48_i32 : i32
      %167 = arith.index_cast %166 : i32 to index
      %c0_105 = arith.constant 0 : index
      %168 = vector.load %arg13[%167, %c0_105] : memref<529x32xf32, #tpu.memory_space<vmem>>, vector<42x32xf32>
      %c12 = arith.constant 12 : index
      %c0_106 = arith.constant 0 : index
      %c0_107 = arith.constant 0 : index
      %169 = vector.load %arg4[%c12, %c0_106, %c0_107] : memref<25x32x64xf32, #tpu.memory_space<vmem>>, vector<1x32x64xf32>
      %170 = vector.shape_cast %169 : vector<1x32x64xf32> to vector<32x64xf32>
      %cst_108 = arith.constant dense<0.000000e+00> : vector<42x64xf32>
      %171 = tpu.matmul %168, %170, %cst_108 {dimension_numbers = #tpu.dot_dimension_numbers<[1], [0], [0], [1], [0, 0, 1, 1], [], []>} : vector<42x32xf32>, vector<32x64xf32>, vector<42x64xf32> -> vector<42x64xf32>
      %172 = arith.addf %165, %171 : vector<42x64xf32>
      %c49_i32 = arith.constant 49 : i32
      %173 = arith.addi %80, %c49_i32 : i32
      %174 = arith.index_cast %173 : i32 to index
      %c0_109 = arith.constant 0 : index
      %175 = vector.load %arg13[%174, %c0_109] : memref<529x32xf32, #tpu.memory_space<vmem>>, vector<42x32xf32>
      %c13 = arith.constant 13 : index
      %c0_110 = arith.constant 0 : index
      %c0_111 = arith.constant 0 : index
      %176 = vector.load %arg4[%c13, %c0_110, %c0_111] : memref<25x32x64xf32, #tpu.memory_space<vmem>>, vector<1x32x64xf32>
      %177 = vector.shape_cast %176 : vector<1x32x64xf32> to vector<32x64xf32>
      %cst_112 = arith.constant dense<0.000000e+00> : vector<42x64xf32>
      %178 = tpu.matmul %175, %177, %cst_112 {dimension_numbers = #tpu.dot_dimension_numbers<[1], [0], [0], [1], [0, 0, 1, 1], [], []>} : vector<42x32xf32>, vector<32x64xf32>, vector<42x64xf32> -> vector<42x64xf32>
      %179 = arith.addf %172, %178 : vector<42x64xf32>
      %c50_i32 = arith.constant 50 : i32
      %180 = arith.addi %80, %c50_i32 : i32
      %181 = arith.index_cast %180 : i32 to index
      %c0_113 = arith.constant 0 : index
      %182 = vector.load %arg13[%181, %c0_113] : memref<529x32xf32, #tpu.memory_space<vmem>>, vector<42x32xf32>
      %c14 = arith.constant 14 : index
      %c0_114 = arith.constant 0 : index
      %c0_115 = arith.constant 0 : index
      %183 = vector.load %arg4[%c14, %c0_114, %c0_115] : memref<25x32x64xf32, #tpu.memory_space<vmem>>, vector<1x32x64xf32>
      %184 = vector.shape_cast %183 : vector<1x32x64xf32> to vector<32x64xf32>
      %cst_116 = arith.constant dense<0.000000e+00> : vector<42x64xf32>
      %185 = tpu.matmul %182, %184, %cst_116 {dimension_numbers = #tpu.dot_dimension_numbers<[1], [0], [0], [1], [0, 0, 1, 1], [], []>} : vector<42x32xf32>, vector<32x64xf32>, vector<42x64xf32> -> vector<42x64xf32>
      %186 = arith.addf %179, %185 : vector<42x64xf32>
      %c69_i32 = arith.constant 69 : i32
      %187 = arith.addi %80, %c69_i32 : i32
      %188 = arith.index_cast %187 : i32 to index
      %c0_117 = arith.constant 0 : index
      %189 = vector.load %arg13[%188, %c0_117] : memref<529x32xf32, #tpu.memory_space<vmem>>, vector<42x32xf32>
      %c15 = arith.constant 15 : index
      %c0_118 = arith.constant 0 : index
      %c0_119 = arith.constant 0 : index
      %190 = vector.load %arg4[%c15, %c0_118, %c0_119] : memref<25x32x64xf32, #tpu.memory_space<vmem>>, vector<1x32x64xf32>
      %191 = vector.shape_cast %190 : vector<1x32x64xf32> to vector<32x64xf32>
      %cst_120 = arith.constant dense<0.000000e+00> : vector<42x64xf32>
      %192 = tpu.matmul %189, %191, %cst_120 {dimension_numbers = #tpu.dot_dimension_numbers<[1], [0], [0], [1], [0, 0, 1, 1], [], []>} : vector<42x32xf32>, vector<32x64xf32>, vector<42x64xf32> -> vector<42x64xf32>
      %193 = arith.addf %186, %192 : vector<42x64xf32>
      %c70_i32 = arith.constant 70 : i32
      %194 = arith.addi %80, %c70_i32 : i32
      %195 = arith.index_cast %194 : i32 to index
      %c0_121 = arith.constant 0 : index
      %196 = vector.load %arg13[%195, %c0_121] : memref<529x32xf32, #tpu.memory_space<vmem>>, vector<42x32xf32>
      %c16 = arith.constant 16 : index
      %c0_122 = arith.constant 0 : index
      %c0_123 = arith.constant 0 : index
      %197 = vector.load %arg4[%c16, %c0_122, %c0_123] : memref<25x32x64xf32, #tpu.memory_space<vmem>>, vector<1x32x64xf32>
      %198 = vector.shape_cast %197 : vector<1x32x64xf32> to vector<32x64xf32>
      %cst_124 = arith.constant dense<0.000000e+00> : vector<42x64xf32>
      %199 = tpu.matmul %196, %198, %cst_124 {dimension_numbers = #tpu.dot_dimension_numbers<[1], [0], [0], [1], [0, 0, 1, 1], [], []>} : vector<42x32xf32>, vector<32x64xf32>, vector<42x64xf32> -> vector<42x64xf32>
      %200 = arith.addf %193, %199 : vector<42x64xf32>
      %c71_i32 = arith.constant 71 : i32
      %201 = arith.addi %80, %c71_i32 : i32
      %202 = arith.index_cast %201 : i32 to index
      %c0_125 = arith.constant 0 : index
      %203 = vector.load %arg13[%202, %c0_125] : memref<529x32xf32, #tpu.memory_space<vmem>>, vector<42x32xf32>
      %c17 = arith.constant 17 : index
      %c0_126 = arith.constant 0 : index
      %c0_127 = arith.constant 0 : index
      %204 = vector.load %arg4[%c17, %c0_126, %c0_127] : memref<25x32x64xf32, #tpu.memory_space<vmem>>, vector<1x32x64xf32>
      %205 = vector.shape_cast %204 : vector<1x32x64xf32> to vector<32x64xf32>
      %cst_128 = arith.constant dense<0.000000e+00> : vector<42x64xf32>
      %206 = tpu.matmul %203, %205, %cst_128 {dimension_numbers = #tpu.dot_dimension_numbers<[1], [0], [0], [1], [0, 0, 1, 1], [], []>} : vector<42x32xf32>, vector<32x64xf32>, vector<42x64xf32> -> vector<42x64xf32>
      %207 = arith.addf %200, %206 : vector<42x64xf32>
      %c72_i32 = arith.constant 72 : i32
      %208 = arith.addi %80, %c72_i32 : i32
      %209 = arith.index_cast %208 : i32 to index
      %c0_129 = arith.constant 0 : index
      %210 = vector.load %arg13[%209, %c0_129] : memref<529x32xf32, #tpu.memory_space<vmem>>, vector<42x32xf32>
      %c18 = arith.constant 18 : index
      %c0_130 = arith.constant 0 : index
      %c0_131 = arith.constant 0 : index
      %211 = vector.load %arg4[%c18, %c0_130, %c0_131] : memref<25x32x64xf32, #tpu.memory_space<vmem>>, vector<1x32x64xf32>
      %212 = vector.shape_cast %211 : vector<1x32x64xf32> to vector<32x64xf32>
      %cst_132 = arith.constant dense<0.000000e+00> : vector<42x64xf32>
      %213 = tpu.matmul %210, %212, %cst_132 {dimension_numbers = #tpu.dot_dimension_numbers<[1], [0], [0], [1], [0, 0, 1, 1], [], []>} : vector<42x32xf32>, vector<32x64xf32>, vector<42x64xf32> -> vector<42x64xf32>
      %214 = arith.addf %207, %213 : vector<42x64xf32>
      %c73_i32 = arith.constant 73 : i32
      %215 = arith.addi %80, %c73_i32 : i32
      %216 = arith.index_cast %215 : i32 to index
      %c0_133 = arith.constant 0 : index
      %217 = vector.load %arg13[%216, %c0_133] : memref<529x32xf32, #tpu.memory_space<vmem>>, vector<42x32xf32>
      %c19 = arith.constant 19 : index
      %c0_134 = arith.constant 0 : index
      %c0_135 = arith.constant 0 : index
      %218 = vector.load %arg4[%c19, %c0_134, %c0_135] : memref<25x32x64xf32, #tpu.memory_space<vmem>>, vector<1x32x64xf32>
      %219 = vector.shape_cast %218 : vector<1x32x64xf32> to vector<32x64xf32>
      %cst_136 = arith.constant dense<0.000000e+00> : vector<42x64xf32>
      %220 = tpu.matmul %217, %219, %cst_136 {dimension_numbers = #tpu.dot_dimension_numbers<[1], [0], [0], [1], [0, 0, 1, 1], [], []>} : vector<42x32xf32>, vector<32x64xf32>, vector<42x64xf32> -> vector<42x64xf32>
      %221 = arith.addf %214, %220 : vector<42x64xf32>
      %c92_i32 = arith.constant 92 : i32
      %222 = arith.addi %80, %c92_i32 : i32
      %223 = arith.index_cast %222 : i32 to index
      %c0_137 = arith.constant 0 : index
      %224 = vector.load %arg13[%223, %c0_137] : memref<529x32xf32, #tpu.memory_space<vmem>>, vector<42x32xf32>
      %c20 = arith.constant 20 : index
      %c0_138 = arith.constant 0 : index
      %c0_139 = arith.constant 0 : index
      %225 = vector.load %arg4[%c20, %c0_138, %c0_139] : memref<25x32x64xf32, #tpu.memory_space<vmem>>, vector<1x32x64xf32>
      %226 = vector.shape_cast %225 : vector<1x32x64xf32> to vector<32x64xf32>
      %cst_140 = arith.constant dense<0.000000e+00> : vector<42x64xf32>
      %227 = tpu.matmul %224, %226, %cst_140 {dimension_numbers = #tpu.dot_dimension_numbers<[1], [0], [0], [1], [0, 0, 1, 1], [], []>} : vector<42x32xf32>, vector<32x64xf32>, vector<42x64xf32> -> vector<42x64xf32>
      %228 = arith.addf %221, %227 : vector<42x64xf32>
      %c93_i32 = arith.constant 93 : i32
      %229 = arith.addi %80, %c93_i32 : i32
      %230 = arith.index_cast %229 : i32 to index
      %c0_141 = arith.constant 0 : index
      %231 = vector.load %arg13[%230, %c0_141] : memref<529x32xf32, #tpu.memory_space<vmem>>, vector<42x32xf32>
      %c21 = arith.constant 21 : index
      %c0_142 = arith.constant 0 : index
      %c0_143 = arith.constant 0 : index
      %232 = vector.load %arg4[%c21, %c0_142, %c0_143] : memref<25x32x64xf32, #tpu.memory_space<vmem>>, vector<1x32x64xf32>
      %233 = vector.shape_cast %232 : vector<1x32x64xf32> to vector<32x64xf32>
      %cst_144 = arith.constant dense<0.000000e+00> : vector<42x64xf32>
      %234 = tpu.matmul %231, %233, %cst_144 {dimension_numbers = #tpu.dot_dimension_numbers<[1], [0], [0], [1], [0, 0, 1, 1], [], []>} : vector<42x32xf32>, vector<32x64xf32>, vector<42x64xf32> -> vector<42x64xf32>
      %235 = arith.addf %228, %234 : vector<42x64xf32>
      %c94_i32 = arith.constant 94 : i32
      %236 = arith.addi %80, %c94_i32 : i32
      %237 = arith.index_cast %236 : i32 to index
      %c0_145 = arith.constant 0 : index
      %238 = vector.load %arg13[%237, %c0_145] : memref<529x32xf32, #tpu.memory_space<vmem>>, vector<42x32xf32>
      %c22 = arith.constant 22 : index
      %c0_146 = arith.constant 0 : index
      %c0_147 = arith.constant 0 : index
      %239 = vector.load %arg4[%c22, %c0_146, %c0_147] : memref<25x32x64xf32, #tpu.memory_space<vmem>>, vector<1x32x64xf32>
      %240 = vector.shape_cast %239 : vector<1x32x64xf32> to vector<32x64xf32>
      %cst_148 = arith.constant dense<0.000000e+00> : vector<42x64xf32>
      %241 = tpu.matmul %238, %240, %cst_148 {dimension_numbers = #tpu.dot_dimension_numbers<[1], [0], [0], [1], [0, 0, 1, 1], [], []>} : vector<42x32xf32>, vector<32x64xf32>, vector<42x64xf32> -> vector<42x64xf32>
      %242 = arith.addf %235, %241 : vector<42x64xf32>
      %c95_i32 = arith.constant 95 : i32
      %243 = arith.addi %80, %c95_i32 : i32
      %244 = arith.index_cast %243 : i32 to index
      %c0_149 = arith.constant 0 : index
      %245 = vector.load %arg13[%244, %c0_149] : memref<529x32xf32, #tpu.memory_space<vmem>>, vector<42x32xf32>
      %c23 = arith.constant 23 : index
      %c0_150 = arith.constant 0 : index
      %c0_151 = arith.constant 0 : index
      %246 = vector.load %arg4[%c23, %c0_150, %c0_151] : memref<25x32x64xf32, #tpu.memory_space<vmem>>, vector<1x32x64xf32>
      %247 = vector.shape_cast %246 : vector<1x32x64xf32> to vector<32x64xf32>
      %cst_152 = arith.constant dense<0.000000e+00> : vector<42x64xf32>
      %248 = tpu.matmul %245, %247, %cst_152 {dimension_numbers = #tpu.dot_dimension_numbers<[1], [0], [0], [1], [0, 0, 1, 1], [], []>} : vector<42x32xf32>, vector<32x64xf32>, vector<42x64xf32> -> vector<42x64xf32>
      %249 = arith.addf %242, %248 : vector<42x64xf32>
      %c96_i32 = arith.constant 96 : i32
      %250 = arith.addi %80, %c96_i32 : i32
      %251 = arith.index_cast %250 : i32 to index
      %c0_153 = arith.constant 0 : index
      %252 = vector.load %arg13[%251, %c0_153] : memref<529x32xf32, #tpu.memory_space<vmem>>, vector<42x32xf32>
      %c24 = arith.constant 24 : index
      %c0_154 = arith.constant 0 : index
      %c0_155 = arith.constant 0 : index
      %253 = vector.load %arg4[%c24, %c0_154, %c0_155] : memref<25x32x64xf32, #tpu.memory_space<vmem>>, vector<1x32x64xf32>
      %254 = vector.shape_cast %253 : vector<1x32x64xf32> to vector<32x64xf32>
      %cst_156 = arith.constant dense<0.000000e+00> : vector<42x64xf32>
      %255 = tpu.matmul %252, %254, %cst_156 {dimension_numbers = #tpu.dot_dimension_numbers<[1], [0], [0], [1], [0, 0, 1, 1], [], []>} : vector<42x32xf32>, vector<32x64xf32>, vector<42x64xf32> -> vector<42x64xf32>
      %256 = arith.addf %249, %255 : vector<42x64xf32>
      %257 = vector.broadcast %30 : vector<1x64xf32> to vector<42x64xf32>
      %258 = arith.addf %256, %257 : vector<42x64xf32>
      %cst_157 = arith.constant 0.000000e+00 : f32
      %259 = vector.broadcast %cst_157 : f32 to vector<42x64xf32>
      %260 = arith.maximumf %258, %259 : vector<42x64xf32>
      %261 = vector.extract_strided_slice %260 {offsets = [0, 0], sizes = [18, 64], strides = [1, 1]} : vector<42x64xf32> to vector<18x64xf32>
      %262 = vector.extract_strided_slice %260 {offsets = [23, 0], sizes = [18, 64], strides = [1, 1]} : vector<42x64xf32> to vector<18x64xf32>
      %263 = arith.maximumf %261, %262 : vector<18x64xf32>
      %cst_158 = arith.constant dense<0.000000e+00> : vector<9x64xf32>
      %264 = tpu.matmul %22, %263, %cst_158 {dimension_numbers = #tpu.dot_dimension_numbers<[1], [0], [0], [1], [0, 0, 1, 1], [], []>} : vector<9x18xf32>, vector<18x64xf32>, vector<9x64xf32> -> vector<9x64xf32>
      %cst_159 = arith.constant dense<0.000000e+00> : vector<9x64xf32>
      %265 = tpu.matmul %29, %263, %cst_159 {dimension_numbers = #tpu.dot_dimension_numbers<[1], [0], [0], [1], [0, 0, 1, 1], [], []>} : vector<9x18xf32>, vector<18x64xf32>, vector<9x64xf32> -> vector<9x64xf32>
      %266 = arith.maximumf %264, %265 : vector<9x64xf32>
      %c9_i32_160 = arith.constant 9 : i32
      %267 = arith.muli %arg16, %c9_i32_160 : i32
      %268 = arith.index_cast %267 : i32 to index
      %c0_161 = arith.constant 0 : index
      %269 = vector.load %arg14[%268, %c0_161] : memref<81x64xf32, #tpu.memory_space<vmem>>, vector<9x64xf32>
      tpu.vector_store %arg14[%268, %c0_161], %266 {strides = array<i32>} : memref<81x64xf32, #tpu.memory_space<vmem>>, vector<9x64xf32>,
    }
    %c9_i32_11 = arith.constant 9 : i32
    %32 = tpu.iota {dimensions = array<i32: 0>} : vector<2x4xi32>
    %33 = tpu.iota {dimensions = array<i32: 1>} : vector<2x4xi32>
    %c2_i32_12 = arith.constant 2 : i32
    %34 = vector.broadcast %c2_i32_12 : i32 to vector<2x4xi32>
    %35 = arith.muli %34, %32 : vector<2x4xi32>
    %36 = arith.cmpi eq, %33, %35 : vector<2x4xi32>
    %37 = arith.extui %36 : vector<2x4xi1> to vector<2x4xi32>
    %38 = arith.sitofp %37 : vector<2x4xi32> to vector<2x4xf32>
    %c2_i32_13 = arith.constant 2 : i32
    %39 = vector.broadcast %c2_i32_13 : i32 to vector<2x4xi32>
    %40 = arith.muli %39, %32 : vector<2x4xi32>
    %c1_i32_14 = arith.constant 1 : i32
    %41 = vector.broadcast %c1_i32_14 : i32 to vector<2x4xi32>
    %42 = arith.addi %40, %41 : vector<2x4xi32>
    %43 = arith.cmpi eq, %33, %42 : vector<2x4xi32>
    %44 = arith.extui %43 : vector<2x4xi1> to vector<2x4xi32>
    %45 = arith.sitofp %44 : vector<2x4xi32> to vector<2x4xf32>
    %c0_15 = arith.constant 0 : index
    %c0_16 = arith.constant 0 : index
    %46 = vector.load %arg7[%c0_15, %c0_16] : memref<1x128xf32, #tpu.memory_space<vmem>>, vector<1x128xf32>
    %c0_i32_17 = arith.constant 0 : i32
    %c2_i32_18 = arith.constant 2 : i32
    %47 = arith.addi %c0_i32_17, %c2_i32_18 : i32
    %c1_i32_19 = arith.constant 1 : i32
    scf.for %arg16 = %c0_i32_17 to %47 step %c1_i32_19  : i32 {
      %c2_i32_46 = arith.constant 2 : i32
      %79 = arith.muli %c2_i32_46, %arg16 : i32
      %c9_i32_47 = arith.constant 9 : i32
      %80 = arith.muli %79, %c9_i32_47 : i32
      %cst_48 = arith.constant 0.000000e+00 : f32
      %81 = vector.broadcast %cst_48 : f32 to vector<14x128xf32>
      %c0_i32_49 = arith.constant 0 : i32
      %82 = arith.addi %80, %c0_i32_49 : i32
      %83 = arith.index_cast %82 : i32 to index
      %c0_50 = arith.constant 0 : index
      %84 = vector.load %arg14[%83, %c0_50] : memref<81x64xf32, #tpu.memory_space<vmem>>, vector<14x64xf32>
      %c0_51 = arith.constant 0 : index
      %c0_52 = arith.constant 0 : index
      %c0_53 = arith.constant 0 : index
      %85 = vector.load %arg6[%c0_51, %c0_52, %c0_53] : memref<25x64x128xf32, #tpu.memory_space<vmem>>, vector<1x64x128xf32>
      %86 = vector.shape_cast %85 : vector<1x64x128xf32> to vector<64x128xf32>
      %cst_54 = arith.constant dense<0.000000e+00> : vector<14x128xf32>
      %87 = tpu.matmul %84, %86, %cst_54 {dimension_numbers = #tpu.dot_dimension_numbers<[1], [0], [0], [1], [0, 0, 1, 1], [], []>} : vector<14x64xf32>, vector<64x128xf32>, vector<14x128xf32> -> vector<14x128xf32>
      %88 = arith.addf %81, %87 : vector<14x128xf32>
      %c1_i32_55 = arith.constant 1 : i32
      %89 = arith.addi %80, %c1_i32_55 : i32
      %90 = arith.index_cast %89 : i32 to index
      %c0_56 = arith.constant 0 : index
      %91 = vector.load %arg14[%90, %c0_56] : memref<81x64xf32, #tpu.memory_space<vmem>>, vector<14x64xf32>
      %c1_57 = arith.constant 1 : index
      %c0_58 = arith.constant 0 : index
      %c0_59 = arith.constant 0 : index
      %92 = vector.load %arg6[%c1_57, %c0_58, %c0_59] : memref<25x64x128xf32, #tpu.memory_space<vmem>>, vector<1x64x128xf32>
      %93 = vector.shape_cast %92 : vector<1x64x128xf32> to vector<64x128xf32>
      %cst_60 = arith.constant dense<0.000000e+00> : vector<14x128xf32>
      %94 = tpu.matmul %91, %93, %cst_60 {dimension_numbers = #tpu.dot_dimension_numbers<[1], [0], [0], [1], [0, 0, 1, 1], [], []>} : vector<14x64xf32>, vector<64x128xf32>, vector<14x128xf32> -> vector<14x128xf32>
      %95 = arith.addf %88, %94 : vector<14x128xf32>
      %c2_i32_61 = arith.constant 2 : i32
      %96 = arith.addi %80, %c2_i32_61 : i32
      %97 = arith.index_cast %96 : i32 to index
      %c0_62 = arith.constant 0 : index
      %98 = vector.load %arg14[%97, %c0_62] : memref<81x64xf32, #tpu.memory_space<vmem>>, vector<14x64xf32>
      %c2_63 = arith.constant 2 : index
      %c0_64 = arith.constant 0 : index
      %c0_65 = arith.constant 0 : index
      %99 = vector.load %arg6[%c2_63, %c0_64, %c0_65] : memref<25x64x128xf32, #tpu.memory_space<vmem>>, vector<1x64x128xf32>
      %100 = vector.shape_cast %99 : vector<1x64x128xf32> to vector<64x128xf32>
      %cst_66 = arith.constant dense<0.000000e+00> : vector<14x128xf32>
      %101 = tpu.matmul %98, %100, %cst_66 {dimension_numbers = #tpu.dot_dimension_numbers<[1], [0], [0], [1], [0, 0, 1, 1], [], []>} : vector<14x64xf32>, vector<64x128xf32>, vector<14x128xf32> -> vector<14x128xf32>
      %102 = arith.addf %95, %101 : vector<14x128xf32>
      %c3_i32 = arith.constant 3 : i32
      %103 = arith.addi %80, %c3_i32 : i32
      %104 = arith.index_cast %103 : i32 to index
      %c0_67 = arith.constant 0 : index
      %105 = vector.load %arg14[%104, %c0_67] : memref<81x64xf32, #tpu.memory_space<vmem>>, vector<14x64xf32>
      %c3_68 = arith.constant 3 : index
      %c0_69 = arith.constant 0 : index
      %c0_70 = arith.constant 0 : index
      %106 = vector.load %arg6[%c3_68, %c0_69, %c0_70] : memref<25x64x128xf32, #tpu.memory_space<vmem>>, vector<1x64x128xf32>
      %107 = vector.shape_cast %106 : vector<1x64x128xf32> to vector<64x128xf32>
      %cst_71 = arith.constant dense<0.000000e+00> : vector<14x128xf32>
      %108 = tpu.matmul %105, %107, %cst_71 {dimension_numbers = #tpu.dot_dimension_numbers<[1], [0], [0], [1], [0, 0, 1, 1], [], []>} : vector<14x64xf32>, vector<64x128xf32>, vector<14x128xf32> -> vector<14x128xf32>
      %109 = arith.addf %102, %108 : vector<14x128xf32>
      %c4_i32 = arith.constant 4 : i32
      %110 = arith.addi %80, %c4_i32 : i32
      %111 = arith.index_cast %110 : i32 to index
      %c0_72 = arith.constant 0 : index
      %112 = vector.load %arg14[%111, %c0_72] : memref<81x64xf32, #tpu.memory_space<vmem>>, vector<14x64xf32>
      %c4 = arith.constant 4 : index
      %c0_73 = arith.constant 0 : index
      %c0_74 = arith.constant 0 : index
      %113 = vector.load %arg6[%c4, %c0_73, %c0_74] : memref<25x64x128xf32, #tpu.memory_space<vmem>>, vector<1x64x128xf32>
      %114 = vector.shape_cast %113 : vector<1x64x128xf32> to vector<64x128xf32>
      %cst_75 = arith.constant dense<0.000000e+00> : vector<14x128xf32>
      %115 = tpu.matmul %112, %114, %cst_75 {dimension_numbers = #tpu.dot_dimension_numbers<[1], [0], [0], [1], [0, 0, 1, 1], [], []>} : vector<14x64xf32>, vector<64x128xf32>, vector<14x128xf32> -> vector<14x128xf32>
      %116 = arith.addf %109, %115 : vector<14x128xf32>
      %c9_i32_76 = arith.constant 9 : i32
      %117 = arith.addi %80, %c9_i32_76 : i32
      %118 = arith.index_cast %117 : i32 to index
      %c0_77 = arith.constant 0 : index
      %119 = vector.load %arg14[%118, %c0_77] : memref<81x64xf32, #tpu.memory_space<vmem>>, vector<14x64xf32>
      %c5 = arith.constant 5 : index
      %c0_78 = arith.constant 0 : index
      %c0_79 = arith.constant 0 : index
      %120 = vector.load %arg6[%c5, %c0_78, %c0_79] : memref<25x64x128xf32, #tpu.memory_space<vmem>>, vector<1x64x128xf32>
      %121 = vector.shape_cast %120 : vector<1x64x128xf32> to vector<64x128xf32>
      %cst_80 = arith.constant dense<0.000000e+00> : vector<14x128xf32>
      %122 = tpu.matmul %119, %121, %cst_80 {dimension_numbers = #tpu.dot_dimension_numbers<[1], [0], [0], [1], [0, 0, 1, 1], [], []>} : vector<14x64xf32>, vector<64x128xf32>, vector<14x128xf32> -> vector<14x128xf32>
      %123 = arith.addf %116, %122 : vector<14x128xf32>
      %c10_i32 = arith.constant 10 : i32
      %124 = arith.addi %80, %c10_i32 : i32
      %125 = arith.index_cast %124 : i32 to index
      %c0_81 = arith.constant 0 : index
      %126 = vector.load %arg14[%125, %c0_81] : memref<81x64xf32, #tpu.memory_space<vmem>>, vector<14x64xf32>
      %c6 = arith.constant 6 : index
      %c0_82 = arith.constant 0 : index
      %c0_83 = arith.constant 0 : index
      %127 = vector.load %arg6[%c6, %c0_82, %c0_83] : memref<25x64x128xf32, #tpu.memory_space<vmem>>, vector<1x64x128xf32>
      %128 = vector.shape_cast %127 : vector<1x64x128xf32> to vector<64x128xf32>
      %cst_84 = arith.constant dense<0.000000e+00> : vector<14x128xf32>
      %129 = tpu.matmul %126, %128, %cst_84 {dimension_numbers = #tpu.dot_dimension_numbers<[1], [0], [0], [1], [0, 0, 1, 1], [], []>} : vector<14x64xf32>, vector<64x128xf32>, vector<14x128xf32> -> vector<14x128xf32>
      %130 = arith.addf %123, %129 : vector<14x128xf32>
      %c11_i32 = arith.constant 11 : i32
      %131 = arith.addi %80, %c11_i32 : i32
      %132 = arith.index_cast %131 : i32 to index
      %c0_85 = arith.constant 0 : index
      %133 = vector.load %arg14[%132, %c0_85] : memref<81x64xf32, #tpu.memory_space<vmem>>, vector<14x64xf32>
      %c7 = arith.constant 7 : index
      %c0_86 = arith.constant 0 : index
      %c0_87 = arith.constant 0 : index
      %134 = vector.load %arg6[%c7, %c0_86, %c0_87] : memref<25x64x128xf32, #tpu.memory_space<vmem>>, vector<1x64x128xf32>
      %135 = vector.shape_cast %134 : vector<1x64x128xf32> to vector<64x128xf32>
      %cst_88 = arith.constant dense<0.000000e+00> : vector<14x128xf32>
      %136 = tpu.matmul %133, %135, %cst_88 {dimension_numbers = #tpu.dot_dimension_numbers<[1], [0], [0], [1], [0, 0, 1, 1], [], []>} : vector<14x64xf32>, vector<64x128xf32>, vector<14x128xf32> -> vector<14x128xf32>
      %137 = arith.addf %130, %136 : vector<14x128xf32>
      %c12_i32 = arith.constant 12 : i32
      %138 = arith.addi %80, %c12_i32 : i32
      %139 = arith.index_cast %138 : i32 to index
      %c0_89 = arith.constant 0 : index
      %140 = vector.load %arg14[%139, %c0_89] : memref<81x64xf32, #tpu.memory_space<vmem>>, vector<14x64xf32>
      %c8 = arith.constant 8 : index
      %c0_90 = arith.constant 0 : index
      %c0_91 = arith.constant 0 : index
      %141 = vector.load %arg6[%c8, %c0_90, %c0_91] : memref<25x64x128xf32, #tpu.memory_space<vmem>>, vector<1x64x128xf32>
      %142 = vector.shape_cast %141 : vector<1x64x128xf32> to vector<64x128xf32>
      %cst_92 = arith.constant dense<0.000000e+00> : vector<14x128xf32>
      %143 = tpu.matmul %140, %142, %cst_92 {dimension_numbers = #tpu.dot_dimension_numbers<[1], [0], [0], [1], [0, 0, 1, 1], [], []>} : vector<14x64xf32>, vector<64x128xf32>, vector<14x128xf32> -> vector<14x128xf32>
      %144 = arith.addf %137, %143 : vector<14x128xf32>
      %c13_i32 = arith.constant 13 : i32
      %145 = arith.addi %80, %c13_i32 : i32
      %146 = arith.index_cast %145 : i32 to index
      %c0_93 = arith.constant 0 : index
      %147 = vector.load %arg14[%146, %c0_93] : memref<81x64xf32, #tpu.memory_space<vmem>>, vector<14x64xf32>
      %c9 = arith.constant 9 : index
      %c0_94 = arith.constant 0 : index
      %c0_95 = arith.constant 0 : index
      %148 = vector.load %arg6[%c9, %c0_94, %c0_95] : memref<25x64x128xf32, #tpu.memory_space<vmem>>, vector<1x64x128xf32>
      %149 = vector.shape_cast %148 : vector<1x64x128xf32> to vector<64x128xf32>
      %cst_96 = arith.constant dense<0.000000e+00> : vector<14x128xf32>
      %150 = tpu.matmul %147, %149, %cst_96 {dimension_numbers = #tpu.dot_dimension_numbers<[1], [0], [0], [1], [0, 0, 1, 1], [], []>} : vector<14x64xf32>, vector<64x128xf32>, vector<14x128xf32> -> vector<14x128xf32>
      %151 = arith.addf %144, %150 : vector<14x128xf32>
      %c18_i32 = arith.constant 18 : i32
      %152 = arith.addi %80, %c18_i32 : i32
      %153 = arith.index_cast %152 : i32 to index
      %c0_97 = arith.constant 0 : index
      %154 = vector.load %arg14[%153, %c0_97] : memref<81x64xf32, #tpu.memory_space<vmem>>, vector<14x64xf32>
      %c10 = arith.constant 10 : index
      %c0_98 = arith.constant 0 : index
      %c0_99 = arith.constant 0 : index
      %155 = vector.load %arg6[%c10, %c0_98, %c0_99] : memref<25x64x128xf32, #tpu.memory_space<vmem>>, vector<1x64x128xf32>
      %156 = vector.shape_cast %155 : vector<1x64x128xf32> to vector<64x128xf32>
      %cst_100 = arith.constant dense<0.000000e+00> : vector<14x128xf32>
      %157 = tpu.matmul %154, %156, %cst_100 {dimension_numbers = #tpu.dot_dimension_numbers<[1], [0], [0], [1], [0, 0, 1, 1], [], []>} : vector<14x64xf32>, vector<64x128xf32>, vector<14x128xf32> -> vector<14x128xf32>
      %158 = arith.addf %151, %157 : vector<14x128xf32>
      %c19_i32 = arith.constant 19 : i32
      %159 = arith.addi %80, %c19_i32 : i32
      %160 = arith.index_cast %159 : i32 to index
      %c0_101 = arith.constant 0 : index
      %161 = vector.load %arg14[%160, %c0_101] : memref<81x64xf32, #tpu.memory_space<vmem>>, vector<14x64xf32>
      %c11 = arith.constant 11 : index
      %c0_102 = arith.constant 0 : index
      %c0_103 = arith.constant 0 : index
      %162 = vector.load %arg6[%c11, %c0_102, %c0_103] : memref<25x64x128xf32, #tpu.memory_space<vmem>>, vector<1x64x128xf32>
      %163 = vector.shape_cast %162 : vector<1x64x128xf32> to vector<64x128xf32>
      %cst_104 = arith.constant dense<0.000000e+00> : vector<14x128xf32>
      %164 = tpu.matmul %161, %163, %cst_104 {dimension_numbers = #tpu.dot_dimension_numbers<[1], [0], [0], [1], [0, 0, 1, 1], [], []>} : vector<14x64xf32>, vector<64x128xf32>, vector<14x128xf32> -> vector<14x128xf32>
      %165 = arith.addf %158, %164 : vector<14x128xf32>
      %c20_i32 = arith.constant 20 : i32
      %166 = arith.addi %80, %c20_i32 : i32
      %167 = arith.index_cast %166 : i32 to index
      %c0_105 = arith.constant 0 : index
      %168 = vector.load %arg14[%167, %c0_105] : memref<81x64xf32, #tpu.memory_space<vmem>>, vector<14x64xf32>
      %c12 = arith.constant 12 : index
      %c0_106 = arith.constant 0 : index
      %c0_107 = arith.constant 0 : index
      %169 = vector.load %arg6[%c12, %c0_106, %c0_107] : memref<25x64x128xf32, #tpu.memory_space<vmem>>, vector<1x64x128xf32>
      %170 = vector.shape_cast %169 : vector<1x64x128xf32> to vector<64x128xf32>
      %cst_108 = arith.constant dense<0.000000e+00> : vector<14x128xf32>
      %171 = tpu.matmul %168, %170, %cst_108 {dimension_numbers = #tpu.dot_dimension_numbers<[1], [0], [0], [1], [0, 0, 1, 1], [], []>} : vector<14x64xf32>, vector<64x128xf32>, vector<14x128xf32> -> vector<14x128xf32>
      %172 = arith.addf %165, %171 : vector<14x128xf32>
      %c21_i32 = arith.constant 21 : i32
      %173 = arith.addi %80, %c21_i32 : i32
      %174 = arith.index_cast %173 : i32 to index
      %c0_109 = arith.constant 0 : index
      %175 = vector.load %arg14[%174, %c0_109] : memref<81x64xf32, #tpu.memory_space<vmem>>, vector<14x64xf32>
      %c13 = arith.constant 13 : index
      %c0_110 = arith.constant 0 : index
      %c0_111 = arith.constant 0 : index
      %176 = vector.load %arg6[%c13, %c0_110, %c0_111] : memref<25x64x128xf32, #tpu.memory_space<vmem>>, vector<1x64x128xf32>
      %177 = vector.shape_cast %176 : vector<1x64x128xf32> to vector<64x128xf32>
      %cst_112 = arith.constant dense<0.000000e+00> : vector<14x128xf32>
      %178 = tpu.matmul %175, %177, %cst_112 {dimension_numbers = #tpu.dot_dimension_numbers<[1], [0], [0], [1], [0, 0, 1, 1], [], []>} : vector<14x64xf32>, vector<64x128xf32>, vector<14x128xf32> -> vector<14x128xf32>
      %179 = arith.addf %172, %178 : vector<14x128xf32>
      %c22_i32 = arith.constant 22 : i32
      %180 = arith.addi %80, %c22_i32 : i32
      %181 = arith.index_cast %180 : i32 to index
      %c0_113 = arith.constant 0 : index
      %182 = vector.load %arg14[%181, %c0_113] : memref<81x64xf32, #tpu.memory_space<vmem>>, vector<14x64xf32>
      %c14 = arith.constant 14 : index
      %c0_114 = arith.constant 0 : index
      %c0_115 = arith.constant 0 : index
      %183 = vector.load %arg6[%c14, %c0_114, %c0_115] : memref<25x64x128xf32, #tpu.memory_space<vmem>>, vector<1x64x128xf32>
      %184 = vector.shape_cast %183 : vector<1x64x128xf32> to vector<64x128xf32>
      %cst_116 = arith.constant dense<0.000000e+00> : vector<14x128xf32>
      %185 = tpu.matmul %182, %184, %cst_116 {dimension_numbers = #tpu.dot_dimension_numbers<[1], [0], [0], [1], [0, 0, 1, 1], [], []>} : vector<14x64xf32>, vector<64x128xf32>, vector<14x128xf32> -> vector<14x128xf32>
      %186 = arith.addf %179, %185 : vector<14x128xf32>
      %c27_i32 = arith.constant 27 : i32
      %187 = arith.addi %80, %c27_i32 : i32
      %188 = arith.index_cast %187 : i32 to index
      %c0_117 = arith.constant 0 : index
      %189 = vector.load %arg14[%188, %c0_117] : memref<81x64xf32, #tpu.memory_space<vmem>>, vector<14x64xf32>
      %c15 = arith.constant 15 : index
      %c0_118 = arith.constant 0 : index
      %c0_119 = arith.constant 0 : index
      %190 = vector.load %arg6[%c15, %c0_118, %c0_119] : memref<25x64x128xf32, #tpu.memory_space<vmem>>, vector<1x64x128xf32>
      %191 = vector.shape_cast %190 : vector<1x64x128xf32> to vector<64x128xf32>
      %cst_120 = arith.constant dense<0.000000e+00> : vector<14x128xf32>
      %192 = tpu.matmul %189, %191, %cst_120 {dimension_numbers = #tpu.dot_dimension_numbers<[1], [0], [0], [1], [0, 0, 1, 1], [], []>} : vector<14x64xf32>, vector<64x128xf32>, vector<14x128xf32> -> vector<14x128xf32>
      %193 = arith.addf %186, %192 : vector<14x128xf32>
      %c28_i32 = arith.constant 28 : i32
      %194 = arith.addi %80, %c28_i32 : i32
      %195 = arith.index_cast %194 : i32 to index
      %c0_121 = arith.constant 0 : index
      %196 = vector.load %arg14[%195, %c0_121] : memref<81x64xf32, #tpu.memory_space<vmem>>, vector<14x64xf32>
      %c16 = arith.constant 16 : index
      %c0_122 = arith.constant 0 : index
      %c0_123 = arith.constant 0 : index
      %197 = vector.load %arg6[%c16, %c0_122, %c0_123] : memref<25x64x128xf32, #tpu.memory_space<vmem>>, vector<1x64x128xf32>
      %198 = vector.shape_cast %197 : vector<1x64x128xf32> to vector<64x128xf32>
      %cst_124 = arith.constant dense<0.000000e+00> : vector<14x128xf32>
      %199 = tpu.matmul %196, %198, %cst_124 {dimension_numbers = #tpu.dot_dimension_numbers<[1], [0], [0], [1], [0, 0, 1, 1], [], []>} : vector<14x64xf32>, vector<64x128xf32>, vector<14x128xf32> -> vector<14x128xf32>
      %200 = arith.addf %193, %199 : vector<14x128xf32>
      %c29_i32 = arith.constant 29 : i32
      %201 = arith.addi %80, %c29_i32 : i32
      %202 = arith.index_cast %201 : i32 to index
      %c0_125 = arith.constant 0 : index
      %203 = vector.load %arg14[%202, %c0_125] : memref<81x64xf32, #tpu.memory_space<vmem>>, vector<14x64xf32>
      %c17 = arith.constant 17 : index
      %c0_126 = arith.constant 0 : index
      %c0_127 = arith.constant 0 : index
      %204 = vector.load %arg6[%c17, %c0_126, %c0_127] : memref<25x64x128xf32, #tpu.memory_space<vmem>>, vector<1x64x128xf32>
      %205 = vector.shape_cast %204 : vector<1x64x128xf32> to vector<64x128xf32>
      %cst_128 = arith.constant dense<0.000000e+00> : vector<14x128xf32>
      %206 = tpu.matmul %203, %205, %cst_128 {dimension_numbers = #tpu.dot_dimension_numbers<[1], [0], [0], [1], [0, 0, 1, 1], [], []>} : vector<14x64xf32>, vector<64x128xf32>, vector<14x128xf32> -> vector<14x128xf32>
      %207 = arith.addf %200, %206 : vector<14x128xf32>
      %c30_i32 = arith.constant 30 : i32
      %208 = arith.addi %80, %c30_i32 : i32
      %209 = arith.index_cast %208 : i32 to index
      %c0_129 = arith.constant 0 : index
      %210 = vector.load %arg14[%209, %c0_129] : memref<81x64xf32, #tpu.memory_space<vmem>>, vector<14x64xf32>
      %c18 = arith.constant 18 : index
      %c0_130 = arith.constant 0 : index
      %c0_131 = arith.constant 0 : index
      %211 = vector.load %arg6[%c18, %c0_130, %c0_131] : memref<25x64x128xf32, #tpu.memory_space<vmem>>, vector<1x64x128xf32>
      %212 = vector.shape_cast %211 : vector<1x64x128xf32> to vector<64x128xf32>
      %cst_132 = arith.constant dense<0.000000e+00> : vector<14x128xf32>
      %213 = tpu.matmul %210, %212, %cst_132 {dimension_numbers = #tpu.dot_dimension_numbers<[1], [0], [0], [1], [0, 0, 1, 1], [], []>} : vector<14x64xf32>, vector<64x128xf32>, vector<14x128xf32> -> vector<14x128xf32>
      %214 = arith.addf %207, %213 : vector<14x128xf32>
      %c31_i32 = arith.constant 31 : i32
      %215 = arith.addi %80, %c31_i32 : i32
      %216 = arith.index_cast %215 : i32 to index
      %c0_133 = arith.constant 0 : index
      %217 = vector.load %arg14[%216, %c0_133] : memref<81x64xf32, #tpu.memory_space<vmem>>, vector<14x64xf32>
      %c19 = arith.constant 19 : index
      %c0_134 = arith.constant 0 : index
      %c0_135 = arith.constant 0 : index
      %218 = vector.load %arg6[%c19, %c0_134, %c0_135] : memref<25x64x128xf32, #tpu.memory_space<vmem>>, vector<1x64x128xf32>
      %219 = vector.shape_cast %218 : vector<1x64x128xf32> to vector<64x128xf32>
      %cst_136 = arith.constant dense<0.000000e+00> : vector<14x128xf32>
      %220 = tpu.matmul %217, %219, %cst_136 {dimension_numbers = #tpu.dot_dimension_numbers<[1], [0], [0], [1], [0, 0, 1, 1], [], []>} : vector<14x64xf32>, vector<64x128xf32>, vector<14x128xf32> -> vector<14x128xf32>
      %221 = arith.addf %214, %220 : vector<14x128xf32>
      %c36_i32 = arith.constant 36 : i32
      %222 = arith.addi %80, %c36_i32 : i32
      %223 = arith.index_cast %222 : i32 to index
      %c0_137 = arith.constant 0 : index
      %224 = vector.load %arg14[%223, %c0_137] : memref<81x64xf32, #tpu.memory_space<vmem>>, vector<14x64xf32>
      %c20 = arith.constant 20 : index
      %c0_138 = arith.constant 0 : index
      %c0_139 = arith.constant 0 : index
      %225 = vector.load %arg6[%c20, %c0_138, %c0_139] : memref<25x64x128xf32, #tpu.memory_space<vmem>>, vector<1x64x128xf32>
      %226 = vector.shape_cast %225 : vector<1x64x128xf32> to vector<64x128xf32>
      %cst_140 = arith.constant dense<0.000000e+00> : vector<14x128xf32>
      %227 = tpu.matmul %224, %226, %cst_140 {dimension_numbers = #tpu.dot_dimension_numbers<[1], [0], [0], [1], [0, 0, 1, 1], [], []>} : vector<14x64xf32>, vector<64x128xf32>, vector<14x128xf32> -> vector<14x128xf32>
      %228 = arith.addf %221, %227 : vector<14x128xf32>
      %c37_i32 = arith.constant 37 : i32
      %229 = arith.addi %80, %c37_i32 : i32
      %230 = arith.index_cast %229 : i32 to index
      %c0_141 = arith.constant 0 : index
      %231 = vector.load %arg14[%230, %c0_141] : memref<81x64xf32, #tpu.memory_space<vmem>>, vector<14x64xf32>
      %c21 = arith.constant 21 : index
      %c0_142 = arith.constant 0 : index
      %c0_143 = arith.constant 0 : index
      %232 = vector.load %arg6[%c21, %c0_142, %c0_143] : memref<25x64x128xf32, #tpu.memory_space<vmem>>, vector<1x64x128xf32>
      %233 = vector.shape_cast %232 : vector<1x64x128xf32> to vector<64x128xf32>
      %cst_144 = arith.constant dense<0.000000e+00> : vector<14x128xf32>
      %234 = tpu.matmul %231, %233, %cst_144 {dimension_numbers = #tpu.dot_dimension_numbers<[1], [0], [0], [1], [0, 0, 1, 1], [], []>} : vector<14x64xf32>, vector<64x128xf32>, vector<14x128xf32> -> vector<14x128xf32>
      %235 = arith.addf %228, %234 : vector<14x128xf32>
      %c38_i32 = arith.constant 38 : i32
      %236 = arith.addi %80, %c38_i32 : i32
      %237 = arith.index_cast %236 : i32 to index
      %c0_145 = arith.constant 0 : index
      %238 = vector.load %arg14[%237, %c0_145] : memref<81x64xf32, #tpu.memory_space<vmem>>, vector<14x64xf32>
      %c22 = arith.constant 22 : index
      %c0_146 = arith.constant 0 : index
      %c0_147 = arith.constant 0 : index
      %239 = vector.load %arg6[%c22, %c0_146, %c0_147] : memref<25x64x128xf32, #tpu.memory_space<vmem>>, vector<1x64x128xf32>
      %240 = vector.shape_cast %239 : vector<1x64x128xf32> to vector<64x128xf32>
      %cst_148 = arith.constant dense<0.000000e+00> : vector<14x128xf32>
      %241 = tpu.matmul %238, %240, %cst_148 {dimension_numbers = #tpu.dot_dimension_numbers<[1], [0], [0], [1], [0, 0, 1, 1], [], []>} : vector<14x64xf32>, vector<64x128xf32>, vector<14x128xf32> -> vector<14x128xf32>
      %242 = arith.addf %235, %241 : vector<14x128xf32>
      %c39_i32 = arith.constant 39 : i32
      %243 = arith.addi %80, %c39_i32 : i32
      %244 = arith.index_cast %243 : i32 to index
      %c0_149 = arith.constant 0 : index
      %245 = vector.load %arg14[%244, %c0_149] : memref<81x64xf32, #tpu.memory_space<vmem>>, vector<14x64xf32>
      %c23 = arith.constant 23 : index
      %c0_150 = arith.constant 0 : index
      %c0_151 = arith.constant 0 : index
      %246 = vector.load %arg6[%c23, %c0_150, %c0_151] : memref<25x64x128xf32, #tpu.memory_space<vmem>>, vector<1x64x128xf32>
      %247 = vector.shape_cast %246 : vector<1x64x128xf32> to vector<64x128xf32>
      %cst_152 = arith.constant dense<0.000000e+00> : vector<14x128xf32>
      %248 = tpu.matmul %245, %247, %cst_152 {dimension_numbers = #tpu.dot_dimension_numbers<[1], [0], [0], [1], [0, 0, 1, 1], [], []>} : vector<14x64xf32>, vector<64x128xf32>, vector<14x128xf32> -> vector<14x128xf32>
      %249 = arith.addf %242, %248 : vector<14x128xf32>
      %c40_i32 = arith.constant 40 : i32
      %250 = arith.addi %80, %c40_i32 : i32
      %251 = arith.index_cast %250 : i32 to index
      %c0_153 = arith.constant 0 : index
      %252 = vector.load %arg14[%251, %c0_153] : memref<81x64xf32, #tpu.memory_space<vmem>>, vector<14x64xf32>
      %c24 = arith.constant 24 : index
      %c0_154 = arith.constant 0 : index
      %c0_155 = arith.constant 0 : index
      %253 = vector.load %arg6[%c24, %c0_154, %c0_155] : memref<25x64x128xf32, #tpu.memory_space<vmem>>, vector<1x64x128xf32>
      %254 = vector.shape_cast %253 : vector<1x64x128xf32> to vector<64x128xf32>
      %cst_156 = arith.constant dense<0.000000e+00> : vector<14x128xf32>
      %255 = tpu.matmul %252, %254, %cst_156 {dimension_numbers = #tpu.dot_dimension_numbers<[1], [0], [0], [1], [0, 0, 1, 1], [], []>} : vector<14x64xf32>, vector<64x128xf32>, vector<14x128xf32> -> vector<14x128xf32>
      %256 = arith.addf %249, %255 : vector<14x128xf32>
      %257 = vector.broadcast %46 : vector<1x128xf32> to vector<14x128xf32>
      %258 = arith.addf %256, %257 : vector<14x128xf32>
      %cst_157 = arith.constant 0.000000e+00 : f32
      %259 = vector.broadcast %cst_157 : f32 to vector<14x128xf32>
      %260 = arith.maximumf %258, %259 : vector<14x128xf32>
      %261 = vector.extract_strided_slice %260 {offsets = [0, 0], sizes = [4, 128], strides = [1, 1]} : vector<14x128xf32> to vector<4x128xf32>
      %262 = vector.extract_strided_slice %260 {offsets = [9, 0], sizes = [4, 128], strides = [1, 1]} : vector<14x128xf32> to vector<4x128xf32>
      %263 = arith.maximumf %261, %262 : vector<4x128xf32>
      %cst_158 = arith.constant dense<0.000000e+00> : vector<2x128xf32>
      %264 = tpu.matmul %38, %263, %cst_158 {dimension_numbers = #tpu.dot_dimension_numbers<[1], [0], [0], [1], [0, 0, 1, 1], [], []>} : vector<2x4xf32>, vector<4x128xf32>, vector<2x128xf32> -> vector<2x128xf32>
      %cst_159 = arith.constant dense<0.000000e+00> : vector<2x128xf32>
      %265 = tpu.matmul %45, %263, %cst_159 {dimension_numbers = #tpu.dot_dimension_numbers<[1], [0], [0], [1], [0, 0, 1, 1], [], []>} : vector<2x4xf32>, vector<4x128xf32>, vector<2x128xf32> -> vector<2x128xf32>
      %266 = arith.maximumf %264, %265 : vector<2x128xf32>
      %c2_i32_160 = arith.constant 2 : i32
      %267 = arith.muli %arg16, %c2_i32_160 : i32
      %268 = arith.index_cast %267 : i32 to index
      %c0_161 = arith.constant 0 : index
      %269 = vector.load %arg15[%268, %c0_161] : memref<4x128xf32, #tpu.memory_space<vmem>>, vector<2x128xf32>
      tpu.vector_store %arg15[%268, %c0_161], %266 {strides = array<i32>} : memref<4x128xf32, #tpu.memory_space<vmem>>, vector<2x128xf32>,
    }
    %c2_i32_20 = arith.constant 2 : i32
    %c0_21 = arith.constant 0 : index
    %c0_22 = arith.constant 0 : index
    %48 = vector.load %arg15[%c0_21, %c0_22] : memref<4x128xf32, #tpu.memory_space<vmem>>, vector<4x128xf32>
    %c0_23 = arith.constant 0 : index
    %c0_24 = arith.constant 0 : index
    %49 = vector.load %arg9[%c0_23, %c0_24] : memref<1x512xf32, #tpu.memory_space<vmem>>, vector<1x512xf32>
    %50 = vector.extract_strided_slice %48 {offsets = [0, 0], sizes = [1, 128], strides = [1, 1]} : vector<4x128xf32> to vector<1x128xf32>
    %c0_25 = arith.constant 0 : index
    %c0_26 = arith.constant 0 : index
    %c0_27 = arith.constant 0 : index
    %51 = vector.load %arg8[%c0_25, %c0_26, %c0_27] : memref<4x128x512xf32, #tpu.memory_space<vmem>>, vector<1x128x512xf32>
    %52 = vector.shape_cast %51 : vector<1x128x512xf32> to vector<128x512xf32>
    %cst = arith.constant dense<0.000000e+00> : vector<1x512xf32>
    %53 = tpu.matmul %50, %52, %cst {dimension_numbers = #tpu.dot_dimension_numbers<[1], [0], [0], [1], [0, 0, 1, 1], [], []>} : vector<1x128xf32>, vector<128x512xf32>, vector<1x512xf32> -> vector<1x512xf32>
    %54 = arith.addf %49, %53 : vector<1x512xf32>
    %55 = vector.extract_strided_slice %48 {offsets = [1, 0], sizes = [1, 128], strides = [1, 1]} : vector<4x128xf32> to vector<1x128xf32>
    %c1 = arith.constant 1 : index
    %c0_28 = arith.constant 0 : index
    %c0_29 = arith.constant 0 : index
    %56 = vector.load %arg8[%c1, %c0_28, %c0_29] : memref<4x128x512xf32, #tpu.memory_space<vmem>>, vector<1x128x512xf32>
    %57 = vector.shape_cast %56 : vector<1x128x512xf32> to vector<128x512xf32>
    %cst_30 = arith.constant dense<0.000000e+00> : vector<1x512xf32>
    %58 = tpu.matmul %55, %57, %cst_30 {dimension_numbers = #tpu.dot_dimension_numbers<[1], [0], [0], [1], [0, 0, 1, 1], [], []>} : vector<1x128xf32>, vector<128x512xf32>, vector<1x512xf32> -> vector<1x512xf32>
    %59 = arith.addf %54, %58 : vector<1x512xf32>
    %60 = vector.extract_strided_slice %48 {offsets = [2, 0], sizes = [1, 128], strides = [1, 1]} : vector<4x128xf32> to vector<1x128xf32>
    %c2 = arith.constant 2 : index
    %c0_31 = arith.constant 0 : index
    %c0_32 = arith.constant 0 : index
    %61 = vector.load %arg8[%c2, %c0_31, %c0_32] : memref<4x128x512xf32, #tpu.memory_space<vmem>>, vector<1x128x512xf32>
    %62 = vector.shape_cast %61 : vector<1x128x512xf32> to vector<128x512xf32>
    %cst_33 = arith.constant dense<0.000000e+00> : vector<1x512xf32>
    %63 = tpu.matmul %60, %62, %cst_33 {dimension_numbers = #tpu.dot_dimension_numbers<[1], [0], [0], [1], [0, 0, 1, 1], [], []>} : vector<1x128xf32>, vector<128x512xf32>, vector<1x512xf32> -> vector<1x512xf32>
    %64 = arith.addf %59, %63 : vector<1x512xf32>
    %65 = vector.extract_strided_slice %48 {offsets = [3, 0], sizes = [1, 128], strides = [1, 1]} : vector<4x128xf32> to vector<1x128xf32>
    %c3 = arith.constant 3 : index
    %c0_34 = arith.constant 0 : index
    %c0_35 = arith.constant 0 : index
    %66 = vector.load %arg8[%c3, %c0_34, %c0_35] : memref<4x128x512xf32, #tpu.memory_space<vmem>>, vector<1x128x512xf32>
    %67 = vector.shape_cast %66 : vector<1x128x512xf32> to vector<128x512xf32>
    %cst_36 = arith.constant dense<0.000000e+00> : vector<1x512xf32>
    %68 = tpu.matmul %65, %67, %cst_36 {dimension_numbers = #tpu.dot_dimension_numbers<[1], [0], [0], [1], [0, 0, 1, 1], [], []>} : vector<1x128xf32>, vector<128x512xf32>, vector<1x512xf32> -> vector<1x512xf32>
    %69 = arith.addf %64, %68 : vector<1x512xf32>
    %cst_37 = arith.constant 0.000000e+00 : f32
    %70 = vector.broadcast %cst_37 : f32 to vector<1x512xf32>
    %71 = arith.maximumf %69, %70 : vector<1x512xf32>
    %c0_38 = arith.constant 0 : index
    %c0_39 = arith.constant 0 : index
    %72 = vector.load %arg10[%c0_38, %c0_39] : memref<512x128xf32, #tpu.memory_space<vmem>>, vector<512x128xf32>
    %cst_40 = arith.constant dense<0.000000e+00> : vector<1x128xf32>
    %73 = tpu.matmul %71, %72, %cst_40 {dimension_numbers = #tpu.dot_dimension_numbers<[1], [0], [0], [1], [0, 0, 1, 1], [], []>} : vector<1x512xf32>, vector<512x128xf32>, vector<1x128xf32> -> vector<1x128xf32>
    %c0_41 = arith.constant 0 : index
    %c0_42 = arith.constant 0 : index
    %74 = vector.load %arg11[%c0_41, %c0_42] : memref<1x128xf32, #tpu.memory_space<vmem>>, vector<1x128xf32>
    %75 = arith.addf %73, %74 : vector<1x128xf32>
    %c0_43 = arith.constant 0 : index
    %c0_44 = arith.constant 0 : index
    %c0_45 = arith.constant 0 : index
    %76 = vector.load %arg12[%c0_43, %c0_44, %c0_45] : memref<1x1x128xf32, #tpu.memory_space<vmem>>, vector<1x1x128xf32>
    %77 = vector.shape_cast %76 : vector<1x1x128xf32> to vector<1x128xf32>
    %78 = vector.shape_cast %75 : vector<1x128xf32> to vector<1x1x128xf32>
    tpu.vector_store %arg12[%c0_43, %c0_44, %c0_45], %78 {strides = array<i32>} : memref<1x1x128xf32, #tpu.memory_space<vmem>>, vector<1x1x128xf32>,
    return
  }
  func.func @transform_0(%arg0: i32) -> (i32, i32, i32) {
    %c0_i32 = arith.constant 0 : i32
    %c0_i32_0 = arith.constant 0 : i32
    %c0_i32_1 = arith.constant 0 : i32
    return %arg0, %c0_i32, %c0_i32_0 : i32, i32, i32
  }
  func.func @transform_1(%arg0: i32) -> (i32, i32, i32) {
    %c0_i32 = arith.constant 0 : i32
    %c0_i32_0 = arith.constant 0 : i32
    %c0_i32_1 = arith.constant 0 : i32
    %c0_i32_2 = arith.constant 0 : i32
    return %c0_i32, %c0_i32_0, %c0_i32_1 : i32, i32, i32
  }
  func.func @transform_2(%arg0: i32) -> (i32, i32) {
    %c0_i32 = arith.constant 0 : i32
    %c0_i32_0 = arith.constant 0 : i32
    %c0_i32_1 = arith.constant 0 : i32
    return %c0_i32, %c0_i32_0 : i32, i32
  }
  func.func @transform_3(%arg0: i32) -> (i32, i32, i32) {
    %c0_i32 = arith.constant 0 : i32
    %c0_i32_0 = arith.constant 0 : i32
    %c0_i32_1 = arith.constant 0 : i32
    %c0_i32_2 = arith.constant 0 : i32
    return %c0_i32, %c0_i32_0, %c0_i32_1 : i32, i32, i32
  }
  func.func @transform_4(%arg0: i32) -> (i32, i32) {
    %c0_i32 = arith.constant 0 : i32
    %c0_i32_0 = arith.constant 0 : i32
    %c0_i32_1 = arith.constant 0 : i32
    return %c0_i32, %c0_i32_0 : i32, i32
  }
  func.func @transform_5(%arg0: i32) -> (i32, i32, i32) {
    %c0_i32 = arith.constant 0 : i32
    %c0_i32_0 = arith.constant 0 : i32
    %c0_i32_1 = arith.constant 0 : i32
    %c0_i32_2 = arith.constant 0 : i32
    return %c0_i32, %c0_i32_0, %c0_i32_1 : i32, i32, i32
  }
  func.func @transform_6(%arg0: i32) -> (i32, i32) {
    %c0_i32 = arith.constant 0 : i32
    %c0_i32_0 = arith.constant 0 : i32
    %c0_i32_1 = arith.constant 0 : i32
    return %c0_i32, %c0_i32_0 : i32, i32
  }
  func.func @transform_7(%arg0: i32) -> (i32, i32, i32) {
    %c0_i32 = arith.constant 0 : i32
    %c0_i32_0 = arith.constant 0 : i32
    %c0_i32_1 = arith.constant 0 : i32
    %c0_i32_2 = arith.constant 0 : i32
    return %c0_i32, %c0_i32_0, %c0_i32_1 : i32, i32, i32
  }
  func.func @transform_8(%arg0: i32) -> (i32, i32) {
    %c0_i32 = arith.constant 0 : i32
    %c0_i32_0 = arith.constant 0 : i32
    %c0_i32_1 = arith.constant 0 : i32
    return %c0_i32, %c0_i32_0 : i32, i32
  }
  func.func @transform_9(%arg0: i32) -> (i32, i32) {
    %c0_i32 = arith.constant 0 : i32
    %c0_i32_0 = arith.constant 0 : i32
    %c0_i32_1 = arith.constant 0 : i32
    return %c0_i32, %c0_i32_0 : i32, i32
  }
  func.func @transform_10(%arg0: i32) -> (i32, i32) {
    %c0_i32 = arith.constant 0 : i32
    %c0_i32_0 = arith.constant 0 : i32
    %c0_i32_1 = arith.constant 0 : i32
    return %c0_i32, %c0_i32_0 : i32, i32
  }
  func.func @transform_11(%arg0: i32) -> (i32, i32, i32) {
    %c0_i32 = arith.constant 0 : i32
    %c0_i32_0 = arith.constant 0 : i32
    %c0_i32_1 = arith.constant 0 : i32
    return %arg0, %c0_i32, %c0_i32_0 : i32, i32, i32
  }
}

</mosaic_0001>

<llo_original>
// kernel: net_forward.1
$region0: #{net_forward.1}
  #allocation0 [shape = 'u32[]', space=smem, size = 0x4, offset = 0x4, fixed_abs, tag = 'smem constant byte address 0x4 - core index']
  #allocation1 [shape = 'u32[144,128]{1,0:T(1,128)}', space=vmem, size = 0x12000, scoped, tag = 'internal scratch']
  #allocation2 [shape = 'f32[529,32]{1,0:T(8,128)}', space=vmem, size = 0x43000, scoped, tag = 'scratch operand']
  #allocation3 [shape = 'f32[81,64]{1,0:T(8,128)}', space=vmem, size = 0xb000, scoped, tag = 'scratch operand']
  #allocation4 [shape = 'f32[4,128]{1,0:T(4,128)}', space=vmem, size = 0x800, scoped, tag = 'scratch operand']
  %s0 = inlined_call_operand.vmem [shape: f32[2,2496,5], index: 0, kind: input, shape index: {}]
  %s1 = inlined_call_operand.vmem [shape: f32[5,5,32], index: 1, kind: input, shape index: {}]
  %s2 = inlined_call_operand.vmem [shape: f32[1,32], index: 2, kind: input, shape index: {}]
  %s3 = inlined_call_operand.vmem [shape: f32[25,32,64], index: 3, kind: input, shape index: {}]
  %s4 = inlined_call_operand.vmem [shape: f32[1,64], index: 4, kind: input, shape index: {}]
  %s5 = inlined_call_operand.vmem [shape: f32[25,64,128], index: 5, kind: input, shape index: {}]
  %s6 = inlined_call_operand.vmem [shape: f32[1,128], index: 6, kind: input, shape index: {}]
  %s7 = inlined_call_operand.vmem [shape: f32[4,128,512], index: 7, kind: input, shape index: {}]
  %s8 = inlined_call_operand.vmem [shape: f32[1,512], index: 8, kind: input, shape index: {}]
  %s9 = inlined_call_operand.vmem [shape: f32[512,128], index: 9, kind: input, shape index: {}]
  %s10 = inlined_call_operand.vmem [shape: f32[1,128], index: 10, kind: input, shape index: {}]
  %s11 = inlined_call_operand.hbm [shape: f32[2,1,128], index: 11, kind: output, shape index: {}]
  %s12 = sld [smem:[#allocation0]]
  $region98: #{net_forward.1} parent=0
    _
  %s14 = ssub.s32 1, %s12
  %s15 = scalar_select 0, %s14, %s12
  $region1: #{net_forward.1} parent=0
    #allocation5 [shape = 'u8[1024]{0}', space=vmem, size = 0x400, scoped, tag = 'output window, operand 0']
    #allocation6 [shape = 's32[2]{0}', space=sflag, size = 0x8, scoped, tag = 'scoped memory for net_forward.1']
    %16 = vsyncpa [#allocation6], 0
    %s17 = scalar_lea.sflag [#allocation6], 1
    %18 = vsyncpa %s17, 0
    loop: start=0, step=1, limit=4
    $region2: #{net_forward.1} parent=1 // loop_pre_header
      _
    $region3: #{net_forward.1} parent=1 // loop_header
      %s20 = sphi 0, %s24
      %p21 = scmp.ge.s32.totalorder %s20, 4
      %s30 = sphi 0, %s32
      %s33 = sphi 0, %s30
      %s34 = sphi 0, %s33
      %s50 = sphi 0, %s34
      %s54 = sphi 0, %s54
      %s56 = sphi 0, %s54
      %s57 = sphi 0, %s56
      %s71 = sphi 0, %s57
      %s75 = sphi 0, %s75
      %s77 = sphi 0, %s75
      %s78 = sphi 0, %s77
      %s92 = sphi 0, %s78
      %s96 = sphi 0, %s96
      %s98 = sphi 0, %s96
      %s99 = sphi 0, %s98
      %s113 = sphi 0, %s99
      %s117 = sphi 0, %s117
      %s119 = sphi 0, %s117
      %s120 = sphi 0, %s119
      %s134 = sphi 0, %s120
      %s138 = sphi 0, %s138
      %s140 = sphi 0, %s138
      %s141 = sphi 0, %s140
      %s155 = sphi 0, %s141
      %s159 = sphi 0, %s159
      %s161 = sphi 0, %s159
      %s162 = sphi 0, %s161
      %s176 = sphi 0, %s162
      %s180 = sphi 0, %s180
      %s182 = sphi 0, %s180
      %s183 = sphi 0, %s182
      %s197 = sphi 0, %s183
      %s201 = sphi 0, %s201
      %s203 = sphi 0, %s201
      %s204 = sphi 0, %s203
      %s218 = sphi 0, %s204
      %s222 = sphi 0, %s222
      %s224 = sphi 0, %s222
      %s225 = sphi 0, %s224
      %s239 = sphi 0, %s225
      %s243 = sphi 0, %s243
      %s245 = sphi 0, %s243
      %s246 = sphi 0, %s245
      %s260 = sphi 0, %s246
      %s266 = sphi 0, %s268
      %s269 = sphi 0, %s266
      %s270 = sphi 0, %s269
      %s286 = sphi 0, %s270
    $region4: #{net_forward.1} parent=1 // loop_header_branch
      %23 = sbr.rel (%p21) target = $region8
    $region5: #{net_forward.1} parent=1 // loop_body
      %s25 = ssub.s32 %s20, 1
      %s26 = ssub.s32 %s20, 2
      %s27 = sadd.s32 %s20, 1
      %s28 = ssub.s32 %s20, %s27
      %p29 = scmp.eq.s32.totalorder %s28, 0
      %s31 = sadd.s32 %s30, 1
      %s32 = scalar_select %p29, %s30, %s31
      %p35 = pneg %p29
      %p36 = scmp.eq.s32.totalorder %s20, 1
      %p37 = por %p35, %p36
      %p38 = scmp.ne.s32.totalorder %s30, %s33
      %p39 = scmp.eq.s32.totalorder %s20, 0
      %p40 = por %p38, %p39
      %p41 = scmp.ne.s32.totalorder %s30, %s33
      %p42 = scmp.eq.s32.totalorder %s25, 1
      %p43 = por %p41, %p42
      %p44 = scmp.ne.s32.totalorder %s33, %s34
      %p45 = scmp.eq.s32.totalorder %s25, 0
      %p46 = por %p44, %p45
      %p47 = scmp.ne.s32.totalorder %s33, %s34
      %p48 = scmp.eq.s32.totalorder %s26, 1
      %p49 = por %p47, %p48
      %p51 = scmp.ne.s32.totalorder %s34, %s50
      %p52 = scmp.eq.s32.totalorder %s26, 0
      %p53 = por %p51, %p52
      %s55 = sadd.s32 %s54, 1
      %p58 = scmp.eq.s32.totalorder %s20, 1
      %p59 = scmp.ne.s32.totalorder %s54, %s56
      %p60 = scmp.eq.s32.totalorder %s20, 0
      %p61 = por %p59, %p60
      %p62 = scmp.ne.s32.totalorder %s54, %s56
      %p63 = scmp.eq.s32.totalorder %s25, 1
      %p64 = por %p62, %p63
      %p65 = scmp.ne.s32.totalorder %s56, %s57
      %p66 = scmp.eq.s32.totalorder %s25, 0
      %p67 = por %p65, %p66
      %p68 = scmp.ne.s32.totalorder %s56, %s57
      %p69 = scmp.eq.s32.totalorder %s26, 1
      %p70 = por %p68, %p69
      %p72 = scmp.ne.s32.totalorder %s57, %s71
      %p73 = scmp.eq.s32.totalorder %s26, 0
      %p74 = por %p72, %p73
      %s76 = sadd.s32 %s75, 1
      %p79 = scmp.eq.s32.totalorder %s20, 1
      %p80 = scmp.ne.s32.totalorder %s75, %s77
      %p81 = scmp.eq.s32.totalorder %s20, 0
      %p82 = por %p80, %p81
      %p83 = scmp.ne.s32.totalorder %s75, %s77
      %p84 = scmp.eq.s32.totalorder %s25, 1
      %p85 = por %p83, %p84
      %p86 = scmp.ne.s32.totalorder %s77, %s78
      %p87 = scmp.eq.s32.totalorder %s25, 0
      %p88 = por %p86, %p87
      %p89 = scmp.ne.s32.totalorder %s77, %s78
      %p90 = scmp.eq.s32.totalorder %s26, 1
      %p91 = por %p89, %p90
      %p93 = scmp.ne.s32.totalorder %s78, %s92
      %p94 = scmp.eq.s32.totalorder %s26, 0
      %p95 = por %p93, %p94
      %s97 = sadd.s32 %s96, 1
      %p100 = scmp.eq.s32.totalorder %s20, 1
      %p101 = scmp.ne.s32.totalorder %s96, %s98
      %p102 = scmp.eq.s32.totalorder %s20, 0
      %p103 = por %p101, %p102
      %p104 = scmp.ne.s32.totalorder %s96, %s98
      %p105 = scmp.eq.s32.totalorder %s25, 1
      %p106 = por %p104, %p105
      %p107 = scmp.ne.s32.totalorder %s98, %s99
      %p108 = scmp.eq.s32.totalorder %s25, 0
      %p109 = por %p107, %p108
      %p110 = scmp.ne.s32.totalorder %s98, %s99
      %p111 = scmp.eq.s32.totalorder %s26, 1
      %p112 = por %p110, %p111
      %p114 = scmp.ne.s32.totalorder %s99, %s113
      %p115 = scmp.eq.s32.totalorder %s26, 0
      %p116 = por %p114, %p115
      %s118 = sadd.s32 %s117, 1
      %p121 = scmp.eq.s32.totalorder %s20, 1
      %p122 = scmp.ne.s32.totalorder %s117, %s119
      %p123 = scmp.eq.s32.totalorder %s20, 0
      %p124 = por %p122, %p123
      %p125 = scmp.ne.s32.totalorder %s117, %s119
      %p126 = scmp.eq.s32.totalorder %s25, 1
      %p127 = por %p125, %p126
      %p128 = scmp.ne.s32.totalorder %s119, %s120
      %p129 = scmp.eq.s32.totalorder %s25, 0
      %p130 = por %p128, %p129
      %p131 = scmp.ne.s32.totalorder %s119, %s120
      %p132 = scmp.eq.s32.totalorder %s26, 1
      %p133 = por %p131, %p132
      %p135 = scmp.ne.s32.totalorder %s120, %s134
      %p136 = scmp.eq.s32.totalorder %s26, 0
      %p137 = por %p135, %p136
      %s139 = sadd.s32 %s138, 1
      %p142 = scmp.eq.s32.totalorder %s20, 1
      %p143 = scmp.ne.s32.totalorder %s138, %s140
      %p144 = scmp.eq.s32.totalorder %s20, 0
      %p145 = por %p143, %p144
      %p146 = scmp.ne.s32.totalorder %s138, %s140
      %p147 = scmp.eq.s32.totalorder %s25, 1
      %p148 = por %p146, %p147
      %p149 = scmp.ne.s32.totalorder %s140, %s141
      %p150 = scmp.eq.s32.totalorder %s25, 0
      %p151 = por %p149, %p150
      %p152 = scmp.ne.s32.totalorder %s140, %s141
      %p153 = scmp.eq.s32.totalorder %s26, 1
      %p154 = por %p152, %p153
      %p156 = scmp.ne.s32.totalorder %s141, %s155
      %p157 = scmp.eq.s32.totalorder %s26, 0
      %p158 = por %p156, %p157
      %s160 = sadd.s32 %s159, 1
      %p163 = scmp.eq.s32.totalorder %s20, 1
      %p164 = scmp.ne.s32.totalorder %s159, %s161
      %p165 = scmp.eq.s32.totalorder %s20, 0
      %p166 = por %p164, %p165
      %p167 = scmp.ne.s32.totalorder %s159, %s161
      %p168 = scmp.eq.s32.totalorder %s25, 1
      %p169 = por %p167, %p168
      %p170 = scmp.ne.s32.totalorder %s161, %s162
      %p171 = scmp.eq.s32.totalorder %s25, 0
      %p172 = por %p170, %p171
      %p173 = scmp.ne.s32.totalorder %s161, %s162
      %p174 = scmp.eq.s32.totalorder %s26, 1
      %p175 = por %p173, %p174
      %p177 = scmp.ne.s32.totalorder %s162, %s176
      %p178 = scmp.eq.s32.totalorder %s26, 0
      %p179 = por %p177, %p178
      %s181 = sadd.s32 %s180, 1
      %p184 = scmp.eq.s32.totalorder %s20, 1
      %p185 = scmp.ne.s32.totalorder %s180, %s182
      %p186 = scmp.eq.s32.totalorder %s20, 0
      %p187 = por %p185, %p186
      %p188 = scmp.ne.s32.totalorder %s180, %s182
      %p189 = scmp.eq.s32.totalorder %s25, 1
      %p190 = por %p188, %p189
      %p191 = scmp.ne.s32.totalorder %s182, %s183
      %p192 = scmp.eq.s32.totalorder %s25, 0
      %p193 = por %p191, %p192
      %p194 = scmp.ne.s32.totalorder %s182, %s183
      %p195 = scmp.eq.s32.totalorder %s26, 1
      %p196 = por %p194, %p195
      %p198 = scmp.ne.s32.totalorder %s183, %s197
      %p199 = scmp.eq.s32.totalorder %s26, 0
      %p200 = por %p198, %p199
      %s202 = sadd.s32 %s201, 1
      %p205 = scmp.eq.s32.totalorder %s20, 1
      %p206 = scmp.ne.s32.totalorder %s201, %s203
      %p207 = scmp.eq.s32.totalorder %s20, 0
      %p208 = por %p206, %p207
      %p209 = scmp.ne.s32.totalorder %s201, %s203
      %p210 = scmp.eq.s32.totalorder %s25, 1
      %p211 = por %p209, %p210
      %p212 = scmp.ne.s32.totalorder %s203, %s204
      %p213 = scmp.eq.s32.totalorder %s25, 0
      %p214 = por %p212, %p213
      %p215 = scmp.ne.s32.totalorder %s203, %s204
      %p216 = scmp.eq.s32.totalorder %s26, 1
      %p217 = por %p215, %p216
      %p219 = scmp.ne.s32.totalorder %s204, %s218
      %p220 = scmp.eq.s32.totalorder %s26, 0
      %p221 = por %p219, %p220
      %s223 = sadd.s32 %s222, 1
      %p226 = scmp.eq.s32.totalorder %s20, 1
      %p227 = scmp.ne.s32.totalorder %s222, %s224
      %p228 = scmp.eq.s32.totalorder %s20, 0
      %p229 = por %p227, %p228
      %p230 = scmp.ne.s32.totalorder %s222, %s224
      %p231 = scmp.eq.s32.totalorder %s25, 1
      %p232 = por %p230, %p231
      %p233 = scmp.ne.s32.totalorder %s224, %s225
      %p234 = scmp.eq.s32.totalorder %s25, 0
      %p235 = por %p233, %p234
      %p236 = scmp.ne.s32.totalorder %s224, %s225
      %p237 = scmp.eq.s32.totalorder %s26, 1
      %p238 = por %p236, %p237
      %p240 = scmp.ne.s32.totalorder %s225, %s239
      %p241 = scmp.eq.s32.totalorder %s26, 0
      %p242 = por %p240, %p241
      %s244 = sadd.s32 %s243, 1
      %p247 = scmp.eq.s32.totalorder %s20, 1
      %p248 = scmp.ne.s32.totalorder %s243, %s245
      %p249 = scmp.eq.s32.totalorder %s20, 0
      %p250 = por %p248, %p249
      %p251 = scmp.ne.s32.totalorder %s243, %s245
      %p252 = scmp.eq.s32.totalorder %s25, 1
      %p253 = por %p251, %p252
      %p254 = scmp.ne.s32.totalorder %s245, %s246
      %p255 = scmp.eq.s32.totalorder %s25, 0
      %p256 = por %p254, %p255
      %p257 = scmp.ne.s32.totalorder %s245, %s246
      %p258 = scmp.eq.s32.totalorder %s26, 1
      %p259 = por %p257, %p258
      %p261 = scmp.ne.s32.totalorder %s246, %s260
      %p262 = scmp.eq.s32.totalorder %s26, 0
      %p263 = por %p261, %p262
      %s264 = ssub.s32 %s20, %s27
      %p265 = scmp.eq.s32.totalorder %s264, 0
      %s267 = sadd.s32 %s266, 1
      %s268 = scalar_select %p265, %s266, %s267
      %p271 = pneg %p265
      %p272 = scmp.eq.s32.totalorder %s20, 1
      %p273 = por %p271, %p272
      %p274 = scmp.ne.s32.totalorder %s266, %s269
      %p275 = scmp.eq.s32.totalorder %s20, 0
      %p276 = por %p274, %p275
      %p277 = scmp.ne.s32.totalorder %s266, %s269
      %p278 = scmp.eq.s32.totalorder %s25, 1
      %p279 = por %p277, %p278
      %p280 = scmp.ne.s32.totalorder %s269, %s270
      %p281 = scmp.eq.s32.totalorder %s25, 0
      %p282 = por %p280, %p281
      %p283 = scmp.ne.s32.totalorder %s269, %s270
      %p284 = scmp.eq.s32.totalorder %s26, 1
      %p285 = por %p283, %p284
      %p287 = scmp.ne.s32.totalorder %s270, %s286
      %p288 = scmp.eq.s32.totalorder %s26, 0
      %p289 = por %p287, %p288
      %p290 = scmp.le.s32.totalorder 1, %s20
      %p291 = scmp.lt.s32.totalorder %s20, 3
      %p292 = pnand %p290, %p291
      %p293 = pneg %p292
      // Predicated region
      $region9: #{net_forward.1} parent=5 // pred_check
        _
      $region10: #{net_forward.1} parent=5 // pred_check_branch
        %295 = sbr.rel (%p292) target = $region12
      $region11: #{net_forward.1} parent=5 // pred_region
        %s296 = ssub.s32 %s20, 1
        // Predicated region
        $region13: #{net_forward.1} parent=11 // pred_check
          %p297 = pneg %p67
        $region14: #{net_forward.1} parent=11 // pred_check_branch
          %299 = sbr.rel (%p297) target = $region16
        $region15: #{net_forward.1} parent=11 // pred_region
          _
        $region16: #{net_forward.1} parent=11 // pred_fallthru
          _
        // Predicated region
        $region17: #{net_forward.1} parent=11 // pred_check
          %p300 = pneg %p88
        $region18: #{net_forward.1} parent=11 // pred_check_branch
          %302 = sbr.rel (%p300) target = $region20
        $region19: #{net_forward.1} parent=11 // pred_region
          _
        $region20: #{net_forward.1} parent=11 // pred_fallthru
          _
        // Predicated region
        $region21: #{net_forward.1} parent=11 // pred_check
          %p303 = pneg %p109
        $region22: #{net_forward.1} parent=11 // pred_check_branch
          %305 = sbr.rel (%p303) target = $region24
        $region23: #{net_forward.1} parent=11 // pred_region
          _
        $region24: #{net_forward.1} parent=11 // pred_fallthru
          _
        // Predicated region
        $region25: #{net_forward.1} parent=11 // pred_check
          %p306 = pneg %p130
        $region26: #{net_forward.1} parent=11 // pred_check_branch
          %308 = sbr.rel (%p306) target = $region28
        $region27: #{net_forward.1} parent=11 // pred_region
          _
        $region28: #{net_forward.1} parent=11 // pred_fallthru
          _
        // Predicated region
        $region29: #{net_forward.1} parent=11 // pred_check
          %p309 = pneg %p151
        $region30: #{net_forward.1} parent=11 // pred_check_branch
          %311 = sbr.rel (%p309) target = $region32
        $region31: #{net_forward.1} parent=11 // pred_region
          _
        $region32: #{net_forward.1} parent=11 // pred_fallthru
          _
        // Predicated region
        $region33: #{net_forward.1} parent=11 // pred_check
          %p312 = pneg %p172
        $region34: #{net_forward.1} parent=11 // pred_check_branch
          %314 = sbr.rel (%p312) target = $region36
        $region35: #{net_forward.1} parent=11 // pred_region
          _
        $region36: #{net_forward.1} parent=11 // pred_fallthru
          _
        // Predicated region
        $region37: #{net_forward.1} parent=11 // pred_check
          %p315 = pneg %p193
        $region38: #{net_forward.1} parent=11 // pred_check_branch
          %317 = sbr.rel (%p315) target = $region40
        $region39: #{net_forward.1} parent=11 // pred_region
          _
        $region40: #{net_forward.1} parent=11 // pred_fallthru
          _
        // Predicated region
        $region41: #{net_forward.1} parent=11 // pred_check
          %p318 = pneg %p214
        $region42: #{net_forward.1} parent=11 // pred_check_branch
          %320 = sbr.rel (%p318) target = $region44
        $region43: #{net_forward.1} parent=11 // pred_region
          _
        $region44: #{net_forward.1} parent=11 // pred_fallthru
          _
        // Predicated region
        $region45: #{net_forward.1} parent=11 // pred_check
          %p321 = pneg %p235
        $region46: #{net_forward.1} parent=11 // pred_check_branch
          %323 = sbr.rel (%p321) target = $region48
        $region47: #{net_forward.1} parent=11 // pred_region
          _
        $region48: #{net_forward.1} parent=11 // pred_fallthru
          _
        // Predicated region
        $region49: #{net_forward.1} parent=11 // pred_check
          %p324 = pneg %p256
        $region50: #{net_forward.1} parent=11 // pred_check_branch
          %326 = sbr.rel (%p324) target = $region52
        $region51: #{net_forward.1} parent=11 // pred_region
          _
        $region52: #{net_forward.1} parent=11 // pred_fallthru
          _
      $region12: #{net_forward.1} parent=5 // pred_fallthru
        _
      %p327 = scmp.lt.s32.totalorder %s20, 2
      // Predicated region
      $region53: #{net_forward.1} parent=5 // pred_check
        %p328 = pneg %p327
      $region54: #{net_forward.1} parent=5 // pred_check_branch
        %330 = sbr.rel (%p328) target = $region56
      $region55: #{net_forward.1} parent=5 // pred_region
        // Predicated region
        $region57: #{net_forward.1} parent=55 // pred_check
          %p331 = pneg %p40
        $region58: #{net_forward.1} parent=55 // pred_check_branch
          %333 = sbr.rel (%p331) target = $region60
        $region59: #{net_forward.1} parent=55 // pred_region
          %p334 = scmp.lt.s32.totalorder %s20, 1
          %s335 = scalar_select %p334, %s20, 1
          %s336 = smul.addr %s335, 312
          %s337 = smul.addr %s336, 8
          %s338 = scalar_lea.vmem %s0, %s337
        $region60: #{net_forward.1} parent=55 // pred_fallthru
          _
      $region56: #{net_forward.1} parent=5 // pred_fallthru
        _
      %p339 = scmp.le.s32.totalorder 1, %s20
      %p340 = scmp.lt.s32.totalorder %s20, 3
      %p341 = pnand %p339, %p340
      %p342 = pneg %p341
      // Predicated region
      $region61: #{net_forward.1} parent=5 // pred_check
        _
      $region62: #{net_forward.1} parent=5 // pred_check_branch
        %344 = sbr.rel (%p341) target = $region64
      $region63: #{net_forward.1} parent=5 // pred_region
        %s345 = ssub.s32 %s20, 1
        %p346 = scmp.lt.s32.totalorder %s25, 1
        %s347 = scalar_select %p346, %s25, 1
        %s348 = smul.addr %s347, 312
        %s349 = smul.addr %s348, 8
        %s350 = scalar_lea.vmem %s0, %s349
        %p351 = pneg %p46
        %p352 = pneg %p43
        %p353 = pneg %p67
        %p354 = pneg %p64
        %p355 = pneg %p88
        %p356 = pneg %p85
        %p357 = pneg %p109
        %p358 = pneg %p106
        %p359 = pneg %p130
        %p360 = pneg %p127
        %p361 = pneg %p151
        %p362 = pneg %p148
        %p363 = pneg %p172
        %p364 = pneg %p169
        %p365 = pneg %p193
        %p366 = pneg %p190
        %p367 = pneg %p214
        %p368 = pneg %p211
        %p369 = pneg %p235
        %p370 = pneg %p232
        %p371 = pneg %p256
        %p372 = pneg %p253
        %p373 = pneg %p282
        %p374 = pneg %p279
        %s375 = sand.u32 %s269, 1
        %s376 = scalar_lea.sflag [#allocation6], %s375
        %s377 = sand.u32 %s269, 1
        %s378 = scalar_lea.vmem [#allocation5], %s377
        %p379 = scmp.lt.s32.totalorder %s25, 1
        %s380 = scalar_select %p379, %s25, 1
        %s381 = smul.addr %s380, 312
        %s382 = smul.addr %s381, 8
        %s383 = scalar_lea.vmem %s0, %s382
        %v384 = vlaneseq
        %v385 = vshrl.u32 %v384, 7
        %v386 = vadd.s32 %v385, 8
        %v387 = vadd.s32 %v385, 16
        %v388 = vlaneseq
        %v389 = vand.u32 %v388, 127
        %v390 = vmul.u32 %v385, 2
        %v391 = vmul.u32 %v386, 2
        %v392 = vmul.u32 %v387, 2
        %vm393 = vcmp.eq.s32.totalorder %v389, %v390
        %vm394 = vcmp.eq.s32.totalorder %v389, %v391
        %vm395 = vcmp.eq.s32.totalorder %v389, %v392
        %v396 = vsel %vm393, 1, 0
        %v397 = vsel %vm394, 1, 0
        %v398 = vsel %vm395, 1, 0
        %v399 = vcvt.s32.f32 %v396
        %v400 = vcvt.s32.f32 %v397
        %v401 = vcvt.s32.f32 %v398
        %v402 = vadd.s32 %v390, 1
        %v403 = vadd.s32 %v391, 1
        %v404 = vadd.s32 %v392, 1
        %vm405 = vcmp.eq.s32.totalorder %v389, %v402
        %vm406 = vcmp.eq.s32.totalorder %v389, %v403
        %vm407 = vcmp.eq.s32.totalorder %v389, %v404
        %v408 = vsel %vm405, 1, 0
        %v409 = vsel %vm406, 1, 0
        %v410 = vsel %vm407, 1, 0
        %v411 = vcvt.s32.f32 %v408
        %v412 = vcvt.s32.f32 %v409
        %v413 = vcvt.s32.f32 %v410
        %v414 = vld [vmem:[%s2] sm:$0x1]
        loop: start=0, step=1, limit=23
        $region65: #{net_forward.1} parent=63 // loop_pre_header
          _
        $region66: #{net_forward.1} parent=63 // loop_header
          %s416 = sphi 0, %s420
          %p417 = scmp.ge.s32.totalorder %s416, 23
        $region67: #{net_forward.1} parent=63 // loop_header_branch
          %419 = sbr.rel (%p417) target = $region71
        $region68: #{net_forward.1} parent=63 // loop_body
          %s421 = smul.u32 %s416, 100
          %s422 = scalar_lea.vmem %s383, %s421
          %v423 = vld [vmem:[%s422] sm:$0xff]
          %v424 = vld [vmem:[%s422 + $0x8] sm:$0xff]
          %v425 = vld [vmem:[%s422 + $0x10] sm:$0xff]
          %v426 = vld [vmem:[%s422 + $0x18] sm:$0xff]
          %v427 = vld [vmem:[%s422 + $0x20] sm:$0xff]
          %v428 = vld [vmem:[%s422 + $0x28] sm:$0xff]
          %v429 = vld [vmem:[%s422 + $0x30] sm:$0xff]
          %v430 = vld [vmem:[%s422 + $0x38] sm:$0xff]
          %v431 = vld [vmem:[%s422 + $0x40] sm:$0xff]
          %v432 = vld [vmem:[%s422 + $0x48] sm:$0xff]
          %v433 = vld [vmem:[%s422 + $0x50] sm:$0xff]
          %v434 = vld [vmem:[%s422 + $0x58] sm:$0xff]
          %v435 = vld [vmem:[%s1] sm:$0x1f]
          %s436 = sadd.s32 %s421, 50
          %s437 = scalar_lea.vmem %s383, %s436
          %v438 = vld [vmem:[%s437] sm:$0xff]
          %v439 = vld [vmem:[%s437 + $0x8] sm:$0xff]
          %v440 = vld [vmem:[%s437 + $0x10] sm:$0xff]
          %v441 = vld [vmem:[%s437 + $0x18] sm:$0xff]
          %v442 = vld [vmem:[%s437 + $0x20] sm:$0xff]
          %v443 = vld [vmem:[%s437 + $0x28] sm:$0xff]
          %v444 = vld [vmem:[%s437 + $0x30] sm:$0xff]
          %v445 = vld [vmem:[%s437 + $0x38] sm:$0xff]
          %v446 = vld [vmem:[%s437 + $0x40] sm:$0xff]
          %v447 = vld [vmem:[%s437 + $0x48] sm:$0xff]
          %v448 = vld [vmem:[%s437 + $0x50] sm:$0xff]
          %v449 = vld [vmem:[%s437 + $0x58] sm:$0xff]
          %s450 = scalar_lea.vmem %s1, 8
          %v451 = vld [vmem:[%s450] sm:$0x1f]
          %vm452 = vcmask 39936
          %v454 = vsel %vm452, %v438, 0
          %v457 = vsel %vm452, %v439, 0
          %v460 = vsel %vm452, %v440, 0
          %v463 = vsel %vm452, %v441, 0
          %v466 = vsel %vm452, %v442, 0
          %v469 = vsel %vm452, %v443, 0
          %v472 = vsel %vm452, %v444, 0
          %v475 = vsel %vm452, %v445, 0
          %v478 = vsel %vm452, %v446, 0
          %v481 = vsel %vm452, %v447, 0
          %v484 = vsel %vm452, %v448, 0
          %v487 = vsel %vm452, %v449, 0
          %vm489 = vcmask 1044480
          %v491 = vsel %vm489, %v451, 0
          %493 = vmatprep.subr.mxu0 0.0
          %494 = vmatpush1.msra.mxu0 %v491
          %495 = vmatprep.subr.mxu0 0.0
          %496 = vmatpush1.msra.mxu0 0.0
          %497 = vmatprep.subr.mxu0 0.0
          %498 = vmatpush1.msra.mxu0 0.0
          %499 = vmatprep.subr.mxu0 0.0
          %500 = vmatpush1.msra.mxu0 0.0
          %501 = vmatprep.subr.mxu0 0.0
          %502 = vmatpush1.msra.mxu0 0.0
          %503 = vmatprep.subr.mxu0 0.0
          %504 = vmatpush1.msra.mxu0 0.0
          %505 = vmatprep.subr.mxu0 0.0
          %506 = vmatpush1.msra.mxu0 0.0
          %507 = vmatprep.subr.mxu0 0.0
          %508 = vmatpush1.msra.mxu0 0.0
          %509 = vmatprep.subr.mxu0 0.0
          %510 = vmatpush1.msra.mxu0 0.0
          %511 = vmatprep.subr.mxu0 0.0
          %512 = vmatpush1.msra.mxu0 0.0
          %513 = vmatprep.subr.mxu0 0.0
          %514 = vmatpush1.msra.mxu0 0.0
          %515 = vmatprep.subr.mxu0 0.0
          %516 = vmatpush1.msra.mxu0 0.0
          %517 = vmatprep.subr.mxu0 0.0
          %518 = vmatpush1.msra.mxu0 0.0
          %519 = vmatprep.subr.mxu0 0.0
          %520 = vmatpush1.msra.mxu0 0.0
          %521 = vmatprep.subr.mxu0 0.0
          %522 = vmatpush1.msra.mxu0 0.0
          %523 = vmatprep.subr.mxu0 0.0
          %524 = vmatpush1.msra.mxu0 0.0
          %525 = vmatprep.subr.mxu0 0.0
          %526 = vmatpush1.msra.mxu0 0.0
          %527 = vmatprep.subr.mxu0 0.0
          %528 = vmatpush1.msra.mxu0 0.0
          %529 = vmatprep.subr.mxu0 0.0
          %530 = vmatpush1.msra.mxu0 0.0
          %531 = vmatprep.subr.mxu0 0.0
          %532 = vmatpush1.msra.mxu0 0.0
          %533 = vmatprep.subr.mxu0 0.0
          %534 = vmatpush1.msra.mxu0 0.0
          %535 = vmatprep.subr.mxu0 0.0
          %536 = vmatpush1.msra.mxu0 0.0
          %537 = vmatprep.subr.mxu0 0.0
          %538 = vmatpush1.msra.mxu0 0.0
          %539 = vmatprep.subr.mxu0 0.0
          %540 = vmatpush1.msra.mxu0 0.0
          %541 = vmatprep.subr.mxu0 0.0
          %542 = vmatpush1.msra.mxu0 0.0
          %543 = vmatprep.subr.mxu0 0.0
          %544 = vmatpush1.msra.mxu0 0.0
          %545 = vmatprep.subr.mxu0 0.0
          %546 = vmatpush1.msra.mxu0 0.0
          %547 = vmatprep.subr.mxu0 0.0
          %548 = vmatpush1.msra.mxu0 0.0
          %549 = vmatprep.subr.mxu0 0.0
          %550 = vmatpush1.msra.mxu0 0.0
          %551 = vmatprep.subr.mxu0 0.0
          %552 = vmatpush1.msra.mxu0 0.0
          %553 = vmatprep.subr.mxu0 0.0
          %554 = vmatpush1.msra.mxu0 0.0
          %555 = vmatprep.subr.mxu0 0.0
          %556 = vmatpush1.msra.mxu0 0.0
          %557 = vmatprep.mubr.f32.mxu0 0.0
          %558 = vmatmul.mubr.f32.gmra.mrb[0].mxu0 %v454
          %v559 = vpop.f32.mrb[0].mxu0
          %v560 = vadd.f32 0.0, %v559
          %v561 = vpop.f32.mrb[0].mxu0
          %562 = vmatprep.mubr.f32.mxu0 0.0
          %563 = vmatmul.mubr.f32.gmra.mrb[0].mxu0 %v457
          %v564 = vpop.f32.mrb[0].mxu0
          %v565 = vadd.f32 0.0, %v564
          %v566 = vpop.f32.mrb[0].mxu0
          %567 = vmatprep.mubr.f32.mxu0 0.0
          %568 = vmatmul.mubr.f32.gmra.mrb[0].mxu0 %v460
          %v569 = vpop.f32.mrb[0].mxu0
          %v570 = vadd.f32 0.0, %v569
          %v571 = vpop.f32.mrb[0].mxu0
          %572 = vmatprep.mubr.f32.mxu0 0.0
          %573 = vmatmul.mubr.f32.gmra.mrb[0].mxu0 %v463
          %v574 = vpop.f32.mrb[0].mxu0
          %v575 = vadd.f32 0.0, %v574
          %v576 = vpop.f32.mrb[0].mxu0
          %577 = vmatprep.mubr.f32.mxu0 0.0
          %578 = vmatmul.mubr.f32.gmra.mrb[0].mxu0 %v466
          %v579 = vpop.f32.mrb[0].mxu0
          %v580 = vadd.f32 0.0, %v579
          %v581 = vpop.f32.mrb[0].mxu0
          %582 = vmatprep.mubr.f32.mxu0 0.0
          %583 = vmatmul.mubr.f32.gmra.mrb[0].mxu0 %v469
          %v584 = vpop.f32.mrb[0].mxu0
          %v585 = vadd.f32 0.0, %v584
          %v586 = vpop.f32.mrb[0].mxu0
          %587 = vmatprep.mubr.f32.mxu0 0.0
          %588 = vmatmul.mubr.f32.gmra.mrb[0].mxu0 %v472
          %v589 = vpop.f32.mrb[0].mxu0
          %v590 = vadd.f32 0.0, %v589
          %v591 = vpop.f32.mrb[0].mxu0
          %592 = vmatprep.mubr.f32.mxu0 0.0
          %593 = vmatmul.mubr.f32.gmra.mrb[0].mxu0 %v475
          %v594 = vpop.f32.mrb[0].mxu0
          %v595 = vadd.f32 0.0, %v594
          %v596 = vpop.f32.mrb[0].mxu0
          %597 = vmatprep.mubr.f32.mxu0 0.0
          %598 = vmatmul.mubr.f32.gmra.mrb[0].mxu0 %v478
          %v599 = vpop.f32.mrb[0].mxu0
          %v600 = vadd.f32 0.0, %v599
          %v601 = vpop.f32.mrb[0].mxu0
          %602 = vmatprep.mubr.f32.mxu0 0.0
          %603 = vmatmul.mubr.f32.gmra.mrb[0].mxu0 %v481
          %v604 = vpop.f32.mrb[0].mxu0
          %v605 = vadd.f32 0.0, %v604
          %v606 = vpop.f32.mrb[0].mxu0
          %607 = vmatprep.mubr.f32.mxu0 0.0
          %608 = vmatmul.mubr.f32.gmra.mrb[0].mxu0 %v484
          %v609 = vpop.f32.mrb[0].mxu0
          %v610 = vadd.f32 0.0, %v609
          %v611 = vpop.f32.mrb[0].mxu0
          %612 = vmatprep.mubr.f32.mxu0 0.0
          %613 = vmatmul.mubr.f32.gmra.mrb[0].mxu0 %v487
          %v614 = vpop.f32.mrb[0].mxu0
          %v615 = vadd.f32 0.0, %v614
          %v616 = vpop.f32.mrb[0].mxu0
          %617 = vdwg.mxu0
          %v619 = vsel %vm452, %v423, 0
          %v622 = vsel %vm452, %v424, 0
          %v625 = vsel %vm452, %v425, 0
          %v628 = vsel %vm452, %v426, 0
          %v631 = vsel %vm452, %v427, 0
          %v634 = vsel %vm452, %v428, 0
          %v637 = vsel %vm452, %v429, 0
          %v640 = vsel %vm452, %v430, 0
          %v643 = vsel %vm452, %v431, 0
          %v646 = vsel %vm452, %v432, 0
          %v649 = vsel %vm452, %v433, 0
          %v652 = vsel %vm452, %v434, 0
          %v655 = vsel %vm489, %v435, 0
          %657 = vmatprep.subr.mxu0 0.0
          %658 = vmatpush1.msra.mxu0 %v655
          %659 = vmatprep.subr.mxu0 0.0
          %660 = vmatpush1.msra.mxu0 0.0
          %661 = vmatprep.subr.mxu0 0.0
          %662 = vmatpush1.msra.mxu0 0.0
          %663 = vmatprep.subr.mxu0 0.0
          %664 = vmatpush1.msra.mxu0 0.0
          %665 = vmatprep.subr.mxu0 0.0
          %666 = vmatpush1.msra.mxu0 0.0
          %667 = vmatprep.subr.mxu0 0.0
          %668 = vmatpush1.msra.mxu0 0.0
          %669 = vmatprep.subr.mxu0 0.0
          %670 = vmatpush1.msra.mxu0 0.0
          %671 = vmatprep.subr.mxu0 0.0
          %672 = vmatpush1.msra.mxu0 0.0
          %673 = vmatprep.subr.mxu0 0.0
          %674 = vmatpush1.msra.mxu0 0.0
          %675 = vmatprep.subr.mxu0 0.0
          %676 = vmatpush1.msra.mxu0 0.0
          %677 = vmatprep.subr.mxu0 0.0
          %678 = vmatpush1.msra.mxu0 0.0
          %679 = vmatprep.subr.mxu0 0.0
          %680 = vmatpush1.msra.mxu0 0.0
          %681 = vmatprep.subr.mxu0 0.0
          %682 = vmatpush1.msra.mxu0 0.0
          %683 = vmatprep.subr.mxu0 0.0
          %684 = vmatpush1.msra.mxu0 0.0
          %685 = vmatprep.subr.mxu0 0.0
          %686 = vmatpush1.msra.mxu0 0.0
          %687 = vmatprep.subr.mxu0 0.0
          %688 = vmatpush1.msra.mxu0 0.0
          %689 = vmatprep.subr.mxu0 0.0
          %690 = vmatpush1.msra.mxu0 0.0
          %691 = vmatprep.subr.mxu0 0.0
          %692 = vmatpush1.msra.mxu0 0.0
          %693 = vmatprep.subr.mxu0 0.0
          %694 = vmatpush1.msra.mxu0 0.0
          %695 = vmatprep.subr.mxu0 0.0
          %696 = vmatpush1.msra.mxu0 0.0
          %697 = vmatprep.subr.mxu0 0.0
          %698 = vmatpush1.msra.mxu0 0.0
          %699 = vmatprep.subr.mxu0 0.0
          %700 = vmatpush1.msra.mxu0 0.0
          %701 = vmatprep.subr.mxu0 0.0
          %702 = vmatpush1.msra.mxu0 0.0
          %703 = vmatprep.subr.mxu0 0.0
          %704 = vmatpush1.msra.mxu0 0.0
          %705 = vmatprep.subr.mxu0 0.0
          %706 = vmatpush1.msra.mxu0 0.0
          %707 = vmatprep.subr.mxu0 0.0
          %708 = vmatpush1.msra.mxu0 0.0
          %709 = vmatprep.subr.mxu0 0.0
          %710 = vmatpush1.msra.mxu0 0.0
          %711 = vmatprep.subr.mxu0 0.0
          %712 = vmatpush1.msra.mxu0 0.0
          %713 = vmatprep.subr.mxu0 0.0
          %714 = vmatpush1.msra.mxu0 0.0
          %715 = vmatprep.subr.mxu0 0.0
          %716 = vmatpush1.msra.mxu0 0.0
          %717 = vmatprep.subr.mxu0 0.0
          %718 = vmatpush1.msra.mxu0 0.0
          %719 = vmatprep.subr.mxu0 0.0
          %720 = vmatpush1.msra.mxu0 0.0
          %721 = vmatprep.mubr.f32.mxu0 0.0
          %722 = vmatmul.mubr.f32.gmra.mrb[0].mxu0 %v619
          %v723 = vpop.f32.mrb[0].mxu0
          %v724 = vadd.f32 %v560, %v723
          %v725 = vpop.f32.mrb[0].mxu0
          %726 = vmatprep.mubr.f32.mxu0 0.0
          %727 = vmatmul.mubr.f32.gmra.mrb[0].mxu0 %v622
          %v728 = vpop.f32.mrb[0].mxu0
          %v729 = vadd.f32 %v565, %v728
          %v730 = vpop.f32.mrb[0].mxu0
          %731 = vmatprep.mubr.f32.mxu0 0.0
          %732 = vmatmul.mubr.f32.gmra.mrb[0].mxu0 %v625
          %v733 = vpop.f32.mrb[0].mxu0
          %v734 = vadd.f32 %v570, %v733
          %v735 = vpop.f32.mrb[0].mxu0
          %736 = vmatprep.mubr.f32.mxu0 0.0
          %737 = vmatmul.mubr.f32.gmra.mrb[0].mxu0 %v628
          %v738 = vpop.f32.mrb[0].mxu0
          %v739 = vadd.f32 %v575, %v738
          %v740 = vpop.f32.mrb[0].mxu0
          %741 = vmatprep.mubr.f32.mxu0 0.0
          %742 = vmatmul.mubr.f32.gmra.mrb[0].mxu0 %v631
          %v743 = vpop.f32.mrb[0].mxu0
          %v744 = vadd.f32 %v580, %v743
          %v745 = vpop.f32.mrb[0].mxu0
          %746 = vmatprep.mubr.f32.mxu0 0.0
          %747 = vmatmul.mubr.f32.gmra.mrb[0].mxu0 %v634
          %v748 = vpop.f32.mrb[0].mxu0
          %v749 = vadd.f32 %v585, %v748
          %v750 = vpop.f32.mrb[0].mxu0
          %751 = vmatprep.mubr.f32.mxu0 0.0
          %752 = vmatmul.mubr.f32.gmra.mrb[0].mxu0 %v637
          %v753 = vpop.f32.mrb[0].mxu0
          %v754 = vadd.f32 %v590, %v753
          %v755 = vpop.f32.mrb[0].mxu0
          %756 = vmatprep.mubr.f32.mxu0 0.0
          %757 = vmatmul.mubr.f32.gmra.mrb[0].mxu0 %v640
          %v758 = vpop.f32.mrb[0].mxu0
          %v759 = vadd.f32 %v595, %v758
          %v760 = vpop.f32.mrb[0].mxu0
          %761 = vmatprep.mubr.f32.mxu0 0.0
          %762 = vmatmul.mubr.f32.gmra.mrb[0].mxu0 %v643
          %v763 = vpop.f32.mrb[0].mxu0
          %v764 = vadd.f32 %v600, %v763
          %v765 = vpop.f32.mrb[0].mxu0
          %766 = vmatprep.mubr.f32.mxu0 0.0
          %767 = vmatmul.mubr.f32.gmra.mrb[0].mxu0 %v646
          %v768 = vpop.f32.mrb[0].mxu0
          %v769 = vadd.f32 %v605, %v768
          %v770 = vpop.f32.mrb[0].mxu0
          %771 = vmatprep.mubr.f32.mxu0 0.0
          %772 = vmatmul.mubr.f32.gmra.mrb[0].mxu0 %v649
          %v773 = vpop.f32.mrb[0].mxu0
          %v774 = vadd.f32 %v610, %v773
          %v775 = vpop.f32.mrb[0].mxu0
          %776 = vmatprep.mubr.f32.mxu0 0.0
          %777 = vmatmul.mubr.f32.gmra.mrb[0].mxu0 %v652
          %v778 = vpop.f32.mrb[0].mxu0
          %v779 = vadd.f32 %v615, %v778
          %v780 = vpop.f32.mrb[0].mxu0
          %781 = vdwg.mxu0
          %s782 = sadd.s32 %s421, 100
          %s783 = scalar_lea.vmem %s383, %s782
          %v784 = vld [vmem:[%s783] sm:$0xff]
          %v785 = vld [vmem:[%s783 + $0x8] sm:$0xff]
          %v786 = vld [vmem:[%s783 + $0x10] sm:$0xff]
          %v787 = vld [vmem:[%s783 + $0x18] sm:$0xff]
          %v788 = vld [vmem:[%s783 + $0x20] sm:$0xff]
          %v789 = vld [vmem:[%s783 + $0x28] sm:$0xff]
          %v790 = vld [vmem:[%s783 + $0x30] sm:$0xff]
          %v791 = vld [vmem:[%s783 + $0x38] sm:$0xff]
          %v792 = vld [vmem:[%s783 + $0x40] sm:$0xff]
          %v793 = vld [vmem:[%s783 + $0x48] sm:$0xff]
          %v794 = vld [vmem:[%s783 + $0x50] sm:$0xff]
          %v795 = vld [vmem:[%s783 + $0x58] sm:$0xff]
          %s796 = scalar_lea.vmem %s1, 16
          %v797 = vld [vmem:[%s796] sm:$0x1f]
          %v799 = vsel %vm452, %v784, 0
          %v802 = vsel %vm452, %v785, 0
          %v805 = vsel %vm452, %v786, 0
          %v808 = vsel %vm452, %v787, 0
          %v811 = vsel %vm452, %v788, 0
          %v814 = vsel %vm452, %v789, 0
          %v817 = vsel %vm452, %v790, 0
          %v820 = vsel %vm452, %v791, 0
          %v823 = vsel %vm452, %v792, 0
          %v826 = vsel %vm452, %v793, 0
          %v829 = vsel %vm452, %v794, 0
          %v832 = vsel %vm452, %v795, 0
          %v835 = vsel %vm489, %v797, 0
          %837 = vmatprep.subr.mxu0 0.0
          %838 = vmatpush1.msra.mxu0 %v835
          %839 = vmatprep.subr.mxu0 0.0
          %840 = vmatpush1.msra.mxu0 0.0
          %841 = vmatprep.subr.mxu0 0.0
          %842 = vmatpush1.msra.mxu0 0.0
          %843 = vmatprep.subr.mxu0 0.0
          %844 = vmatpush1.msra.mxu0 0.0
          %845 = vmatprep.subr.mxu0 0.0
          %846 = vmatpush1.msra.mxu0 0.0
          %847 = vmatprep.subr.mxu0 0.0
          %848 = vmatpush1.msra.mxu0 0.0
          %849 = vmatprep.subr.mxu0 0.0
          %850 = vmatpush1.msra.mxu0 0.0
          %851 = vmatprep.subr.mxu0 0.0
          %852 = vmatpush1.msra.mxu0 0.0
          %853 = vmatprep.subr.mxu0 0.0
          %854 = vmatpush1.msra.mxu0 0.0
          %855 = vmatprep.subr.mxu0 0.0
          %856 = vmatpush1.msra.mxu0 0.0
          %857 = vmatprep.subr.mxu0 0.0
          %858 = vmatpush1.msra.mxu0 0.0
          %859 = vmatprep.subr.mxu0 0.0
          %860 = vmatpush1.msra.mxu0 0.0
          %861 = vmatprep.subr.mxu0 0.0
          %862 = vmatpush1.msra.mxu0 0.0
          %863 = vmatprep.subr.mxu0 0.0
          %864 = vmatpush1.msra.mxu0 0.0
          %865 = vmatprep.subr.mxu0 0.0
          %866 = vmatpush1.msra.mxu0 0.0
          %867 = vmatprep.subr.mxu0 0.0
          %868 = vmatpush1.msra.mxu0 0.0
          %869 = vmatprep.subr.mxu0 0.0
          %870 = vmatpush1.msra.mxu0 0.0
          %871 = vmatprep.subr.mxu0 0.0
          %872 = vmatpush1.msra.mxu0 0.0
          %873 = vmatprep.subr.mxu0 0.0
          %874 = vmatpush1.msra.mxu0 0.0
          %875 = vmatprep.subr.mxu0 0.0
          %876 = vmatpush1.msra.mxu0 0.0
          %877 = vmatprep.subr.mxu0 0.0
          %878 = vmatpush1.msra.mxu0 0.0
          %879 = vmatprep.subr.mxu0 0.0
          %880 = vmatpush1.msra.mxu0 0.0
          %881 = vmatprep.subr.mxu0 0.0
          %882 = vmatpush1.msra.mxu0 0.0
          %883 = vmatprep.subr.mxu0 0.0
          %884 = vmatpush1.msra.mxu0 0.0
          %885 = vmatprep.subr.mxu0 0.0
          %886 = vmatpush1.msra.mxu0 0.0
          %887 = vmatprep.subr.mxu0 0.0
          %888 = vmatpush1.msra.mxu0 0.0
          %889 = vmatprep.subr.mxu0 0.0
          %890 = vmatpush1.msra.mxu0 0.0
          %891 = vmatprep.subr.mxu0 0.0
          %892 = vmatpush1.msra.mxu0 0.0
          %893 = vmatprep.subr.mxu0 0.0
          %894 = vmatpush1.msra.mxu0 0.0
          %895 = vmatprep.subr.mxu0 0.0
          %896 = vmatpush1.msra.mxu0 0.0
          %897 = vmatprep.subr.mxu0 0.0
          %898 = vmatpush1.msra.mxu0 0.0
          %899 = vmatprep.subr.mxu0 0.0
          %900 = vmatpush1.msra.mxu0 0.0
          %901 = vmatprep.mubr.f32.mxu0 0.0
          %902 = vmatmul.mubr.f32.gmra.mrb[0].mxu0 %v799
          %v903 = vpop.f32.mrb[0].mxu0
          %v904 = vadd.f32 0.0, %v903
          %v905 = vpop.f32.mrb[0].mxu0
          %906 = vmatprep.mubr.f32.mxu0 0.0
          %907 = vmatmul.mubr.f32.gmra.mrb[0].mxu0 %v802
          %v908 = vpop.f32.mrb[0].mxu0
          %v909 = vadd.f32 0.0, %v908
          %v910 = vpop.f32.mrb[0].mxu0
          %911 = vmatprep.mubr.f32.mxu0 0.0
          %912 = vmatmul.mubr.f32.gmra.mrb[0].mxu0 %v805
          %v913 = vpop.f32.mrb[0].mxu0
          %v914 = vadd.f32 0.0, %v913
          %v915 = vpop.f32.mrb[0].mxu0
          %916 = vmatprep.mubr.f32.mxu0 0.0
          %917 = vmatmul.mubr.f32.gmra.mrb[0].mxu0 %v808
          %v918 = vpop.f32.mrb[0].mxu0
          %v919 = vadd.f32 0.0, %v918
          %v920 = vpop.f32.mrb[0].mxu0
          %921 = vmatprep.mubr.f32.mxu0 0.0
          %922 = vmatmul.mubr.f32.gmra.mrb[0].mxu0 %v811
          %v923 = vpop.f32.mrb[0].mxu0
          %v924 = vadd.f32 0.0, %v923
          %v925 = vpop.f32.mrb[0].mxu0
          %926 = vmatprep.mubr.f32.mxu0 0.0
          %927 = vmatmul.mubr.f32.gmra.mrb[0].mxu0 %v814
          %v928 = vpop.f32.mrb[0].mxu0
          %v929 = vadd.f32 0.0, %v928
          %v930 = vpop.f32.mrb[0].mxu0
          %931 = vmatprep.mubr.f32.mxu0 0.0
          %932 = vmatmul.mubr.f32.gmra.mrb[0].mxu0 %v817
          %v933 = vpop.f32.mrb[0].mxu0
          %v934 = vadd.f32 0.0, %v933
          %v935 = vpop.f32.mrb[0].mxu0
          %936 = vmatprep.mubr.f32.mxu0 0.0
          %937 = vmatmul.mubr.f32.gmra.mrb[0].mxu0 %v820
          %v938 = vpop.f32.mrb[0].mxu0
          %v939 = vadd.f32 0.0, %v938
          %v940 = vpop.f32.mrb[0].mxu0
          %941 = vmatprep.mubr.f32.mxu0 0.0
          %942 = vmatmul.mubr.f32.gmra.mrb[0].mxu0 %v823
          %v943 = vpop.f32.mrb[0].mxu0
          %v944 = vadd.f32 0.0, %v943
          %v945 = vpop.f32.mrb[0].mxu0
          %946 = vmatprep.mubr.f32.mxu0 0.0
          %947 = vmatmul.mubr.f32.gmra.mrb[0].mxu0 %v826
          %v948 = vpop.f32.mrb[0].mxu0
          %v949 = vadd.f32 0.0, %v948
          %v950 = vpop.f32.mrb[0].mxu0
          %951 = vmatprep.mubr.f32.mxu0 0.0
          %952 = vmatmul.mubr.f32.gmra.mrb[0].mxu0 %v829
          %v953 = vpop.f32.mrb[0].mxu0
          %v954 = vadd.f32 0.0, %v953
          %v955 = vpop.f32.mrb[0].mxu0
          %956 = vmatprep.mubr.f32.mxu0 0.0
          %957 = vmatmul.mubr.f32.gmra.mrb[0].mxu0 %v832
          %v958 = vpop.f32.mrb[0].mxu0
          %v959 = vadd.f32 0.0, %v958
          %v960 = vpop.f32.mrb[0].mxu0
          %961 = vdwg.mxu0
          %v962 = vadd.f32 %v724, %v904
          %v963 = vadd.f32 %v729, %v909
          %v964 = vadd.f32 %v734, %v914
          %v965 = vadd.f32 %v739, %v919
          %v966 = vadd.f32 %v744, %v924
          %v967 = vadd.f32 %v749, %v929
          %v968 = vadd.f32 %v754, %v934
          %v969 = vadd.f32 %v759, %v939
          %v970 = vadd.f32 %v764, %v944
          %v971 = vadd.f32 %v769, %v949
          %v972 = vadd.f32 %v774, %v954
          %v973 = vadd.f32 %v779, %v959
          %s974 = sadd.s32 %s421, 150
          %s975 = scalar_lea.vmem %s383, %s974
          %v976 = vld [vmem:[%s975] sm:$0xff]
          %v977 = vld [vmem:[%s975 + $0x8] sm:$0xff]
          %v978 = vld [vmem:[%s975 + $0x10] sm:$0xff]
          %v979 = vld [vmem:[%s975 + $0x18] sm:$0xff]
          %v980 = vld [vmem:[%s975 + $0x20] sm:$0xff]
          %v981 = vld [vmem:[%s975 + $0x28] sm:$0xff]
          %v982 = vld [vmem:[%s975 + $0x30] sm:$0xff]
          %v983 = vld [vmem:[%s975 + $0x38] sm:$0xff]
          %v984 = vld [vmem:[%s975 + $0x40] sm:$0xff]
          %v985 = vld [vmem:[%s975 + $0x48] sm:$0xff]
          %v986 = vld [vmem:[%s975 + $0x50] sm:$0xff]
          %v987 = vld [vmem:[%s975 + $0x58] sm:$0xff]
          %s988 = scalar_lea.vmem %s1, 24
          %v989 = vld [vmem:[%s988] sm:$0x1f]
          %v991 = vsel %vm452, %v976, 0
          %v994 = vsel %vm452, %v977, 0
          %v997 = vsel %vm452, %v978, 0
          %v1000 = vsel %vm452, %v979, 0
          %v1003 = vsel %vm452, %v980, 0
          %v1006 = vsel %vm452, %v981, 0
          %v1009 = vsel %vm452, %v982, 0
          %v1012 = vsel %vm452, %v983, 0
          %v1015 = vsel %vm452, %v984, 0
          %v1018 = vsel %vm452, %v985, 0
          %v1021 = vsel %vm452, %v986, 0
          %v1024 = vsel %vm452, %v987, 0
          %v1027 = vsel %vm489, %v989, 0
          %1029 = vmatprep.subr.mxu0 0.0
          %1030 = vmatpush1.msra.mxu0 %v1027
          %1031 = vmatprep.subr.mxu0 0.0
          %1032 = vmatpush1.msra.mxu0 0.0
          %1033 = vmatprep.subr.mxu0 0.0
          %1034 = vmatpush1.msra.mxu0 0.0
          %1035 = vmatprep.subr.mxu0 0.0
          %1036 = vmatpush1.msra.mxu0 0.0
          %1037 = vmatprep.subr.mxu0 0.0
          %1038 = vmatpush1.msra.mxu0 0.0
          %1039 = vmatprep.subr.mxu0 0.0
          %1040 = vmatpush1.msra.mxu0 0.0
          %1041 = vmatprep.subr.mxu0 0.0
          %1042 = vmatpush1.msra.mxu0 0.0
          %1043 = vmatprep.subr.mxu0 0.0
          %1044 = vmatpush1.msra.mxu0 0.0
          %1045 = vmatprep.subr.mxu0 0.0
          %1046 = vmatpush1.msra.mxu0 0.0
          %1047 = vmatprep.subr.mxu0 0.0
          %1048 = vmatpush1.msra.mxu0 0.0
          %1049 = vmatprep.subr.mxu0 0.0
          %1050 = vmatpush1.msra.mxu0 0.0
          %1051 = vmatprep.subr.mxu0 0.0
          %1052 = vmatpush1.msra.mxu0 0.0
          %1053 = vmatprep.subr.mxu0 0.0
          %1054 = vmatpush1.msra.mxu0 0.0
          %1055 = vmatprep.subr.mxu0 0.0
          %1056 = vmatpush1.msra.mxu0 0.0
          %1057 = vmatprep.subr.mxu0 0.0
          %1058 = vmatpush1.msra.mxu0 0.0
          %1059 = vmatprep.subr.mxu0 0.0
          %1060 = vmatpush1.msra.mxu0 0.0
          %1061 = vmatprep.subr.mxu0 0.0
          %1062 = vmatpush1.msra.mxu0 0.0
          %1063 = vmatprep.subr.mxu0 0.0
          %1064 = vmatpush1.msra.mxu0 0.0
          %1065 = vmatprep.subr.mxu0 0.0
          %1066 = vmatpush1.msra.mxu0 0.0
          %1067 = vmatprep.subr.mxu0 0.0
          %1068 = vmatpush1.msra.mxu0 0.0
          %1069 = vmatprep.subr.mxu0 0.0
          %1070 = vmatpush1.msra.mxu0 0.0
          %1071 = vmatprep.subr.mxu0 0.0
          %1072 = vmatpush1.msra.mxu0 0.0
          %1073 = vmatprep.subr.mxu0 0.0
          %1074 = vmatpush1.msra.mxu0 0.0
          %1075 = vmatprep.subr.mxu0 0.0
          %1076 = vmatpush1.msra.mxu0 0.0
          %1077 = vmatprep.subr.mxu0 0.0
          %1078 = vmatpush1.msra.mxu0 0.0
          %1079 = vmatprep.subr.mxu0 0.0
          %1080 = vmatpush1.msra.mxu0 0.0
          %1081 = vmatprep.subr.mxu0 0.0
          %1082 = vmatpush1.msra.mxu0 0.0
          %1083 = vmatprep.subr.mxu0 0.0
          %1084 = vmatpush1.msra.mxu0 0.0
          %1085 = vmatprep.subr.mxu0 0.0
          %1086 = vmatpush1.msra.mxu0 0.0
          %1087 = vmatprep.subr.mxu0 0.0
          %1088 = vmatpush1.msra.mxu0 0.0
          %1089 = vmatprep.subr.mxu0 0.0
          %1090 = vmatpush1.msra.mxu0 0.0
          %1091 = vmatprep.subr.mxu0 0.0
          %1092 = vmatpush1.msra.mxu0 0.0
          %1093 = vmatprep.mubr.f32.mxu0 0.0
          %1094 = vmatmul.mubr.f32.gmra.mrb[0].mxu0 %v991
          %v1095 = vpop.f32.mrb[0].mxu0
          %v1096 = vadd.f32 0.0, %v1095
          %v1097 = vpop.f32.mrb[0].mxu0
          %1098 = vmatprep.mubr.f32.mxu0 0.0
          %1099 = vmatmul.mubr.f32.gmra.mrb[0].mxu0 %v994
          %v1100 = vpop.f32.mrb[0].mxu0
          %v1101 = vadd.f32 0.0, %v1100
          %v1102 = vpop.f32.mrb[0].mxu0
          %1103 = vmatprep.mubr.f32.mxu0 0.0
          %1104 = vmatmul.mubr.f32.gmra.mrb[0].mxu0 %v997
          %v1105 = vpop.f32.mrb[0].mxu0
          %v1106 = vadd.f32 0.0, %v1105
          %v1107 = vpop.f32.mrb[0].mxu0
          %1108 = vmatprep.mubr.f32.mxu0 0.0
          %1109 = vmatmul.mubr.f32.gmra.mrb[0].mxu0 %v1000
          %v1110 = vpop.f32.mrb[0].mxu0
          %v1111 = vadd.f32 0.0, %v1110
          %v1112 = vpop.f32.mrb[0].mxu0
          %1113 = vmatprep.mubr.f32.mxu0 0.0
          %1114 = vmatmul.mubr.f32.gmra.mrb[0].mxu0 %v1003
          %v1115 = vpop.f32.mrb[0].mxu0
          %v1116 = vadd.f32 0.0, %v1115
          %v1117 = vpop.f32.mrb[0].mxu0
          %1118 = vmatprep.mubr.f32.mxu0 0.0
          %1119 = vmatmul.mubr.f32.gmra.mrb[0].mxu0 %v1006
          %v1120 = vpop.f32.mrb[0].mxu0
          %v1121 = vadd.f32 0.0, %v1120
          %v1122 = vpop.f32.mrb[0].mxu0
          %1123 = vmatprep.mubr.f32.mxu0 0.0
          %1124 = vmatmul.mubr.f32.gmra.mrb[0].mxu0 %v1009
          %v1125 = vpop.f32.mrb[0].mxu0
          %v1126 = vadd.f32 0.0, %v1125
          %v1127 = vpop.f32.mrb[0].mxu0
          %1128 = vmatprep.mubr.f32.mxu0 0.0
          %1129 = vmatmul.mubr.f32.gmra.mrb[0].mxu0 %v1012
          %v1130 = vpop.f32.mrb[0].mxu0
          %v1131 = vadd.f32 0.0, %v1130
          %v1132 = vpop.f32.mrb[0].mxu0
          %1133 = vmatprep.mubr.f32.mxu0 0.0
          %1134 = vmatmul.mubr.f32.gmra.mrb[0].mxu0 %v1015
          %v1135 = vpop.f32.mrb[0].mxu0
          %v1136 = vadd.f32 0.0, %v1135
          %v1137 = vpop.f32.mrb[0].mxu0
          %1138 = vmatprep.mubr.f32.mxu0 0.0
          %1139 = vmatmul.mubr.f32.gmra.mrb[0].mxu0 %v1018
          %v1140 = vpop.f32.mrb[0].mxu0
          %v1141 = vadd.f32 0.0, %v1140
          %v1142 = vpop.f32.mrb[0].mxu0
          %1143 = vmatprep.mubr.f32.mxu0 0.0
          %1144 = vmatmul.mubr.f32.gmra.mrb[0].mxu0 %v1021
          %v1145 = vpop.f32.mrb[0].mxu0
          %v1146 = vadd.f32 0.0, %v1145
          %v1147 = vpop.f32.mrb[0].mxu0
          %1148 = vmatprep.mubr.f32.mxu0 0.0
          %1149 = vmatmul.mubr.f32.gmra.mrb[0].mxu0 %v1024
          %v1150 = vpop.f32.mrb[0].mxu0
          %v1151 = vadd.f32 0.0, %v1150
          %v1152 = vpop.f32.mrb[0].mxu0
          %1153 = vdwg.mxu0
          %v1154 = vadd.f32 %v962, %v1096
          %v1155 = vadd.f32 %v963, %v1101
          %v1156 = vadd.f32 %v964, %v1106
          %v1157 = vadd.f32 %v965, %v1111
          %v1158 = vadd.f32 %v966, %v1116
          %v1159 = vadd.f32 %v967, %v1121
          %v1160 = vadd.f32 %v968, %v1126
          %v1161 = vadd.f32 %v969, %v1131
          %v1162 = vadd.f32 %v970, %v1136
          %v1163 = vadd.f32 %v971, %v1141
          %v1164 = vadd.f32 %v972, %v1146
          %v1165 = vadd.f32 %v973, %v1151
          %s1166 = sadd.s32 %s421, 200
          %s1167 = scalar_lea.vmem %s383, %s1166
          %v1168 = vld [vmem:[%s1167] sm:$0xff]
          %v1169 = vld [vmem:[%s1167 + $0x8] sm:$0xff]
          %v1170 = vld [vmem:[%s1167 + $0x10] sm:$0xff]
          %v1171 = vld [vmem:[%s1167 + $0x18] sm:$0xff]
          %v1172 = vld [vmem:[%s1167 + $0x20] sm:$0xff]
          %v1173 = vld [vmem:[%s1167 + $0x28] sm:$0xff]
          %v1174 = vld [vmem:[%s1167 + $0x30] sm:$0xff]
          %v1175 = vld [vmem:[%s1167 + $0x38] sm:$0xff]
          %v1176 = vld [vmem:[%s1167 + $0x40] sm:$0xff]
          %v1177 = vld [vmem:[%s1167 + $0x48] sm:$0xff]
          %v1178 = vld [vmem:[%s1167 + $0x50] sm:$0xff]
          %v1179 = vld [vmem:[%s1167 + $0x58] sm:$0xff]
          %s1180 = scalar_lea.vmem %s1, 32
          %v1181 = vld [vmem:[%s1180] sm:$0x1f]
          %v1183 = vsel %vm452, %v1168, 0
          %v1186 = vsel %vm452, %v1169, 0
          %v1189 = vsel %vm452, %v1170, 0
          %v1192 = vsel %vm452, %v1171, 0
          %v1195 = vsel %vm452, %v1172, 0
          %v1198 = vsel %vm452, %v1173, 0
          %v1201 = vsel %vm452, %v1174, 0
          %v1204 = vsel %vm452, %v1175, 0
          %v1207 = vsel %vm452, %v1176, 0
          %v1210 = vsel %vm452, %v1177, 0
          %v1213 = vsel %vm452, %v1178, 0
          %v1216 = vsel %vm452, %v1179, 0
          %v1219 = vsel %vm489, %v1181, 0
          %1221 = vmatprep.subr.mxu0 0.0
          %1222 = vmatpush1.msra.mxu0 %v1219
          %1223 = vmatprep.subr.mxu0 0.0
          %1224 = vmatpush1.msra.mxu0 0.0
          %1225 = vmatprep.subr.mxu0 0.0
          %1226 = vmatpush1.msra.mxu0 0.0
          %1227 = vmatprep.subr.mxu0 0.0
          %1228 = vmatpush1.msra.mxu0 0.0
          %1229 = vmatprep.subr.mxu0 0.0
          %1230 = vmatpush1.msra.mxu0 0.0
          %1231 = vmatprep.subr.mxu0 0.0
          %1232 = vmatpush1.msra.mxu0 0.0
          %1233 = vmatprep.subr.mxu0 0.0
          %1234 = vmatpush1.msra.mxu0 0.0
          %1235 = vmatprep.subr.mxu0 0.0
          %1236 = vmatpush1.msra.mxu0 0.0
          %1237 = vmatprep.subr.mxu0 0.0
          %1238 = vmatpush1.msra.mxu0 0.0
          %1239 = vmatprep.subr.mxu0 0.0
          %1240 = vmatpush1.msra.mxu0 0.0
          %1241 = vmatprep.subr.mxu0 0.0
          %1242 = vmatpush1.msra.mxu0 0.0
          %1243 = vmatprep.subr.mxu0 0.0
          %1244 = vmatpush1.msra.mxu0 0.0
          %1245 = vmatprep.subr.mxu0 0.0
          %1246 = vmatpush1.msra.mxu0 0.0
          %1247 = vmatprep.subr.mxu0 0.0
          %1248 = vmatpush1.msra.mxu0 0.0
          %1249 = vmatprep.subr.mxu0 0.0
          %1250 = vmatpush1.msra.mxu0 0.0
          %1251 = vmatprep.subr.mxu0 0.0
          %1252 = vmatpush1.msra.mxu0 0.0
          %1253 = vmatprep.subr.mxu0 0.0
          %1254 = vmatpush1.msra.mxu0 0.0
          %1255 = vmatprep.subr.mxu0 0.0
          %1256 = vmatpush1.msra.mxu0 0.0
          %1257 = vmatprep.subr.mxu0 0.0
          %1258 = vmatpush1.msra.mxu0 0.0
          %1259 = vmatprep.subr.mxu0 0.0
          %1260 = vmatpush1.msra.mxu0 0.0
          %1261 = vmatprep.subr.mxu0 0.0
          %1262 = vmatpush1.msra.mxu0 0.0
          %1263 = vmatprep.subr.mxu0 0.0
          %1264 = vmatpush1.msra.mxu0 0.0
          %1265 = vmatprep.subr.mxu0 0.0
          %1266 = vmatpush1.msra.mxu0 0.0
          %1267 = vmatprep.subr.mxu0 0.0
          %1268 = vmatpush1.msra.mxu0 0.0
          %1269 = vmatprep.subr.mxu0 0.0
          %1270 = vmatpush1.msra.mxu0 0.0
          %1271 = vmatprep.subr.mxu0 0.0
          %1272 = vmatpush1.msra.mxu0 0.0
          %1273 = vmatprep.subr.mxu0 0.0
          %1274 = vmatpush1.msra.mxu0 0.0
          %1275 = vmatprep.subr.mxu0 0.0
          %1276 = vmatpush1.msra.mxu0 0.0
          %1277 = vmatprep.subr.mxu0 0.0
          %1278 = vmatpush1.msra.mxu0 0.0
          %1279 = vmatprep.subr.mxu0 0.0
          %1280 = vmatpush1.msra.mxu0 0.0
          %1281 = vmatprep.subr.mxu0 0.0
          %1282 = vmatpush1.msra.mxu0 0.0
          %1283 = vmatprep.subr.mxu0 0.0
          %1284 = vmatpush1.msra.mxu0 0.0
          %1285 = vmatprep.mubr.f32.mxu0 0.0
          %1286 = vmatmul.mubr.f32.gmra.mrb[0].mxu0 %v1183
          %v1287 = vpop.f32.mrb[0].mxu0
          %v1288 = vadd.f32 0.0, %v1287
          %v1289 = vpop.f32.mrb[0].mxu0
          %1290 = vmatprep.mubr.f32.mxu0 0.0
          %1291 = vmatmul.mubr.f32.gmra.mrb[0].mxu0 %v1186
          %v1292 = vpop.f32.mrb[0].mxu0
          %v1293 = vadd.f32 0.0, %v1292
          %v1294 = vpop.f32.mrb[0].mxu0
          %1295 = vmatprep.mubr.f32.mxu0 0.0
          %1296 = vmatmul.mubr.f32.gmra.mrb[0].mxu0 %v1189
          %v1297 = vpop.f32.mrb[0].mxu0
          %v1298 = vadd.f32 0.0, %v1297
          %v1299 = vpop.f32.mrb[0].mxu0
          %1300 = vmatprep.mubr.f32.mxu0 0.0
          %1301 = vmatmul.mubr.f32.gmra.mrb[0].mxu0 %v1192
          %v1302 = vpop.f32.mrb[0].mxu0
          %v1303 = vadd.f32 0.0, %v1302
          %v1304 = vpop.f32.mrb[0].mxu0
          %1305 = vmatprep.mubr.f32.mxu0 0.0
          %1306 = vmatmul.mubr.f32.gmra.mrb[0].mxu0 %v1195
          %v1307 = vpop.f32.mrb[0].mxu0
          %v1308 = vadd.f32 0.0, %v1307
          %v1309 = vpop.f32.mrb[0].mxu0
          %1310 = vmatprep.mubr.f32.mxu0 0.0
          %1311 = vmatmul.mubr.f32.gmra.mrb[0].mxu0 %v1198
          %v1312 = vpop.f32.mrb[0].mxu0
          %v1313 = vadd.f32 0.0, %v1312
          %v1314 = vpop.f32.mrb[0].mxu0
          %1315 = vmatprep.mubr.f32.mxu0 0.0
          %1316 = vmatmul.mubr.f32.gmra.mrb[0].mxu0 %v1201
          %v1317 = vpop.f32.mrb[0].mxu0
          %v1318 = vadd.f32 0.0, %v1317
          %v1319 = vpop.f32.mrb[0].mxu0
          %1320 = vmatprep.mubr.f32.mxu0 0.0
          %1321 = vmatmul.mubr.f32.gmra.mrb[0].mxu0 %v1204
          %v1322 = vpop.f32.mrb[0].mxu0
          %v1323 = vadd.f32 0.0, %v1322
          %v1324 = vpop.f32.mrb[0].mxu0
          %1325 = vmatprep.mubr.f32.mxu0 0.0
          %1326 = vmatmul.mubr.f32.gmra.mrb[0].mxu0 %v1207
          %v1327 = vpop.f32.mrb[0].mxu0
          %v1328 = vadd.f32 0.0, %v1327
          %v1329 = vpop.f32.mrb[0].mxu0
          %1330 = vmatprep.mubr.f32.mxu0 0.0
          %1331 = vmatmul.mubr.f32.gmra.mrb[0].mxu0 %v1210
          %v1332 = vpop.f32.mrb[0].mxu0
          %v1333 = vadd.f32 0.0, %v1332
          %v1334 = vpop.f32.mrb[0].mxu0
          %1335 = vmatprep.mubr.f32.mxu0 0.0
          %1336 = vmatmul.mubr.f32.gmra.mrb[0].mxu0 %v1213
          %v1337 = vpop.f32.mrb[0].mxu0
          %v1338 = vadd.f32 0.0, %v1337
          %v1339 = vpop.f32.mrb[0].mxu0
          %1340 = vmatprep.mubr.f32.mxu0 0.0
          %1341 = vmatmul.mubr.f32.gmra.mrb[0].mxu0 %v1216
          %v1342 = vpop.f32.mrb[0].mxu0
          %v1343 = vadd.f32 0.0, %v1342
          %v1344 = vpop.f32.mrb[0].mxu0
          %1345 = vdwg.mxu0
          %v1346 = vadd.f32 %v1154, %v1288
          %v1347 = vadd.f32 %v1155, %v1293
          %v1348 = vadd.f32 %v1156, %v1298
          %v1349 = vadd.f32 %v1157, %v1303
          %v1350 = vadd.f32 %v1158, %v1308
          %v1351 = vadd.f32 %v1159, %v1313
          %v1352 = vadd.f32 %v1160, %v1318
          %v1353 = vadd.f32 %v1161, %v1323
          %v1354 = vadd.f32 %v1162, %v1328
          %v1355 = vadd.f32 %v1163, %v1333
          %v1356 = vadd.f32 %v1164, %v1338
          %v1357 = vadd.f32 %v1165, %v1343
          %v1359 = vlaneseq
          %v1360 = vshrl.u32 %v1359, 7
          %v1361 = vsub.s32 0, %v1360
          %v1362 = vrot.slane %v414, %v1361
          %v1364 = vadd.f32 %v1346, %v1362
          %v1365 = vadd.f32 %v1347, %v1362
          %v1366 = vadd.f32 %v1348, %v1362
          %v1367 = vadd.f32 %v1349, %v1362
          %v1368 = vadd.f32 %v1350, %v1362
          %v1369 = vadd.f32 %v1351, %v1362
          %v1370 = vadd.f32 %v1352, %v1362
          %v1371 = vadd.f32 %v1353, %v1362
          %v1372 = vadd.f32 %v1354, %v1362
          %v1373 = vadd.f32 %v1355, %v1362
          %v1374 = vadd.f32 %v1356, %v1362
          %v1375 = vadd.f32 %v1357, %v1362
          %v1376 = vmax.f32 %v1364, 0.0
          %v1377 = vmax.f32 %v1365, 0.0
          %v1378 = vmax.f32 %v1366, 0.0
          %v1379 = vmax.f32 %v1367, 0.0
          %v1380 = vmax.f32 %v1368, 0.0
          %v1381 = vmax.f32 %v1369, 0.0
          %v1382 = vmax.f32 %v1370, 0.0
          %v1383 = vmax.f32 %v1371, 0.0
          %v1384 = vmax.f32 %v1372, 0.0
          %v1385 = vmax.f32 %v1373, 0.0
          %v1386 = vmax.f32 %v1374, 0.0
          %v1387 = vmax.f32 %v1375, 0.0
          %vm1394 = vcmask 1045504
          %v1395 = vrot.slane %v1382, 2
          %v1396 = vrot.slane %v1383, 2
          %v1397 = vsel %vm1394, %v1395, %v1396
          %v1398 = vrot.slane %v1384, 2
          %v1399 = vsel %vm1394, %v1396, %v1398
          %v1400 = vrot.slane %v1385, 2
          %v1401 = vsel %vm1394, %v1398, %v1400
          %v1402 = vrot.slane %v1386, 2
          %v1403 = vsel %vm1394, %v1400, %v1402
          %v1404 = vrot.slane %v1387, 2
          %v1405 = vsel %vm1394, %v1402, %v1404
          %v1412 = vmax.f32 %v1376, %v1397
          %v1413 = vmax.f32 %v1377, %v1399
          %v1414 = vmax.f32 %v1378, %v1401
          %v1415 = vmax.f32 %v1379, %v1403
          %v1416 = vmax.f32 %v1380, %v1405
          %v1417 = vmax.f32 %v1381, %v1404
          %vm1418 = vcmask 375808
          %v1420 = vsel %vm1418, %v399, 0
          %v1423 = vsel %vm1418, %v400, 0
          %v1426 = vsel %vm1418, %v401, 0
          %v1429 = vsel %vm1394, %v1417, 0
          %1431 = vmatprep.subr.mxu0 0.0
          %1432 = vmatpush1.msra.mxu0 %v1412
          %1433 = vmatprep.subr.mxu0 0.0
          %1434 = vmatpush1.msra.mxu0 %v1413
          %1435 = vmatprep.subr.mxu0 0.0
          %1436 = vmatpush1.msra.mxu0 %v1414
          %1437 = vmatprep.subr.mxu0 0.0
          %1438 = vmatpush1.msra.mxu0 %v1415
          %1439 = vmatprep.subr.mxu0 0.0
          %1440 = vmatpush1.msra.mxu0 %v1416
          %1441 = vmatprep.subr.mxu0 0.0
          %1442 = vmatpush1.msra.mxu0 %v1429
          %1443 = vmatprep.subr.mxu0 0.0
          %1444 = vmatpush1.msra.mxu0 0.0
          %1445 = vmatprep.subr.mxu0 0.0
          %1446 = vmatpush1.msra.mxu0 0.0
          %1447 = vmatprep.subr.mxu0 0.0
          %1448 = vmatpush1.msra.mxu0 0.0
          %1449 = vmatprep.subr.mxu0 0.0
          %1450 = vmatpush1.msra.mxu0 0.0
          %1451 = vmatprep.subr.mxu0 0.0
          %1452 = vmatpush1.msra.mxu0 0.0
          %1453 = vmatprep.subr.mxu0 0.0
          %1454 = vmatpush1.msra.mxu0 0.0
          %1455 = vmatprep.subr.mxu0 0.0
          %1456 = vmatpush1.msra.mxu0 0.0
          %1457 = vmatprep.subr.mxu0 0.0
          %1458 = vmatpush1.msra.mxu0 0.0
          %1459 = vmatprep.subr.mxu0 0.0
          %1460 = vmatpush1.msra.mxu0 0.0
          %1461 = vmatprep.subr.mxu0 0.0
          %1462 = vmatpush1.msra.mxu0 0.0
          %1463 = vmatprep.subr.mxu0 0.0
          %1464 = vmatpush1.msra.mxu0 0.0
          %1465 = vmatprep.subr.mxu0 0.0
          %1466 = vmatpush1.msra.mxu0 0.0
          %1467 = vmatprep.subr.mxu0 0.0
          %1468 = vmatpush1.msra.mxu0 0.0
          %1469 = vmatprep.subr.mxu0 0.0
          %1470 = vmatpush1.msra.mxu0 0.0
          %1471 = vmatprep.subr.mxu0 0.0
          %1472 = vmatpush1.msra.mxu0 0.0
          %1473 = vmatprep.subr.mxu0 0.0
          %1474 = vmatpush1.msra.mxu0 0.0
          %1475 = vmatprep.subr.mxu0 0.0
          %1476 = vmatpush1.msra.mxu0 0.0
          %1477 = vmatprep.subr.mxu0 0.0
          %1478 = vmatpush1.msra.mxu0 0.0
          %1479 = vmatprep.subr.mxu0 0.0
          %1480 = vmatpush1.msra.mxu0 0.0
          %1481 = vmatprep.subr.mxu0 0.0
          %1482 = vmatpush1.msra.mxu0 0.0
          %1483 = vmatprep.subr.mxu0 0.0
          %1484 = vmatpush1.msra.mxu0 0.0
          %1485 = vmatprep.subr.mxu0 0.0
          %1486 = vmatpush1.msra.mxu0 0.0
          %1487 = vmatprep.subr.mxu0 0.0
          %1488 = vmatpush1.msra.mxu0 0.0
          %1489 = vmatprep.subr.mxu0 0.0
          %1490 = vmatpush1.msra.mxu0 0.0
          %1491 = vmatprep.subr.mxu0 0.0
          %1492 = vmatpush1.msra.mxu0 0.0
          %1493 = vmatprep.subr.mxu0 0.0
          %1494 = vmatpush1.msra.mxu0 0.0
          %1495 = vmatprep.mubr.f32.mxu0 0.0
          %1496 = vmatmul.mubr.f32.gmra.mrb[0].mxu0 %v1420
          %v1497 = vpop.f32.mrb[0].mxu0
          %v1498 = vadd.f32 0.0, %v1497
          %v1499 = vpop.f32.mrb[0].mxu0
          %1500 = vmatprep.mubr.f32.mxu0 0.0
          %1501 = vmatmul.mubr.f32.gmra.mrb[0].mxu0 %v1423
          %v1502 = vpop.f32.mrb[0].mxu0
          %v1503 = vadd.f32 0.0, %v1502
          %v1504 = vpop.f32.mrb[0].mxu0
          %1505 = vmatprep.mubr.f32.mxu0 0.0
          %1506 = vmatmul.mubr.f32.gmra.mrb[0].mxu0 %v1426
          %v1507 = vpop.f32.mrb[0].mxu0
          %v1508 = vadd.f32 0.0, %v1507
          %v1509 = vpop.f32.mrb[0].mxu0
          %1510 = vdwg.mxu0
          %v1512 = vsel %vm1418, %v411, 0
          %v1515 = vsel %vm1418, %v412, 0
          %v1518 = vsel %vm1418, %v413, 0
          %1520 = vmatprep.subr.mxu0 0.0
          %1521 = vmatpush1.msra.mxu0 %v1412
          %1522 = vmatprep.subr.mxu0 0.0
          %1523 = vmatpush1.msra.mxu0 %v1413
          %1524 = vmatprep.subr.mxu0 0.0
          %1525 = vmatpush1.msra.mxu0 %v1414
          %1526 = vmatprep.subr.mxu0 0.0
          %1527 = vmatpush1.msra.mxu0 %v1415
          %1528 = vmatprep.subr.mxu0 0.0
          %1529 = vmatpush1.msra.mxu0 %v1416
          %1530 = vmatprep.subr.mxu0 0.0
          %1531 = vmatpush1.msra.mxu0 %v1429
          %1532 = vmatprep.subr.mxu0 0.0
          %1533 = vmatpush1.msra.mxu0 0.0
          %1534 = vmatprep.subr.mxu0 0.0
          %1535 = vmatpush1.msra.mxu0 0.0
          %1536 = vmatprep.subr.mxu0 0.0
          %1537 = vmatpush1.msra.mxu0 0.0
          %1538 = vmatprep.subr.mxu0 0.0
          %1539 = vmatpush1.msra.mxu0 0.0
          %1540 = vmatprep.subr.mxu0 0.0
          %1541 = vmatpush1.msra.mxu0 0.0
          %1542 = vmatprep.subr.mxu0 0.0
          %1543 = vmatpush1.msra.mxu0 0.0
          %1544 = vmatprep.subr.mxu0 0.0
          %1545 = vmatpush1.msra.mxu0 0.0
          %1546 = vmatprep.subr.mxu0 0.0
          %1547 = vmatpush1.msra.mxu0 0.0
          %1548 = vmatprep.subr.mxu0 0.0
          %1549 = vmatpush1.msra.mxu0 0.0
          %1550 = vmatprep.subr.mxu0 0.0
          %1551 = vmatpush1.msra.mxu0 0.0
          %1552 = vmatprep.subr.mxu0 0.0
          %1553 = vmatpush1.msra.mxu0 0.0
          %1554 = vmatprep.subr.mxu0 0.0
          %1555 = vmatpush1.msra.mxu0 0.0
          %1556 = vmatprep.subr.mxu0 0.0
          %1557 = vmatpush1.msra.mxu0 0.0
          %1558 = vmatprep.subr.mxu0 0.0
          %1559 = vmatpush1.msra.mxu0 0.0
          %1560 = vmatprep.subr.mxu0 0.0
          %1561 = vmatpush1.msra.mxu0 0.0
          %1562 = vmatprep.subr.mxu0 0.0
          %1563 = vmatpush1.msra.mxu0 0.0
          %1564 = vmatprep.subr.mxu0 0.0
          %1565 = vmatpush1.msra.mxu0 0.0
          %1566 = vmatprep.subr.mxu0 0.0
          %1567 = vmatpush1.msra.mxu0 0.0
          %1568 = vmatprep.subr.mxu0 0.0
          %1569 = vmatpush1.msra.mxu0 0.0
          %1570 = vmatprep.subr.mxu0 0.0
          %1571 = vmatpush1.msra.mxu0 0.0
          %1572 = vmatprep.subr.mxu0 0.0
          %1573 = vmatpush1.msra.mxu0 0.0
          %1574 = vmatprep.subr.mxu0 0.0
          %1575 = vmatpush1.msra.mxu0 0.0
          %1576 = vmatprep.subr.mxu0 0.0
          %1577 = vmatpush1.msra.mxu0 0.0
          %1578 = vmatprep.subr.mxu0 0.0
          %1579 = vmatpush1.msra.mxu0 0.0
          %1580 = vmatprep.subr.mxu0 0.0
          %1581 = vmatpush1.msra.mxu0 0.0
          %1582 = vmatprep.subr.mxu0 0.0
          %1583 = vmatpush1.msra.mxu0 0.0
          %1584 = vmatprep.mubr.f32.mxu0 0.0
          %1585 = vmatmul.mubr.f32.gmra.mrb[0].mxu0 %v1512
          %v1586 = vpop.f32.mrb[0].mxu0
          %v1587 = vadd.f32 0.0, %v1586
          %v1588 = vpop.f32.mrb[0].mxu0
          %1589 = vmatprep.mubr.f32.mxu0 0.0
          %1590 = vmatmul.mubr.f32.gmra.mrb[0].mxu0 %v1515
          %v1591 = vpop.f32.mrb[0].mxu0
          %v1592 = vadd.f32 0.0, %v1591
          %v1593 = vpop.f32.mrb[0].mxu0
          %1594 = vmatprep.mubr.f32.mxu0 0.0
          %1595 = vmatmul.mubr.f32.gmra.mrb[0].mxu0 %v1518
          %v1596 = vpop.f32.mrb[0].mxu0
          %v1597 = vadd.f32 0.0, %v1596
          %v1598 = vpop.f32.mrb[0].mxu0
          %1599 = vdwg.mxu0
          %v1600 = vmax.f32 %v1498, %v1587
          %v1601 = vmax.f32 %v1503, %v1592
          %v1602 = vmax.f32 %v1508, %v1597
          %s1603 = smul.u32 %s416, 23
          %s1604 = scalar_lea.vmem [#allocation2], %s1603
          %vm1605 = vcmask 261120
          %1606 = vst.msk [vmem:[%s1604] sm:$0xff] %vm1605, %v1600
          %1607 = vst.msk [vmem:[%s1604 + $0x8] sm:$0xff] %vm1605, %v1601
          %vm1608 = vcmask 260096
          %1609 = vst.msk [vmem:[%s1604 + $0x10] sm:$0x7f] %vm1608, %v1602
        $region69: #{net_forward.1} parent=63 // loop_footer
          %s420 = sadd.s32 1, %s416
        $region70: #{net_forward.1} parent=63 // loop_footer_branch
          %415 = sbr.rel target = $region66
        $region71: #{net_forward.1} parent=63 // loop_exit
          _
        %v1610 = vld [vmem:[%s4] sm:$0x1]
        loop: start=0, step=1, limit=9
        $region72: #{net_forward.1} parent=63 // loop_pre_header
          _
        $region73: #{net_forward.1} parent=63 // loop_header
          %s1612 = sphi 0, %s1616
          %p1613 = scmp.ge.s32.totalorder %s1612, 9
        $region74: #{net_forward.1} parent=63 // loop_header_branch
          %1615 = sbr.rel (%p1613) target = $region78
        $region75: #{net_forward.1} parent=63 // loop_body
          %s1617 = smul.u32 %s1612, 46
          %s1618 = scalar_lea.vmem [#allocation2], %s1617
          %v1619 = vld [vmem:[%s1618] sm:$0xff]
          %v1620 = vld [vmem:[%s1618 + $0x8] sm:$0xff]
          %v1621 = vld [vmem:[%s1618 + $0x10] sm:$0xff]
          %v1622 = vld [vmem:[%s1618 + $0x18] sm:$0xff]
          %v1623 = vld [vmem:[%s1618 + $0x20] sm:$0xff]
          %v1624 = vld [vmem:[%s1618 + $0x28] sm:$0x3]
          %v1625 = vld [vmem:[%s3] sm:$0xff]
          %v1626 = vld [vmem:[%s3 + $0x8] sm:$0xff]
          %v1627 = vld [vmem:[%s3 + $0x10] sm:$0xff]
          %v1628 = vld [vmem:[%s3 + $0x18] sm:$0xff]
          %s1629 = sadd.s32 %s1617, 1
          %s1630 = scalar_lea.vmem [#allocation2], %s1629
          %v1631 = vld [vmem:[%s1630] sm:$0xff]
          %v1632 = vld [vmem:[%s1630 + $0x8] sm:$0xff]
          %v1633 = vld [vmem:[%s1630 + $0x10] sm:$0xff]
          %v1634 = vld [vmem:[%s1630 + $0x18] sm:$0xff]
          %v1635 = vld [vmem:[%s1630 + $0x20] sm:$0xff]
          %v1636 = vld [vmem:[%s1630 + $0x28] sm:$0x3]
          %s1637 = scalar_lea.vmem %s3, 32
          %v1638 = vld [vmem:[%s1637] sm:$0xff]
          %v1639 = vld [vmem:[%s1637 + $0x8] sm:$0xff]
          %v1640 = vld [vmem:[%s1637 + $0x10] sm:$0xff]
          %v1641 = vld [vmem:[%s1637 + $0x18] sm:$0xff]
          %vm1642 = vcmask 261120
          %v1644 = vsel %vm1642, %v1631, 0
          %v1647 = vsel %vm1642, %v1632, 0
          %v1650 = vsel %vm1642, %v1633, 0
          %v1653 = vsel %vm1642, %v1634, 0
          %v1656 = vsel %vm1642, %v1635, 0
          %v1659 = vsel %vm1642, %v1636, 0
          %1661 = vmatprep.subr.mxu0 0.0
          %1662 = vmatpush1.msra.mxu0 %v1638
          %1663 = vmatprep.subr.mxu0 0.0
          %1664 = vmatpush1.msra.mxu0 %v1639
          %1665 = vmatprep.subr.mxu0 0.0
          %1666 = vmatpush1.msra.mxu0 %v1640
          %1667 = vmatprep.subr.mxu0 0.0
          %1668 = vmatpush1.msra.mxu0 %v1641
          %1669 = vmatprep.subr.mxu0 0.0
          %1670 = vmatpush1.msra.mxu0 0.0
          %1671 = vmatprep.subr.mxu0 0.0
          %1672 = vmatpush1.msra.mxu0 0.0
          %1673 = vmatprep.subr.mxu0 0.0
          %1674 = vmatpush1.msra.mxu0 0.0
          %1675 = vmatprep.subr.mxu0 0.0
          %1676 = vmatpush1.msra.mxu0 0.0
          %1677 = vmatprep.subr.mxu0 0.0
          %1678 = vmatpush1.msra.mxu0 0.0
          %1679 = vmatprep.subr.mxu0 0.0
          %1680 = vmatpush1.msra.mxu0 0.0
          %1681 = vmatprep.subr.mxu0 0.0
          %1682 = vmatpush1.msra.mxu0 0.0
          %1683 = vmatprep.subr.mxu0 0.0
          %1684 = vmatpush1.msra.mxu0 0.0
          %1685 = vmatprep.subr.mxu0 0.0
          %1686 = vmatpush1.msra.mxu0 0.0
          %1687 = vmatprep.subr.mxu0 0.0
          %1688 = vmatpush1.msra.mxu0 0.0
          %1689 = vmatprep.subr.mxu0 0.0
          %1690 = vmatpush1.msra.mxu0 0.0
          %1691 = vmatprep.subr.mxu0 0.0
          %1692 = vmatpush1.msra.mxu0 0.0
          %1693 = vmatprep.subr.mxu0 0.0
          %1694 = vmatpush1.msra.mxu0 0.0
          %1695 = vmatprep.subr.mxu0 0.0
          %1696 = vmatpush1.msra.mxu0 0.0
          %1697 = vmatprep.subr.mxu0 0.0
          %1698 = vmatpush1.msra.mxu0 0.0
          %1699 = vmatprep.subr.mxu0 0.0
          %1700 = vmatpush1.msra.mxu0 0.0
          %1701 = vmatprep.subr.mxu0 0.0
          %1702 = vmatpush1.msra.mxu0 0.0
          %1703 = vmatprep.subr.mxu0 0.0
          %1704 = vmatpush1.msra.mxu0 0.0
          %1705 = vmatprep.subr.mxu0 0.0
          %1706 = vmatpush1.msra.mxu0 0.0
          %1707 = vmatprep.subr.mxu0 0.0
          %1708 = vmatpush1.msra.mxu0 0.0
          %1709 = vmatprep.subr.mxu0 0.0
          %1710 = vmatpush1.msra.mxu0 0.0
          %1711 = vmatprep.subr.mxu0 0.0
          %1712 = vmatpush1.msra.mxu0 0.0
          %1713 = vmatprep.subr.mxu0 0.0
          %1714 = vmatpush1.msra.mxu0 0.0
          %1715 = vmatprep.subr.mxu0 0.0
          %1716 = vmatpush1.msra.mxu0 0.0
          %1717 = vmatprep.subr.mxu0 0.0
          %1718 = vmatpush1.msra.mxu0 0.0
          %1719 = vmatprep.subr.mxu0 0.0
          %1720 = vmatpush1.msra.mxu0 0.0
          %1721 = vmatprep.subr.mxu0 0.0
          %1722 = vmatpush1.msra.mxu0 0.0
          %1723 = vmatprep.subr.mxu0 0.0
          %1724 = vmatpush1.msra.mxu0 0.0
          %1725 = vmatprep.mubr.f32.mxu0 0.0
          %1726 = vmatmul.mubr.f32.gmra.mrb[0].mxu0 %v1644
          %v1727 = vpop.f32.mrb[0].mxu0
          %v1728 = vadd.f32 0.0, %v1727
          %v1729 = vpop.f32.mrb[0].mxu0
          %1730 = vmatprep.mubr.f32.mxu0 0.0
          %1731 = vmatmul.mubr.f32.gmra.mrb[0].mxu0 %v1647
          %v1732 = vpop.f32.mrb[0].mxu0
          %v1733 = vadd.f32 0.0, %v1732
          %v1734 = vpop.f32.mrb[0].mxu0
          %1735 = vmatprep.mubr.f32.mxu0 0.0
          %1736 = vmatmul.mubr.f32.gmra.mrb[0].mxu0 %v1650
          %v1737 = vpop.f32.mrb[0].mxu0
          %v1738 = vadd.f32 0.0, %v1737
          %v1739 = vpop.f32.mrb[0].mxu0
          %1740 = vmatprep.mubr.f32.mxu0 0.0
          %1741 = vmatmul.mubr.f32.gmra.mrb[0].mxu0 %v1653
          %v1742 = vpop.f32.mrb[0].mxu0
          %v1743 = vadd.f32 0.0, %v1742
          %v1744 = vpop.f32.mrb[0].mxu0
          %1745 = vmatprep.mubr.f32.mxu0 0.0
          %1746 = vmatmul.mubr.f32.gmra.mrb[0].mxu0 %v1656
          %v1747 = vpop.f32.mrb[0].mxu0
          %v1748 = vadd.f32 0.0, %v1747
          %v1749 = vpop.f32.mrb[0].mxu0
          %1750 = vmatprep.mubr.f32.mxu0 0.0
          %1751 = vmatmul.mubr.f32.gmra.mrb[0].mxu0 %v1659
          %v1752 = vpop.f32.mrb[0].mxu0
          %v1753 = vadd.f32 0.0, %v1752
          %v1754 = vpop.f32.mrb[0].mxu0
          %1755 = vdwg.mxu0
          %v1757 = vsel %vm1642, %v1619, 0
          %v1760 = vsel %vm1642, %v1620, 0
          %v1763 = vsel %vm1642, %v1621, 0
          %v1766 = vsel %vm1642, %v1622, 0
          %v1769 = vsel %vm1642, %v1623, 0
          %v1772 = vsel %vm1642, %v1624, 0
          %1774 = vmatprep.subr.mxu0 0.0
          %1775 = vmatpush1.msra.mxu0 %v1625
          %1776 = vmatprep.subr.mxu0 0.0
          %1777 = vmatpush1.msra.mxu0 %v1626
          %1778 = vmatprep.subr.mxu0 0.0
          %1779 = vmatpush1.msra.mxu0 %v1627
          %1780 = vmatprep.subr.mxu0 0.0
          %1781 = vmatpush1.msra.mxu0 %v1628
          %1782 = vmatprep.subr.mxu0 0.0
          %1783 = vmatpush1.msra.mxu0 0.0
          %1784 = vmatprep.subr.mxu0 0.0
          %1785 = vmatpush1.msra.mxu0 0.0
          %1786 = vmatprep.subr.mxu0 0.0
          %1787 = vmatpush1.msra.mxu0 0.0
          %1788 = vmatprep.subr.mxu0 0.0
          %1789 = vmatpush1.msra.mxu0 0.0
          %1790 = vmatprep.subr.mxu0 0.0
          %1791 = vmatpush1.msra.mxu0 0.0
          %1792 = vmatprep.subr.mxu0 0.0
          %1793 = vmatpush1.msra.mxu0 0.0
          %1794 = vmatprep.subr.mxu0 0.0
          %1795 = vmatpush1.msra.mxu0 0.0
          %1796 = vmatprep.subr.mxu0 0.0
          %1797 = vmatpush1.msra.mxu0 0.0
          %1798 = vmatprep.subr.mxu0 0.0
          %1799 = vmatpush1.msra.mxu0 0.0
          %1800 = vmatprep.subr.mxu0 0.0
          %1801 = vmatpush1.msra.mxu0 0.0
          %1802 = vmatprep.subr.mxu0 0.0
          %1803 = vmatpush1.msra.mxu0 0.0
          %1804 = vmatprep.subr.mxu0 0.0
          %1805 = vmatpush1.msra.mxu0 0.0
          %1806 = vmatprep.subr.mxu0 0.0
          %1807 = vmatpush1.msra.mxu0 0.0
          %1808 = vmatprep.subr.mxu0 0.0
          %1809 = vmatpush1.msra.mxu0 0.0
          %1810 = vmatprep.subr.mxu0 0.0
          %1811 = vmatpush1.msra.mxu0 0.0
          %1812 = vmatprep.subr.mxu0 0.0
          %1813 = vmatpush1.msra.mxu0 0.0
          %1814 = vmatprep.subr.mxu0 0.0
          %1815 = vmatpush1.msra.mxu0 0.0
          %1816 = vmatprep.subr.mxu0 0.0
          %1817 = vmatpush1.msra.mxu0 0.0
          %1818 = vmatprep.subr.mxu0 0.0
          %1819 = vmatpush1.msra.mxu0 0.0
          %1820 = vmatprep.subr.mxu0 0.0
          %1821 = vmatpush1.msra.mxu0 0.0
          %1822 = vmatprep.subr.mxu0 0.0
          %1823 = vmatpush1.msra.mxu0 0.0
          %1824 = vmatprep.subr.mxu0 0.0
          %1825 = vmatpush1.msra.mxu0 0.0
          %1826 = vmatprep.subr.mxu0 0.0
          %1827 = vmatpush1.msra.mxu0 0.0
          %1828 = vmatprep.subr.mxu0 0.0
          %1829 = vmatpush1.msra.mxu0 0.0
          %1830 = vmatprep.subr.mxu0 0.0
          %1831 = vmatpush1.msra.mxu0 0.0
          %1832 = vmatprep.subr.mxu0 0.0
          %1833 = vmatpush1.msra.mxu0 0.0
          %1834 = vmatprep.subr.mxu0 0.0
          %1835 = vmatpush1.msra.mxu0 0.0
          %1836 = vmatprep.subr.mxu0 0.0
          %1837 = vmatpush1.msra.mxu0 0.0
          %1838 = vmatprep.mubr.f32.mxu0 0.0
          %1839 = vmatmul.mubr.f32.gmra.mrb[0].mxu0 %v1757
          %v1840 = vpop.f32.mrb[0].mxu0
          %v1841 = vadd.f32 %v1728, %v1840
          %v1842 = vpop.f32.mrb[0].mxu0
          %1843 = vmatprep.mubr.f32.mxu0 0.0
          %1844 = vmatmul.mubr.f32.gmra.mrb[0].mxu0 %v1760
          %v1845 = vpop.f32.mrb[0].mxu0
          %v1846 = vadd.f32 %v1733, %v1845
          %v1847 = vpop.f32.mrb[0].mxu0
          %1848 = vmatprep.mubr.f32.mxu0 0.0
          %1849 = vmatmul.mubr.f32.gmra.mrb[0].mxu0 %v1763
          %v1850 = vpop.f32.mrb[0].mxu0
          %v1851 = vadd.f32 %v1738, %v1850
          %v1852 = vpop.f32.mrb[0].mxu0
          %1853 = vmatprep.mubr.f32.mxu0 0.0
          %1854 = vmatmul.mubr.f32.gmra.mrb[0].mxu0 %v1766
          %v1855 = vpop.f32.mrb[0].mxu0
          %v1856 = vadd.f32 %v1743, %v1855
          %v1857 = vpop.f32.mrb[0].mxu0
          %1858 = vmatprep.mubr.f32.mxu0 0.0
          %1859 = vmatmul.mubr.f32.gmra.mrb[0].mxu0 %v1769
          %v1860 = vpop.f32.mrb[0].mxu0
          %v1861 = vadd.f32 %v1748, %v1860
          %v1862 = vpop.f32.mrb[0].mxu0
          %1863 = vmatprep.mubr.f32.mxu0 0.0
          %1864 = vmatmul.mubr.f32.gmra.mrb[0].mxu0 %v1772
          %v1865 = vpop.f32.mrb[0].mxu0
          %v1866 = vadd.f32 %v1753, %v1865
          %v1867 = vpop.f32.mrb[0].mxu0
          %1868 = vdwg.mxu0
          %s1869 = sadd.s32 %s1617, 2
          %s1870 = scalar_lea.vmem [#allocation2], %s1869
          %v1871 = vld [vmem:[%s1870] sm:$0xff]
          %v1872 = vld [vmem:[%s1870 + $0x8] sm:$0xff]
          %v1873 = vld [vmem:[%s1870 + $0x10] sm:$0xff]
          %v1874 = vld [vmem:[%s1870 + $0x18] sm:$0xff]
          %v1875 = vld [vmem:[%s1870 + $0x20] sm:$0xff]
          %v1876 = vld [vmem:[%s1870 + $0x28] sm:$0x3]
          %s1877 = scalar_lea.vmem %s3, 64
          %v1878 = vld [vmem:[%s1877] sm:$0xff]
          %v1879 = vld [vmem:[%s1877 + $0x8] sm:$0xff]
          %v1880 = vld [vmem:[%s1877 + $0x10] sm:$0xff]
          %v1881 = vld [vmem:[%s1877 + $0x18] sm:$0xff]
          %v1883 = vsel %vm1642, %v1871, 0
          %v1886 = vsel %vm1642, %v1872, 0
          %v1889 = vsel %vm1642, %v1873, 0
          %v1892 = vsel %vm1642, %v1874, 0
          %v1895 = vsel %vm1642, %v1875, 0
          %v1898 = vsel %vm1642, %v1876, 0
          %1900 = vmatprep.subr.mxu0 0.0
          %1901 = vmatpush1.msra.mxu0 %v1878
          %1902 = vmatprep.subr.mxu0 0.0
          %1903 = vmatpush1.msra.mxu0 %v1879
          %1904 = vmatprep.subr.mxu0 0.0
          %1905 = vmatpush1.msra.mxu0 %v1880
          %1906 = vmatprep.subr.mxu0 0.0
          %1907 = vmatpush1.msra.mxu0 %v1881
          %1908 = vmatprep.subr.mxu0 0.0
          %1909 = vmatpush1.msra.mxu0 0.0
          %1910 = vmatprep.subr.mxu0 0.0
          %1911 = vmatpush1.msra.mxu0 0.0
          %1912 = vmatprep.subr.mxu0 0.0
          %1913 = vmatpush1.msra.mxu0 0.0
          %1914 = vmatprep.subr.mxu0 0.0
          %1915 = vmatpush1.msra.mxu0 0.0
          %1916 = vmatprep.subr.mxu0 0.0
          %1917 = vmatpush1.msra.mxu0 0.0
          %1918 = vmatprep.subr.mxu0 0.0
          %1919 = vmatpush1.msra.mxu0 0.0
          %1920 = vmatprep.subr.mxu0 0.0
          %1921 = vmatpush1.msra.mxu0 0.0
          %1922 = vmatprep.subr.mxu0 0.0
          %1923 = vmatpush1.msra.mxu0 0.0
          %1924 = vmatprep.subr.mxu0 0.0
          %1925 = vmatpush1.msra.mxu0 0.0
          %1926 = vmatprep.subr.mxu0 0.0
          %1927 = vmatpush1.msra.mxu0 0.0
          %1928 = vmatprep.subr.mxu0 0.0
          %1929 = vmatpush1.msra.mxu0 0.0
          %1930 = vmatprep.subr.mxu0 0.0
          %1931 = vmatpush1.msra.mxu0 0.0
          %1932 = vmatprep.subr.mxu0 0.0
          %1933 = vmatpush1.msra.mxu0 0.0
          %1934 = vmatprep.subr.mxu0 0.0
          %1935 = vmatpush1.msra.mxu0 0.0
          %1936 = vmatprep.subr.mxu0 0.0
          %1937 = vmatpush1.msra.mxu0 0.0
          %1938 = vmatprep.subr.mxu0 0.0
          %1939 = vmatpush1.msra.mxu0 0.0
          %1940 = vmatprep.subr.mxu0 0.0
          %1941 = vmatpush1.msra.mxu0 0.0
          %1942 = vmatprep.subr.mxu0 0.0
          %1943 = vmatpush1.msra.mxu0 0.0
          %1944 = vmatprep.subr.mxu0 0.0
          %1945 = vmatpush1.msra.mxu0 0.0
          %1946 = vmatprep.subr.mxu0 0.0
          %1947 = vmatpush1.msra.mxu0 0.0
          %1948 = vmatprep.subr.mxu0 0.0
          %1949 = vmatpush1.msra.mxu0 0.0
          %1950 = vmatprep.subr.mxu0 0.0
          %1951 = vmatpush1.msra.mxu0 0.0
          %1952 = vmatprep.subr.mxu0 0.0
          %1953 = vmatpush1.msra.mxu0 0.0
          %1954 = vmatprep.subr.mxu0 0.0
          %1955 = vmatpush1.msra.mxu0 0.0
          %1956 = vmatprep.subr.mxu0 0.0
          %1957 = vmatpush1.msra.mxu0 0.0
          %1958 = vmatprep.subr.mxu0 0.0
          %1959 = vmatpush1.msra.mxu0 0.0
          %1960 = vmatprep.subr.mxu0 0.0
          %1961 = vmatpush1.msra.mxu0 0.0
          %1962 = vmatprep.subr.mxu0 0.0
          %1963 = vmatpush1.msra.mxu0 0.0
          %1964 = vmatprep.mubr.f32.mxu0 0.0
          %1965 = vmatmul.mubr.f32.gmra.mrb[0].mxu0 %v1883
          %v1966 = vpop.f32.mrb[0].mxu0
          %v1967 = vadd.f32 0.0, %v1966
          %v1968 = vpop.f32.mrb[0].mxu0
          %1969 = vmatprep.mubr.f32.mxu0 0.0
          %1970 = vmatmul.mubr.f32.gmra.mrb[0].mxu0 %v1886
          %v1971 = vpop.f32.mrb[0].mxu0
          %v1972 = vadd.f32 0.0, %v1971
          %v1973 = vpop.f32.mrb[0].mxu0
          %1974 = vmatprep.mubr.f32.mxu0 0.0
          %1975 = vmatmul.mubr.f32.gmra.mrb[0].mxu0 %v1889
          %v1976 = vpop.f32.mrb[0].mxu0
          %v1977 = vadd.f32 0.0, %v1976
          %v1978 = vpop.f32.mrb[0].mxu0
          %1979 = vmatprep.mubr.f32.mxu0 0.0
          %1980 = vmatmul.mubr.f32.gmra.mrb[0].mxu0 %v1892
          %v1981 = vpop.f32.mrb[0].mxu0
          %v1982 = vadd.f32 0.0, %v1981
          %v1983 = vpop.f32.mrb[0].mxu0
          %1984 = vmatprep.mubr.f32.mxu0 0.0
          %1985 = vmatmul.mubr.f32.gmra.mrb[0].mxu0 %v1895
          %v1986 = vpop.f32.mrb[0].mxu0
          %v1987 = vadd.f32 0.0, %v1986
          %v1988 = vpop.f32.mrb[0].mxu0
          %1989 = vmatprep.mubr.f32.mxu0 0.0
          %1990 = vmatmul.mubr.f32.gmra.mrb[0].mxu0 %v1898
          %v1991 = vpop.f32.mrb[0].mxu0
          %v1992 = vadd.f32 0.0, %v1991
          %v1993 = vpop.f32.mrb[0].mxu0
          %1994 = vdwg.mxu0
          %v1995 = vadd.f32 %v1841, %v1967
          %v1996 = vadd.f32 %v1846, %v1972
          %v1997 = vadd.f32 %v1851, %v1977
          %v1998 = vadd.f32 %v1856, %v1982
          %v1999 = vadd.f32 %v1861, %v1987
          %v2000 = vadd.f32 %v1866, %v1992
          %s2001 = sadd.s32 %s1617, 3
          %s2002 = scalar_lea.vmem [#allocation2], %s2001
          %v2003 = vld [vmem:[%s2002] sm:$0xff]
          %v2004 = vld [vmem:[%s2002 + $0x8] sm:$0xff]
          %v2005 = vld [vmem:[%s2002 + $0x10] sm:$0xff]
          %v2006 = vld [vmem:[%s2002 + $0x18] sm:$0xff]
          %v2007 = vld [vmem:[%s2002 + $0x20] sm:$0xff]
          %v2008 = vld [vmem:[%s2002 + $0x28] sm:$0x3]
          %s2009 = scalar_lea.vmem %s3, 96
          %v2010 = vld [vmem:[%s2009] sm:$0xff]
          %v2011 = vld [vmem:[%s2009 + $0x8] sm:$0xff]
          %v2012 = vld [vmem:[%s2009 + $0x10] sm:$0xff]
          %v2013 = vld [vmem:[%s2009 + $0x18] sm:$0xff]
          %v2015 = vsel %vm1642, %v2003, 0
          %v2018 = vsel %vm1642, %v2004, 0
          %v2021 = vsel %vm1642, %v2005, 0
          %v2024 = vsel %vm1642, %v2006, 0
          %v2027 = vsel %vm1642, %v2007, 0
          %v2030 = vsel %vm1642, %v2008, 0
          %2032 = vmatprep.subr.mxu0 0.0
          %2033 = vmatpush1.msra.mxu0 %v2010
          %2034 = vmatprep.subr.mxu0 0.0
          %2035 = vmatpush1.msra.mxu0 %v2011
          %2036 = vmatprep.subr.mxu0 0.0
          %2037 = vmatpush1.msra.mxu0 %v2012
          %2038 = vmatprep.subr.mxu0 0.0
          %2039 = vmatpush1.msra.mxu0 %v2013
          %2040 = vmatprep.subr.mxu0 0.0
          %2041 = vmatpush1.msra.mxu0 0.0
          %2042 = vmatprep.subr.mxu0 0.0
          %2043 = vmatpush1.msra.mxu0 0.0
          %2044 = vmatprep.subr.mxu0 0.0
          %2045 = vmatpush1.msra.mxu0 0.0
          %2046 = vmatprep.subr.mxu0 0.0
          %2047 = vmatpush1.msra.mxu0 0.0
          %2048 = vmatprep.subr.mxu0 0.0
          %2049 = vmatpush1.msra.mxu0 0.0
          %2050 = vmatprep.subr.mxu0 0.0
          %2051 = vmatpush1.msra.mxu0 0.0
          %2052 = vmatprep.subr.mxu0 0.0
          %2053 = vmatpush1.msra.mxu0 0.0
          %2054 = vmatprep.subr.mxu0 0.0
          %2055 = vmatpush1.msra.mxu0 0.0
          %2056 = vmatprep.subr.mxu0 0.0
          %2057 = vmatpush1.msra.mxu0 0.0
          %2058 = vmatprep.subr.mxu0 0.0
          %2059 = vmatpush1.msra.mxu0 0.0
          %2060 = vmatprep.subr.mxu0 0.0
          %2061 = vmatpush1.msra.mxu0 0.0
          %2062 = vmatprep.subr.mxu0 0.0
          %2063 = vmatpush1.msra.mxu0 0.0
          %2064 = vmatprep.subr.mxu0 0.0
          %2065 = vmatpush1.msra.mxu0 0.0
          %2066 = vmatprep.subr.mxu0 0.0
          %2067 = vmatpush1.msra.mxu0 0.0
          %2068 = vmatprep.subr.mxu0 0.0
          %2069 = vmatpush1.msra.mxu0 0.0
          %2070 = vmatprep.subr.mxu0 0.0
          %2071 = vmatpush1.msra.mxu0 0.0
          %2072 = vmatprep.subr.mxu0 0.0
          %2073 = vmatpush1.msra.mxu0 0.0
          %2074 = vmatprep.subr.mxu0 0.0
          %2075 = vmatpush1.msra.mxu0 0.0
          %2076 = vmatprep.subr.mxu0 0.0
          %2077 = vmatpush1.msra.mxu0 0.0
          %2078 = vmatprep.subr.mxu0 0.0
          %2079 = vmatpush1.msra.mxu0 0.0
          %2080 = vmatprep.subr.mxu0 0.0
          %2081 = vmatpush1.msra.mxu0 0.0
          %2082 = vmatprep.subr.mxu0 0.0
          %2083 = vmatpush1.msra.mxu0 0.0
          %2084 = vmatprep.subr.mxu0 0.0
          %2085 = vmatpush1.msra.mxu0 0.0
          %2086 = vmatprep.subr.mxu0 0.0
          %2087 = vmatpush1.msra.mxu0 0.0
          %2088 = vmatprep.subr.mxu0 0.0
          %2089 = vmatpush1.msra.mxu0 0.0
          %2090 = vmatprep.subr.mxu0 0.0
          %2091 = vmatpush1.msra.mxu0 0.0
          %2092 = vmatprep.subr.mxu0 0.0
          %2093 = vmatpush1.msra.mxu0 0.0
          %2094 = vmatprep.subr.mxu0 0.0
          %2095 = vmatpush1.msra.mxu0 0.0
          %2096 = vmatprep.mubr.f32.mxu0 0.0
          %2097 = vmatmul.mubr.f32.gmra.mrb[0].mxu0 %v2015
          %v2098 = vpop.f32.mrb[0].mxu0
          %v2099 = vadd.f32 0.0, %v2098
          %v2100 = vpop.f32.mrb[0].mxu0
          %2101 = vmatprep.mubr.f32.mxu0 0.0
          %2102 = vmatmul.mubr.f32.gmra.mrb[0].mxu0 %v2018
          %v2103 = vpop.f32.mrb[0].mxu0
          %v2104 = vadd.f32 0.0, %v2103
          %v2105 = vpop.f32.mrb[0].mxu0
          %2106 = vmatprep.mubr.f32.mxu0 0.0
          %2107 = vmatmul.mubr.f32.gmra.mrb[0].mxu0 %v2021
          %v2108 = vpop.f32.mrb[0].mxu0
          %v2109 = vadd.f32 0.0, %v2108
          %v2110 = vpop.f32.mrb[0].mxu0
          %2111 = vmatprep.mubr.f32.mxu0 0.0
          %2112 = vmatmul.mubr.f32.gmra.mrb[0].mxu0 %v2024
          %v2113 = vpop.f32.mrb[0].mxu0
          %v2114 = vadd.f32 0.0, %v2113
          %v2115 = vpop.f32.mrb[0].mxu0
          %2116 = vmatprep.mubr.f32.mxu0 0.0
          %2117 = vmatmul.mubr.f32.gmra.mrb[0].mxu0 %v2027
          %v2118 = vpop.f32.mrb[0].mxu0
          %v2119 = vadd.f32 0.0, %v2118
          %v2120 = vpop.f32.mrb[0].mxu0
          %2121 = vmatprep.mubr.f32.mxu0 0.0
          %2122 = vmatmul.mubr.f32.gmra.mrb[0].mxu0 %v2030
          %v2123 = vpop.f32.mrb[0].mxu0
          %v2124 = vadd.f32 0.0, %v2123
          %v2125 = vpop.f32.mrb[0].mxu0
          %2126 = vdwg.mxu0
          %v2127 = vadd.f32 %v1995, %v2099
          %v2128 = vadd.f32 %v1996, %v2104
          %v2129 = vadd.f32 %v1997, %v2109
          %v2130 = vadd.f32 %v1998, %v2114
          %v2131 = vadd.f32 %v1999, %v2119
          %v2132 = vadd.f32 %v2000, %v2124
          %s2133 = sadd.s32 %s1617, 4
          %s2134 = scalar_lea.vmem [#allocation2], %s2133
          %v2135 = vld [vmem:[%s2134] sm:$0xff]
          %v2136 = vld [vmem:[%s2134 + $0x8] sm:$0xff]
          %v2137 = vld [vmem:[%s2134 + $0x10] sm:$0xff]
          %v2138 = vld [vmem:[%s2134 + $0x18] sm:$0xff]
          %v2139 = vld [vmem:[%s2134 + $0x20] sm:$0xff]
          %v2140 = vld [vmem:[%s2134 + $0x28] sm:$0x3]
          %s2141 = scalar_lea.vmem %s3, 128
          %v2142 = vld [vmem:[%s2141] sm:$0xff]
          %v2143 = vld [vmem:[%s2141 + $0x8] sm:$0xff]
          %v2144 = vld [vmem:[%s2141 + $0x10] sm:$0xff]
          %v2145 = vld [vmem:[%s2141 + $0x18] sm:$0xff]
          %v2147 = vsel %vm1642, %v2135, 0
          %v2150 = vsel %vm1642, %v2136, 0
          %v2153 = vsel %vm1642, %v2137, 0
          %v2156 = vsel %vm1642, %v2138, 0
          %v2159 = vsel %vm1642, %v2139, 0
          %v2162 = vsel %vm1642, %v2140, 0
          %2164 = vmatprep.subr.mxu0 0.0
          %2165 = vmatpush1.msra.mxu0 %v2142
          %2166 = vmatprep.subr.mxu0 0.0
          %2167 = vmatpush1.msra.mxu0 %v2143
          %2168 = vmatprep.subr.mxu0 0.0
          %2169 = vmatpush1.msra.mxu0 %v2144
          %2170 = vmatprep.subr.mxu0 0.0
          %2171 = vmatpush1.msra.mxu0 %v2145
          %2172 = vmatprep.subr.mxu0 0.0
          %2173 = vmatpush1.msra.mxu0 0.0
          %2174 = vmatprep.subr.mxu0 0.0
          %2175 = vmatpush1.msra.mxu0 0.0
          %2176 = vmatprep.subr.mxu0 0.0
          %2177 = vmatpush1.msra.mxu0 0.0
          %2178 = vmatprep.subr.mxu0 0.0
          %2179 = vmatpush1.msra.mxu0 0.0
          %2180 = vmatprep.subr.mxu0 0.0
          %2181 = vmatpush1.msra.mxu0 0.0
          %2182 = vmatprep.subr.mxu0 0.0
          %2183 = vmatpush1.msra.mxu0 0.0
          %2184 = vmatprep.subr.mxu0 0.0
          %2185 = vmatpush1.msra.mxu0 0.0
          %2186 = vmatprep.subr.mxu0 0.0
          %2187 = vmatpush1.msra.mxu0 0.0
          %2188 = vmatprep.subr.mxu0 0.0
          %2189 = vmatpush1.msra.mxu0 0.0
          %2190 = vmatprep.subr.mxu0 0.0
          %2191 = vmatpush1.msra.mxu0 0.0
          %2192 = vmatprep.subr.mxu0 0.0
          %2193 = vmatpush1.msra.mxu0 0.0
          %2194 = vmatprep.subr.mxu0 0.0
          %2195 = vmatpush1.msra.mxu0 0.0
          %2196 = vmatprep.subr.mxu0 0.0
          %2197 = vmatpush1.msra.mxu0 0.0
          %2198 = vmatprep.subr.mxu0 0.0
          %2199 = vmatpush1.msra.mxu0 0.0
          %2200 = vmatprep.subr.mxu0 0.0
          %2201 = vmatpush1.msra.mxu0 0.0
          %2202 = vmatprep.subr.mxu0 0.0
          %2203 = vmatpush1.msra.mxu0 0.0
          %2204 = vmatprep.subr.mxu0 0.0
          %2205 = vmatpush1.msra.mxu0 0.0
          %2206 = vmatprep.subr.mxu0 0.0
          %2207 = vmatpush1.msra.mxu0 0.0
          %2208 = vmatprep.subr.mxu0 0.0
          %2209 = vmatpush1.msra.mxu0 0.0
          %2210 = vmatprep.subr.mxu0 0.0
          %2211 = vmatpush1.msra.mxu0 0.0
          %2212 = vmatprep.subr.mxu0 0.0
          %2213 = vmatpush1.msra.mxu0 0.0
          %2214 = vmatprep.subr.mxu0 0.0
          %2215 = vmatpush1.msra.mxu0 0.0
          %2216 = vmatprep.subr.mxu0 0.0
          %2217 = vmatpush1.msra.mxu0 0.0
          %2218 = vmatprep.subr.mxu0 0.0
          %2219 = vmatpush1.msra.mxu0 0.0
          %2220 = vmatprep.subr.mxu0 0.0
          %2221 = vmatpush1.msra.mxu0 0.0
          %2222 = vmatprep.subr.mxu0 0.0
          %2223 = vmatpush1.msra.mxu0 0.0
          %2224 = vmatprep.subr.mxu0 0.0
          %2225 = vmatpush1.msra.mxu0 0.0
          %2226 = vmatprep.subr.mxu0 0.0
          %2227 = vmatpush1.msra.mxu0 0.0
          %2228 = vmatprep.mubr.f32.mxu0 0.0
          %2229 = vmatmul.mubr.f32.gmra.mrb[0].mxu0 %v2147
          %v2230 = vpop.f32.mrb[0].mxu0
          %v2231 = vadd.f32 0.0, %v2230
          %v2232 = vpop.f32.mrb[0].mxu0
          %2233 = vmatprep.mubr.f32.mxu0 0.0
          %2234 = vmatmul.mubr.f32.gmra.mrb[0].mxu0 %v2150
          %v2235 = vpop.f32.mrb[0].mxu0
          %v2236 = vadd.f32 0.0, %v2235
          %v2237 = vpop.f32.mrb[0].mxu0
          %2238 = vmatprep.mubr.f32.mxu0 0.0
          %2239 = vmatmul.mubr.f32.gmra.mrb[0].mxu0 %v2153
          %v2240 = vpop.f32.mrb[0].mxu0
          %v2241 = vadd.f32 0.0, %v2240
          %v2242 = vpop.f32.mrb[0].mxu0
          %2243 = vmatprep.mubr.f32.mxu0 0.0
          %2244 = vmatmul.mubr.f32.gmra.mrb[0].mxu0 %v2156
          %v2245 = vpop.f32.mrb[0].mxu0
          %v2246 = vadd.f32 0.0, %v2245
          %v2247 = vpop.f32.mrb[0].mxu0
          %2248 = vmatprep.mubr.f32.mxu0 0.0
          %2249 = vmatmul.mubr.f32.gmra.mrb[0].mxu0 %v2159
          %v2250 = vpop.f32.mrb[0].mxu0
          %v2251 = vadd.f32 0.0, %v2250
          %v2252 = vpop.f32.mrb[0].mxu0
          %2253 = vmatprep.mubr.f32.mxu0 0.0
          %2254 = vmatmul.mubr.f32.gmra.mrb[0].mxu0 %v2162
          %v2255 = vpop.f32.mrb[0].mxu0
          %v2256 = vadd.f32 0.0, %v2255
          %v2257 = vpop.f32.mrb[0].mxu0
          %2258 = vdwg.mxu0
          %v2259 = vadd.f32 %v2127, %v2231
          %v2260 = vadd.f32 %v2128, %v2236
          %v2261 = vadd.f32 %v2129, %v2241
          %v2262 = vadd.f32 %v2130, %v2246
          %v2263 = vadd.f32 %v2131, %v2251
          %v2264 = vadd.f32 %v2132, %v2256
          %s2265 = sadd.s32 %s1617, 23
          %s2266 = scalar_lea.vmem [#allocation2], %s2265
          %v2267 = vld [vmem:[%s2266] sm:$0xff]
          %v2268 = vld [vmem:[%s2266 + $0x8] sm:$0xff]
          %v2269 = vld [vmem:[%s2266 + $0x10] sm:$0xff]
          %v2270 = vld [vmem:[%s2266 + $0x18] sm:$0xff]
          %v2271 = vld [vmem:[%s2266 + $0x20] sm:$0xff]
          %v2272 = vld [vmem:[%s2266 + $0x28] sm:$0x3]
          %s2273 = scalar_lea.vmem %s3, 160
          %v2274 = vld [vmem:[%s2273] sm:$0xff]
          %v2275 = vld [vmem:[%s2273 + $0x8] sm:$0xff]
          %v2276 = vld [vmem:[%s2273 + $0x10] sm:$0xff]
          %v2277 = vld [vmem:[%s2273 + $0x18] sm:$0xff]
          %v2279 = vsel %vm1642, %v2267, 0
          %v2282 = vsel %vm1642, %v2268, 0
          %v2285 = vsel %vm1642, %v2269, 0
          %v2288 = vsel %vm1642, %v2270, 0
          %v2291 = vsel %vm1642, %v2271, 0
          %v2294 = vsel %vm1642, %v2272, 0
          %2296 = vmatprep.subr.mxu0 0.0
          %2297 = vmatpush1.msra.mxu0 %v2274
          %2298 = vmatprep.subr.mxu0 0.0
          %2299 = vmatpush1.msra.mxu0 %v2275
          %2300 = vmatprep.subr.mxu0 0.0
          %2301 = vmatpush1.msra.mxu0 %v2276
          %2302 = vmatprep.subr.mxu0 0.0
          %2303 = vmatpush1.msra.mxu0 %v2277
          %2304 = vmatprep.subr.mxu0 0.0
          %2305 = vmatpush1.msra.mxu0 0.0
          %2306 = vmatprep.subr.mxu0 0.0
          %2307 = vmatpush1.msra.mxu0 0.0
          %2308 = vmatprep.subr.mxu0 0.0
          %2309 = vmatpush1.msra.mxu0 0.0
          %2310 = vmatprep.subr.mxu0 0.0
          %2311 = vmatpush1.msra.mxu0 0.0
          %2312 = vmatprep.subr.mxu0 0.0
          %2313 = vmatpush1.msra.mxu0 0.0
          %2314 = vmatprep.subr.mxu0 0.0
          %2315 = vmatpush1.msra.mxu0 0.0
          %2316 = vmatprep.subr.mxu0 0.0
          %2317 = vmatpush1.msra.mxu0 0.0
          %2318 = vmatprep.subr.mxu0 0.0
          %2319 = vmatpush1.msra.mxu0 0.0
          %2320 = vmatprep.subr.mxu0 0.0
          %2321 = vmatpush1.msra.mxu0 0.0
          %2322 = vmatprep.subr.mxu0 0.0
          %2323 = vmatpush1.msra.mxu0 0.0
          %2324 = vmatprep.subr.mxu0 0.0
          %2325 = vmatpush1.msra.mxu0 0.0
          %2326 = vmatprep.subr.mxu0 0.0
          %2327 = vmatpush1.msra.mxu0 0.0
          %2328 = vmatprep.subr.mxu0 0.0
          %2329 = vmatpush1.msra.mxu0 0.0
          %2330 = vmatprep.subr.mxu0 0.0
          %2331 = vmatpush1.msra.mxu0 0.0
          %2332 = vmatprep.subr.mxu0 0.0
          %2333 = vmatpush1.msra.mxu0 0.0
          %2334 = vmatprep.subr.mxu0 0.0
          %2335 = vmatpush1.msra.mxu0 0.0
          %2336 = vmatprep.subr.mxu0 0.0
          %2337 = vmatpush1.msra.mxu0 0.0
          %2338 = vmatprep.subr.mxu0 0.0
          %2339 = vmatpush1.msra.mxu0 0.0
          %2340 = vmatprep.subr.mxu0 0.0
          %2341 = vmatpush1.msra.mxu0 0.0
          %2342 = vmatprep.subr.mxu0 0.0
          %2343 = vmatpush1.msra.mxu0 0.0
          %2344 = vmatprep.subr.mxu0 0.0
          %2345 = vmatpush1.msra.mxu0 0.0
          %2346 = vmatprep.subr.mxu0 0.0
          %2347 = vmatpush1.msra.mxu0 0.0
          %2348 = vmatprep.subr.mxu0 0.0
          %2349 = vmatpush1.msra.mxu0 0.0
          %2350 = vmatprep.subr.mxu0 0.0
          %2351 = vmatpush1.msra.mxu0 0.0
          %2352 = vmatprep.subr.mxu0 0.0
          %2353 = vmatpush1.msra.mxu0 0.0
          %2354 = vmatprep.subr.mxu0 0.0
          %2355 = vmatpush1.msra.mxu0 0.0
          %2356 = vmatprep.subr.mxu0 0.0
          %2357 = vmatpush1.msra.mxu0 0.0
          %2358 = vmatprep.subr.mxu0 0.0
          %2359 = vmatpush1.msra.mxu0 0.0
          %2360 = vmatprep.mubr.f32.mxu0 0.0
          %2361 = vmatmul.mubr.f32.gmra.mrb[0].mxu0 %v2279
          %v2362 = vpop.f32.mrb[0].mxu0
          %v2363 = vadd.f32 0.0, %v2362
          %v2364 = vpop.f32.mrb[0].mxu0
          %2365 = vmatprep.mubr.f32.mxu0 0.0
          %2366 = vmatmul.mubr.f32.gmra.mrb[0].mxu0 %v2282
          %v2367 = vpop.f32.mrb[0].mxu0
          %v2368 = vadd.f32 0.0, %v2367
          %v2369 = vpop.f32.mrb[0].mxu0
          %2370 = vmatprep.mubr.f32.mxu0 0.0
          %2371 = vmatmul.mubr.f32.gmra.mrb[0].mxu0 %v2285
          %v2372 = vpop.f32.mrb[0].mxu0
          %v2373 = vadd.f32 0.0, %v2372
          %v2374 = vpop.f32.mrb[0].mxu0
          %2375 = vmatprep.mubr.f32.mxu0 0.0
          %2376 = vmatmul.mubr.f32.gmra.mrb[0].mxu0 %v2288
          %v2377 = vpop.f32.mrb[0].mxu0
          %v2378 = vadd.f32 0.0, %v2377
          %v2379 = vpop.f32.mrb[0].mxu0
          %2380 = vmatprep.mubr.f32.mxu0 0.0
          %2381 = vmatmul.mubr.f32.gmra.mrb[0].mxu0 %v2291
          %v2382 = vpop.f32.mrb[0].mxu0
          %v2383 = vadd.f32 0.0, %v2382
          %v2384 = vpop.f32.mrb[0].mxu0
          %2385 = vmatprep.mubr.f32.mxu0 0.0
          %2386 = vmatmul.mubr.f32.gmra.mrb[0].mxu0 %v2294
          %v2387 = vpop.f32.mrb[0].mxu0
          %v2388 = vadd.f32 0.0, %v2387
          %v2389 = vpop.f32.mrb[0].mxu0
          %2390 = vdwg.mxu0
          %v2391 = vadd.f32 %v2259, %v2363
          %v2392 = vadd.f32 %v2260, %v2368
          %v2393 = vadd.f32 %v2261, %v2373
          %v2394 = vadd.f32 %v2262, %v2378
          %v2395 = vadd.f32 %v2263, %v2383
          %v2396 = vadd.f32 %v2264, %v2388
          %s2397 = sadd.s32 %s1617, 24
          %s2398 = scalar_lea.vmem [#allocation2], %s2397
          %v2399 = vld [vmem:[%s2398] sm:$0xff]
          %v2400 = vld [vmem:[%s2398 + $0x8] sm:$0xff]
          %v2401 = vld [vmem:[%s2398 + $0x10] sm:$0xff]
          %v2402 = vld [vmem:[%s2398 + $0x18] sm:$0xff]
          %v2403 = vld [vmem:[%s2398 + $0x20] sm:$0xff]
          %v2404 = vld [vmem:[%s2398 + $0x28] sm:$0x3]
          %s2405 = scalar_lea.vmem %s3, 192
          %v2406 = vld [vmem:[%s2405] sm:$0xff]
          %v2407 = vld [vmem:[%s2405 + $0x8] sm:$0xff]
          %v2408 = vld [vmem:[%s2405 + $0x10] sm:$0xff]
          %v2409 = vld [vmem:[%s2405 + $0x18] sm:$0xff]
          %v2411 = vsel %vm1642, %v2399, 0
          %v2414 = vsel %vm1642, %v2400, 0
          %v2417 = vsel %vm1642, %v2401, 0
          %v2420 = vsel %vm1642, %v2402, 0
          %v2423 = vsel %vm1642, %v2403, 0
          %v2426 = vsel %vm1642, %v2404, 0
          %2428 = vmatprep.subr.mxu0 0.0
          %2429 = vmatpush1.msra.mxu0 %v2406
          %2430 = vmatprep.subr.mxu0 0.0
          %2431 = vmatpush1.msra.mxu0 %v2407
          %2432 = vmatprep.subr.mxu0 0.0
          %2433 = vmatpush1.msra.mxu0 %v2408
          %2434 = vmatprep.subr.mxu0 0.0
          %2435 = vmatpush1.msra.mxu0 %v2409
          %2436 = vmatprep.subr.mxu0 0.0
          %2437 = vmatpush1.msra.mxu0 0.0
          %2438 = vmatprep.subr.mxu0 0.0
          %2439 = vmatpush1.msra.mxu0 0.0
          %2440 = vmatprep.subr.mxu0 0.0
          %2441 = vmatpush1.msra.mxu0 0.0
          %2442 = vmatprep.subr.mxu0 0.0
          %2443 = vmatpush1.msra.mxu0 0.0
          %2444 = vmatprep.subr.mxu0 0.0
          %2445 = vmatpush1.msra.mxu0 0.0
          %2446 = vmatprep.subr.mxu0 0.0
          %2447 = vmatpush1.msra.mxu0 0.0
          %2448 = vmatprep.subr.mxu0 0.0
          %2449 = vmatpush1.msra.mxu0 0.0
          %2450 = vmatprep.subr.mxu0 0.0
          %2451 = vmatpush1.msra.mxu0 0.0
          %2452 = vmatprep.subr.mxu0 0.0
          %2453 = vmatpush1.msra.mxu0 0.0
          %2454 = vmatprep.subr.mxu0 0.0
          %2455 = vmatpush1.msra.mxu0 0.0
          %2456 = vmatprep.subr.mxu0 0.0
          %2457 = vmatpush1.msra.mxu0 0.0
          %2458 = vmatprep.subr.mxu0 0.0
          %2459 = vmatpush1.msra.mxu0 0.0
          %2460 = vmatprep.subr.mxu0 0.0
          %2461 = vmatpush1.msra.mxu0 0.0
          %2462 = vmatprep.subr.mxu0 0.0
          %2463 = vmatpush1.msra.mxu0 0.0
          %2464 = vmatprep.subr.mxu0 0.0
          %2465 = vmatpush1.msra.mxu0 0.0
          %2466 = vmatprep.subr.mxu0 0.0
          %2467 = vmatpush1.msra.mxu0 0.0
          %2468 = vmatprep.subr.mxu0 0.0
          %2469 = vmatpush1.msra.mxu0 0.0
          %2470 = vmatprep.subr.mxu0 0.0
          %2471 = vmatpush1.msra.mxu0 0.0
          %2472 = vmatprep.subr.mxu0 0.0
          %2473 = vmatpush1.msra.mxu0 0.0
          %2474 = vmatprep.subr.mxu0 0.0
          %2475 = vmatpush1.msra.mxu0 0.0
          %2476 = vmatprep.subr.mxu0 0.0
          %2477 = vmatpush1.msra.mxu0 0.0
          %2478 = vmatprep.subr.mxu0 0.0
          %2479 = vmatpush1.msra.mxu0 0.0
          %2480 = vmatprep.subr.mxu0 0.0
          %2481 = vmatpush1.msra.mxu0 0.0
          %2482 = vmatprep.subr.mxu0 0.0
          %2483 = vmatpush1.msra.mxu0 0.0
          %2484 = vmatprep.subr.mxu0 0.0
          %2485 = vmatpush1.msra.mxu0 0.0
          %2486 = vmatprep.subr.mxu0 0.0
          %2487 = vmatpush1.msra.mxu0 0.0
          %2488 = vmatprep.subr.mxu0 0.0
          %2489 = vmatpush1.msra.mxu0 0.0
          %2490 = vmatprep.subr.mxu0 0.0
          %2491 = vmatpush1.msra.mxu0 0.0
          %2492 = vmatprep.mubr.f32.mxu0 0.0
          %2493 = vmatmul.mubr.f32.gmra.mrb[0].mxu0 %v2411
          %v2494 = vpop.f32.mrb[0].mxu0
          %v2495 = vadd.f32 0.0, %v2494
          %v2496 = vpop.f32.mrb[0].mxu0
          %2497 = vmatprep.mubr.f32.mxu0 0.0
          %2498 = vmatmul.mubr.f32.gmra.mrb[0].mxu0 %v2414
          %v2499 = vpop.f32.mrb[0].mxu0
          %v2500 = vadd.f32 0.0, %v2499
          %v2501 = vpop.f32.mrb[0].mxu0
          %2502 = vmatprep.mubr.f32.mxu0 0.0
          %2503 = vmatmul.mubr.f32.gmra.mrb[0].mxu0 %v2417
          %v2504 = vpop.f32.mrb[0].mxu0
          %v2505 = vadd.f32 0.0, %v2504
          %v2506 = vpop.f32.mrb[0].mxu0
          %2507 = vmatprep.mubr.f32.mxu0 0.0
          %2508 = vmatmul.mubr.f32.gmra.mrb[0].mxu0 %v2420
          %v2509 = vpop.f32.mrb[0].mxu0
          %v2510 = vadd.f32 0.0, %v2509
          %v2511 = vpop.f32.mrb[0].mxu0
          %2512 = vmatprep.mubr.f32.mxu0 0.0
          %2513 = vmatmul.mubr.f32.gmra.mrb[0].mxu0 %v2423
          %v2514 = vpop.f32.mrb[0].mxu0
          %v2515 = vadd.f32 0.0, %v2514
          %v2516 = vpop.f32.mrb[0].mxu0
          %2517 = vmatprep.mubr.f32.mxu0 0.0
          %2518 = vmatmul.mubr.f32.gmra.mrb[0].mxu0 %v2426
          %v2519 = vpop.f32.mrb[0].mxu0
          %v2520 = vadd.f32 0.0, %v2519
          %v2521 = vpop.f32.mrb[0].mxu0
          %2522 = vdwg.mxu0
          %v2523 = vadd.f32 %v2391, %v2495
          %v2524 = vadd.f32 %v2392, %v2500
          %v2525 = vadd.f32 %v2393, %v2505
          %v2526 = vadd.f32 %v2394, %v2510
          %v2527 = vadd.f32 %v2395, %v2515
          %v2528 = vadd.f32 %v2396, %v2520
          %s2529 = sadd.s32 %s1617, 25
          %s2530 = scalar_lea.vmem [#allocation2], %s2529
          %v2531 = vld [vmem:[%s2530] sm:$0xff]
          %v2532 = vld [vmem:[%s2530 + $0x8] sm:$0xff]
          %v2533 = vld [vmem:[%s2530 + $0x10] sm:$0xff]
          %v2534 = vld [vmem:[%s2530 + $0x18] sm:$0xff]
          %v2535 = vld [vmem:[%s2530 + $0x20] sm:$0xff]
          %v2536 = vld [vmem:[%s2530 + $0x28] sm:$0x3]
          %s2537 = scalar_lea.vmem %s3, 224
          %v2538 = vld [vmem:[%s2537] sm:$0xff]
          %v2539 = vld [vmem:[%s2537 + $0x8] sm:$0xff]
          %v2540 = vld [vmem:[%s2537 + $0x10] sm:$0xff]
          %v2541 = vld [vmem:[%s2537 + $0x18] sm:$0xff]
          %v2543 = vsel %vm1642, %v2531, 0
          %v2546 = vsel %vm1642, %v2532, 0
          %v2549 = vsel %vm1642, %v2533, 0
          %v2552 = vsel %vm1642, %v2534, 0
          %v2555 = vsel %vm1642, %v2535, 0
          %v2558 = vsel %vm1642, %v2536, 0
          %2560 = vmatprep.subr.mxu0 0.0
          %2561 = vmatpush1.msra.mxu0 %v2538
          %2562 = vmatprep.subr.mxu0 0.0
          %2563 = vmatpush1.msra.mxu0 %v2539
          %2564 = vmatprep.subr.mxu0 0.0
          %2565 = vmatpush1.msra.mxu0 %v2540
          %2566 = vmatprep.subr.mxu0 0.0
          %2567 = vmatpush1.msra.mxu0 %v2541
          %2568 = vmatprep.subr.mxu0 0.0
          %2569 = vmatpush1.msra.mxu0 0.0
          %2570 = vmatprep.subr.mxu0 0.0
          %2571 = vmatpush1.msra.mxu0 0.0
          %2572 = vmatprep.subr.mxu0 0.0
          %2573 = vmatpush1.msra.mxu0 0.0
          %2574 = vmatprep.subr.mxu0 0.0
          %2575 = vmatpush1.msra.mxu0 0.0
          %2576 = vmatprep.subr.mxu0 0.0
          %2577 = vmatpush1.msra.mxu0 0.0
          %2578 = vmatprep.subr.mxu0 0.0
          %2579 = vmatpush1.msra.mxu0 0.0
          %2580 = vmatprep.subr.mxu0 0.0
          %2581 = vmatpush1.msra.mxu0 0.0
          %2582 = vmatprep.subr.mxu0 0.0
          %2583 = vmatpush1.msra.mxu0 0.0
          %2584 = vmatprep.subr.mxu0 0.0
          %2585 = vmatpush1.msra.mxu0 0.0
          %2586 = vmatprep.subr.mxu0 0.0
          %2587 = vmatpush1.msra.mxu0 0.0
          %2588 = vmatprep.subr.mxu0 0.0
          %2589 = vmatpush1.msra.mxu0 0.0
          %2590 = vmatprep.subr.mxu0 0.0
          %2591 = vmatpush1.msra.mxu0 0.0
          %2592 = vmatprep.subr.mxu0 0.0
          %2593 = vmatpush1.msra.mxu0 0.0
          %2594 = vmatprep.subr.mxu0 0.0
          %2595 = vmatpush1.msra.mxu0 0.0
          %2596 = vmatprep.subr.mxu0 0.0
          %2597 = vmatpush1.msra.mxu0 0.0
          %2598 = vmatprep.subr.mxu0 0.0
          %2599 = vmatpush1.msra.mxu0 0.0
          %2600 = vmatprep.subr.mxu0 0.0
          %2601 = vmatpush1.msra.mxu0 0.0
          %2602 = vmatprep.subr.mxu0 0.0
          %2603 = vmatpush1.msra.mxu0 0.0
          %2604 = vmatprep.subr.mxu0 0.0
          %2605 = vmatpush1.msra.mxu0 0.0
          %2606 = vmatprep.subr.mxu0 0.0
          %2607 = vmatpush1.msra.mxu0 0.0
          %2608 = vmatprep.subr.mxu0 0.0
          %2609 = vmatpush1.msra.mxu0 0.0
          %2610 = vmatprep.subr.mxu0 0.0
          %2611 = vmatpush1.msra.mxu0 0.0
          %2612 = vmatprep.subr.mxu0 0.0
          %2613 = vmatpush1.msra.mxu0 0.0
          %2614 = vmatprep.subr.mxu0 0.0
          %2615 = vmatpush1.msra.mxu0 0.0
          %2616 = vmatprep.subr.mxu0 0.0
          %2617 = vmatpush1.msra.mxu0 0.0
          %2618 = vmatprep.subr.mxu0 0.0
          %2619 = vmatpush1.msra.mxu0 0.0
          %2620 = vmatprep.subr.mxu0 0.0
          %2621 = vmatpush1.msra.mxu0 0.0
          %2622 = vmatprep.subr.mxu0 0.0
          %2623 = vmatpush1.msra.mxu0 0.0
          %2624 = vmatprep.mubr.f32.mxu0 0.0
          %2625 = vmatmul.mubr.f32.gmra.mrb[0].mxu0 %v2543
          %v2626 = vpop.f32.mrb[0].mxu0
          %v2627 = vadd.f32 0.0, %v2626
          %v2628 = vpop.f32.mrb[0].mxu0
          %2629 = vmatprep.mubr.f32.mxu0 0.0
          %2630 = vmatmul.mubr.f32.gmra.mrb[0].mxu0 %v2546
          %v2631 = vpop.f32.mrb[0].mxu0
          %v2632 = vadd.f32 0.0, %v2631
          %v2633 = vpop.f32.mrb[0].mxu0
          %2634 = vmatprep.mubr.f32.mxu0 0.0
          %2635 = vmatmul.mubr.f32.gmra.mrb[0].mxu0 %v2549
          %v2636 = vpop.f32.mrb[0].mxu0
          %v2637 = vadd.f32 0.0, %v2636
          %v2638 = vpop.f32.mrb[0].mxu0
          %2639 = vmatprep.mubr.f32.mxu0 0.0
          %2640 = vmatmul.mubr.f32.gmra.mrb[0].mxu0 %v2552
          %v2641 = vpop.f32.mrb[0].mxu0
          %v2642 = vadd.f32 0.0, %v2641
          %v2643 = vpop.f32.mrb[0].mxu0
          %2644 = vmatprep.mubr.f32.mxu0 0.0
          %2645 = vmatmul.mubr.f32.gmra.mrb[0].mxu0 %v2555
          %v2646 = vpop.f32.mrb[0].mxu0
          %v2647 = vadd.f32 0.0, %v2646
          %v2648 = vpop.f32.mrb[0].mxu0
          %2649 = vmatprep.mubr.f32.mxu0 0.0
          %2650 = vmatmul.mubr.f32.gmra.mrb[0].mxu0 %v2558
          %v2651 = vpop.f32.mrb[0].mxu0
          %v2652 = vadd.f32 0.0, %v2651
          %v2653 = vpop.f32.mrb[0].mxu0
          %2654 = vdwg.mxu0
          %v2655 = vadd.f32 %v2523, %v2627
          %v2656 = vadd.f32 %v2524, %v2632
          %v2657 = vadd.f32 %v2525, %v2637
          %v2658 = vadd.f32 %v2526, %v2642
          %v2659 = vadd.f32 %v2527, %v2647
          %v2660 = vadd.f32 %v2528, %v2652
          %s2661 = sadd.s32 %s1617, 26
          %s2662 = scalar_lea.vmem [#allocation2], %s2661
          %v2663 = vld [vmem:[%s2662] sm:$0xff]
          %v2664 = vld [vmem:[%s2662 + $0x8] sm:$0xff]
          %v2665 = vld [vmem:[%s2662 + $0x10] sm:$0xff]
          %v2666 = vld [vmem:[%s2662 + $0x18] sm:$0xff]
          %v2667 = vld [vmem:[%s2662 + $0x20] sm:$0xff]
          %v2668 = vld [vmem:[%s2662 + $0x28] sm:$0x3]
          %s2669 = scalar_lea.vmem %s3, 256
          %v2670 = vld [vmem:[%s2669] sm:$0xff]
          %v2671 = vld [vmem:[%s2669 + $0x8] sm:$0xff]
          %v2672 = vld [vmem:[%s2669 + $0x10] sm:$0xff]
          %v2673 = vld [vmem:[%s2669 + $0x18] sm:$0xff]
          %v2675 = vsel %vm1642, %v2663, 0
          %v2678 = vsel %vm1642, %v2664, 0
          %v2681 = vsel %vm1642, %v2665, 0
          %v2684 = vsel %vm1642, %v2666, 0
          %v2687 = vsel %vm1642, %v2667, 0
          %v2690 = vsel %vm1642, %v2668, 0
          %2692 = vmatprep.subr.mxu0 0.0
          %2693 = vmatpush1.msra.mxu0 %v2670
          %2694 = vmatprep.subr.mxu0 0.0
          %2695 = vmatpush1.msra.mxu0 %v2671
          %2696 = vmatprep.subr.mxu0 0.0
          %2697 = vmatpush1.msra.mxu0 %v2672
          %2698 = vmatprep.subr.mxu0 0.0
          %2699 = vmatpush1.msra.mxu0 %v2673
          %2700 = vmatprep.subr.mxu0 0.0
          %2701 = vmatpush1.msra.mxu0 0.0
          %2702 = vmatprep.subr.mxu0 0.0
          %2703 = vmatpush1.msra.mxu0 0.0
          %2704 = vmatprep.subr.mxu0 0.0
          %2705 = vmatpush1.msra.mxu0 0.0
          %2706 = vmatprep.subr.mxu0 0.0
          %2707 = vmatpush1.msra.mxu0 0.0
          %2708 = vmatprep.subr.mxu0 0.0
          %2709 = vmatpush1.msra.mxu0 0.0
          %2710 = vmatprep.subr.mxu0 0.0
          %2711 = vmatpush1.msra.mxu0 0.0
          %2712 = vmatprep.subr.mxu0 0.0
          %2713 = vmatpush1.msra.mxu0 0.0
          %2714 = vmatprep.subr.mxu0 0.0
          %2715 = vmatpush1.msra.mxu0 0.0
          %2716 = vmatprep.subr.mxu0 0.0
          %2717 = vmatpush1.msra.mxu0 0.0
          %2718 = vmatprep.subr.mxu0 0.0
          %2719 = vmatpush1.msra.mxu0 0.0
          %2720 = vmatprep.subr.mxu0 0.0
          %2721 = vmatpush1.msra.mxu0 0.0
          %2722 = vmatprep.subr.mxu0 0.0
          %2723 = vmatpush1.msra.mxu0 0.0
          %2724 = vmatprep.subr.mxu0 0.0
          %2725 = vmatpush1.msra.mxu0 0.0
          %2726 = vmatprep.subr.mxu0 0.0
          %2727 = vmatpush1.msra.mxu0 0.0
          %2728 = vmatprep.subr.mxu0 0.0
          %2729 = vmatpush1.msra.mxu0 0.0
          %2730 = vmatprep.subr.mxu0 0.0
          %2731 = vmatpush1.msra.mxu0 0.0
          %2732 = vmatprep.subr.mxu0 0.0
          %2733 = vmatpush1.msra.mxu0 0.0
          %2734 = vmatprep.subr.mxu0 0.0
          %2735 = vmatpush1.msra.mxu0 0.0
          %2736 = vmatprep.subr.mxu0 0.0
          %2737 = vmatpush1.msra.mxu0 0.0
          %2738 = vmatprep.subr.mxu0 0.0
          %2739 = vmatpush1.msra.mxu0 0.0
          %2740 = vmatprep.subr.mxu0 0.0
          %2741 = vmatpush1.msra.mxu0 0.0
          %2742 = vmatprep.subr.mxu0 0.0
          %2743 = vmatpush1.msra.mxu0 0.0
          %2744 = vmatprep.subr.mxu0 0.0
          %2745 = vmatpush1.msra.mxu0 0.0
          %2746 = vmatprep.subr.mxu0 0.0
          %2747 = vmatpush1.msra.mxu0 0.0
          %2748 = vmatprep.subr.mxu0 0.0
          %2749 = vmatpush1.msra.mxu0 0.0
          %2750 = vmatprep.subr.mxu0 0.0
          %2751 = vmatpush1.msra.mxu0 0.0
          %2752 = vmatprep.subr.mxu0 0.0
          %2753 = vmatpush1.msra.mxu0 0.0
          %2754 = vmatprep.subr.mxu0 0.0
          %2755 = vmatpush1.msra.mxu0 0.0
          %2756 = vmatprep.mubr.f32.mxu0 0.0
          %2757 = vmatmul.mubr.f32.gmra.mrb[0].mxu0 %v2675
          %v2758 = vpop.f32.mrb[0].mxu0
          %v2759 = vadd.f32 0.0, %v2758
          %v2760 = vpop.f32.mrb[0].mxu0
          %2761 = vmatprep.mubr.f32.mxu0 0.0
          %2762 = vmatmul.mubr.f32.gmra.mrb[0].mxu0 %v2678
          %v2763 = vpop.f32.mrb[0].mxu0
          %v2764 = vadd.f32 0.0, %v2763
          %v2765 = vpop.f32.mrb[0].mxu0
          %2766 = vmatprep.mubr.f32.mxu0 0.0
          %2767 = vmatmul.mubr.f32.gmra.mrb[0].mxu0 %v2681
          %v2768 = vpop.f32.mrb[0].mxu0
          %v2769 = vadd.f32 0.0, %v2768
          %v2770 = vpop.f32.mrb[0].mxu0
          %2771 = vmatprep.mubr.f32.mxu0 0.0
          %2772 = vmatmul.mubr.f32.gmra.mrb[0].mxu0 %v2684
          %v2773 = vpop.f32.mrb[0].mxu0
          %v2774 = vadd.f32 0.0, %v2773
          %v2775 = vpop.f32.mrb[0].mxu0
          %2776 = vmatprep.mubr.f32.mxu0 0.0
          %2777 = vmatmul.mubr.f32.gmra.mrb[0].mxu0 %v2687
          %v2778 = vpop.f32.mrb[0].mxu0
          %v2779 = vadd.f32 0.0, %v2778
          %v2780 = vpop.f32.mrb[0].mxu0
          %2781 = vmatprep.mubr.f32.mxu0 0.0
          %2782 = vmatmul.mubr.f32.gmra.mrb[0].mxu0 %v2690
          %v2783 = vpop.f32.mrb[0].mxu0
          %v2784 = vadd.f32 0.0, %v2783
          %v2785 = vpop.f32.mrb[0].mxu0
          %2786 = vdwg.mxu0
          %v2787 = vadd.f32 %v2655, %v2759
          %v2788 = vadd.f32 %v2656, %v2764
          %v2789 = vadd.f32 %v2657, %v2769
          %v2790 = vadd.f32 %v2658, %v2774
          %v2791 = vadd.f32 %v2659, %v2779
          %v2792 = vadd.f32 %v2660, %v2784
          %s2793 = sadd.s32 %s1617, 27
          %s2794 = scalar_lea.vmem [#allocation2], %s2793
          %v2795 = vld [vmem:[%s2794] sm:$0xff]
          %v2796 = vld [vmem:[%s2794 + $0x8] sm:$0xff]
          %v2797 = vld [vmem:[%s2794 + $0x10] sm:$0xff]
          %v2798 = vld [vmem:[%s2794 + $0x18] sm:$0xff]
          %v2799 = vld [vmem:[%s2794 + $0x20] sm:$0xff]
          %v2800 = vld [vmem:[%s2794 + $0x28] sm:$0x3]
          %s2801 = scalar_lea.vmem %s3, 288
          %v2802 = vld [vmem:[%s2801] sm:$0xff]
          %v2803 = vld [vmem:[%s2801 + $0x8] sm:$0xff]
          %v2804 = vld [vmem:[%s2801 + $0x10] sm:$0xff]
          %v2805 = vld [vmem:[%s2801 + $0x18] sm:$0xff]
          %v2807 = vsel %vm1642, %v2795, 0
          %v2810 = vsel %vm1642, %v2796, 0
          %v2813 = vsel %vm1642, %v2797, 0
          %v2816 = vsel %vm1642, %v2798, 0
          %v2819 = vsel %vm1642, %v2799, 0
          %v2822 = vsel %vm1642, %v2800, 0
          %2824 = vmatprep.subr.mxu0 0.0
          %2825 = vmatpush1.msra.mxu0 %v2802
          %2826 = vmatprep.subr.mxu0 0.0
          %2827 = vmatpush1.msra.mxu0 %v2803
          %2828 = vmatprep.subr.mxu0 0.0
          %2829 = vmatpush1.msra.mxu0 %v2804
          %2830 = vmatprep.subr.mxu0 0.0
          %2831 = vmatpush1.msra.mxu0 %v2805
          %2832 = vmatprep.subr.mxu0 0.0
          %2833 = vmatpush1.msra.mxu0 0.0
          %2834 = vmatprep.subr.mxu0 0.0
          %2835 = vmatpush1.msra.mxu0 0.0
          %2836 = vmatprep.subr.mxu0 0.0
          %2837 = vmatpush1.msra.mxu0 0.0
          %2838 = vmatprep.subr.mxu0 0.0
          %2839 = vmatpush1.msra.mxu0 0.0
          %2840 = vmatprep.subr.mxu0 0.0
          %2841 = vmatpush1.msra.mxu0 0.0
          %2842 = vmatprep.subr.mxu0 0.0
          %2843 = vmatpush1.msra.mxu0 0.0
          %2844 = vmatprep.subr.mxu0 0.0
          %2845 = vmatpush1.msra.mxu0 0.0
          %2846 = vmatprep.subr.mxu0 0.0
          %2847 = vmatpush1.msra.mxu0 0.0
          %2848 = vmatprep.subr.mxu0 0.0
          %2849 = vmatpush1.msra.mxu0 0.0
          %2850 = vmatprep.subr.mxu0 0.0
          %2851 = vmatpush1.msra.mxu0 0.0
          %2852 = vmatprep.subr.mxu0 0.0
          %2853 = vmatpush1.msra.mxu0 0.0
          %2854 = vmatprep.subr.mxu0 0.0
          %2855 = vmatpush1.msra.mxu0 0.0
          %2856 = vmatprep.subr.mxu0 0.0
          %2857 = vmatpush1.msra.mxu0 0.0
          %2858 = vmatprep.subr.mxu0 0.0
          %2859 = vmatpush1.msra.mxu0 0.0
          %2860 = vmatprep.subr.mxu0 0.0
          %2861 = vmatpush1.msra.mxu0 0.0
          %2862 = vmatprep.subr.mxu0 0.0
          %2863 = vmatpush1.msra.mxu0 0.0
          %2864 = vmatprep.subr.mxu0 0.0
          %2865 = vmatpush1.msra.mxu0 0.0
          %2866 = vmatprep.subr.mxu0 0.0
          %2867 = vmatpush1.msra.mxu0 0.0
          %2868 = vmatprep.subr.mxu0 0.0
          %2869 = vmatpush1.msra.mxu0 0.0
          %2870 = vmatprep.subr.mxu0 0.0
          %2871 = vmatpush1.msra.mxu0 0.0
          %2872 = vmatprep.subr.mxu0 0.0
          %2873 = vmatpush1.msra.mxu0 0.0
          %2874 = vmatprep.subr.mxu0 0.0
          %2875 = vmatpush1.msra.mxu0 0.0
          %2876 = vmatprep.subr.mxu0 0.0
          %2877 = vmatpush1.msra.mxu0 0.0
          %2878 = vmatprep.subr.mxu0 0.0
          %2879 = vmatpush1.msra.mxu0 0.0
          %2880 = vmatprep.subr.mxu0 0.0
          %2881 = vmatpush1.msra.mxu0 0.0
          %2882 = vmatprep.subr.mxu0 0.0
          %2883 = vmatpush1.msra.mxu0 0.0
          %2884 = vmatprep.subr.mxu0 0.0
          %2885 = vmatpush1.msra.mxu0 0.0
          %2886 = vmatprep.subr.mxu0 0.0
          %2887 = vmatpush1.msra.mxu0 0.0
          %2888 = vmatprep.mubr.f32.mxu0 0.0
          %2889 = vmatmul.mubr.f32.gmra.mrb[0].mxu0 %v2807
          %v2890 = vpop.f32.mrb[0].mxu0
          %v2891 = vadd.f32 0.0, %v2890
          %v2892 = vpop.f32.mrb[0].mxu0
          %2893 = vmatprep.mubr.f32.mxu0 0.0
          %2894 = vmatmul.mubr.f32.gmra.mrb[0].mxu0 %v2810
          %v2895 = vpop.f32.mrb[0].mxu0
          %v2896 = vadd.f32 0.0, %v2895
          %v2897 = vpop.f32.mrb[0].mxu0
          %2898 = vmatprep.mubr.f32.mxu0 0.0
          %2899 = vmatmul.mubr.f32.gmra.mrb[0].mxu0 %v2813
          %v2900 = vpop.f32.mrb[0].mxu0
          %v2901 = vadd.f32 0.0, %v2900
          %v2902 = vpop.f32.mrb[0].mxu0
          %2903 = vmatprep.mubr.f32.mxu0 0.0
          %2904 = vmatmul.mubr.f32.gmra.mrb[0].mxu0 %v2816
          %v2905 = vpop.f32.mrb[0].mxu0
          %v2906 = vadd.f32 0.0, %v2905
          %v2907 = vpop.f32.mrb[0].mxu0
          %2908 = vmatprep.mubr.f32.mxu0 0.0
          %2909 = vmatmul.mubr.f32.gmra.mrb[0].mxu0 %v2819
          %v2910 = vpop.f32.mrb[0].mxu0
          %v2911 = vadd.f32 0.0, %v2910
          %v2912 = vpop.f32.mrb[0].mxu0
          %2913 = vmatprep.mubr.f32.mxu0 0.0
          %2914 = vmatmul.mubr.f32.gmra.mrb[0].mxu0 %v2822
          %v2915 = vpop.f32.mrb[0].mxu0
          %v2916 = vadd.f32 0.0, %v2915
          %v2917 = vpop.f32.mrb[0].mxu0
          %2918 = vdwg.mxu0
          %v2919 = vadd.f32 %v2787, %v2891
          %v2920 = vadd.f32 %v2788, %v2896
          %v2921 = vadd.f32 %v2789, %v2901
          %v2922 = vadd.f32 %v2790, %v2906
          %v2923 = vadd.f32 %v2791, %v2911
          %v2924 = vadd.f32 %v2792, %v2916
          %s2925 = sadd.s32 %s1617, 46
          %s2926 = scalar_lea.vmem [#allocation2], %s2925
          %v2927 = vld [vmem:[%s2926] sm:$0xff]
          %v2928 = vld [vmem:[%s2926 + $0x8] sm:$0xff]
          %v2929 = vld [vmem:[%s2926 + $0x10] sm:$0xff]
          %v2930 = vld [vmem:[%s2926 + $0x18] sm:$0xff]
          %v2931 = vld [vmem:[%s2926 + $0x20] sm:$0xff]
          %v2932 = vld [vmem:[%s2926 + $0x28] sm:$0x3]
          %s2933 = scalar_lea.vmem %s3, 320
          %v2934 = vld [vmem:[%s2933] sm:$0xff]
          %v2935 = vld [vmem:[%s2933 + $0x8] sm:$0xff]
          %v2936 = vld [vmem:[%s2933 + $0x10] sm:$0xff]
          %v2937 = vld [vmem:[%s2933 + $0x18] sm:$0xff]
          %v2939 = vsel %vm1642, %v2927, 0
          %v2942 = vsel %vm1642, %v2928, 0
          %v2945 = vsel %vm1642, %v2929, 0
          %v2948 = vsel %vm1642, %v2930, 0
          %v2951 = vsel %vm1642, %v2931, 0
          %v2954 = vsel %vm1642, %v2932, 0
          %2956 = vmatprep.subr.mxu0 0.0
          %2957 = vmatpush1.msra.mxu0 %v2934
          %2958 = vmatprep.subr.mxu0 0.0
          %2959 = vmatpush1.msra.mxu0 %v2935
          %2960 = vmatprep.subr.mxu0 0.0
          %2961 = vmatpush1.msra.mxu0 %v2936
          %2962 = vmatprep.subr.mxu0 0.0
          %2963 = vmatpush1.msra.mxu0 %v2937
          %2964 = vmatprep.subr.mxu0 0.0
          %2965 = vmatpush1.msra.mxu0 0.0
          %2966 = vmatprep.subr.mxu0 0.0
          %2967 = vmatpush1.msra.mxu0 0.0
          %2968 = vmatprep.subr.mxu0 0.0
          %2969 = vmatpush1.msra.mxu0 0.0
          %2970 = vmatprep.subr.mxu0 0.0
          %2971 = vmatpush1.msra.mxu0 0.0
          %2972 = vmatprep.subr.mxu0 0.0
          %2973 = vmatpush1.msra.mxu0 0.0
          %2974 = vmatprep.subr.mxu0 0.0
          %2975 = vmatpush1.msra.mxu0 0.0
          %2976 = vmatprep.subr.mxu0 0.0
          %2977 = vmatpush1.msra.mxu0 0.0
          %2978 = vmatprep.subr.mxu0 0.0
          %2979 = vmatpush1.msra.mxu0 0.0
          %2980 = vmatprep.subr.mxu0 0.0
          %2981 = vmatpush1.msra.mxu0 0.0
          %2982 = vmatprep.subr.mxu0 0.0
          %2983 = vmatpush1.msra.mxu0 0.0
          %2984 = vmatprep.subr.mxu0 0.0
          %2985 = vmatpush1.msra.mxu0 0.0
          %2986 = vmatprep.subr.mxu0 0.0
          %2987 = vmatpush1.msra.mxu0 0.0
          %2988 = vmatprep.subr.mxu0 0.0
          %2989 = vmatpush1.msra.mxu0 0.0
          %2990 = vmatprep.subr.mxu0 0.0
          %2991 = vmatpush1.msra.mxu0 0.0
          %2992 = vmatprep.subr.mxu0 0.0
          %2993 = vmatpush1.msra.mxu0 0.0
          %2994 = vmatprep.subr.mxu0 0.0
          %2995 = vmatpush1.msra.mxu0 0.0
          %2996 = vmatprep.subr.mxu0 0.0
          %2997 = vmatpush1.msra.mxu0 0.0
          %2998 = vmatprep.subr.mxu0 0.0
          %2999 = vmatpush1.msra.mxu0 0.0
          %3000 = vmatprep.subr.mxu0 0.0
          %3001 = vmatpush1.msra.mxu0 0.0
          %3002 = vmatprep.subr.mxu0 0.0
          %3003 = vmatpush1.msra.mxu0 0.0
          %3004 = vmatprep.subr.mxu0 0.0
          %3005 = vmatpush1.msra.mxu0 0.0
          %3006 = vmatprep.subr.mxu0 0.0
          %3007 = vmatpush1.msra.mxu0 0.0
          %3008 = vmatprep.subr.mxu0 0.0
          %3009 = vmatpush1.msra.mxu0 0.0
          %3010 = vmatprep.subr.mxu0 0.0
          %3011 = vmatpush1.msra.mxu0 0.0
          %3012 = vmatprep.subr.mxu0 0.0
          %3013 = vmatpush1.msra.mxu0 0.0
          %3014 = vmatprep.subr.mxu0 0.0
          %3015 = vmatpush1.msra.mxu0 0.0
          %3016 = vmatprep.subr.mxu0 0.0
          %3017 = vmatpush1.msra.mxu0 0.0
          %3018 = vmatprep.subr.mxu0 0.0
          %3019 = vmatpush1.msra.mxu0 0.0
          %3020 = vmatprep.mubr.f32.mxu0 0.0
          %3021 = vmatmul.mubr.f32.gmra.mrb[0].mxu0 %v2939
          %v3022 = vpop.f32.mrb[0].mxu0
          %v3023 = vadd.f32 0.0, %v3022
          %v3024 = vpop.f32.mrb[0].mxu0
          %3025 = vmatprep.mubr.f32.mxu0 0.0
          %3026 = vmatmul.mubr.f32.gmra.mrb[0].mxu0 %v2942
          %v3027 = vpop.f32.mrb[0].mxu0
          %v3028 = vadd.f32 0.0, %v3027
          %v3029 = vpop.f32.mrb[0].mxu0
          %3030 = vmatprep.mubr.f32.mxu0 0.0
          %3031 = vmatmul.mubr.f32.gmra.mrb[0].mxu0 %v2945
          %v3032 = vpop.f32.mrb[0].mxu0
          %v3033 = vadd.f32 0.0, %v3032
          %v3034 = vpop.f32.mrb[0].mxu0
          %3035 = vmatprep.mubr.f32.mxu0 0.0
          %3036 = vmatmul.mubr.f32.gmra.mrb[0].mxu0 %v2948
          %v3037 = vpop.f32.mrb[0].mxu0
          %v3038 = vadd.f32 0.0, %v3037
          %v3039 = vpop.f32.mrb[0].mxu0
          %3040 = vmatprep.mubr.f32.mxu0 0.0
          %3041 = vmatmul.mubr.f32.gmra.mrb[0].mxu0 %v2951
          %v3042 = vpop.f32.mrb[0].mxu0
          %v3043 = vadd.f32 0.0, %v3042
          %v3044 = vpop.f32.mrb[0].mxu0
          %3045 = vmatprep.mubr.f32.mxu0 0.0
          %3046 = vmatmul.mubr.f32.gmra.mrb[0].mxu0 %v2954
          %v3047 = vpop.f32.mrb[0].mxu0
          %v3048 = vadd.f32 0.0, %v3047
          %v3049 = vpop.f32.mrb[0].mxu0
          %3050 = vdwg.mxu0
          %v3051 = vadd.f32 %v2919, %v3023
          %v3052 = vadd.f32 %v2920, %v3028
          %v3053 = vadd.f32 %v2921, %v3033
          %v3054 = vadd.f32 %v2922, %v3038
          %v3055 = vadd.f32 %v2923, %v3043
          %v3056 = vadd.f32 %v2924, %v3048
          %s3057 = sadd.s32 %s1617, 47
          %s3058 = scalar_lea.vmem [#allocation2], %s3057
          %v3059 = vld [vmem:[%s3058] sm:$0xff]
          %v3060 = vld [vmem:[%s3058 + $0x8] sm:$0xff]
          %v3061 = vld [vmem:[%s3058 + $0x10] sm:$0xff]
          %v3062 = vld [vmem:[%s3058 + $0x18] sm:$0xff]
          %v3063 = vld [vmem:[%s3058 + $0x20] sm:$0xff]
          %v3064 = vld [vmem:[%s3058 + $0x28] sm:$0x3]
          %s3065 = scalar_lea.vmem %s3, 352
          %v3066 = vld [vmem:[%s3065] sm:$0xff]
          %v3067 = vld [vmem:[%s3065 + $0x8] sm:$0xff]
          %v3068 = vld [vmem:[%s3065 + $0x10] sm:$0xff]
          %v3069 = vld [vmem:[%s3065 + $0x18] sm:$0xff]
          %v3071 = vsel %vm1642, %v3059, 0
          %v3074 = vsel %vm1642, %v3060, 0
          %v3077 = vsel %vm1642, %v3061, 0
          %v3080 = vsel %vm1642, %v3062, 0
          %v3083 = vsel %vm1642, %v3063, 0
          %v3086 = vsel %vm1642, %v3064, 0
          %3088 = vmatprep.subr.mxu0 0.0
          %3089 = vmatpush1.msra.mxu0 %v3066
          %3090 = vmatprep.subr.mxu0 0.0
          %3091 = vmatpush1.msra.mxu0 %v3067
          %3092 = vmatprep.subr.mxu0 0.0
          %3093 = vmatpush1.msra.mxu0 %v3068
          %3094 = vmatprep.subr.mxu0 0.0
          %3095 = vmatpush1.msra.mxu0 %v3069
          %3096 = vmatprep.subr.mxu0 0.0
          %3097 = vmatpush1.msra.mxu0 0.0
          %3098 = vmatprep.subr.mxu0 0.0
          %3099 = vmatpush1.msra.mxu0 0.0
          %3100 = vmatprep.subr.mxu0 0.0
          %3101 = vmatpush1.msra.mxu0 0.0
          %3102 = vmatprep.subr.mxu0 0.0
          %3103 = vmatpush1.msra.mxu0 0.0
          %3104 = vmatprep.subr.mxu0 0.0
          %3105 = vmatpush1.msra.mxu0 0.0
          %3106 = vmatprep.subr.mxu0 0.0
          %3107 = vmatpush1.msra.mxu0 0.0
          %3108 = vmatprep.subr.mxu0 0.0
          %3109 = vmatpush1.msra.mxu0 0.0
          %3110 = vmatprep.subr.mxu0 0.0
          %3111 = vmatpush1.msra.mxu0 0.0
          %3112 = vmatprep.subr.mxu0 0.0
          %3113 = vmatpush1.msra.mxu0 0.0
          %3114 = vmatprep.subr.mxu0 0.0
          %3115 = vmatpush1.msra.mxu0 0.0
          %3116 = vmatprep.subr.mxu0 0.0
          %3117 = vmatpush1.msra.mxu0 0.0
          %3118 = vmatprep.subr.mxu0 0.0
          %3119 = vmatpush1.msra.mxu0 0.0
          %3120 = vmatprep.subr.mxu0 0.0
          %3121 = vmatpush1.msra.mxu0 0.0
          %3122 = vmatprep.subr.mxu0 0.0
          %3123 = vmatpush1.msra.mxu0 0.0
          %3124 = vmatprep.subr.mxu0 0.0
          %3125 = vmatpush1.msra.mxu0 0.0
          %3126 = vmatprep.subr.mxu0 0.0
          %3127 = vmatpush1.msra.mxu0 0.0
          %3128 = vmatprep.subr.mxu0 0.0
          %3129 = vmatpush1.msra.mxu0 0.0
          %3130 = vmatprep.subr.mxu0 0.0
          %3131 = vmatpush1.msra.mxu0 0.0
          %3132 = vmatprep.subr.mxu0 0.0
          %3133 = vmatpush1.msra.mxu0 0.0
          %3134 = vmatprep.subr.mxu0 0.0
          %3135 = vmatpush1.msra.mxu0 0.0
          %3136 = vmatprep.subr.mxu0 0.0
          %3137 = vmatpush1.msra.mxu0 0.0
          %3138 = vmatprep.subr.mxu0 0.0
          %3139 = vmatpush1.msra.mxu0 0.0
          %3140 = vmatprep.subr.mxu0 0.0
          %3141 = vmatpush1.msra.mxu0 0.0
          %3142 = vmatprep.subr.mxu0 0.0
          %3143 = vmatpush1.msra.mxu0 0.0
          %3144 = vmatprep.subr.mxu0 0.0
          %3145 = vmatpush1.msra.mxu0 0.0
          %3146 = vmatprep.subr.mxu0 0.0
          %3147 = vmatpush1.msra.mxu0 0.0
          %3148 = vmatprep.subr.mxu0 0.0
          %3149 = vmatpush1.msra.mxu0 0.0
          %3150 = vmatprep.subr.mxu0 0.0
          %3151 = vmatpush1.msra.mxu0 0.0
          %3152 = vmatprep.mubr.f32.mxu0 0.0
          %3153 = vmatmul.mubr.f32.gmra.mrb[0].mxu0 %v3071
          %v3154 = vpop.f32.mrb[0].mxu0
          %v3155 = vadd.f32 0.0, %v3154
          %v3156 = vpop.f32.mrb[0].mxu0
          %3157 = vmatprep.mubr.f32.mxu0 0.0
          %3158 = vmatmul.mubr.f32.gmra.mrb[0].mxu0 %v3074
          %v3159 = vpop.f32.mrb[0].mxu0
          %v3160 = vadd.f32 0.0, %v3159
          %v3161 = vpop.f32.mrb[0].mxu0
          %3162 = vmatprep.mubr.f32.mxu0 0.0
          %3163 = vmatmul.mubr.f32.gmra.mrb[0].mxu0 %v3077
          %v3164 = vpop.f32.mrb[0].mxu0
          %v3165 = vadd.f32 0.0, %v3164
          %v3166 = vpop.f32.mrb[0].mxu0
          %3167 = vmatprep.mubr.f32.mxu0 0.0
          %3168 = vmatmul.mubr.f32.gmra.mrb[0].mxu0 %v3080
          %v3169 = vpop.f32.mrb[0].mxu0
          %v3170 = vadd.f32 0.0, %v3169
          %v3171 = vpop.f32.mrb[0].mxu0
          %3172 = vmatprep.mubr.f32.mxu0 0.0
          %3173 = vmatmul.mubr.f32.gmra.mrb[0].mxu0 %v3083
          %v3174 = vpop.f32.mrb[0].mxu0
          %v3175 = vadd.f32 0.0, %v3174
          %v3176 = vpop.f32.mrb[0].mxu0
          %3177 = vmatprep.mubr.f32.mxu0 0.0
          %3178 = vmatmul.mubr.f32.gmra.mrb[0].mxu0 %v3086
          %v3179 = vpop.f32.mrb[0].mxu0
          %v3180 = vadd.f32 0.0, %v3179
          %v3181 = vpop.f32.mrb[0].mxu0
          %3182 = vdwg.mxu0
          %v3183 = vadd.f32 %v3051, %v3155
          %v3184 = vadd.f32 %v3052, %v3160
          %v3185 = vadd.f32 %v3053, %v3165
          %v3186 = vadd.f32 %v3054, %v3170
          %v3187 = vadd.f32 %v3055, %v3175
          %v3188 = vadd.f32 %v3056, %v3180
          %s3189 = sadd.s32 %s1617, 48
          %s3190 = scalar_lea.vmem [#allocation2], %s3189
          %v3191 = vld [vmem:[%s3190] sm:$0xff]
          %v3192 = vld [vmem:[%s3190 + $0x8] sm:$0xff]
          %v3193 = vld [vmem:[%s3190 + $0x10] sm:$0xff]
          %v3194 = vld [vmem:[%s3190 + $0x18] sm:$0xff]
          %v3195 = vld [vmem:[%s3190 + $0x20] sm:$0xff]
          %v3196 = vld [vmem:[%s3190 + $0x28] sm:$0x3]
          %s3197 = scalar_lea.vmem %s3, 384
          %v3198 = vld [vmem:[%s3197] sm:$0xff]
          %v3199 = vld [vmem:[%s3197 + $0x8] sm:$0xff]
          %v3200 = vld [vmem:[%s3197 + $0x10] sm:$0xff]
          %v3201 = vld [vmem:[%s3197 + $0x18] sm:$0xff]
          %v3203 = vsel %vm1642, %v3191, 0
          %v3206 = vsel %vm1642, %v3192, 0
          %v3209 = vsel %vm1642, %v3193, 0
          %v3212 = vsel %vm1642, %v3194, 0
          %v3215 = vsel %vm1642, %v3195, 0
          %v3218 = vsel %vm1642, %v3196, 0
          %3220 = vmatprep.subr.mxu0 0.0
          %3221 = vmatpush1.msra.mxu0 %v3198
          %3222 = vmatprep.subr.mxu0 0.0
          %3223 = vmatpush1.msra.mxu0 %v3199
          %3224 = vmatprep.subr.mxu0 0.0
          %3225 = vmatpush1.msra.mxu0 %v3200
          %3226 = vmatprep.subr.mxu0 0.0
          %3227 = vmatpush1.msra.mxu0 %v3201
          %3228 = vmatprep.subr.mxu0 0.0
          %3229 = vmatpush1.msra.mxu0 0.0
          %3230 = vmatprep.subr.mxu0 0.0
          %3231 = vmatpush1.msra.mxu0 0.0
          %3232 = vmatprep.subr.mxu0 0.0
          %3233 = vmatpush1.msra.mxu0 0.0
          %3234 = vmatprep.subr.mxu0 0.0
          %3235 = vmatpush1.msra.mxu0 0.0
          %3236 = vmatprep.subr.mxu0 0.0
          %3237 = vmatpush1.msra.mxu0 0.0
          %3238 = vmatprep.subr.mxu0 0.0
          %3239 = vmatpush1.msra.mxu0 0.0
          %3240 = vmatprep.subr.mxu0 0.0
          %3241 = vmatpush1.msra.mxu0 0.0
          %3242 = vmatprep.subr.mxu0 0.0
          %3243 = vmatpush1.msra.mxu0 0.0
          %3244 = vmatprep.subr.mxu0 0.0
          %3245 = vmatpush1.msra.mxu0 0.0
          %3246 = vmatprep.subr.mxu0 0.0
          %3247 = vmatpush1.msra.mxu0 0.0
          %3248 = vmatprep.subr.mxu0 0.0
          %3249 = vmatpush1.msra.mxu0 0.0
          %3250 = vmatprep.subr.mxu0 0.0
          %3251 = vmatpush1.msra.mxu0 0.0
          %3252 = vmatprep.subr.mxu0 0.0
          %3253 = vmatpush1.msra.mxu0 0.0
          %3254 = vmatprep.subr.mxu0 0.0
          %3255 = vmatpush1.msra.mxu0 0.0
          %3256 = vmatprep.subr.mxu0 0.0
          %3257 = vmatpush1.msra.mxu0 0.0
          %3258 = vmatprep.subr.mxu0 0.0
          %3259 = vmatpush1.msra.mxu0 0.0
          %3260 = vmatprep.subr.mxu0 0.0
          %3261 = vmatpush1.msra.mxu0 0.0
          %3262 = vmatprep.subr.mxu0 0.0
          %3263 = vmatpush1.msra.mxu0 0.0
          %3264 = vmatprep.subr.mxu0 0.0
          %3265 = vmatpush1.msra.mxu0 0.0
          %3266 = vmatprep.subr.mxu0 0.0
          %3267 = vmatpush1.msra.mxu0 0.0
          %3268 = vmatprep.subr.mxu0 0.0
          %3269 = vmatpush1.msra.mxu0 0.0
          %3270 = vmatprep.subr.mxu0 0.0
          %3271 = vmatpush1.msra.mxu0 0.0
          %3272 = vmatprep.subr.mxu0 0.0
          %3273 = vmatpush1.msra.mxu0 0.0
          %3274 = vmatprep.subr.mxu0 0.0
          %3275 = vmatpush1.msra.mxu0 0.0
          %3276 = vmatprep.subr.mxu0 0.0
          %3277 = vmatpush1.msra.mxu0 0.0
          %3278 = vmatprep.subr.mxu0 0.0
          %3279 = vmatpush1.msra.mxu0 0.0
          %3280 = vmatprep.subr.mxu0 0.0
          %3281 = vmatpush1.msra.mxu0 0.0
          %3282 = vmatprep.subr.mxu0 0.0
          %3283 = vmatpush1.msra.mxu0 0.0
          %3284 = vmatprep.mubr.f32.mxu0 0.0
          %3285 = vmatmul.mubr.f32.gmra.mrb[0].mxu0 %v3203
          %v3286 = vpop.f32.mrb[0].mxu0
          %v3287 = vadd.f32 0.0, %v3286
          %v3288 = vpop.f32.mrb[0].mxu0
          %3289 = vmatprep.mubr.f32.mxu0 0.0
          %3290 = vmatmul.mubr.f32.gmra.mrb[0].mxu0 %v3206
          %v3291 = vpop.f32.mrb[0].mxu0
          %v3292 = vadd.f32 0.0, %v3291
          %v3293 = vpop.f32.mrb[0].mxu0
          %3294 = vmatprep.mubr.f32.mxu0 0.0
          %3295 = vmatmul.mubr.f32.gmra.mrb[0].mxu0 %v3209
          %v3296 = vpop.f32.mrb[0].mxu0
          %v3297 = vadd.f32 0.0, %v3296
          %v3298 = vpop.f32.mrb[0].mxu0
          %3299 = vmatprep.mubr.f32.mxu0 0.0
          %3300 = vmatmul.mubr.f32.gmra.mrb[0].mxu0 %v3212
          %v3301 = vpop.f32.mrb[0].mxu0
          %v3302 = vadd.f32 0.0, %v3301
          %v3303 = vpop.f32.mrb[0].mxu0
          %3304 = vmatprep.mubr.f32.mxu0 0.0
          %3305 = vmatmul.mubr.f32.gmra.mrb[0].mxu0 %v3215
          %v3306 = vpop.f32.mrb[0].mxu0
          %v3307 = vadd.f32 0.0, %v3306
          %v3308 = vpop.f32.mrb[0].mxu0
          %3309 = vmatprep.mubr.f32.mxu0 0.0
          %3310 = vmatmul.mubr.f32.gmra.mrb[0].mxu0 %v3218
          %v3311 = vpop.f32.mrb[0].mxu0
          %v3312 = vadd.f32 0.0, %v3311
          %v3313 = vpop.f32.mrb[0].mxu0
          %3314 = vdwg.mxu0
          %v3315 = vadd.f32 %v3183, %v3287
          %v3316 = vadd.f32 %v3184, %v3292
          %v3317 = vadd.f32 %v3185, %v3297
          %v3318 = vadd.f32 %v3186, %v3302
          %v3319 = vadd.f32 %v3187, %v3307
          %v3320 = vadd.f32 %v3188, %v3312
          %s3321 = sadd.s32 %s1617, 49
          %s3322 = scalar_lea.vmem [#allocation2], %s3321
          %v3323 = vld [vmem:[%s3322] sm:$0xff]
          %v3324 = vld [vmem:[%s3322 + $0x8] sm:$0xff]
          %v3325 = vld [vmem:[%s3322 + $0x10] sm:$0xff]
          %v3326 = vld [vmem:[%s3322 + $0x18] sm:$0xff]
          %v3327 = vld [vmem:[%s3322 + $0x20] sm:$0xff]
          %v3328 = vld [vmem:[%s3322 + $0x28] sm:$0x3]
          %s3329 = scalar_lea.vmem %s3, 416
          %v3330 = vld [vmem:[%s3329] sm:$0xff]
          %v3331 = vld [vmem:[%s3329 + $0x8] sm:$0xff]
          %v3332 = vld [vmem:[%s3329 + $0x10] sm:$0xff]
          %v3333 = vld [vmem:[%s3329 + $0x18] sm:$0xff]
          %v3335 = vsel %vm1642, %v3323, 0
          %v3338 = vsel %vm1642, %v3324, 0
          %v3341 = vsel %vm1642, %v3325, 0
          %v3344 = vsel %vm1642, %v3326, 0
          %v3347 = vsel %vm1642, %v3327, 0
          %v3350 = vsel %vm1642, %v3328, 0
          %3352 = vmatprep.subr.mxu0 0.0
          %3353 = vmatpush1.msra.mxu0 %v3330
          %3354 = vmatprep.subr.mxu0 0.0
          %3355 = vmatpush1.msra.mxu0 %v3331
          %3356 = vmatprep.subr.mxu0 0.0
          %3357 = vmatpush1.msra.mxu0 %v3332
          %3358 = vmatprep.subr.mxu0 0.0
          %3359 = vmatpush1.msra.mxu0 %v3333
          %3360 = vmatprep.subr.mxu0 0.0
          %3361 = vmatpush1.msra.mxu0 0.0
          %3362 = vmatprep.subr.mxu0 0.0
          %3363 = vmatpush1.msra.mxu0 0.0
          %3364 = vmatprep.subr.mxu0 0.0
          %3365 = vmatpush1.msra.mxu0 0.0
          %3366 = vmatprep.subr.mxu0 0.0
          %3367 = vmatpush1.msra.mxu0 0.0
          %3368 = vmatprep.subr.mxu0 0.0
          %3369 = vmatpush1.msra.mxu0 0.0
          %3370 = vmatprep.subr.mxu0 0.0
          %3371 = vmatpush1.msra.mxu0 0.0
          %3372 = vmatprep.subr.mxu0 0.0
          %3373 = vmatpush1.msra.mxu0 0.0
          %3374 = vmatprep.subr.mxu0 0.0
          %3375 = vmatpush1.msra.mxu0 0.0
          %3376 = vmatprep.subr.mxu0 0.0
          %3377 = vmatpush1.msra.mxu0 0.0
          %3378 = vmatprep.subr.mxu0 0.0
          %3379 = vmatpush1.msra.mxu0 0.0
          %3380 = vmatprep.subr.mxu0 0.0
          %3381 = vmatpush1.msra.mxu0 0.0
          %3382 = vmatprep.subr.mxu0 0.0
          %3383 = vmatpush1.msra.mxu0 0.0
          %3384 = vmatprep.subr.mxu0 0.0
          %3385 = vmatpush1.msra.mxu0 0.0
          %3386 = vmatprep.subr.mxu0 0.0
          %3387 = vmatpush1.msra.mxu0 0.0
          %3388 = vmatprep.subr.mxu0 0.0
          %3389 = vmatpush1.msra.mxu0 0.0
          %3390 = vmatprep.subr.mxu0 0.0
          %3391 = vmatpush1.msra.mxu0 0.0
          %3392 = vmatprep.subr.mxu0 0.0
          %3393 = vmatpush1.msra.mxu0 0.0
          %3394 = vmatprep.subr.mxu0 0.0
          %3395 = vmatpush1.msra.mxu0 0.0
          %3396 = vmatprep.subr.mxu0 0.0
          %3397 = vmatpush1.msra.mxu0 0.0
          %3398 = vmatprep.subr.mxu0 0.0
          %3399 = vmatpush1.msra.mxu0 0.0
          %3400 = vmatprep.subr.mxu0 0.0
          %3401 = vmatpush1.msra.mxu0 0.0
          %3402 = vmatprep.subr.mxu0 0.0
          %3403 = vmatpush1.msra.mxu0 0.0
          %3404 = vmatprep.subr.mxu0 0.0
          %3405 = vmatpush1.msra.mxu0 0.0
          %3406 = vmatprep.subr.mxu0 0.0
          %3407 = vmatpush1.msra.mxu0 0.0
          %3408 = vmatprep.subr.mxu0 0.0
          %3409 = vmatpush1.msra.mxu0 0.0
          %3410 = vmatprep.subr.mxu0 0.0
          %3411 = vmatpush1.msra.mxu0 0.0
          %3412 = vmatprep.subr.mxu0 0.0
          %3413 = vmatpush1.msra.mxu0 0.0
          %3414 = vmatprep.subr.mxu0 0.0
          %3415 = vmatpush1.msra.mxu0 0.0
          %3416 = vmatprep.mubr.f32.mxu0 0.0
          %3417 = vmatmul.mubr.f32.gmra.mrb[0].mxu0 %v3335
          %v3418 = vpop.f32.mrb[0].mxu0
          %v3419 = vadd.f32 0.0, %v3418
          %v3420 = vpop.f32.mrb[0].mxu0
          %3421 = vmatprep.mubr.f32.mxu0 0.0
          %3422 = vmatmul.mubr.f32.gmra.mrb[0].mxu0 %v3338
          %v3423 = vpop.f32.mrb[0].mxu0
          %v3424 = vadd.f32 0.0, %v3423
          %v3425 = vpop.f32.mrb[0].mxu0
          %3426 = vmatprep.mubr.f32.mxu0 0.0
          %3427 = vmatmul.mubr.f32.gmra.mrb[0].mxu0 %v3341
          %v3428 = vpop.f32.mrb[0].mxu0
          %v3429 = vadd.f32 0.0, %v3428
          %v3430 = vpop.f32.mrb[0].mxu0
          %3431 = vmatprep.mubr.f32.mxu0 0.0
          %3432 = vmatmul.mubr.f32.gmra.mrb[0].mxu0 %v3344
          %v3433 = vpop.f32.mrb[0].mxu0
          %v3434 = vadd.f32 0.0, %v3433
          %v3435 = vpop.f32.mrb[0].mxu0
          %3436 = vmatprep.mubr.f32.mxu0 0.0
          %3437 = vmatmul.mubr.f32.gmra.mrb[0].mxu0 %v3347
          %v3438 = vpop.f32.mrb[0].mxu0
          %v3439 = vadd.f32 0.0, %v3438
          %v3440 = vpop.f32.mrb[0].mxu0
          %3441 = vmatprep.mubr.f32.mxu0 0.0
          %3442 = vmatmul.mubr.f32.gmra.mrb[0].mxu0 %v3350
          %v3443 = vpop.f32.mrb[0].mxu0
          %v3444 = vadd.f32 0.0, %v3443
          %v3445 = vpop.f32.mrb[0].mxu0
          %3446 = vdwg.mxu0
          %v3447 = vadd.f32 %v3315, %v3419
          %v3448 = vadd.f32 %v3316, %v3424
          %v3449 = vadd.f32 %v3317, %v3429
          %v3450 = vadd.f32 %v3318, %v3434
          %v3451 = vadd.f32 %v3319, %v3439
          %v3452 = vadd.f32 %v3320, %v3444
          %s3453 = sadd.s32 %s1617, 50
          %s3454 = scalar_lea.vmem [#allocation2], %s3453
          %v3455 = vld [vmem:[%s3454] sm:$0xff]
          %v3456 = vld [vmem:[%s3454 + $0x8] sm:$0xff]
          %v3457 = vld [vmem:[%s3454 + $0x10] sm:$0xff]
          %v3458 = vld [vmem:[%s3454 + $0x18] sm:$0xff]
          %v3459 = vld [vmem:[%s3454 + $0x20] sm:$0xff]
          %v3460 = vld [vmem:[%s3454 + $0x28] sm:$0x3]
          %s3461 = scalar_lea.vmem %s3, 448
          %v3462 = vld [vmem:[%s3461] sm:$0xff]
          %v3463 = vld [vmem:[%s3461 + $0x8] sm:$0xff]
          %v3464 = vld [vmem:[%s3461 + $0x10] sm:$0xff]
          %v3465 = vld [vmem:[%s3461 + $0x18] sm:$0xff]
          %v3467 = vsel %vm1642, %v3455, 0
          %v3470 = vsel %vm1642, %v3456, 0
          %v3473 = vsel %vm1642, %v3457, 0
          %v3476 = vsel %vm1642, %v3458, 0
          %v3479 = vsel %vm1642, %v3459, 0
          %v3482 = vsel %vm1642, %v3460, 0
          %3484 = vmatprep.subr.mxu0 0.0
          %3485 = vmatpush1.msra.mxu0 %v3462
          %3486 = vmatprep.subr.mxu0 0.0
          %3487 = vmatpush1.msra.mxu0 %v3463
          %3488 = vmatprep.subr.mxu0 0.0
          %3489 = vmatpush1.msra.mxu0 %v3464
          %3490 = vmatprep.subr.mxu0 0.0
          %3491 = vmatpush1.msra.mxu0 %v3465
          %3492 = vmatprep.subr.mxu0 0.0
          %3493 = vmatpush1.msra.mxu0 0.0
          %3494 = vmatprep.subr.mxu0 0.0
          %3495 = vmatpush1.msra.mxu0 0.0
          %3496 = vmatprep.subr.mxu0 0.0
          %3497 = vmatpush1.msra.mxu0 0.0
          %3498 = vmatprep.subr.mxu0 0.0
          %3499 = vmatpush1.msra.mxu0 0.0
          %3500 = vmatprep.subr.mxu0 0.0
          %3501 = vmatpush1.msra.mxu0 0.0
          %3502 = vmatprep.subr.mxu0 0.0
          %3503 = vmatpush1.msra.mxu0 0.0
          %3504 = vmatprep.subr.mxu0 0.0
          %3505 = vmatpush1.msra.mxu0 0.0
          %3506 = vmatprep.subr.mxu0 0.0
          %3507 = vmatpush1.msra.mxu0 0.0
          %3508 = vmatprep.subr.mxu0 0.0
          %3509 = vmatpush1.msra.mxu0 0.0
          %3510 = vmatprep.subr.mxu0 0.0
          %3511 = vmatpush1.msra.mxu0 0.0
          %3512 = vmatprep.subr.mxu0 0.0
          %3513 = vmatpush1.msra.mxu0 0.0
          %3514 = vmatprep.subr.mxu0 0.0
          %3515 = vmatpush1.msra.mxu0 0.0
          %3516 = vmatprep.subr.mxu0 0.0
          %3517 = vmatpush1.msra.mxu0 0.0
          %3518 = vmatprep.subr.mxu0 0.0
          %3519 = vmatpush1.msra.mxu0 0.0
          %3520 = vmatprep.subr.mxu0 0.0
          %3521 = vmatpush1.msra.mxu0 0.0
          %3522 = vmatprep.subr.mxu0 0.0
          %3523 = vmatpush1.msra.mxu0 0.0
          %3524 = vmatprep.subr.mxu0 0.0
          %3525 = vmatpush1.msra.mxu0 0.0
          %3526 = vmatprep.subr.mxu0 0.0
          %3527 = vmatpush1.msra.mxu0 0.0
          %3528 = vmatprep.subr.mxu0 0.0
          %3529 = vmatpush1.msra.mxu0 0.0
          %3530 = vmatprep.subr.mxu0 0.0
          %3531 = vmatpush1.msra.mxu0 0.0
          %3532 = vmatprep.subr.mxu0 0.0
          %3533 = vmatpush1.msra.mxu0 0.0
          %3534 = vmatprep.subr.mxu0 0.0
          %3535 = vmatpush1.msra.mxu0 0.0
          %3536 = vmatprep.subr.mxu0 0.0
          %3537 = vmatpush1.msra.mxu0 0.0
          %3538 = vmatprep.subr.mxu0 0.0
          %3539 = vmatpush1.msra.mxu0 0.0
          %3540 = vmatprep.subr.mxu0 0.0
          %3541 = vmatpush1.msra.mxu0 0.0
          %3542 = vmatprep.subr.mxu0 0.0
          %3543 = vmatpush1.msra.mxu0 0.0
          %3544 = vmatprep.subr.mxu0 0.0
          %3545 = vmatpush1.msra.mxu0 0.0
          %3546 = vmatprep.subr.mxu0 0.0
          %3547 = vmatpush1.msra.mxu0 0.0
          %3548 = vmatprep.mubr.f32.mxu0 0.0
          %3549 = vmatmul.mubr.f32.gmra.mrb[0].mxu0 %v3467
          %v3550 = vpop.f32.mrb[0].mxu0
          %v3551 = vadd.f32 0.0, %v3550
          %v3552 = vpop.f32.mrb[0].mxu0
          %3553 = vmatprep.mubr.f32.mxu0 0.0
          %3554 = vmatmul.mubr.f32.gmra.mrb[0].mxu0 %v3470
          %v3555 = vpop.f32.mrb[0].mxu0
          %v3556 = vadd.f32 0.0, %v3555
          %v3557 = vpop.f32.mrb[0].mxu0
          %3558 = vmatprep.mubr.f32.mxu0 0.0
          %3559 = vmatmul.mubr.f32.gmra.mrb[0].mxu0 %v3473
          %v3560 = vpop.f32.mrb[0].mxu0
          %v3561 = vadd.f32 0.0, %v3560
          %v3562 = vpop.f32.mrb[0].mxu0
          %3563 = vmatprep.mubr.f32.mxu0 0.0
          %3564 = vmatmul.mubr.f32.gmra.mrb[0].mxu0 %v3476
          %v3565 = vpop.f32.mrb[0].mxu0
          %v3566 = vadd.f32 0.0, %v3565
          %v3567 = vpop.f32.mrb[0].mxu0
          %3568 = vmatprep.mubr.f32.mxu0 0.0
          %3569 = vmatmul.mubr.f32.gmra.mrb[0].mxu0 %v3479
          %v3570 = vpop.f32.mrb[0].mxu0
          %v3571 = vadd.f32 0.0, %v3570
          %v3572 = vpop.f32.mrb[0].mxu0
          %3573 = vmatprep.mubr.f32.mxu0 0.0
          %3574 = vmatmul.mubr.f32.gmra.mrb[0].mxu0 %v3482
          %v3575 = vpop.f32.mrb[0].mxu0
          %v3576 = vadd.f32 0.0, %v3575
          %v3577 = vpop.f32.mrb[0].mxu0
          %3578 = vdwg.mxu0
          %v3579 = vadd.f32 %v3447, %v3551
          %v3580 = vadd.f32 %v3448, %v3556
          %v3581 = vadd.f32 %v3449, %v3561
          %v3582 = vadd.f32 %v3450, %v3566
          %v3583 = vadd.f32 %v3451, %v3571
          %v3584 = vadd.f32 %v3452, %v3576
          %s3585 = sadd.s32 %s1617, 69
          %s3586 = scalar_lea.vmem [#allocation2], %s3585
          %v3587 = vld [vmem:[%s3586] sm:$0xff]
          %v3588 = vld [vmem:[%s3586 + $0x8] sm:$0xff]
          %v3589 = vld [vmem:[%s3586 + $0x10] sm:$0xff]
          %v3590 = vld [vmem:[%s3586 + $0x18] sm:$0xff]
          %v3591 = vld [vmem:[%s3586 + $0x20] sm:$0xff]
          %v3592 = vld [vmem:[%s3586 + $0x28] sm:$0x3]
          %s3593 = scalar_lea.vmem %s3, 480
          %v3594 = vld [vmem:[%s3593] sm:$0xff]
          %v3595 = vld [vmem:[%s3593 + $0x8] sm:$0xff]
          %v3596 = vld [vmem:[%s3593 + $0x10] sm:$0xff]
          %v3597 = vld [vmem:[%s3593 + $0x18] sm:$0xff]
          %v3599 = vsel %vm1642, %v3587, 0
          %v3602 = vsel %vm1642, %v3588, 0
          %v3605 = vsel %vm1642, %v3589, 0
          %v3608 = vsel %vm1642, %v3590, 0
          %v3611 = vsel %vm1642, %v3591, 0
          %v3614 = vsel %vm1642, %v3592, 0
          %3616 = vmatprep.subr.mxu0 0.0
          %3617 = vmatpush1.msra.mxu0 %v3594
          %3618 = vmatprep.subr.mxu0 0.0
          %3619 = vmatpush1.msra.mxu0 %v3595
          %3620 = vmatprep.subr.mxu0 0.0
          %3621 = vmatpush1.msra.mxu0 %v3596
          %3622 = vmatprep.subr.mxu0 0.0
          %3623 = vmatpush1.msra.mxu0 %v3597
          %3624 = vmatprep.subr.mxu0 0.0
          %3625 = vmatpush1.msra.mxu0 0.0
          %3626 = vmatprep.subr.mxu0 0.0
          %3627 = vmatpush1.msra.mxu0 0.0
          %3628 = vmatprep.subr.mxu0 0.0
          %3629 = vmatpush1.msra.mxu0 0.0
          %3630 = vmatprep.subr.mxu0 0.0
          %3631 = vmatpush1.msra.mxu0 0.0
          %3632 = vmatprep.subr.mxu0 0.0
          %3633 = vmatpush1.msra.mxu0 0.0
          %3634 = vmatprep.subr.mxu0 0.0
          %3635 = vmatpush1.msra.mxu0 0.0
          %3636 = vmatprep.subr.mxu0 0.0
          %3637 = vmatpush1.msra.mxu0 0.0
          %3638 = vmatprep.subr.mxu0 0.0
          %3639 = vmatpush1.msra.mxu0 0.0
          %3640 = vmatprep.subr.mxu0 0.0
          %3641 = vmatpush1.msra.mxu0 0.0
          %3642 = vmatprep.subr.mxu0 0.0
          %3643 = vmatpush1.msra.mxu0 0.0
          %3644 = vmatprep.subr.mxu0 0.0
          %3645 = vmatpush1.msra.mxu0 0.0
          %3646 = vmatprep.subr.mxu0 0.0
          %3647 = vmatpush1.msra.mxu0 0.0
          %3648 = vmatprep.subr.mxu0 0.0
          %3649 = vmatpush1.msra.mxu0 0.0
          %3650 = vmatprep.subr.mxu0 0.0
          %3651 = vmatpush1.msra.mxu0 0.0
          %3652 = vmatprep.subr.mxu0 0.0
          %3653 = vmatpush1.msra.mxu0 0.0
          %3654 = vmatprep.subr.mxu0 0.0
          %3655 = vmatpush1.msra.mxu0 0.0
          %3656 = vmatprep.subr.mxu0 0.0
          %3657 = vmatpush1.msra.mxu0 0.0
          %3658 = vmatprep.subr.mxu0 0.0
          %3659 = vmatpush1.msra.mxu0 0.0
          %3660 = vmatprep.subr.mxu0 0.0
          %3661 = vmatpush1.msra.mxu0 0.0
          %3662 = vmatprep.subr.mxu0 0.0
          %3663 = vmatpush1.msra.mxu0 0.0
          %3664 = vmatprep.subr.mxu0 0.0
          %3665 = vmatpush1.msra.mxu0 0.0
          %3666 = vmatprep.subr.mxu0 0.0
          %3667 = vmatpush1.msra.mxu0 0.0
          %3668 = vmatprep.subr.mxu0 0.0
          %3669 = vmatpush1.msra.mxu0 0.0
          %3670 = vmatprep.subr.mxu0 0.0
          %3671 = vmatpush1.msra.mxu0 0.0
          %3672 = vmatprep.subr.mxu0 0.0
          %3673 = vmatpush1.msra.mxu0 0.0
          %3674 = vmatprep.subr.mxu0 0.0
          %3675 = vmatpush1.msra.mxu0 0.0
          %3676 = vmatprep.subr.mxu0 0.0
          %3677 = vmatpush1.msra.mxu0 0.0
          %3678 = vmatprep.subr.mxu0 0.0
          %3679 = vmatpush1.msra.mxu0 0.0
          %3680 = vmatprep.mubr.f32.mxu0 0.0
          %3681 = vmatmul.mubr.f32.gmra.mrb[0].mxu0 %v3599
          %v3682 = vpop.f32.mrb[0].mxu0
          %v3683 = vadd.f32 0.0, %v3682
          %v3684 = vpop.f32.mrb[0].mxu0
          %3685 = vmatprep.mubr.f32.mxu0 0.0
          %3686 = vmatmul.mubr.f32.gmra.mrb[0].mxu0 %v3602
          %v3687 = vpop.f32.mrb[0].mxu0
          %v3688 = vadd.f32 0.0, %v3687
          %v3689 = vpop.f32.mrb[0].mxu0
          %3690 = vmatprep.mubr.f32.mxu0 0.0
          %3691 = vmatmul.mubr.f32.gmra.mrb[0].mxu0 %v3605
          %v3692 = vpop.f32.mrb[0].mxu0
          %v3693 = vadd.f32 0.0, %v3692
          %v3694 = vpop.f32.mrb[0].mxu0
          %3695 = vmatprep.mubr.f32.mxu0 0.0
          %3696 = vmatmul.mubr.f32.gmra.mrb[0].mxu0 %v3608
          %v3697 = vpop.f32.mrb[0].mxu0
          %v3698 = vadd.f32 0.0, %v3697
          %v3699 = vpop.f32.mrb[0].mxu0
          %3700 = vmatprep.mubr.f32.mxu0 0.0
          %3701 = vmatmul.mubr.f32.gmra.mrb[0].mxu0 %v3611
          %v3702 = vpop.f32.mrb[0].mxu0
          %v3703 = vadd.f32 0.0, %v3702
          %v3704 = vpop.f32.mrb[0].mxu0
          %3705 = vmatprep.mubr.f32.mxu0 0.0
          %3706 = vmatmul.mubr.f32.gmra.mrb[0].mxu0 %v3614
          %v3707 = vpop.f32.mrb[0].mxu0
          %v3708 = vadd.f32 0.0, %v3707
          %v3709 = vpop.f32.mrb[0].mxu0
          %3710 = vdwg.mxu0
          %v3711 = vadd.f32 %v3579, %v3683
          %v3712 = vadd.f32 %v3580, %v3688
          %v3713 = vadd.f32 %v3581, %v3693
          %v3714 = vadd.f32 %v3582, %v3698
          %v3715 = vadd.f32 %v3583, %v3703
          %v3716 = vadd.f32 %v3584, %v3708
          %s3717 = sadd.s32 %s1617, 70
          %s3718 = scalar_lea.vmem [#allocation2], %s3717
          %v3719 = vld [vmem:[%s3718] sm:$0xff]
          %v3720 = vld [vmem:[%s3718 + $0x8] sm:$0xff]
          %v3721 = vld [vmem:[%s3718 + $0x10] sm:$0xff]
          %v3722 = vld [vmem:[%s3718 + $0x18] sm:$0xff]
          %v3723 = vld [vmem:[%s3718 + $0x20] sm:$0xff]
          %v3724 = vld [vmem:[%s3718 + $0x28] sm:$0x3]
          %s3725 = scalar_lea.vmem %s3, 512
          %v3726 = vld [vmem:[%s3725] sm:$0xff]
          %v3727 = vld [vmem:[%s3725 + $0x8] sm:$0xff]
          %v3728 = vld [vmem:[%s3725 + $0x10] sm:$0xff]
          %v3729 = vld [vmem:[%s3725 + $0x18] sm:$0xff]
          %v3731 = vsel %vm1642, %v3719, 0
          %v3734 = vsel %vm1642, %v3720, 0
          %v3737 = vsel %vm1642, %v3721, 0
          %v3740 = vsel %vm1642, %v3722, 0
          %v3743 = vsel %vm1642, %v3723, 0
          %v3746 = vsel %vm1642, %v3724, 0
          %3748 = vmatprep.subr.mxu0 0.0
          %3749 = vmatpush1.msra.mxu0 %v3726
          %3750 = vmatprep.subr.mxu0 0.0
          %3751 = vmatpush1.msra.mxu0 %v3727
          %3752 = vmatprep.subr.mxu0 0.0
          %3753 = vmatpush1.msra.mxu0 %v3728
          %3754 = vmatprep.subr.mxu0 0.0
          %3755 = vmatpush1.msra.mxu0 %v3729
          %3756 = vmatprep.subr.mxu0 0.0
          %3757 = vmatpush1.msra.mxu0 0.0
          %3758 = vmatprep.subr.mxu0 0.0
          %3759 = vmatpush1.msra.mxu0 0.0
          %3760 = vmatprep.subr.mxu0 0.0
          %3761 = vmatpush1.msra.mxu0 0.0
          %3762 = vmatprep.subr.mxu0 0.0
          %3763 = vmatpush1.msra.mxu0 0.0
          %3764 = vmatprep.subr.mxu0 0.0
          %3765 = vmatpush1.msra.mxu0 0.0
          %3766 = vmatprep.subr.mxu0 0.0
          %3767 = vmatpush1.msra.mxu0 0.0
          %3768 = vmatprep.subr.mxu0 0.0
          %3769 = vmatpush1.msra.mxu0 0.0
          %3770 = vmatprep.subr.mxu0 0.0
          %3771 = vmatpush1.msra.mxu0 0.0
          %3772 = vmatprep.subr.mxu0 0.0
          %3773 = vmatpush1.msra.mxu0 0.0
          %3774 = vmatprep.subr.mxu0 0.0
          %3775 = vmatpush1.msra.mxu0 0.0
          %3776 = vmatprep.subr.mxu0 0.0
          %3777 = vmatpush1.msra.mxu0 0.0
          %3778 = vmatprep.subr.mxu0 0.0
          %3779 = vmatpush1.msra.mxu0 0.0
          %3780 = vmatprep.subr.mxu0 0.0
          %3781 = vmatpush1.msra.mxu0 0.0
          %3782 = vmatprep.subr.mxu0 0.0
          %3783 = vmatpush1.msra.mxu0 0.0
          %3784 = vmatprep.subr.mxu0 0.0
          %3785 = vmatpush1.msra.mxu0 0.0
          %3786 = vmatprep.subr.mxu0 0.0
          %3787 = vmatpush1.msra.mxu0 0.0
          %3788 = vmatprep.subr.mxu0 0.0
          %3789 = vmatpush1.msra.mxu0 0.0
          %3790 = vmatprep.subr.mxu0 0.0
          %3791 = vmatpush1.msra.mxu0 0.0
          %3792 = vmatprep.subr.mxu0 0.0
          %3793 = vmatpush1.msra.mxu0 0.0
          %3794 = vmatprep.subr.mxu0 0.0
          %3795 = vmatpush1.msra.mxu0 0.0
          %3796 = vmatprep.subr.mxu0 0.0
          %3797 = vmatpush1.msra.mxu0 0.0
          %3798 = vmatprep.subr.mxu0 0.0
          %3799 = vmatpush1.msra.mxu0 0.0
          %3800 = vmatprep.subr.mxu0 0.0
          %3801 = vmatpush1.msra.mxu0 0.0
          %3802 = vmatprep.subr.mxu0 0.0
          %3803 = vmatpush1.msra.mxu0 0.0
          %3804 = vmatprep.subr.mxu0 0.0
          %3805 = vmatpush1.msra.mxu0 0.0
          %3806 = vmatprep.subr.mxu0 0.0
          %3807 = vmatpush1.msra.mxu0 0.0
          %3808 = vmatprep.subr.mxu0 0.0
          %3809 = vmatpush1.msra.mxu0 0.0
          %3810 = vmatprep.subr.mxu0 0.0
          %3811 = vmatpush1.msra.mxu0 0.0
          %3812 = vmatprep.mubr.f32.mxu0 0.0
          %3813 = vmatmul.mubr.f32.gmra.mrb[0].mxu0 %v3731
          %v3814 = vpop.f32.mrb[0].mxu0
          %v3815 = vadd.f32 0.0, %v3814
          %v3816 = vpop.f32.mrb[0].mxu0
          %3817 = vmatprep.mubr.f32.mxu0 0.0
          %3818 = vmatmul.mubr.f32.gmra.mrb[0].mxu0 %v3734
          %v3819 = vpop.f32.mrb[0].mxu0
          %v3820 = vadd.f32 0.0, %v3819
          %v3821 = vpop.f32.mrb[0].mxu0
          %3822 = vmatprep.mubr.f32.mxu0 0.0
          %3823 = vmatmul.mubr.f32.gmra.mrb[0].mxu0 %v3737
          %v3824 = vpop.f32.mrb[0].mxu0
          %v3825 = vadd.f32 0.0, %v3824
          %v3826 = vpop.f32.mrb[0].mxu0
          %3827 = vmatprep.mubr.f32.mxu0 0.0
          %3828 = vmatmul.mubr.f32.gmra.mrb[0].mxu0 %v3740
          %v3829 = vpop.f32.mrb[0].mxu0
          %v3830 = vadd.f32 0.0, %v3829
          %v3831 = vpop.f32.mrb[0].mxu0
          %3832 = vmatprep.mubr.f32.mxu0 0.0
          %3833 = vmatmul.mubr.f32.gmra.mrb[0].mxu0 %v3743
          %v3834 = vpop.f32.mrb[0].mxu0
          %v3835 = vadd.f32 0.0, %v3834
          %v3836 = vpop.f32.mrb[0].mxu0
          %3837 = vmatprep.mubr.f32.mxu0 0.0
          %3838 = vmatmul.mubr.f32.gmra.mrb[0].mxu0 %v3746
          %v3839 = vpop.f32.mrb[0].mxu0
          %v3840 = vadd.f32 0.0, %v3839
          %v3841 = vpop.f32.mrb[0].mxu0
          %3842 = vdwg.mxu0
          %v3843 = vadd.f32 %v3711, %v3815
          %v3844 = vadd.f32 %v3712, %v3820
          %v3845 = vadd.f32 %v3713, %v3825
          %v3846 = vadd.f32 %v3714, %v3830
          %v3847 = vadd.f32 %v3715, %v3835
          %v3848 = vadd.f32 %v3716, %v3840
          %s3849 = sadd.s32 %s1617, 71
          %s3850 = scalar_lea.vmem [#allocation2], %s3849
          %v3851 = vld [vmem:[%s3850] sm:$0xff]
          %v3852 = vld [vmem:[%s3850 + $0x8] sm:$0xff]
          %v3853 = vld [vmem:[%s3850 + $0x10] sm:$0xff]
          %v3854 = vld [vmem:[%s3850 + $0x18] sm:$0xff]
          %v3855 = vld [vmem:[%s3850 + $0x20] sm:$0xff]
          %v3856 = vld [vmem:[%s3850 + $0x28] sm:$0x3]
          %s3857 = scalar_lea.vmem %s3, 544
          %v3858 = vld [vmem:[%s3857] sm:$0xff]
          %v3859 = vld [vmem:[%s3857 + $0x8] sm:$0xff]
          %v3860 = vld [vmem:[%s3857 + $0x10] sm:$0xff]
          %v3861 = vld [vmem:[%s3857 + $0x18] sm:$0xff]
          %v3863 = vsel %vm1642, %v3851, 0
          %v3866 = vsel %vm1642, %v3852, 0
          %v3869 = vsel %vm1642, %v3853, 0
          %v3872 = vsel %vm1642, %v3854, 0
          %v3875 = vsel %vm1642, %v3855, 0
          %v3878 = vsel %vm1642, %v3856, 0
          %3880 = vmatprep.subr.mxu0 0.0
          %3881 = vmatpush1.msra.mxu0 %v3858
          %3882 = vmatprep.subr.mxu0 0.0
          %3883 = vmatpush1.msra.mxu0 %v3859
          %3884 = vmatprep.subr.mxu0 0.0
          %3885 = vmatpush1.msra.mxu0 %v3860
          %3886 = vmatprep.subr.mxu0 0.0
          %3887 = vmatpush1.msra.mxu0 %v3861
          %3888 = vmatprep.subr.mxu0 0.0
          %3889 = vmatpush1.msra.mxu0 0.0
          %3890 = vmatprep.subr.mxu0 0.0
          %3891 = vmatpush1.msra.mxu0 0.0
          %3892 = vmatprep.subr.mxu0 0.0
          %3893 = vmatpush1.msra.mxu0 0.0
          %3894 = vmatprep.subr.mxu0 0.0
          %3895 = vmatpush1.msra.mxu0 0.0
          %3896 = vmatprep.subr.mxu0 0.0
          %3897 = vmatpush1.msra.mxu0 0.0
          %3898 = vmatprep.subr.mxu0 0.0
          %3899 = vmatpush1.msra.mxu0 0.0
          %3900 = vmatprep.subr.mxu0 0.0
          %3901 = vmatpush1.msra.mxu0 0.0
          %3902 = vmatprep.subr.mxu0 0.0
          %3903 = vmatpush1.msra.mxu0 0.0
          %3904 = vmatprep.subr.mxu0 0.0
          %3905 = vmatpush1.msra.mxu0 0.0
          %3906 = vmatprep.subr.mxu0 0.0
          %3907 = vmatpush1.msra.mxu0 0.0
          %3908 = vmatprep.subr.mxu0 0.0
          %3909 = vmatpush1.msra.mxu0 0.0
          %3910 = vmatprep.subr.mxu0 0.0
          %3911 = vmatpush1.msra.mxu0 0.0
          %3912 = vmatprep.subr.mxu0 0.0
          %3913 = vmatpush1.msra.mxu0 0.0
          %3914 = vmatprep.subr.mxu0 0.0
          %3915 = vmatpush1.msra.mxu0 0.0
          %3916 = vmatprep.subr.mxu0 0.0
          %3917 = vmatpush1.msra.mxu0 0.0
          %3918 = vmatprep.subr.mxu0 0.0
          %3919 = vmatpush1.msra.mxu0 0.0
          %3920 = vmatprep.subr.mxu0 0.0
          %3921 = vmatpush1.msra.mxu0 0.0
          %3922 = vmatprep.subr.mxu0 0.0
          %3923 = vmatpush1.msra.mxu0 0.0
          %3924 = vmatprep.subr.mxu0 0.0
          %3925 = vmatpush1.msra.mxu0 0.0
          %3926 = vmatprep.subr.mxu0 0.0
          %3927 = vmatpush1.msra.mxu0 0.0
          %3928 = vmatprep.subr.mxu0 0.0
          %3929 = vmatpush1.msra.mxu0 0.0
          %3930 = vmatprep.subr.mxu0 0.0
          %3931 = vmatpush1.msra.mxu0 0.0
          %3932 = vmatprep.subr.mxu0 0.0
          %3933 = vmatpush1.msra.mxu0 0.0
          %3934 = vmatprep.subr.mxu0 0.0
          %3935 = vmatpush1.msra.mxu0 0.0
          %3936 = vmatprep.subr.mxu0 0.0
          %3937 = vmatpush1.msra.mxu0 0.0
          %3938 = vmatprep.subr.mxu0 0.0
          %3939 = vmatpush1.msra.mxu0 0.0
          %3940 = vmatprep.subr.mxu0 0.0
          %3941 = vmatpush1.msra.mxu0 0.0
          %3942 = vmatprep.subr.mxu0 0.0
          %3943 = vmatpush1.msra.mxu0 0.0
          %3944 = vmatprep.mubr.f32.mxu0 0.0
          %3945 = vmatmul.mubr.f32.gmra.mrb[0].mxu0 %v3863
          %v3946 = vpop.f32.mrb[0].mxu0
          %v3947 = vadd.f32 0.0, %v3946
          %v3948 = vpop.f32.mrb[0].mxu0
          %3949 = vmatprep.mubr.f32.mxu0 0.0
          %3950 = vmatmul.mubr.f32.gmra.mrb[0].mxu0 %v3866
          %v3951 = vpop.f32.mrb[0].mxu0
          %v3952 = vadd.f32 0.0, %v3951
          %v3953 = vpop.f32.mrb[0].mxu0
          %3954 = vmatprep.mubr.f32.mxu0 0.0
          %3955 = vmatmul.mubr.f32.gmra.mrb[0].mxu0 %v3869
          %v3956 = vpop.f32.mrb[0].mxu0
          %v3957 = vadd.f32 0.0, %v3956
          %v3958 = vpop.f32.mrb[0].mxu0
          %3959 = vmatprep.mubr.f32.mxu0 0.0
          %3960 = vmatmul.mubr.f32.gmra.mrb[0].mxu0 %v3872
          %v3961 = vpop.f32.mrb[0].mxu0
          %v3962 = vadd.f32 0.0, %v3961
          %v3963 = vpop.f32.mrb[0].mxu0
          %3964 = vmatprep.mubr.f32.mxu0 0.0
          %3965 = vmatmul.mubr.f32.gmra.mrb[0].mxu0 %v3875
          %v3966 = vpop.f32.mrb[0].mxu0
          %v3967 = vadd.f32 0.0, %v3966
          %v3968 = vpop.f32.mrb[0].mxu0
          %3969 = vmatprep.mubr.f32.mxu0 0.0
          %3970 = vmatmul.mubr.f32.gmra.mrb[0].mxu0 %v3878
          %v3971 = vpop.f32.mrb[0].mxu0
          %v3972 = vadd.f32 0.0, %v3971
          %v3973 = vpop.f32.mrb[0].mxu0
          %3974 = vdwg.mxu0
          %v3975 = vadd.f32 %v3843, %v3947
          %v3976 = vadd.f32 %v3844, %v3952
          %v3977 = vadd.f32 %v3845, %v3957
          %v3978 = vadd.f32 %v3846, %v3962
          %v3979 = vadd.f32 %v3847, %v3967
          %v3980 = vadd.f32 %v3848, %v3972
          %s3981 = sadd.s32 %s1617, 72
          %s3982 = scalar_lea.vmem [#allocation2], %s3981
          %v3983 = vld [vmem:[%s3982] sm:$0xff]
          %v3984 = vld [vmem:[%s3982 + $0x8] sm:$0xff]
          %v3985 = vld [vmem:[%s3982 + $0x10] sm:$0xff]
          %v3986 = vld [vmem:[%s3982 + $0x18] sm:$0xff]
          %v3987 = vld [vmem:[%s3982 + $0x20] sm:$0xff]
          %v3988 = vld [vmem:[%s3982 + $0x28] sm:$0x3]
          %s3989 = scalar_lea.vmem %s3, 576
          %v3990 = vld [vmem:[%s3989] sm:$0xff]
          %v3991 = vld [vmem:[%s3989 + $0x8] sm:$0xff]
          %v3992 = vld [vmem:[%s3989 + $0x10] sm:$0xff]
          %v3993 = vld [vmem:[%s3989 + $0x18] sm:$0xff]
          %v3995 = vsel %vm1642, %v3983, 0
          %v3998 = vsel %vm1642, %v3984, 0
          %v4001 = vsel %vm1642, %v3985, 0
          %v4004 = vsel %vm1642, %v3986, 0
          %v4007 = vsel %vm1642, %v3987, 0
          %v4010 = vsel %vm1642, %v3988, 0
          %4012 = vmatprep.subr.mxu0 0.0
          %4013 = vmatpush1.msra.mxu0 %v3990
          %4014 = vmatprep.subr.mxu0 0.0
          %4015 = vmatpush1.msra.mxu0 %v3991
          %4016 = vmatprep.subr.mxu0 0.0
          %4017 = vmatpush1.msra.mxu0 %v3992
          %4018 = vmatprep.subr.mxu0 0.0
          %4019 = vmatpush1.msra.mxu0 %v3993
          %4020 = vmatprep.subr.mxu0 0.0
          %4021 = vmatpush1.msra.mxu0 0.0
          %4022 = vmatprep.subr.mxu0 0.0
          %4023 = vmatpush1.msra.mxu0 0.0
          %4024 = vmatprep.subr.mxu0 0.0
          %4025 = vmatpush1.msra.mxu0 0.0
          %4026 = vmatprep.subr.mxu0 0.0
          %4027 = vmatpush1.msra.mxu0 0.0
          %4028 = vmatprep.subr.mxu0 0.0
          %4029 = vmatpush1.msra.mxu0 0.0
          %4030 = vmatprep.subr.mxu0 0.0
          %4031 = vmatpush1.msra.mxu0 0.0
          %4032 = vmatprep.subr.mxu0 0.0
          %4033 = vmatpush1.msra.mxu0 0.0
          %4034 = vmatprep.subr.mxu0 0.0
          %4035 = vmatpush1.msra.mxu0 0.0
          %4036 = vmatprep.subr.mxu0 0.0
          %4037 = vmatpush1.msra.mxu0 0.0
          %4038 = vmatprep.subr.mxu0 0.0
          %4039 = vmatpush1.msra.mxu0 0.0
          %4040 = vmatprep.subr.mxu0 0.0
          %4041 = vmatpush1.msra.mxu0 0.0
          %4042 = vmatprep.subr.mxu0 0.0
          %4043 = vmatpush1.msra.mxu0 0.0
          %4044 = vmatprep.subr.mxu0 0.0
          %4045 = vmatpush1.msra.mxu0 0.0
          %4046 = vmatprep.subr.mxu0 0.0
          %4047 = vmatpush1.msra.mxu0 0.0
          %4048 = vmatprep.subr.mxu0 0.0
          %4049 = vmatpush1.msra.mxu0 0.0
          %4050 = vmatprep.subr.mxu0 0.0
          %4051 = vmatpush1.msra.mxu0 0.0
          %4052 = vmatprep.subr.mxu0 0.0
          %4053 = vmatpush1.msra.mxu0 0.0
          %4054 = vmatprep.subr.mxu0 0.0
          %4055 = vmatpush1.msra.mxu0 0.0
          %4056 = vmatprep.subr.mxu0 0.0
          %4057 = vmatpush1.msra.mxu0 0.0
          %4058 = vmatprep.subr.mxu0 0.0
          %4059 = vmatpush1.msra.mxu0 0.0
          %4060 = vmatprep.subr.mxu0 0.0
          %4061 = vmatpush1.msra.mxu0 0.0
          %4062 = vmatprep.subr.mxu0 0.0
          %4063 = vmatpush1.msra.mxu0 0.0
          %4064 = vmatprep.subr.mxu0 0.0
          %4065 = vmatpush1.msra.mxu0 0.0
          %4066 = vmatprep.subr.mxu0 0.0
          %4067 = vmatpush1.msra.mxu0 0.0
          %4068 = vmatprep.subr.mxu0 0.0
          %4069 = vmatpush1.msra.mxu0 0.0
          %4070 = vmatprep.subr.mxu0 0.0
          %4071 = vmatpush1.msra.mxu0 0.0
          %4072 = vmatprep.subr.mxu0 0.0
          %4073 = vmatpush1.msra.mxu0 0.0
          %4074 = vmatprep.subr.mxu0 0.0
          %4075 = vmatpush1.msra.mxu0 0.0
          %4076 = vmatprep.mubr.f32.mxu0 0.0
          %4077 = vmatmul.mubr.f32.gmra.mrb[0].mxu0 %v3995
          %v4078 = vpop.f32.mrb[0].mxu0
          %v4079 = vadd.f32 0.0, %v4078
          %v4080 = vpop.f32.mrb[0].mxu0
          %4081 = vmatprep.mubr.f32.mxu0 0.0
          %4082 = vmatmul.mubr.f32.gmra.mrb[0].mxu0 %v3998
          %v4083 = vpop.f32.mrb[0].mxu0
          %v4084 = vadd.f32 0.0, %v4083
          %v4085 = vpop.f32.mrb[0].mxu0
          %4086 = vmatprep.mubr.f32.mxu0 0.0
          %4087 = vmatmul.mubr.f32.gmra.mrb[0].mxu0 %v4001
          %v4088 = vpop.f32.mrb[0].mxu0
          %v4089 = vadd.f32 0.0, %v4088
          %v4090 = vpop.f32.mrb[0].mxu0
          %4091 = vmatprep.mubr.f32.mxu0 0.0
          %4092 = vmatmul.mubr.f32.gmra.mrb[0].mxu0 %v4004
          %v4093 = vpop.f32.mrb[0].mxu0
          %v4094 = vadd.f32 0.0, %v4093
          %v4095 = vpop.f32.mrb[0].mxu0
          %4096 = vmatprep.mubr.f32.mxu0 0.0
          %4097 = vmatmul.mubr.f32.gmra.mrb[0].mxu0 %v4007
          %v4098 = vpop.f32.mrb[0].mxu0
          %v4099 = vadd.f32 0.0, %v4098
          %v4100 = vpop.f32.mrb[0].mxu0
          %4101 = vmatprep.mubr.f32.mxu0 0.0
          %4102 = vmatmul.mubr.f32.gmra.mrb[0].mxu0 %v4010
          %v4103 = vpop.f32.mrb[0].mxu0
          %v4104 = vadd.f32 0.0, %v4103
          %v4105 = vpop.f32.mrb[0].mxu0
          %4106 = vdwg.mxu0
          %v4107 = vadd.f32 %v3975, %v4079
          %v4108 = vadd.f32 %v3976, %v4084
          %v4109 = vadd.f32 %v3977, %v4089
          %v4110 = vadd.f32 %v3978, %v4094
          %v4111 = vadd.f32 %v3979, %v4099
          %v4112 = vadd.f32 %v3980, %v4104
          %s4113 = sadd.s32 %s1617, 73
          %s4114 = scalar_lea.vmem [#allocation2], %s4113
          %v4115 = vld [vmem:[%s4114] sm:$0xff]
          %v4116 = vld [vmem:[%s4114 + $0x8] sm:$0xff]
          %v4117 = vld [vmem:[%s4114 + $0x10] sm:$0xff]
          %v4118 = vld [vmem:[%s4114 + $0x18] sm:$0xff]
          %v4119 = vld [vmem:[%s4114 + $0x20] sm:$0xff]
          %v4120 = vld [vmem:[%s4114 + $0x28] sm:$0x3]
          %s4121 = scalar_lea.vmem %s3, 608
          %v4122 = vld [vmem:[%s4121] sm:$0xff]
          %v4123 = vld [vmem:[%s4121 + $0x8] sm:$0xff]
          %v4124 = vld [vmem:[%s4121 + $0x10] sm:$0xff]
          %v4125 = vld [vmem:[%s4121 + $0x18] sm:$0xff]
          %v4127 = vsel %vm1642, %v4115, 0
          %v4130 = vsel %vm1642, %v4116, 0
          %v4133 = vsel %vm1642, %v4117, 0
          %v4136 = vsel %vm1642, %v4118, 0
          %v4139 = vsel %vm1642, %v4119, 0
          %v4142 = vsel %vm1642, %v4120, 0
          %4144 = vmatprep.subr.mxu0 0.0
          %4145 = vmatpush1.msra.mxu0 %v4122
          %4146 = vmatprep.subr.mxu0 0.0
          %4147 = vmatpush1.msra.mxu0 %v4123
          %4148 = vmatprep.subr.mxu0 0.0
          %4149 = vmatpush1.msra.mxu0 %v4124
          %4150 = vmatprep.subr.mxu0 0.0
          %4151 = vmatpush1.msra.mxu0 %v4125
          %4152 = vmatprep.subr.mxu0 0.0
          %4153 = vmatpush1.msra.mxu0 0.0
          %4154 = vmatprep.subr.mxu0 0.0
          %4155 = vmatpush1.msra.mxu0 0.0
          %4156 = vmatprep.subr.mxu0 0.0
          %4157 = vmatpush1.msra.mxu0 0.0
          %4158 = vmatprep.subr.mxu0 0.0
          %4159 = vmatpush1.msra.mxu0 0.0
          %4160 = vmatprep.subr.mxu0 0.0
          %4161 = vmatpush1.msra.mxu0 0.0
          %4162 = vmatprep.subr.mxu0 0.0
          %4163 = vmatpush1.msra.mxu0 0.0
          %4164 = vmatprep.subr.mxu0 0.0
          %4165 = vmatpush1.msra.mxu0 0.0
          %4166 = vmatprep.subr.mxu0 0.0
          %4167 = vmatpush1.msra.mxu0 0.0
          %4168 = vmatprep.subr.mxu0 0.0
          %4169 = vmatpush1.msra.mxu0 0.0
          %4170 = vmatprep.subr.mxu0 0.0
          %4171 = vmatpush1.msra.mxu0 0.0
          %4172 = vmatprep.subr.mxu0 0.0
          %4173 = vmatpush1.msra.mxu0 0.0
          %4174 = vmatprep.subr.mxu0 0.0
          %4175 = vmatpush1.msra.mxu0 0.0
          %4176 = vmatprep.subr.mxu0 0.0
          %4177 = vmatpush1.msra.mxu0 0.0
          %4178 = vmatprep.subr.mxu0 0.0
          %4179 = vmatpush1.msra.mxu0 0.0
          %4180 = vmatprep.subr.mxu0 0.0
          %4181 = vmatpush1.msra.mxu0 0.0
          %4182 = vmatprep.subr.mxu0 0.0
          %4183 = vmatpush1.msra.mxu0 0.0
          %4184 = vmatprep.subr.mxu0 0.0
          %4185 = vmatpush1.msra.mxu0 0.0
          %4186 = vmatprep.subr.mxu0 0.0
          %4187 = vmatpush1.msra.mxu0 0.0
          %4188 = vmatprep.subr.mxu0 0.0
          %4189 = vmatpush1.msra.mxu0 0.0
          %4190 = vmatprep.subr.mxu0 0.0
          %4191 = vmatpush1.msra.mxu0 0.0
          %4192 = vmatprep.subr.mxu0 0.0
          %4193 = vmatpush1.msra.mxu0 0.0
          %4194 = vmatprep.subr.mxu0 0.0
          %4195 = vmatpush1.msra.mxu0 0.0
          %4196 = vmatprep.subr.mxu0 0.0
          %4197 = vmatpush1.msra.mxu0 0.0
          %4198 = vmatprep.subr.mxu0 0.0
          %4199 = vmatpush1.msra.mxu0 0.0
          %4200 = vmatprep.subr.mxu0 0.0
          %4201 = vmatpush1.msra.mxu0 0.0
          %4202 = vmatprep.subr.mxu0 0.0
          %4203 = vmatpush1.msra.mxu0 0.0
          %4204 = vmatprep.subr.mxu0 0.0
          %4205 = vmatpush1.msra.mxu0 0.0
          %4206 = vmatprep.subr.mxu0 0.0
          %4207 = vmatpush1.msra.mxu0 0.0
          %4208 = vmatprep.mubr.f32.mxu0 0.0
          %4209 = vmatmul.mubr.f32.gmra.mrb[0].mxu0 %v4127
          %v4210 = vpop.f32.mrb[0].mxu0
          %v4211 = vadd.f32 0.0, %v4210
          %v4212 = vpop.f32.mrb[0].mxu0
          %4213 = vmatprep.mubr.f32.mxu0 0.0
          %4214 = vmatmul.mubr.f32.gmra.mrb[0].mxu0 %v4130
          %v4215 = vpop.f32.mrb[0].mxu0
          %v4216 = vadd.f32 0.0, %v4215
          %v4217 = vpop.f32.mrb[0].mxu0
          %4218 = vmatprep.mubr.f32.mxu0 0.0
          %4219 = vmatmul.mubr.f32.gmra.mrb[0].mxu0 %v4133
          %v4220 = vpop.f32.mrb[0].mxu0
          %v4221 = vadd.f32 0.0, %v4220
          %v4222 = vpop.f32.mrb[0].mxu0
          %4223 = vmatprep.mubr.f32.mxu0 0.0
          %4224 = vmatmul.mubr.f32.gmra.mrb[0].mxu0 %v4136
          %v4225 = vpop.f32.mrb[0].mxu0
          %v4226 = vadd.f32 0.0, %v4225
          %v4227 = vpop.f32.mrb[0].mxu0
          %4228 = vmatprep.mubr.f32.mxu0 0.0
          %4229 = vmatmul.mubr.f32.gmra.mrb[0].mxu0 %v4139
          %v4230 = vpop.f32.mrb[0].mxu0
          %v4231 = vadd.f32 0.0, %v4230
          %v4232 = vpop.f32.mrb[0].mxu0
          %4233 = vmatprep.mubr.f32.mxu0 0.0
          %4234 = vmatmul.mubr.f32.gmra.mrb[0].mxu0 %v4142
          %v4235 = vpop.f32.mrb[0].mxu0
          %v4236 = vadd.f32 0.0, %v4235
          %v4237 = vpop.f32.mrb[0].mxu0
          %4238 = vdwg.mxu0
          %v4239 = vadd.f32 %v4107, %v4211
          %v4240 = vadd.f32 %v4108, %v4216
          %v4241 = vadd.f32 %v4109, %v4221
          %v4242 = vadd.f32 %v4110, %v4226
          %v4243 = vadd.f32 %v4111, %v4231
          %v4244 = vadd.f32 %v4112, %v4236
          %s4245 = sadd.s32 %s1617, 92
          %s4246 = scalar_lea.vmem [#allocation2], %s4245
          %v4247 = vld [vmem:[%s4246] sm:$0xff]
          %v4248 = vld [vmem:[%s4246 + $0x8] sm:$0xff]
          %v4249 = vld [vmem:[%s4246 + $0x10] sm:$0xff]
          %v4250 = vld [vmem:[%s4246 + $0x18] sm:$0xff]
          %v4251 = vld [vmem:[%s4246 + $0x20] sm:$0xff]
          %v4252 = vld [vmem:[%s4246 + $0x28] sm:$0x3]
          %s4253 = scalar_lea.vmem %s3, 640
          %v4254 = vld [vmem:[%s4253] sm:$0xff]
          %v4255 = vld [vmem:[%s4253 + $0x8] sm:$0xff]
          %v4256 = vld [vmem:[%s4253 + $0x10] sm:$0xff]
          %v4257 = vld [vmem:[%s4253 + $0x18] sm:$0xff]
          %v4259 = vsel %vm1642, %v4247, 0
          %v4262 = vsel %vm1642, %v4248, 0
          %v4265 = vsel %vm1642, %v4249, 0
          %v4268 = vsel %vm1642, %v4250, 0
          %v4271 = vsel %vm1642, %v4251, 0
          %v4274 = vsel %vm1642, %v4252, 0
          %4276 = vmatprep.subr.mxu0 0.0
          %4277 = vmatpush1.msra.mxu0 %v4254
          %4278 = vmatprep.subr.mxu0 0.0
          %4279 = vmatpush1.msra.mxu0 %v4255
          %4280 = vmatprep.subr.mxu0 0.0
          %4281 = vmatpush1.msra.mxu0 %v4256
          %4282 = vmatprep.subr.mxu0 0.0
          %4283 = vmatpush1.msra.mxu0 %v4257
          %4284 = vmatprep.subr.mxu0 0.0
          %4285 = vmatpush1.msra.mxu0 0.0
          %4286 = vmatprep.subr.mxu0 0.0
          %4287 = vmatpush1.msra.mxu0 0.0
          %4288 = vmatprep.subr.mxu0 0.0
          %4289 = vmatpush1.msra.mxu0 0.0
          %4290 = vmatprep.subr.mxu0 0.0
          %4291 = vmatpush1.msra.mxu0 0.0
          %4292 = vmatprep.subr.mxu0 0.0
          %4293 = vmatpush1.msra.mxu0 0.0
          %4294 = vmatprep.subr.mxu0 0.0
          %4295 = vmatpush1.msra.mxu0 0.0
          %4296 = vmatprep.subr.mxu0 0.0
          %4297 = vmatpush1.msra.mxu0 0.0
          %4298 = vmatprep.subr.mxu0 0.0
          %4299 = vmatpush1.msra.mxu0 0.0
          %4300 = vmatprep.subr.mxu0 0.0
          %4301 = vmatpush1.msra.mxu0 0.0
          %4302 = vmatprep.subr.mxu0 0.0
          %4303 = vmatpush1.msra.mxu0 0.0
          %4304 = vmatprep.subr.mxu0 0.0
          %4305 = vmatpush1.msra.mxu0 0.0
          %4306 = vmatprep.subr.mxu0 0.0
          %4307 = vmatpush1.msra.mxu0 0.0
          %4308 = vmatprep.subr.mxu0 0.0
          %4309 = vmatpush1.msra.mxu0 0.0
          %4310 = vmatprep.subr.mxu0 0.0
          %4311 = vmatpush1.msra.mxu0 0.0
          %4312 = vmatprep.subr.mxu0 0.0
          %4313 = vmatpush1.msra.mxu0 0.0
          %4314 = vmatprep.subr.mxu0 0.0
          %4315 = vmatpush1.msra.mxu0 0.0
          %4316 = vmatprep.subr.mxu0 0.0
          %4317 = vmatpush1.msra.mxu0 0.0
          %4318 = vmatprep.subr.mxu0 0.0
          %4319 = vmatpush1.msra.mxu0 0.0
          %4320 = vmatprep.subr.mxu0 0.0
          %4321 = vmatpush1.msra.mxu0 0.0
          %4322 = vmatprep.subr.mxu0 0.0
          %4323 = vmatpush1.msra.mxu0 0.0
          %4324 = vmatprep.subr.mxu0 0.0
          %4325 = vmatpush1.msra.mxu0 0.0
          %4326 = vmatprep.subr.mxu0 0.0
          %4327 = vmatpush1.msra.mxu0 0.0
          %4328 = vmatprep.subr.mxu0 0.0
          %4329 = vmatpush1.msra.mxu0 0.0
          %4330 = vmatprep.subr.mxu0 0.0
          %4331 = vmatpush1.msra.mxu0 0.0
          %4332 = vmatprep.subr.mxu0 0.0
          %4333 = vmatpush1.msra.mxu0 0.0
          %4334 = vmatprep.subr.mxu0 0.0
          %4335 = vmatpush1.msra.mxu0 0.0
          %4336 = vmatprep.subr.mxu0 0.0
          %4337 = vmatpush1.msra.mxu0 0.0
          %4338 = vmatprep.subr.mxu0 0.0
          %4339 = vmatpush1.msra.mxu0 0.0
          %4340 = vmatprep.mubr.f32.mxu0 0.0
          %4341 = vmatmul.mubr.f32.gmra.mrb[0].mxu0 %v4259
          %v4342 = vpop.f32.mrb[0].mxu0
          %v4343 = vadd.f32 0.0, %v4342
          %v4344 = vpop.f32.mrb[0].mxu0
          %4345 = vmatprep.mubr.f32.mxu0 0.0
          %4346 = vmatmul.mubr.f32.gmra.mrb[0].mxu0 %v4262
          %v4347 = vpop.f32.mrb[0].mxu0
          %v4348 = vadd.f32 0.0, %v4347
          %v4349 = vpop.f32.mrb[0].mxu0
          %4350 = vmatprep.mubr.f32.mxu0 0.0
          %4351 = vmatmul.mubr.f32.gmra.mrb[0].mxu0 %v4265
          %v4352 = vpop.f32.mrb[0].mxu0
          %v4353 = vadd.f32 0.0, %v4352
          %v4354 = vpop.f32.mrb[0].mxu0
          %4355 = vmatprep.mubr.f32.mxu0 0.0
          %4356 = vmatmul.mubr.f32.gmra.mrb[0].mxu0 %v4268
          %v4357 = vpop.f32.mrb[0].mxu0
          %v4358 = vadd.f32 0.0, %v4357
          %v4359 = vpop.f32.mrb[0].mxu0
          %4360 = vmatprep.mubr.f32.mxu0 0.0
          %4361 = vmatmul.mubr.f32.gmra.mrb[0].mxu0 %v4271
          %v4362 = vpop.f32.mrb[0].mxu0
          %v4363 = vadd.f32 0.0, %v4362
          %v4364 = vpop.f32.mrb[0].mxu0
          %4365 = vmatprep.mubr.f32.mxu0 0.0
          %4366 = vmatmul.mubr.f32.gmra.mrb[0].mxu0 %v4274
          %v4367 = vpop.f32.mrb[0].mxu0
          %v4368 = vadd.f32 0.0, %v4367
          %v4369 = vpop.f32.mrb[0].mxu0
          %4370 = vdwg.mxu0
          %v4371 = vadd.f32 %v4239, %v4343
          %v4372 = vadd.f32 %v4240, %v4348
          %v4373 = vadd.f32 %v4241, %v4353
          %v4374 = vadd.f32 %v4242, %v4358
          %v4375 = vadd.f32 %v4243, %v4363
          %v4376 = vadd.f32 %v4244, %v4368
          %s4377 = sadd.s32 %s1617, 93
          %s4378 = scalar_lea.vmem [#allocation2], %s4377
          %v4379 = vld [vmem:[%s4378] sm:$0xff]
          %v4380 = vld [vmem:[%s4378 + $0x8] sm:$0xff]
          %v4381 = vld [vmem:[%s4378 + $0x10] sm:$0xff]
          %v4382 = vld [vmem:[%s4378 + $0x18] sm:$0xff]
          %v4383 = vld [vmem:[%s4378 + $0x20] sm:$0xff]
          %v4384 = vld [vmem:[%s4378 + $0x28] sm:$0x3]
          %s4385 = scalar_lea.vmem %s3, 672
          %v4386 = vld [vmem:[%s4385] sm:$0xff]
          %v4387 = vld [vmem:[%s4385 + $0x8] sm:$0xff]
          %v4388 = vld [vmem:[%s4385 + $0x10] sm:$0xff]
          %v4389 = vld [vmem:[%s4385 + $0x18] sm:$0xff]
          %v4391 = vsel %vm1642, %v4379, 0
          %v4394 = vsel %vm1642, %v4380, 0
          %v4397 = vsel %vm1642, %v4381, 0
          %v4400 = vsel %vm1642, %v4382, 0
          %v4403 = vsel %vm1642, %v4383, 0
          %v4406 = vsel %vm1642, %v4384, 0
          %4408 = vmatprep.subr.mxu0 0.0
          %4409 = vmatpush1.msra.mxu0 %v4386
          %4410 = vmatprep.subr.mxu0 0.0
          %4411 = vmatpush1.msra.mxu0 %v4387
          %4412 = vmatprep.subr.mxu0 0.0
          %4413 = vmatpush1.msra.mxu0 %v4388
          %4414 = vmatprep.subr.mxu0 0.0
          %4415 = vmatpush1.msra.mxu0 %v4389
          %4416 = vmatprep.subr.mxu0 0.0
          %4417 = vmatpush1.msra.mxu0 0.0
          %4418 = vmatprep.subr.mxu0 0.0
          %4419 = vmatpush1.msra.mxu0 0.0
          %4420 = vmatprep.subr.mxu0 0.0
          %4421 = vmatpush1.msra.mxu0 0.0
          %4422 = vmatprep.subr.mxu0 0.0
          %4423 = vmatpush1.msra.mxu0 0.0
          %4424 = vmatprep.subr.mxu0 0.0
          %4425 = vmatpush1.msra.mxu0 0.0
          %4426 = vmatprep.subr.mxu0 0.0
          %4427 = vmatpush1.msra.mxu0 0.0
          %4428 = vmatprep.subr.mxu0 0.0
          %4429 = vmatpush1.msra.mxu0 0.0
          %4430 = vmatprep.subr.mxu0 0.0
          %4431 = vmatpush1.msra.mxu0 0.0
          %4432 = vmatprep.subr.mxu0 0.0
          %4433 = vmatpush1.msra.mxu0 0.0
          %4434 = vmatprep.subr.mxu0 0.0
          %4435 = vmatpush1.msra.mxu0 0.0
          %4436 = vmatprep.subr.mxu0 0.0
          %4437 = vmatpush1.msra.mxu0 0.0
          %4438 = vmatprep.subr.mxu0 0.0
          %4439 = vmatpush1.msra.mxu0 0.0
          %4440 = vmatprep.subr.mxu0 0.0
          %4441 = vmatpush1.msra.mxu0 0.0
          %4442 = vmatprep.subr.mxu0 0.0
          %4443 = vmatpush1.msra.mxu0 0.0
          %4444 = vmatprep.subr.mxu0 0.0
          %4445 = vmatpush1.msra.mxu0 0.0
          %4446 = vmatprep.subr.mxu0 0.0
          %4447 = vmatpush1.msra.mxu0 0.0
          %4448 = vmatprep.subr.mxu0 0.0
          %4449 = vmatpush1.msra.mxu0 0.0
          %4450 = vmatprep.subr.mxu0 0.0
          %4451 = vmatpush1.msra.mxu0 0.0
          %4452 = vmatprep.subr.mxu0 0.0
          %4453 = vmatpush1.msra.mxu0 0.0
          %4454 = vmatprep.subr.mxu0 0.0
          %4455 = vmatpush1.msra.mxu0 0.0
          %4456 = vmatprep.subr.mxu0 0.0
          %4457 = vmatpush1.msra.mxu0 0.0
          %4458 = vmatprep.subr.mxu0 0.0
          %4459 = vmatpush1.msra.mxu0 0.0
          %4460 = vmatprep.subr.mxu0 0.0
          %4461 = vmatpush1.msra.mxu0 0.0
          %4462 = vmatprep.subr.mxu0 0.0
          %4463 = vmatpush1.msra.mxu0 0.0
          %4464 = vmatprep.subr.mxu0 0.0
          %4465 = vmatpush1.msra.mxu0 0.0
          %4466 = vmatprep.subr.mxu0 0.0
          %4467 = vmatpush1.msra.mxu0 0.0
          %4468 = vmatprep.subr.mxu0 0.0
          %4469 = vmatpush1.msra.mxu0 0.0
          %4470 = vmatprep.subr.mxu0 0.0
          %4471 = vmatpush1.msra.mxu0 0.0
          %4472 = vmatprep.mubr.f32.mxu0 0.0
          %4473 = vmatmul.mubr.f32.gmra.mrb[0].mxu0 %v4391
          %v4474 = vpop.f32.mrb[0].mxu0
          %v4475 = vadd.f32 0.0, %v4474
          %v4476 = vpop.f32.mrb[0].mxu0
          %4477 = vmatprep.mubr.f32.mxu0 0.0
          %4478 = vmatmul.mubr.f32.gmra.mrb[0].mxu0 %v4394
          %v4479 = vpop.f32.mrb[0].mxu0
          %v4480 = vadd.f32 0.0, %v4479
          %v4481 = vpop.f32.mrb[0].mxu0
          %4482 = vmatprep.mubr.f32.mxu0 0.0
          %4483 = vmatmul.mubr.f32.gmra.mrb[0].mxu0 %v4397
          %v4484 = vpop.f32.mrb[0].mxu0
          %v4485 = vadd.f32 0.0, %v4484
          %v4486 = vpop.f32.mrb[0].mxu0
          %4487 = vmatprep.mubr.f32.mxu0 0.0
          %4488 = vmatmul.mubr.f32.gmra.mrb[0].mxu0 %v4400
          %v4489 = vpop.f32.mrb[0].mxu0
          %v4490 = vadd.f32 0.0, %v4489
          %v4491 = vpop.f32.mrb[0].mxu0
          %4492 = vmatprep.mubr.f32.mxu0 0.0
          %4493 = vmatmul.mubr.f32.gmra.mrb[0].mxu0 %v4403
          %v4494 = vpop.f32.mrb[0].mxu0
          %v4495 = vadd.f32 0.0, %v4494
          %v4496 = vpop.f32.mrb[0].mxu0
          %4497 = vmatprep.mubr.f32.mxu0 0.0
          %4498 = vmatmul.mubr.f32.gmra.mrb[0].mxu0 %v4406
          %v4499 = vpop.f32.mrb[0].mxu0
          %v4500 = vadd.f32 0.0, %v4499
          %v4501 = vpop.f32.mrb[0].mxu0
          %4502 = vdwg.mxu0
          %v4503 = vadd.f32 %v4371, %v4475
          %v4504 = vadd.f32 %v4372, %v4480
          %v4505 = vadd.f32 %v4373, %v4485
          %v4506 = vadd.f32 %v4374, %v4490
          %v4507 = vadd.f32 %v4375, %v4495
          %v4508 = vadd.f32 %v4376, %v4500
          %s4509 = sadd.s32 %s1617, 94
          %s4510 = scalar_lea.vmem [#allocation2], %s4509
          %v4511 = vld [vmem:[%s4510] sm:$0xff]
          %v4512 = vld [vmem:[%s4510 + $0x8] sm:$0xff]
          %v4513 = vld [vmem:[%s4510 + $0x10] sm:$0xff]
          %v4514 = vld [vmem:[%s4510 + $0x18] sm:$0xff]
          %v4515 = vld [vmem:[%s4510 + $0x20] sm:$0xff]
          %v4516 = vld [vmem:[%s4510 + $0x28] sm:$0x3]
          %s4517 = scalar_lea.vmem %s3, 704
          %v4518 = vld [vmem:[%s4517] sm:$0xff]
          %v4519 = vld [vmem:[%s4517 + $0x8] sm:$0xff]
          %v4520 = vld [vmem:[%s4517 + $0x10] sm:$0xff]
          %v4521 = vld [vmem:[%s4517 + $0x18] sm:$0xff]
          %v4523 = vsel %vm1642, %v4511, 0
          %v4526 = vsel %vm1642, %v4512, 0
          %v4529 = vsel %vm1642, %v4513, 0
          %v4532 = vsel %vm1642, %v4514, 0
          %v4535 = vsel %vm1642, %v4515, 0
          %v4538 = vsel %vm1642, %v4516, 0
          %4540 = vmatprep.subr.mxu0 0.0
          %4541 = vmatpush1.msra.mxu0 %v4518
          %4542 = vmatprep.subr.mxu0 0.0
          %4543 = vmatpush1.msra.mxu0 %v4519
          %4544 = vmatprep.subr.mxu0 0.0
          %4545 = vmatpush1.msra.mxu0 %v4520
          %4546 = vmatprep.subr.mxu0 0.0
          %4547 = vmatpush1.msra.mxu0 %v4521
          %4548 = vmatprep.subr.mxu0 0.0
          %4549 = vmatpush1.msra.mxu0 0.0
          %4550 = vmatprep.subr.mxu0 0.0
          %4551 = vmatpush1.msra.mxu0 0.0
          %4552 = vmatprep.subr.mxu0 0.0
          %4553 = vmatpush1.msra.mxu0 0.0
          %4554 = vmatprep.subr.mxu0 0.0
          %4555 = vmatpush1.msra.mxu0 0.0
          %4556 = vmatprep.subr.mxu0 0.0
          %4557 = vmatpush1.msra.mxu0 0.0
          %4558 = vmatprep.subr.mxu0 0.0
          %4559 = vmatpush1.msra.mxu0 0.0
          %4560 = vmatprep.subr.mxu0 0.0
          %4561 = vmatpush1.msra.mxu0 0.0
          %4562 = vmatprep.subr.mxu0 0.0
          %4563 = vmatpush1.msra.mxu0 0.0
          %4564 = vmatprep.subr.mxu0 0.0
          %4565 = vmatpush1.msra.mxu0 0.0
          %4566 = vmatprep.subr.mxu0 0.0
          %4567 = vmatpush1.msra.mxu0 0.0
          %4568 = vmatprep.subr.mxu0 0.0
          %4569 = vmatpush1.msra.mxu0 0.0
          %4570 = vmatprep.subr.mxu0 0.0
          %4571 = vmatpush1.msra.mxu0 0.0
          %4572 = vmatprep.subr.mxu0 0.0
          %4573 = vmatpush1.msra.mxu0 0.0
          %4574 = vmatprep.subr.mxu0 0.0
          %4575 = vmatpush1.msra.mxu0 0.0
          %4576 = vmatprep.subr.mxu0 0.0
          %4577 = vmatpush1.msra.mxu0 0.0
          %4578 = vmatprep.subr.mxu0 0.0
          %4579 = vmatpush1.msra.mxu0 0.0
          %4580 = vmatprep.subr.mxu0 0.0
          %4581 = vmatpush1.msra.mxu0 0.0
          %4582 = vmatprep.subr.mxu0 0.0
          %4583 = vmatpush1.msra.mxu0 0.0
          %4584 = vmatprep.subr.mxu0 0.0
          %4585 = vmatpush1.msra.mxu0 0.0
          %4586 = vmatprep.subr.mxu0 0.0
          %4587 = vmatpush1.msra.mxu0 0.0
          %4588 = vmatprep.subr.mxu0 0.0
          %4589 = vmatpush1.msra.mxu0 0.0
          %4590 = vmatprep.subr.mxu0 0.0
          %4591 = vmatpush1.msra.mxu0 0.0
          %4592 = vmatprep.subr.mxu0 0.0
          %4593 = vmatpush1.msra.mxu0 0.0
          %4594 = vmatprep.subr.mxu0 0.0
          %4595 = vmatpush1.msra.mxu0 0.0
          %4596 = vmatprep.subr.mxu0 0.0
          %4597 = vmatpush1.msra.mxu0 0.0
          %4598 = vmatprep.subr.mxu0 0.0
          %4599 = vmatpush1.msra.mxu0 0.0
          %4600 = vmatprep.subr.mxu0 0.0
          %4601 = vmatpush1.msra.mxu0 0.0
          %4602 = vmatprep.subr.mxu0 0.0
          %4603 = vmatpush1.msra.mxu0 0.0
          %4604 = vmatprep.mubr.f32.mxu0 0.0
          %4605 = vmatmul.mubr.f32.gmra.mrb[0].mxu0 %v4523
          %v4606 = vpop.f32.mrb[0].mxu0
          %v4607 = vadd.f32 0.0, %v4606
          %v4608 = vpop.f32.mrb[0].mxu0
          %4609 = vmatprep.mubr.f32.mxu0 0.0
          %4610 = vmatmul.mubr.f32.gmra.mrb[0].mxu0 %v4526
          %v4611 = vpop.f32.mrb[0].mxu0
          %v4612 = vadd.f32 0.0, %v4611
          %v4613 = vpop.f32.mrb[0].mxu0
          %4614 = vmatprep.mubr.f32.mxu0 0.0
          %4615 = vmatmul.mubr.f32.gmra.mrb[0].mxu0 %v4529
          %v4616 = vpop.f32.mrb[0].mxu0
          %v4617 = vadd.f32 0.0, %v4616
          %v4618 = vpop.f32.mrb[0].mxu0
          %4619 = vmatprep.mubr.f32.mxu0 0.0
          %4620 = vmatmul.mubr.f32.gmra.mrb[0].mxu0 %v4532
          %v4621 = vpop.f32.mrb[0].mxu0
          %v4622 = vadd.f32 0.0, %v4621
          %v4623 = vpop.f32.mrb[0].mxu0
          %4624 = vmatprep.mubr.f32.mxu0 0.0
          %4625 = vmatmul.mubr.f32.gmra.mrb[0].mxu0 %v4535
          %v4626 = vpop.f32.mrb[0].mxu0
          %v4627 = vadd.f32 0.0, %v4626
          %v4628 = vpop.f32.mrb[0].mxu0
          %4629 = vmatprep.mubr.f32.mxu0 0.0
          %4630 = vmatmul.mubr.f32.gmra.mrb[0].mxu0 %v4538
          %v4631 = vpop.f32.mrb[0].mxu0
          %v4632 = vadd.f32 0.0, %v4631
          %v4633 = vpop.f32.mrb[0].mxu0
          %4634 = vdwg.mxu0
          %v4635 = vadd.f32 %v4503, %v4607
          %v4636 = vadd.f32 %v4504, %v4612
          %v4637 = vadd.f32 %v4505, %v4617
          %v4638 = vadd.f32 %v4506, %v4622
          %v4639 = vadd.f32 %v4507, %v4627
          %v4640 = vadd.f32 %v4508, %v4632
          %s4641 = sadd.s32 %s1617, 95
          %s4642 = scalar_lea.vmem [#allocation2], %s4641
          %v4643 = vld [vmem:[%s4642] sm:$0xff]
          %v4644 = vld [vmem:[%s4642 + $0x8] sm:$0xff]
          %v4645 = vld [vmem:[%s4642 + $0x10] sm:$0xff]
          %v4646 = vld [vmem:[%s4642 + $0x18] sm:$0xff]
          %v4647 = vld [vmem:[%s4642 + $0x20] sm:$0xff]
          %v4648 = vld [vmem:[%s4642 + $0x28] sm:$0x3]
          %s4649 = scalar_lea.vmem %s3, 736
          %v4650 = vld [vmem:[%s4649] sm:$0xff]
          %v4651 = vld [vmem:[%s4649 + $0x8] sm:$0xff]
          %v4652 = vld [vmem:[%s4649 + $0x10] sm:$0xff]
          %v4653 = vld [vmem:[%s4649 + $0x18] sm:$0xff]
          %v4655 = vsel %vm1642, %v4643, 0
          %v4658 = vsel %vm1642, %v4644, 0
          %v4661 = vsel %vm1642, %v4645, 0
          %v4664 = vsel %vm1642, %v4646, 0
          %v4667 = vsel %vm1642, %v4647, 0
          %v4670 = vsel %vm1642, %v4648, 0
          %4672 = vmatprep.subr.mxu0 0.0
          %4673 = vmatpush1.msra.mxu0 %v4650
          %4674 = vmatprep.subr.mxu0 0.0
          %4675 = vmatpush1.msra.mxu0 %v4651
          %4676 = vmatprep.subr.mxu0 0.0
          %4677 = vmatpush1.msra.mxu0 %v4652
          %4678 = vmatprep.subr.mxu0 0.0
          %4679 = vmatpush1.msra.mxu0 %v4653
          %4680 = vmatprep.subr.mxu0 0.0
          %4681 = vmatpush1.msra.mxu0 0.0
          %4682 = vmatprep.subr.mxu0 0.0
          %4683 = vmatpush1.msra.mxu0 0.0
          %4684 = vmatprep.subr.mxu0 0.0
          %4685 = vmatpush1.msra.mxu0 0.0
          %4686 = vmatprep.subr.mxu0 0.0
          %4687 = vmatpush1.msra.mxu0 0.0
          %4688 = vmatprep.subr.mxu0 0.0
          %4689 = vmatpush1.msra.mxu0 0.0
          %4690 = vmatprep.subr.mxu0 0.0
          %4691 = vmatpush1.msra.mxu0 0.0
          %4692 = vmatprep.subr.mxu0 0.0
          %4693 = vmatpush1.msra.mxu0 0.0
          %4694 = vmatprep.subr.mxu0 0.0
          %4695 = vmatpush1.msra.mxu0 0.0
          %4696 = vmatprep.subr.mxu0 0.0
          %4697 = vmatpush1.msra.mxu0 0.0
          %4698 = vmatprep.subr.mxu0 0.0
          %4699 = vmatpush1.msra.mxu0 0.0
          %4700 = vmatprep.subr.mxu0 0.0
          %4701 = vmatpush1.msra.mxu0 0.0
          %4702 = vmatprep.subr.mxu0 0.0
          %4703 = vmatpush1.msra.mxu0 0.0
          %4704 = vmatprep.subr.mxu0 0.0
          %4705 = vmatpush1.msra.mxu0 0.0
          %4706 = vmatprep.subr.mxu0 0.0
          %4707 = vmatpush1.msra.mxu0 0.0
          %4708 = vmatprep.subr.mxu0 0.0
          %4709 = vmatpush1.msra.mxu0 0.0
          %4710 = vmatprep.subr.mxu0 0.0
          %4711 = vmatpush1.msra.mxu0 0.0
          %4712 = vmatprep.subr.mxu0 0.0
          %4713 = vmatpush1.msra.mxu0 0.0
          %4714 = vmatprep.subr.mxu0 0.0
          %4715 = vmatpush1.msra.mxu0 0.0
          %4716 = vmatprep.subr.mxu0 0.0
          %4717 = vmatpush1.msra.mxu0 0.0
          %4718 = vmatprep.subr.mxu0 0.0
          %4719 = vmatpush1.msra.mxu0 0.0
          %4720 = vmatprep.subr.mxu0 0.0
          %4721 = vmatpush1.msra.mxu0 0.0
          %4722 = vmatprep.subr.mxu0 0.0
          %4723 = vmatpush1.msra.mxu0 0.0
          %4724 = vmatprep.subr.mxu0 0.0
          %4725 = vmatpush1.msra.mxu0 0.0
          %4726 = vmatprep.subr.mxu0 0.0
          %4727 = vmatpush1.msra.mxu0 0.0
          %4728 = vmatprep.subr.mxu0 0.0
          %4729 = vmatpush1.msra.mxu0 0.0
          %4730 = vmatprep.subr.mxu0 0.0
          %4731 = vmatpush1.msra.mxu0 0.0
          %4732 = vmatprep.subr.mxu0 0.0
          %4733 = vmatpush1.msra.mxu0 0.0
          %4734 = vmatprep.subr.mxu0 0.0
          %4735 = vmatpush1.msra.mxu0 0.0
          %4736 = vmatprep.mubr.f32.mxu0 0.0
          %4737 = vmatmul.mubr.f32.gmra.mrb[0].mxu0 %v4655
          %v4738 = vpop.f32.mrb[0].mxu0
          %v4739 = vadd.f32 0.0, %v4738
          %v4740 = vpop.f32.mrb[0].mxu0
          %4741 = vmatprep.mubr.f32.mxu0 0.0
          %4742 = vmatmul.mubr.f32.gmra.mrb[0].mxu0 %v4658
          %v4743 = vpop.f32.mrb[0].mxu0
          %v4744 = vadd.f32 0.0, %v4743
          %v4745 = vpop.f32.mrb[0].mxu0
          %4746 = vmatprep.mubr.f32.mxu0 0.0
          %4747 = vmatmul.mubr.f32.gmra.mrb[0].mxu0 %v4661
          %v4748 = vpop.f32.mrb[0].mxu0
          %v4749 = vadd.f32 0.0, %v4748
          %v4750 = vpop.f32.mrb[0].mxu0
          %4751 = vmatprep.mubr.f32.mxu0 0.0
          %4752 = vmatmul.mubr.f32.gmra.mrb[0].mxu0 %v4664
          %v4753 = vpop.f32.mrb[0].mxu0
          %v4754 = vadd.f32 0.0, %v4753
          %v4755 = vpop.f32.mrb[0].mxu0
          %4756 = vmatprep.mubr.f32.mxu0 0.0
          %4757 = vmatmul.mubr.f32.gmra.mrb[0].mxu0 %v4667
          %v4758 = vpop.f32.mrb[0].mxu0
          %v4759 = vadd.f32 0.0, %v4758
          %v4760 = vpop.f32.mrb[0].mxu0
          %4761 = vmatprep.mubr.f32.mxu0 0.0
          %4762 = vmatmul.mubr.f32.gmra.mrb[0].mxu0 %v4670
          %v4763 = vpop.f32.mrb[0].mxu0
          %v4764 = vadd.f32 0.0, %v4763
          %v4765 = vpop.f32.mrb[0].mxu0
          %4766 = vdwg.mxu0
          %v4767 = vadd.f32 %v4635, %v4739
          %v4768 = vadd.f32 %v4636, %v4744
          %v4769 = vadd.f32 %v4637, %v4749
          %v4770 = vadd.f32 %v4638, %v4754
          %v4771 = vadd.f32 %v4639, %v4759
          %v4772 = vadd.f32 %v4640, %v4764
          %s4773 = sadd.s32 %s1617, 96
          %s4774 = scalar_lea.vmem [#allocation2], %s4773
          %v4775 = vld [vmem:[%s4774] sm:$0xff]
          %v4776 = vld [vmem:[%s4774 + $0x8] sm:$0xff]
          %v4777 = vld [vmem:[%s4774 + $0x10] sm:$0xff]
          %v4778 = vld [vmem:[%s4774 + $0x18] sm:$0xff]
          %v4779 = vld [vmem:[%s4774 + $0x20] sm:$0xff]
          %v4780 = vld [vmem:[%s4774 + $0x28] sm:$0x3]
          %s4781 = scalar_lea.vmem %s3, 768
          %v4782 = vld [vmem:[%s4781] sm:$0xff]
          %v4783 = vld [vmem:[%s4781 + $0x8] sm:$0xff]
          %v4784 = vld [vmem:[%s4781 + $0x10] sm:$0xff]
          %v4785 = vld [vmem:[%s4781 + $0x18] sm:$0xff]
          %v4787 = vsel %vm1642, %v4775, 0
          %v4790 = vsel %vm1642, %v4776, 0
          %v4793 = vsel %vm1642, %v4777, 0
          %v4796 = vsel %vm1642, %v4778, 0
          %v4799 = vsel %vm1642, %v4779, 0
          %v4802 = vsel %vm1642, %v4780, 0
          %4804 = vmatprep.subr.mxu0 0.0
          %4805 = vmatpush1.msra.mxu0 %v4782
          %4806 = vmatprep.subr.mxu0 0.0
          %4807 = vmatpush1.msra.mxu0 %v4783
          %4808 = vmatprep.subr.mxu0 0.0
          %4809 = vmatpush1.msra.mxu0 %v4784
          %4810 = vmatprep.subr.mxu0 0.0
          %4811 = vmatpush1.msra.mxu0 %v4785
          %4812 = vmatprep.subr.mxu0 0.0
          %4813 = vmatpush1.msra.mxu0 0.0
          %4814 = vmatprep.subr.mxu0 0.0
          %4815 = vmatpush1.msra.mxu0 0.0
          %4816 = vmatprep.subr.mxu0 0.0
          %4817 = vmatpush1.msra.mxu0 0.0
          %4818 = vmatprep.subr.mxu0 0.0
          %4819 = vmatpush1.msra.mxu0 0.0
          %4820 = vmatprep.subr.mxu0 0.0
          %4821 = vmatpush1.msra.mxu0 0.0
          %4822 = vmatprep.subr.mxu0 0.0
          %4823 = vmatpush1.msra.mxu0 0.0
          %4824 = vmatprep.subr.mxu0 0.0
          %4825 = vmatpush1.msra.mxu0 0.0
          %4826 = vmatprep.subr.mxu0 0.0
          %4827 = vmatpush1.msra.mxu0 0.0
          %4828 = vmatprep.subr.mxu0 0.0
          %4829 = vmatpush1.msra.mxu0 0.0
          %4830 = vmatprep.subr.mxu0 0.0
          %4831 = vmatpush1.msra.mxu0 0.0
          %4832 = vmatprep.subr.mxu0 0.0
          %4833 = vmatpush1.msra.mxu0 0.0
          %4834 = vmatprep.subr.mxu0 0.0
          %4835 = vmatpush1.msra.mxu0 0.0
          %4836 = vmatprep.subr.mxu0 0.0
          %4837 = vmatpush1.msra.mxu0 0.0
          %4838 = vmatprep.subr.mxu0 0.0
          %4839 = vmatpush1.msra.mxu0 0.0
          %4840 = vmatprep.subr.mxu0 0.0
          %4841 = vmatpush1.msra.mxu0 0.0
          %4842 = vmatprep.subr.mxu0 0.0
          %4843 = vmatpush1.msra.mxu0 0.0
          %4844 = vmatprep.subr.mxu0 0.0
          %4845 = vmatpush1.msra.mxu0 0.0
          %4846 = vmatprep.subr.mxu0 0.0
          %4847 = vmatpush1.msra.mxu0 0.0
          %4848 = vmatprep.subr.mxu0 0.0
          %4849 = vmatpush1.msra.mxu0 0.0
          %4850 = vmatprep.subr.mxu0 0.0
          %4851 = vmatpush1.msra.mxu0 0.0
          %4852 = vmatprep.subr.mxu0 0.0
          %4853 = vmatpush1.msra.mxu0 0.0
          %4854 = vmatprep.subr.mxu0 0.0
          %4855 = vmatpush1.msra.mxu0 0.0
          %4856 = vmatprep.subr.mxu0 0.0
          %4857 = vmatpush1.msra.mxu0 0.0
          %4858 = vmatprep.subr.mxu0 0.0
          %4859 = vmatpush1.msra.mxu0 0.0
          %4860 = vmatprep.subr.mxu0 0.0
          %4861 = vmatpush1.msra.mxu0 0.0
          %4862 = vmatprep.subr.mxu0 0.0
          %4863 = vmatpush1.msra.mxu0 0.0
          %4864 = vmatprep.subr.mxu0 0.0
          %4865 = vmatpush1.msra.mxu0 0.0
          %4866 = vmatprep.subr.mxu0 0.0
          %4867 = vmatpush1.msra.mxu0 0.0
          %4868 = vmatprep.mubr.f32.mxu0 0.0
          %4869 = vmatmul.mubr.f32.gmra.mrb[0].mxu0 %v4787
          %v4870 = vpop.f32.mrb[0].mxu0
          %v4871 = vadd.f32 0.0, %v4870
          %v4872 = vpop.f32.mrb[0].mxu0
          %4873 = vmatprep.mubr.f32.mxu0 0.0
          %4874 = vmatmul.mubr.f32.gmra.mrb[0].mxu0 %v4790
          %v4875 = vpop.f32.mrb[0].mxu0
          %v4876 = vadd.f32 0.0, %v4875
          %v4877 = vpop.f32.mrb[0].mxu0
          %4878 = vmatprep.mubr.f32.mxu0 0.0
          %4879 = vmatmul.mubr.f32.gmra.mrb[0].mxu0 %v4793
          %v4880 = vpop.f32.mrb[0].mxu0
          %v4881 = vadd.f32 0.0, %v4880
          %v4882 = vpop.f32.mrb[0].mxu0
          %4883 = vmatprep.mubr.f32.mxu0 0.0
          %4884 = vmatmul.mubr.f32.gmra.mrb[0].mxu0 %v4796
          %v4885 = vpop.f32.mrb[0].mxu0
          %v4886 = vadd.f32 0.0, %v4885
          %v4887 = vpop.f32.mrb[0].mxu0
          %4888 = vmatprep.mubr.f32.mxu0 0.0
          %4889 = vmatmul.mubr.f32.gmra.mrb[0].mxu0 %v4799
          %v4890 = vpop.f32.mrb[0].mxu0
          %v4891 = vadd.f32 0.0, %v4890
          %v4892 = vpop.f32.mrb[0].mxu0
          %4893 = vmatprep.mubr.f32.mxu0 0.0
          %4894 = vmatmul.mubr.f32.gmra.mrb[0].mxu0 %v4802
          %v4895 = vpop.f32.mrb[0].mxu0
          %v4896 = vadd.f32 0.0, %v4895
          %v4897 = vpop.f32.mrb[0].mxu0
          %4898 = vdwg.mxu0
          %v4899 = vadd.f32 %v4767, %v4871
          %v4900 = vadd.f32 %v4768, %v4876
          %v4901 = vadd.f32 %v4769, %v4881
          %v4902 = vadd.f32 %v4770, %v4886
          %v4903 = vadd.f32 %v4771, %v4891
          %v4904 = vadd.f32 %v4772, %v4896
          %v4906 = vlaneseq
          %v4907 = vshrl.u32 %v4906, 7
          %v4908 = vsub.s32 0, %v4907
          %v4909 = vrot.slane %v1610, %v4908
          %v4911 = vadd.f32 %v4899, %v4909
          %v4912 = vadd.f32 %v4900, %v4909
          %v4913 = vadd.f32 %v4901, %v4909
          %v4914 = vadd.f32 %v4902, %v4909
          %v4915 = vadd.f32 %v4903, %v4909
          %v4916 = vadd.f32 %v4904, %v4909
          %v4917 = vmax.f32 %v4911, 0.0
          %v4918 = vmax.f32 %v4912, 0.0
          %v4919 = vmax.f32 %v4913, 0.0
          %v4920 = vmax.f32 %v4914, 0.0
          %v4921 = vmax.f32 %v4915, 0.0
          %v4922 = vmax.f32 %v4916, 0.0
          %vm4927 = vcmask 1040384
          %v4928 = vrot.slane %v4919, 7
          %v4929 = vrot.slane %v4920, 7
          %v4930 = vsel %vm4927, %v4928, %v4929
          %v4931 = vrot.slane %v4921, 7
          %v4932 = vsel %vm4927, %v4929, %v4931
          %v4933 = vrot.slane %v4922, 7
          %v4934 = vsel %vm4927, %v4931, %v4933
          %v4938 = vmax.f32 %v4917, %v4930
          %v4939 = vmax.f32 %v4918, %v4932
          %v4940 = vmax.f32 %v4919, %v4934
          %vm4941 = vcmask 146432
          %v4943 = vsel %vm4941, %v399, 0
          %v4946 = vsel %vm4941, %v400, 0
          %vm4948 = vcmask 1041408
          %v4950 = vsel %vm4948, %v4940, 0
          %4952 = vmatprep.subr.mxu0 0.0
          %4953 = vmatpush1.msra.mxu0 %v4938
          %4954 = vmatprep.subr.mxu0 0.0
          %4955 = vmatpush1.msra.mxu0 %v4939
          %4956 = vmatprep.subr.mxu0 0.0
          %4957 = vmatpush1.msra.mxu0 %v4950
          %4958 = vmatprep.subr.mxu0 0.0
          %4959 = vmatpush1.msra.mxu0 0.0
          %4960 = vmatprep.subr.mxu0 0.0
          %4961 = vmatpush1.msra.mxu0 0.0
          %4962 = vmatprep.subr.mxu0 0.0
          %4963 = vmatpush1.msra.mxu0 0.0
          %4964 = vmatprep.subr.mxu0 0.0
          %4965 = vmatpush1.msra.mxu0 0.0
          %4966 = vmatprep.subr.mxu0 0.0
          %4967 = vmatpush1.msra.mxu0 0.0
          %4968 = vmatprep.subr.mxu0 0.0
          %4969 = vmatpush1.msra.mxu0 0.0
          %4970 = vmatprep.subr.mxu0 0.0
          %4971 = vmatpush1.msra.mxu0 0.0
          %4972 = vmatprep.subr.mxu0 0.0
          %4973 = vmatpush1.msra.mxu0 0.0
          %4974 = vmatprep.subr.mxu0 0.0
          %4975 = vmatpush1.msra.mxu0 0.0
          %4976 = vmatprep.subr.mxu0 0.0
          %4977 = vmatpush1.msra.mxu0 0.0
          %4978 = vmatprep.subr.mxu0 0.0
          %4979 = vmatpush1.msra.mxu0 0.0
          %4980 = vmatprep.subr.mxu0 0.0
          %4981 = vmatpush1.msra.mxu0 0.0
          %4982 = vmatprep.subr.mxu0 0.0
          %4983 = vmatpush1.msra.mxu0 0.0
          %4984 = vmatprep.subr.mxu0 0.0
          %4985 = vmatpush1.msra.mxu0 0.0
          %4986 = vmatprep.subr.mxu0 0.0
          %4987 = vmatpush1.msra.mxu0 0.0
          %4988 = vmatprep.subr.mxu0 0.0
          %4989 = vmatpush1.msra.mxu0 0.0
          %4990 = vmatprep.subr.mxu0 0.0
          %4991 = vmatpush1.msra.mxu0 0.0
          %4992 = vmatprep.subr.mxu0 0.0
          %4993 = vmatpush1.msra.mxu0 0.0
          %4994 = vmatprep.subr.mxu0 0.0
          %4995 = vmatpush1.msra.mxu0 0.0
          %4996 = vmatprep.subr.mxu0 0.0
          %4997 = vmatpush1.msra.mxu0 0.0
          %4998 = vmatprep.subr.mxu0 0.0
          %4999 = vmatpush1.msra.mxu0 0.0
          %5000 = vmatprep.subr.mxu0 0.0
          %5001 = vmatpush1.msra.mxu0 0.0
          %5002 = vmatprep.subr.mxu0 0.0
          %5003 = vmatpush1.msra.mxu0 0.0
          %5004 = vmatprep.subr.mxu0 0.0
          %5005 = vmatpush1.msra.mxu0 0.0
          %5006 = vmatprep.subr.mxu0 0.0
          %5007 = vmatpush1.msra.mxu0 0.0
          %5008 = vmatprep.subr.mxu0 0.0
          %5009 = vmatpush1.msra.mxu0 0.0
          %5010 = vmatprep.subr.mxu0 0.0
          %5011 = vmatpush1.msra.mxu0 0.0
          %5012 = vmatprep.subr.mxu0 0.0
          %5013 = vmatpush1.msra.mxu0 0.0
          %5014 = vmatprep.subr.mxu0 0.0
          %5015 = vmatpush1.msra.mxu0 0.0
          %5016 = vmatprep.mubr.f32.mxu0 0.0
          %5017 = vmatmul.mubr.f32.gmra.mrb[0].mxu0 %v4943
          %v5018 = vpop.f32.mrb[0].mxu0
          %v5019 = vadd.f32 0.0, %v5018
          %v5020 = vpop.f32.mrb[0].mxu0
          %5021 = vmatprep.mubr.f32.mxu0 0.0
          %5022 = vmatmul.mubr.f32.gmra.mrb[0].mxu0 %v4946
          %v5023 = vpop.f32.mrb[0].mxu0
          %v5024 = vadd.f32 0.0, %v5023
          %v5025 = vpop.f32.mrb[0].mxu0
          %5026 = vdwg.mxu0
          %v5028 = vsel %vm4941, %v411, 0
          %v5031 = vsel %vm4941, %v412, 0
          %5033 = vmatprep.subr.mxu0 0.0
          %5034 = vmatpush1.msra.mxu0 %v4938
          %5035 = vmatprep.subr.mxu0 0.0
          %5036 = vmatpush1.msra.mxu0 %v4939
          %5037 = vmatprep.subr.mxu0 0.0
          %5038 = vmatpush1.msra.mxu0 %v4950
          %5039 = vmatprep.subr.mxu0 0.0
          %5040 = vmatpush1.msra.mxu0 0.0
          %5041 = vmatprep.subr.mxu0 0.0
          %5042 = vmatpush1.msra.mxu0 0.0
          %5043 = vmatprep.subr.mxu0 0.0
          %5044 = vmatpush1.msra.mxu0 0.0
          %5045 = vmatprep.subr.mxu0 0.0
          %5046 = vmatpush1.msra.mxu0 0.0
          %5047 = vmatprep.subr.mxu0 0.0
          %5048 = vmatpush1.msra.mxu0 0.0
          %5049 = vmatprep.subr.mxu0 0.0
          %5050 = vmatpush1.msra.mxu0 0.0
          %5051 = vmatprep.subr.mxu0 0.0
          %5052 = vmatpush1.msra.mxu0 0.0
          %5053 = vmatprep.subr.mxu0 0.0
          %5054 = vmatpush1.msra.mxu0 0.0
          %5055 = vmatprep.subr.mxu0 0.0
          %5056 = vmatpush1.msra.mxu0 0.0
          %5057 = vmatprep.subr.mxu0 0.0
          %5058 = vmatpush1.msra.mxu0 0.0
          %5059 = vmatprep.subr.mxu0 0.0
          %5060 = vmatpush1.msra.mxu0 0.0
          %5061 = vmatprep.subr.mxu0 0.0
          %5062 = vmatpush1.msra.mxu0 0.0
          %5063 = vmatprep.subr.mxu0 0.0
          %5064 = vmatpush1.msra.mxu0 0.0
          %5065 = vmatprep.subr.mxu0 0.0
          %5066 = vmatpush1.msra.mxu0 0.0
          %5067 = vmatprep.subr.mxu0 0.0
          %5068 = vmatpush1.msra.mxu0 0.0
          %5069 = vmatprep.subr.mxu0 0.0
          %5070 = vmatpush1.msra.mxu0 0.0
          %5071 = vmatprep.subr.mxu0 0.0
          %5072 = vmatpush1.msra.mxu0 0.0
          %5073 = vmatprep.subr.mxu0 0.0
          %5074 = vmatpush1.msra.mxu0 0.0
          %5075 = vmatprep.subr.mxu0 0.0
          %5076 = vmatpush1.msra.mxu0 0.0
          %5077 = vmatprep.subr.mxu0 0.0
          %5078 = vmatpush1.msra.mxu0 0.0
          %5079 = vmatprep.subr.mxu0 0.0
          %5080 = vmatpush1.msra.mxu0 0.0
          %5081 = vmatprep.subr.mxu0 0.0
          %5082 = vmatpush1.msra.mxu0 0.0
          %5083 = vmatprep.subr.mxu0 0.0
          %5084 = vmatpush1.msra.mxu0 0.0
          %5085 = vmatprep.subr.mxu0 0.0
          %5086 = vmatpush1.msra.mxu0 0.0
          %5087 = vmatprep.subr.mxu0 0.0
          %5088 = vmatpush1.msra.mxu0 0.0
          %5089 = vmatprep.subr.mxu0 0.0
          %5090 = vmatpush1.msra.mxu0 0.0
          %5091 = vmatprep.subr.mxu0 0.0
          %5092 = vmatpush1.msra.mxu0 0.0
          %5093 = vmatprep.subr.mxu0 0.0
          %5094 = vmatpush1.msra.mxu0 0.0
          %5095 = vmatprep.subr.mxu0 0.0
          %5096 = vmatpush1.msra.mxu0 0.0
          %5097 = vmatprep.mubr.f32.mxu0 0.0
          %5098 = vmatmul.mubr.f32.gmra.mrb[0].mxu0 %v5028
          %v5099 = vpop.f32.mrb[0].mxu0
          %v5100 = vadd.f32 0.0, %v5099
          %v5101 = vpop.f32.mrb[0].mxu0
          %5102 = vmatprep.mubr.f32.mxu0 0.0
          %5103 = vmatmul.mubr.f32.gmra.mrb[0].mxu0 %v5031
          %v5104 = vpop.f32.mrb[0].mxu0
          %v5105 = vadd.f32 0.0, %v5104
          %v5106 = vpop.f32.mrb[0].mxu0
          %5107 = vdwg.mxu0
          %v5108 = vmax.f32 %v5019, %v5100
          %v5109 = vmax.f32 %v5024, %v5105
          %s5110 = smul.u32 %s1612, 9
          %s5111 = scalar_lea.vmem [#allocation3], %s5110
          %vm5112 = vcmask 523264
          %5113 = vst.msk [vmem:[%s5111] sm:$0xff] %vm5112, %v5108
          %vm5114 = vcmask 516096
          %5115 = vst.msk [vmem:[%s5111 + $0x8] sm:$0x1] %vm5114, %v5109
        $region76: #{net_forward.1} parent=63 // loop_footer
          %s1616 = sadd.s32 1, %s1612
        $region77: #{net_forward.1} parent=63 // loop_footer_branch
          %1611 = sbr.rel target = $region73
        $region78: #{net_forward.1} parent=63 // loop_exit
          _
        %v5116 = vld [vmem:[%s6] sm:$0x1]
        loop: start=0, step=1, limit=2
        $region79: #{net_forward.1} parent=63 // loop_pre_header
          _
        $region80: #{net_forward.1} parent=63 // loop_header
          %s5118 = sphi 0, %s5122
          %p5119 = scmp.ge.s32.totalorder %s5118, 2
        $region81: #{net_forward.1} parent=63 // loop_header_branch
          %5121 = sbr.rel (%p5119) target = $region85
        $region82: #{net_forward.1} parent=63 // loop_body
          %s5123 = smul.u32 %s5118, 18
          %s5124 = scalar_lea.vmem [#allocation3], %s5123
          %v5125 = vld [vmem:[%s5124] sm:$0xff]
          %v5126 = vld [vmem:[%s5124 + $0x8] sm:$0x3f]
          %v5127 = vld [vmem:[%s5] sm:$0xff]
          %v5128 = vld [vmem:[%s5 + $0x8] sm:$0xff]
          %v5129 = vld [vmem:[%s5 + $0x10] sm:$0xff]
          %v5130 = vld [vmem:[%s5 + $0x18] sm:$0xff]
          %v5131 = vld [vmem:[%s5 + $0x20] sm:$0xff]
          %v5132 = vld [vmem:[%s5 + $0x28] sm:$0xff]
          %v5133 = vld [vmem:[%s5 + $0x30] sm:$0xff]
          %v5134 = vld [vmem:[%s5 + $0x38] sm:$0xff]
          %s5135 = sadd.s32 %s5123, 1
          %s5136 = scalar_lea.vmem [#allocation3], %s5135
          %v5137 = vld [vmem:[%s5136] sm:$0xff]
          %v5138 = vld [vmem:[%s5136 + $0x8] sm:$0x3f]
          %s5139 = scalar_lea.vmem %s5, 64
          %v5140 = vld [vmem:[%s5139] sm:$0xff]
          %v5141 = vld [vmem:[%s5139 + $0x8] sm:$0xff]
          %v5142 = vld [vmem:[%s5139 + $0x10] sm:$0xff]
          %v5143 = vld [vmem:[%s5139 + $0x18] sm:$0xff]
          %v5144 = vld [vmem:[%s5139 + $0x20] sm:$0xff]
          %v5145 = vld [vmem:[%s5139 + $0x28] sm:$0xff]
          %v5146 = vld [vmem:[%s5139 + $0x30] sm:$0xff]
          %v5147 = vld [vmem:[%s5139 + $0x38] sm:$0xff]
          %vm5148 = vcmask 523264
          %v5150 = vsel %vm5148, %v5137, 0
          %v5153 = vsel %vm5148, %v5138, 0
          %5155 = vmatprep.subr.mxu0 0.0
          %5156 = vmatpush1.msra.mxu0 %v5140
          %5157 = vmatprep.subr.mxu0 0.0
          %5158 = vmatpush1.msra.mxu0 %v5141
          %5159 = vmatprep.subr.mxu0 0.0
          %5160 = vmatpush1.msra.mxu0 %v5142
          %5161 = vmatprep.subr.mxu0 0.0
          %5162 = vmatpush1.msra.mxu0 %v5143
          %5163 = vmatprep.subr.mxu0 0.0
          %5164 = vmatpush1.msra.mxu0 %v5144
          %5165 = vmatprep.subr.mxu0 0.0
          %5166 = vmatpush1.msra.mxu0 %v5145
          %5167 = vmatprep.subr.mxu0 0.0
          %5168 = vmatpush1.msra.mxu0 %v5146
          %5169 = vmatprep.subr.mxu0 0.0
          %5170 = vmatpush1.msra.mxu0 %v5147
          %5171 = vmatprep.subr.mxu0 0.0
          %5172 = vmatpush1.msra.mxu0 0.0
          %5173 = vmatprep.subr.mxu0 0.0
          %5174 = vmatpush1.msra.mxu0 0.0
          %5175 = vmatprep.subr.mxu0 0.0
          %5176 = vmatpush1.msra.mxu0 0.0
          %5177 = vmatprep.subr.mxu0 0.0
          %5178 = vmatpush1.msra.mxu0 0.0
          %5179 = vmatprep.subr.mxu0 0.0
          %5180 = vmatpush1.msra.mxu0 0.0
          %5181 = vmatprep.subr.mxu0 0.0
          %5182 = vmatpush1.msra.mxu0 0.0
          %5183 = vmatprep.subr.mxu0 0.0
          %5184 = vmatpush1.msra.mxu0 0.0
          %5185 = vmatprep.subr.mxu0 0.0
          %5186 = vmatpush1.msra.mxu0 0.0
          %5187 = vmatprep.subr.mxu0 0.0
          %5188 = vmatpush1.msra.mxu0 0.0
          %5189 = vmatprep.subr.mxu0 0.0
          %5190 = vmatpush1.msra.mxu0 0.0
          %5191 = vmatprep.subr.mxu0 0.0
          %5192 = vmatpush1.msra.mxu0 0.0
          %5193 = vmatprep.subr.mxu0 0.0
          %5194 = vmatpush1.msra.mxu0 0.0
          %5195 = vmatprep.subr.mxu0 0.0
          %5196 = vmatpush1.msra.mxu0 0.0
          %5197 = vmatprep.subr.mxu0 0.0
          %5198 = vmatpush1.msra.mxu0 0.0
          %5199 = vmatprep.subr.mxu0 0.0
          %5200 = vmatpush1.msra.mxu0 0.0
          %5201 = vmatprep.subr.mxu0 0.0
          %5202 = vmatpush1.msra.mxu0 0.0
          %5203 = vmatprep.subr.mxu0 0.0
          %5204 = vmatpush1.msra.mxu0 0.0
          %5205 = vmatprep.subr.mxu0 0.0
          %5206 = vmatpush1.msra.mxu0 0.0
          %5207 = vmatprep.subr.mxu0 0.0
          %5208 = vmatpush1.msra.mxu0 0.0
          %5209 = vmatprep.subr.mxu0 0.0
          %5210 = vmatpush1.msra.mxu0 0.0
          %5211 = vmatprep.subr.mxu0 0.0
          %5212 = vmatpush1.msra.mxu0 0.0
          %5213 = vmatprep.subr.mxu0 0.0
          %5214 = vmatpush1.msra.mxu0 0.0
          %5215 = vmatprep.subr.mxu0 0.0
          %5216 = vmatpush1.msra.mxu0 0.0
          %5217 = vmatprep.subr.mxu0 0.0
          %5218 = vmatpush1.msra.mxu0 0.0
          %5219 = vmatprep.mubr.f32.mxu0 0.0
          %5220 = vmatmul.mubr.f32.gmra.mrb[0].mxu0 %v5150
          %v5221 = vpop.f32.mrb[0].mxu0
          %v5222 = vadd.f32 0.0, %v5221
          %v5223 = vpop.f32.mrb[0].mxu0
          %5224 = vmatprep.mubr.f32.mxu0 0.0
          %5225 = vmatmul.mubr.f32.gmra.mrb[0].mxu0 %v5153
          %v5226 = vpop.f32.mrb[0].mxu0
          %v5227 = vadd.f32 0.0, %v5226
          %v5228 = vpop.f32.mrb[0].mxu0
          %5229 = vdwg.mxu0
          %v5231 = vsel %vm5148, %v5125, 0
          %v5234 = vsel %vm5148, %v5126, 0
          %5236 = vmatprep.subr.mxu0 0.0
          %5237 = vmatpush1.msra.mxu0 %v5127
          %5238 = vmatprep.subr.mxu0 0.0
          %5239 = vmatpush1.msra.mxu0 %v5128
          %5240 = vmatprep.subr.mxu0 0.0
          %5241 = vmatpush1.msra.mxu0 %v5129
          %5242 = vmatprep.subr.mxu0 0.0
          %5243 = vmatpush1.msra.mxu0 %v5130
          %5244 = vmatprep.subr.mxu0 0.0
          %5245 = vmatpush1.msra.mxu0 %v5131
          %5246 = vmatprep.subr.mxu0 0.0
          %5247 = vmatpush1.msra.mxu0 %v5132
          %5248 = vmatprep.subr.mxu0 0.0
          %5249 = vmatpush1.msra.mxu0 %v5133
          %5250 = vmatprep.subr.mxu0 0.0
          %5251 = vmatpush1.msra.mxu0 %v5134
          %5252 = vmatprep.subr.mxu0 0.0
          %5253 = vmatpush1.msra.mxu0 0.0
          %5254 = vmatprep.subr.mxu0 0.0
          %5255 = vmatpush1.msra.mxu0 0.0
          %5256 = vmatprep.subr.mxu0 0.0
          %5257 = vmatpush1.msra.mxu0 0.0
          %5258 = vmatprep.subr.mxu0 0.0
          %5259 = vmatpush1.msra.mxu0 0.0
          %5260 = vmatprep.subr.mxu0 0.0
          %5261 = vmatpush1.msra.mxu0 0.0
          %5262 = vmatprep.subr.mxu0 0.0
          %5263 = vmatpush1.msra.mxu0 0.0
          %5264 = vmatprep.subr.mxu0 0.0
          %5265 = vmatpush1.msra.mxu0 0.0
          %5266 = vmatprep.subr.mxu0 0.0
          %5267 = vmatpush1.msra.mxu0 0.0
          %5268 = vmatprep.subr.mxu0 0.0
          %5269 = vmatpush1.msra.mxu0 0.0
          %5270 = vmatprep.subr.mxu0 0.0
          %5271 = vmatpush1.msra.mxu0 0.0
          %5272 = vmatprep.subr.mxu0 0.0
          %5273 = vmatpush1.msra.mxu0 0.0
          %5274 = vmatprep.subr.mxu0 0.0
          %5275 = vmatpush1.msra.mxu0 0.0
          %5276 = vmatprep.subr.mxu0 0.0
          %5277 = vmatpush1.msra.mxu0 0.0
          %5278 = vmatprep.subr.mxu0 0.0
          %5279 = vmatpush1.msra.mxu0 0.0
          %5280 = vmatprep.subr.mxu0 0.0
          %5281 = vmatpush1.msra.mxu0 0.0
          %5282 = vmatprep.subr.mxu0 0.0
          %5283 = vmatpush1.msra.mxu0 0.0
          %5284 = vmatprep.subr.mxu0 0.0
          %5285 = vmatpush1.msra.mxu0 0.0
          %5286 = vmatprep.subr.mxu0 0.0
          %5287 = vmatpush1.msra.mxu0 0.0
          %5288 = vmatprep.subr.mxu0 0.0
          %5289 = vmatpush1.msra.mxu0 0.0
          %5290 = vmatprep.subr.mxu0 0.0
          %5291 = vmatpush1.msra.mxu0 0.0
          %5292 = vmatprep.subr.mxu0 0.0
          %5293 = vmatpush1.msra.mxu0 0.0
          %5294 = vmatprep.subr.mxu0 0.0
          %5295 = vmatpush1.msra.mxu0 0.0
          %5296 = vmatprep.subr.mxu0 0.0
          %5297 = vmatpush1.msra.mxu0 0.0
          %5298 = vmatprep.subr.mxu0 0.0
          %5299 = vmatpush1.msra.mxu0 0.0
          %5300 = vmatprep.mubr.f32.mxu0 0.0
          %5301 = vmatmul.mubr.f32.gmra.mrb[0].mxu0 %v5231
          %v5302 = vpop.f32.mrb[0].mxu0
          %v5303 = vadd.f32 %v5222, %v5302
          %v5304 = vpop.f32.mrb[0].mxu0
          %5305 = vmatprep.mubr.f32.mxu0 0.0
          %5306 = vmatmul.mubr.f32.gmra.mrb[0].mxu0 %v5234
          %v5307 = vpop.f32.mrb[0].mxu0
          %v5308 = vadd.f32 %v5227, %v5307
          %v5309 = vpop.f32.mrb[0].mxu0
          %5310 = vdwg.mxu0
          %s5311 = sadd.s32 %s5123, 2
          %s5312 = scalar_lea.vmem [#allocation3], %s5311
          %v5313 = vld [vmem:[%s5312] sm:$0xff]
          %v5314 = vld [vmem:[%s5312 + $0x8] sm:$0x3f]
          %s5315 = scalar_lea.vmem %s5, 128
          %v5316 = vld [vmem:[%s5315] sm:$0xff]
          %v5317 = vld [vmem:[%s5315 + $0x8] sm:$0xff]
          %v5318 = vld [vmem:[%s5315 + $0x10] sm:$0xff]
          %v5319 = vld [vmem:[%s5315 + $0x18] sm:$0xff]
          %v5320 = vld [vmem:[%s5315 + $0x20] sm:$0xff]
          %v5321 = vld [vmem:[%s5315 + $0x28] sm:$0xff]
          %v5322 = vld [vmem:[%s5315 + $0x30] sm:$0xff]
          %v5323 = vld [vmem:[%s5315 + $0x38] sm:$0xff]
          %v5325 = vsel %vm5148, %v5313, 0
          %v5328 = vsel %vm5148, %v5314, 0
          %5330 = vmatprep.subr.mxu0 0.0
          %5331 = vmatpush1.msra.mxu0 %v5316
          %5332 = vmatprep.subr.mxu0 0.0
          %5333 = vmatpush1.msra.mxu0 %v5317
          %5334 = vmatprep.subr.mxu0 0.0
          %5335 = vmatpush1.msra.mxu0 %v5318
          %5336 = vmatprep.subr.mxu0 0.0
          %5337 = vmatpush1.msra.mxu0 %v5319
          %5338 = vmatprep.subr.mxu0 0.0
          %5339 = vmatpush1.msra.mxu0 %v5320
          %5340 = vmatprep.subr.mxu0 0.0
          %5341 = vmatpush1.msra.mxu0 %v5321
          %5342 = vmatprep.subr.mxu0 0.0
          %5343 = vmatpush1.msra.mxu0 %v5322
          %5344 = vmatprep.subr.mxu0 0.0
          %5345 = vmatpush1.msra.mxu0 %v5323
          %5346 = vmatprep.subr.mxu0 0.0
          %5347 = vmatpush1.msra.mxu0 0.0
          %5348 = vmatprep.subr.mxu0 0.0
          %5349 = vmatpush1.msra.mxu0 0.0
          %5350 = vmatprep.subr.mxu0 0.0
          %5351 = vmatpush1.msra.mxu0 0.0
          %5352 = vmatprep.subr.mxu0 0.0
          %5353 = vmatpush1.msra.mxu0 0.0
          %5354 = vmatprep.subr.mxu0 0.0
          %5355 = vmatpush1.msra.mxu0 0.0
          %5356 = vmatprep.subr.mxu0 0.0
          %5357 = vmatpush1.msra.mxu0 0.0
          %5358 = vmatprep.subr.mxu0 0.0
          %5359 = vmatpush1.msra.mxu0 0.0
          %5360 = vmatprep.subr.mxu0 0.0
          %5361 = vmatpush1.msra.mxu0 0.0
          %5362 = vmatprep.subr.mxu0 0.0
          %5363 = vmatpush1.msra.mxu0 0.0
          %5364 = vmatprep.subr.mxu0 0.0
          %5365 = vmatpush1.msra.mxu0 0.0
          %5366 = vmatprep.subr.mxu0 0.0
          %5367 = vmatpush1.msra.mxu0 0.0
          %5368 = vmatprep.subr.mxu0 0.0
          %5369 = vmatpush1.msra.mxu0 0.0
          %5370 = vmatprep.subr.mxu0 0.0
          %5371 = vmatpush1.msra.mxu0 0.0
          %5372 = vmatprep.subr.mxu0 0.0
          %5373 = vmatpush1.msra.mxu0 0.0
          %5374 = vmatprep.subr.mxu0 0.0
          %5375 = vmatpush1.msra.mxu0 0.0
          %5376 = vmatprep.subr.mxu0 0.0
          %5377 = vmatpush1.msra.mxu0 0.0
          %5378 = vmatprep.subr.mxu0 0.0
          %5379 = vmatpush1.msra.mxu0 0.0
          %5380 = vmatprep.subr.mxu0 0.0
          %5381 = vmatpush1.msra.mxu0 0.0
          %5382 = vmatprep.subr.mxu0 0.0
          %5383 = vmatpush1.msra.mxu0 0.0
          %5384 = vmatprep.subr.mxu0 0.0
          %5385 = vmatpush1.msra.mxu0 0.0
          %5386 = vmatprep.subr.mxu0 0.0
          %5387 = vmatpush1.msra.mxu0 0.0
          %5388 = vmatprep.subr.mxu0 0.0
          %5389 = vmatpush1.msra.mxu0 0.0
          %5390 = vmatprep.subr.mxu0 0.0
          %5391 = vmatpush1.msra.mxu0 0.0
          %5392 = vmatprep.subr.mxu0 0.0
          %5393 = vmatpush1.msra.mxu0 0.0
          %5394 = vmatprep.mubr.f32.mxu0 0.0
          %5395 = vmatmul.mubr.f32.gmra.mrb[0].mxu0 %v5325
          %v5396 = vpop.f32.mrb[0].mxu0
          %v5397 = vadd.f32 0.0, %v5396
          %v5398 = vpop.f32.mrb[0].mxu0
          %5399 = vmatprep.mubr.f32.mxu0 0.0
          %5400 = vmatmul.mubr.f32.gmra.mrb[0].mxu0 %v5328
          %v5401 = vpop.f32.mrb[0].mxu0
          %v5402 = vadd.f32 0.0, %v5401
          %v5403 = vpop.f32.mrb[0].mxu0
          %5404 = vdwg.mxu0
          %v5405 = vadd.f32 %v5303, %v5397
          %v5406 = vadd.f32 %v5308, %v5402
          %s5407 = sadd.s32 %s5123, 3
          %s5408 = scalar_lea.vmem [#allocation3], %s5407
          %v5409 = vld [vmem:[%s5408] sm:$0xff]
          %v5410 = vld [vmem:[%s5408 + $0x8] sm:$0x3f]
          %s5411 = scalar_lea.vmem %s5, 192
          %v5412 = vld [vmem:[%s5411] sm:$0xff]
          %v5413 = vld [vmem:[%s5411 + $0x8] sm:$0xff]
          %v5414 = vld [vmem:[%s5411 + $0x10] sm:$0xff]
          %v5415 = vld [vmem:[%s5411 + $0x18] sm:$0xff]
          %v5416 = vld [vmem:[%s5411 + $0x20] sm:$0xff]
          %v5417 = vld [vmem:[%s5411 + $0x28] sm:$0xff]
          %v5418 = vld [vmem:[%s5411 + $0x30] sm:$0xff]
          %v5419 = vld [vmem:[%s5411 + $0x38] sm:$0xff]
          %v5421 = vsel %vm5148, %v5409, 0
          %v5424 = vsel %vm5148, %v5410, 0
          %5426 = vmatprep.subr.mxu0 0.0
          %5427 = vmatpush1.msra.mxu0 %v5412
          %5428 = vmatprep.subr.mxu0 0.0
          %5429 = vmatpush1.msra.mxu0 %v5413
          %5430 = vmatprep.subr.mxu0 0.0
          %5431 = vmatpush1.msra.mxu0 %v5414
          %5432 = vmatprep.subr.mxu0 0.0
          %5433 = vmatpush1.msra.mxu0 %v5415
          %5434 = vmatprep.subr.mxu0 0.0
          %5435 = vmatpush1.msra.mxu0 %v5416
          %5436 = vmatprep.subr.mxu0 0.0
          %5437 = vmatpush1.msra.mxu0 %v5417
          %5438 = vmatprep.subr.mxu0 0.0
          %5439 = vmatpush1.msra.mxu0 %v5418
          %5440 = vmatprep.subr.mxu0 0.0
          %5441 = vmatpush1.msra.mxu0 %v5419
          %5442 = vmatprep.subr.mxu0 0.0
          %5443 = vmatpush1.msra.mxu0 0.0
          %5444 = vmatprep.subr.mxu0 0.0
          %5445 = vmatpush1.msra.mxu0 0.0
          %5446 = vmatprep.subr.mxu0 0.0
          %5447 = vmatpush1.msra.mxu0 0.0
          %5448 = vmatprep.subr.mxu0 0.0
          %5449 = vmatpush1.msra.mxu0 0.0
          %5450 = vmatprep.subr.mxu0 0.0
          %5451 = vmatpush1.msra.mxu0 0.0
          %5452 = vmatprep.subr.mxu0 0.0
          %5453 = vmatpush1.msra.mxu0 0.0
          %5454 = vmatprep.subr.mxu0 0.0
          %5455 = vmatpush1.msra.mxu0 0.0
          %5456 = vmatprep.subr.mxu0 0.0
          %5457 = vmatpush1.msra.mxu0 0.0
          %5458 = vmatprep.subr.mxu0 0.0
          %5459 = vmatpush1.msra.mxu0 0.0
          %5460 = vmatprep.subr.mxu0 0.0
          %5461 = vmatpush1.msra.mxu0 0.0
          %5462 = vmatprep.subr.mxu0 0.0
          %5463 = vmatpush1.msra.mxu0 0.0
          %5464 = vmatprep.subr.mxu0 0.0
          %5465 = vmatpush1.msra.mxu0 0.0
          %5466 = vmatprep.subr.mxu0 0.0
          %5467 = vmatpush1.msra.mxu0 0.0
          %5468 = vmatprep.subr.mxu0 0.0
          %5469 = vmatpush1.msra.mxu0 0.0
          %5470 = vmatprep.subr.mxu0 0.0
          %5471 = vmatpush1.msra.mxu0 0.0
          %5472 = vmatprep.subr.mxu0 0.0
          %5473 = vmatpush1.msra.mxu0 0.0
          %5474 = vmatprep.subr.mxu0 0.0
          %5475 = vmatpush1.msra.mxu0 0.0
          %5476 = vmatprep.subr.mxu0 0.0
          %5477 = vmatpush1.msra.mxu0 0.0
          %5478 = vmatprep.subr.mxu0 0.0
          %5479 = vmatpush1.msra.mxu0 0.0
          %5480 = vmatprep.subr.mxu0 0.0
          %5481 = vmatpush1.msra.mxu0 0.0
          %5482 = vmatprep.subr.mxu0 0.0
          %5483 = vmatpush1.msra.mxu0 0.0
          %5484 = vmatprep.subr.mxu0 0.0
          %5485 = vmatpush1.msra.mxu0 0.0
          %5486 = vmatprep.subr.mxu0 0.0
          %5487 = vmatpush1.msra.mxu0 0.0
          %5488 = vmatprep.subr.mxu0 0.0
          %5489 = vmatpush1.msra.mxu0 0.0
          %5490 = vmatprep.mubr.f32.mxu0 0.0
          %5491 = vmatmul.mubr.f32.gmra.mrb[0].mxu0 %v5421
          %v5492 = vpop.f32.mrb[0].mxu0
          %v5493 = vadd.f32 0.0, %v5492
          %v5494 = vpop.f32.mrb[0].mxu0
          %5495 = vmatprep.mubr.f32.mxu0 0.0
          %5496 = vmatmul.mubr.f32.gmra.mrb[0].mxu0 %v5424
          %v5497 = vpop.f32.mrb[0].mxu0
          %v5498 = vadd.f32 0.0, %v5497
          %v5499 = vpop.f32.mrb[0].mxu0
          %5500 = vdwg.mxu0
          %v5501 = vadd.f32 %v5405, %v5493
          %v5502 = vadd.f32 %v5406, %v5498
          %s5503 = sadd.s32 %s5123, 4
          %s5504 = scalar_lea.vmem [#allocation3], %s5503
          %v5505 = vld [vmem:[%s5504] sm:$0xff]
          %v5506 = vld [vmem:[%s5504 + $0x8] sm:$0x3f]
          %s5507 = scalar_lea.vmem %s5, 256
          %v5508 = vld [vmem:[%s5507] sm:$0xff]
          %v5509 = vld [vmem:[%s5507 + $0x8] sm:$0xff]
          %v5510 = vld [vmem:[%s5507 + $0x10] sm:$0xff]
          %v5511 = vld [vmem:[%s5507 + $0x18] sm:$0xff]
          %v5512 = vld [vmem:[%s5507 + $0x20] sm:$0xff]
          %v5513 = vld [vmem:[%s5507 + $0x28] sm:$0xff]
          %v5514 = vld [vmem:[%s5507 + $0x30] sm:$0xff]
          %v5515 = vld [vmem:[%s5507 + $0x38] sm:$0xff]
          %v5517 = vsel %vm5148, %v5505, 0
          %v5520 = vsel %vm5148, %v5506, 0
          %5522 = vmatprep.subr.mxu0 0.0
          %5523 = vmatpush1.msra.mxu0 %v5508
          %5524 = vmatprep.subr.mxu0 0.0
          %5525 = vmatpush1.msra.mxu0 %v5509
          %5526 = vmatprep.subr.mxu0 0.0
          %5527 = vmatpush1.msra.mxu0 %v5510
          %5528 = vmatprep.subr.mxu0 0.0
          %5529 = vmatpush1.msra.mxu0 %v5511
          %5530 = vmatprep.subr.mxu0 0.0
          %5531 = vmatpush1.msra.mxu0 %v5512
          %5532 = vmatprep.subr.mxu0 0.0
          %5533 = vmatpush1.msra.mxu0 %v5513
          %5534 = vmatprep.subr.mxu0 0.0
          %5535 = vmatpush1.msra.mxu0 %v5514
          %5536 = vmatprep.subr.mxu0 0.0
          %5537 = vmatpush1.msra.mxu0 %v5515
          %5538 = vmatprep.subr.mxu0 0.0
          %5539 = vmatpush1.msra.mxu0 0.0
          %5540 = vmatprep.subr.mxu0 0.0
          %5541 = vmatpush1.msra.mxu0 0.0
          %5542 = vmatprep.subr.mxu0 0.0
          %5543 = vmatpush1.msra.mxu0 0.0
          %5544 = vmatprep.subr.mxu0 0.0
          %5545 = vmatpush1.msra.mxu0 0.0
          %5546 = vmatprep.subr.mxu0 0.0
          %5547 = vmatpush1.msra.mxu0 0.0
          %5548 = vmatprep.subr.mxu0 0.0
          %5549 = vmatpush1.msra.mxu0 0.0
          %5550 = vmatprep.subr.mxu0 0.0
          %5551 = vmatpush1.msra.mxu0 0.0
          %5552 = vmatprep.subr.mxu0 0.0
          %5553 = vmatpush1.msra.mxu0 0.0
          %5554 = vmatprep.subr.mxu0 0.0
          %5555 = vmatpush1.msra.mxu0 0.0
          %5556 = vmatprep.subr.mxu0 0.0
          %5557 = vmatpush1.msra.mxu0 0.0
          %5558 = vmatprep.subr.mxu0 0.0
          %5559 = vmatpush1.msra.mxu0 0.0
          %5560 = vmatprep.subr.mxu0 0.0
          %5561 = vmatpush1.msra.mxu0 0.0
          %5562 = vmatprep.subr.mxu0 0.0
          %5563 = vmatpush1.msra.mxu0 0.0
          %5564 = vmatprep.subr.mxu0 0.0
          %5565 = vmatpush1.msra.mxu0 0.0
          %5566 = vmatprep.subr.mxu0 0.0
          %5567 = vmatpush1.msra.mxu0 0.0
          %5568 = vmatprep.subr.mxu0 0.0
          %5569 = vmatpush1.msra.mxu0 0.0
          %5570 = vmatprep.subr.mxu0 0.0
          %5571 = vmatpush1.msra.mxu0 0.0
          %5572 = vmatprep.subr.mxu0 0.0
          %5573 = vmatpush1.msra.mxu0 0.0
          %5574 = vmatprep.subr.mxu0 0.0
          %5575 = vmatpush1.msra.mxu0 0.0
          %5576 = vmatprep.subr.mxu0 0.0
          %5577 = vmatpush1.msra.mxu0 0.0
          %5578 = vmatprep.subr.mxu0 0.0
          %5579 = vmatpush1.msra.mxu0 0.0
          %5580 = vmatprep.subr.mxu0 0.0
          %5581 = vmatpush1.msra.mxu0 0.0
          %5582 = vmatprep.subr.mxu0 0.0
          %5583 = vmatpush1.msra.mxu0 0.0
          %5584 = vmatprep.subr.mxu0 0.0
          %5585 = vmatpush1.msra.mxu0 0.0
          %5586 = vmatprep.mubr.f32.mxu0 0.0
          %5587 = vmatmul.mubr.f32.gmra.mrb[0].mxu0 %v5517
          %v5588 = vpop.f32.mrb[0].mxu0
          %v5589 = vadd.f32 0.0, %v5588
          %v5590 = vpop.f32.mrb[0].mxu0
          %5591 = vmatprep.mubr.f32.mxu0 0.0
          %5592 = vmatmul.mubr.f32.gmra.mrb[0].mxu0 %v5520
          %v5593 = vpop.f32.mrb[0].mxu0
          %v5594 = vadd.f32 0.0, %v5593
          %v5595 = vpop.f32.mrb[0].mxu0
          %5596 = vdwg.mxu0
          %v5597 = vadd.f32 %v5501, %v5589
          %v5598 = vadd.f32 %v5502, %v5594
          %s5599 = sadd.s32 %s5123, 9
          %s5600 = scalar_lea.vmem [#allocation3], %s5599
          %v5601 = vld [vmem:[%s5600] sm:$0xff]
          %v5602 = vld [vmem:[%s5600 + $0x8] sm:$0x3f]
          %s5603 = scalar_lea.vmem %s5, 320
          %v5604 = vld [vmem:[%s5603] sm:$0xff]
          %v5605 = vld [vmem:[%s5603 + $0x8] sm:$0xff]
          %v5606 = vld [vmem:[%s5603 + $0x10] sm:$0xff]
          %v5607 = vld [vmem:[%s5603 + $0x18] sm:$0xff]
          %v5608 = vld [vmem:[%s5603 + $0x20] sm:$0xff]
          %v5609 = vld [vmem:[%s5603 + $0x28] sm:$0xff]
          %v5610 = vld [vmem:[%s5603 + $0x30] sm:$0xff]
          %v5611 = vld [vmem:[%s5603 + $0x38] sm:$0xff]
          %v5613 = vsel %vm5148, %v5601, 0
          %v5616 = vsel %vm5148, %v5602, 0
          %5618 = vmatprep.subr.mxu0 0.0
          %5619 = vmatpush1.msra.mxu0 %v5604
          %5620 = vmatprep.subr.mxu0 0.0
          %5621 = vmatpush1.msra.mxu0 %v5605
          %5622 = vmatprep.subr.mxu0 0.0
          %5623 = vmatpush1.msra.mxu0 %v5606
          %5624 = vmatprep.subr.mxu0 0.0
          %5625 = vmatpush1.msra.mxu0 %v5607
          %5626 = vmatprep.subr.mxu0 0.0
          %5627 = vmatpush1.msra.mxu0 %v5608
          %5628 = vmatprep.subr.mxu0 0.0
          %5629 = vmatpush1.msra.mxu0 %v5609
          %5630 = vmatprep.subr.mxu0 0.0
          %5631 = vmatpush1.msra.mxu0 %v5610
          %5632 = vmatprep.subr.mxu0 0.0
          %5633 = vmatpush1.msra.mxu0 %v5611
          %5634 = vmatprep.subr.mxu0 0.0
          %5635 = vmatpush1.msra.mxu0 0.0
          %5636 = vmatprep.subr.mxu0 0.0
          %5637 = vmatpush1.msra.mxu0 0.0
          %5638 = vmatprep.subr.mxu0 0.0
          %5639 = vmatpush1.msra.mxu0 0.0
          %5640 = vmatprep.subr.mxu0 0.0
          %5641 = vmatpush1.msra.mxu0 0.0
          %5642 = vmatprep.subr.mxu0 0.0
          %5643 = vmatpush1.msra.mxu0 0.0
          %5644 = vmatprep.subr.mxu0 0.0
          %5645 = vmatpush1.msra.mxu0 0.0
          %5646 = vmatprep.subr.mxu0 0.0
          %5647 = vmatpush1.msra.mxu0 0.0
          %5648 = vmatprep.subr.mxu0 0.0
          %5649 = vmatpush1.msra.mxu0 0.0
          %5650 = vmatprep.subr.mxu0 0.0
          %5651 = vmatpush1.msra.mxu0 0.0
          %5652 = vmatprep.subr.mxu0 0.0
          %5653 = vmatpush1.msra.mxu0 0.0
          %5654 = vmatprep.subr.mxu0 0.0
          %5655 = vmatpush1.msra.mxu0 0.0
          %5656 = vmatprep.subr.mxu0 0.0
          %5657 = vmatpush1.msra.mxu0 0.0
          %5658 = vmatprep.subr.mxu0 0.0
          %5659 = vmatpush1.msra.mxu0 0.0
          %5660 = vmatprep.subr.mxu0 0.0
          %5661 = vmatpush1.msra.mxu0 0.0
          %5662 = vmatprep.subr.mxu0 0.0
          %5663 = vmatpush1.msra.mxu0 0.0
          %5664 = vmatprep.subr.mxu0 0.0
          %5665 = vmatpush1.msra.mxu0 0.0
          %5666 = vmatprep.subr.mxu0 0.0
          %5667 = vmatpush1.msra.mxu0 0.0
          %5668 = vmatprep.subr.mxu0 0.0
          %5669 = vmatpush1.msra.mxu0 0.0
          %5670 = vmatprep.subr.mxu0 0.0
          %5671 = vmatpush1.msra.mxu0 0.0
          %5672 = vmatprep.subr.mxu0 0.0
          %5673 = vmatpush1.msra.mxu0 0.0
          %5674 = vmatprep.subr.mxu0 0.0
          %5675 = vmatpush1.msra.mxu0 0.0
          %5676 = vmatprep.subr.mxu0 0.0
          %5677 = vmatpush1.msra.mxu0 0.0
          %5678 = vmatprep.subr.mxu0 0.0
          %5679 = vmatpush1.msra.mxu0 0.0
          %5680 = vmatprep.subr.mxu0 0.0
          %5681 = vmatpush1.msra.mxu0 0.0
          %5682 = vmatprep.mubr.f32.mxu0 0.0
          %5683 = vmatmul.mubr.f32.gmra.mrb[0].mxu0 %v5613
          %v5684 = vpop.f32.mrb[0].mxu0
          %v5685 = vadd.f32 0.0, %v5684
          %v5686 = vpop.f32.mrb[0].mxu0
          %5687 = vmatprep.mubr.f32.mxu0 0.0
          %5688 = vmatmul.mubr.f32.gmra.mrb[0].mxu0 %v5616
          %v5689 = vpop.f32.mrb[0].mxu0
          %v5690 = vadd.f32 0.0, %v5689
          %v5691 = vpop.f32.mrb[0].mxu0
          %5692 = vdwg.mxu0
          %v5693 = vadd.f32 %v5597, %v5685
          %v5694 = vadd.f32 %v5598, %v5690
          %s5695 = sadd.s32 %s5123, 10
          %s5696 = scalar_lea.vmem [#allocation3], %s5695
          %v5697 = vld [vmem:[%s5696] sm:$0xff]
          %v5698 = vld [vmem:[%s5696 + $0x8] sm:$0x3f]
          %s5699 = scalar_lea.vmem %s5, 384
          %v5700 = vld [vmem:[%s5699] sm:$0xff]
          %v5701 = vld [vmem:[%s5699 + $0x8] sm:$0xff]
          %v5702 = vld [vmem:[%s5699 + $0x10] sm:$0xff]
          %v5703 = vld [vmem:[%s5699 + $0x18] sm:$0xff]
          %v5704 = vld [vmem:[%s5699 + $0x20] sm:$0xff]
          %v5705 = vld [vmem:[%s5699 + $0x28] sm:$0xff]
          %v5706 = vld [vmem:[%s5699 + $0x30] sm:$0xff]
          %v5707 = vld [vmem:[%s5699 + $0x38] sm:$0xff]
          %v5709 = vsel %vm5148, %v5697, 0
          %v5712 = vsel %vm5148, %v5698, 0
          %5714 = vmatprep.subr.mxu0 0.0
          %5715 = vmatpush1.msra.mxu0 %v5700
          %5716 = vmatprep.subr.mxu0 0.0
          %5717 = vmatpush1.msra.mxu0 %v5701
          %5718 = vmatprep.subr.mxu0 0.0
          %5719 = vmatpush1.msra.mxu0 %v5702
          %5720 = vmatprep.subr.mxu0 0.0
          %5721 = vmatpush1.msra.mxu0 %v5703
          %5722 = vmatprep.subr.mxu0 0.0
          %5723 = vmatpush1.msra.mxu0 %v5704
          %5724 = vmatprep.subr.mxu0 0.0
          %5725 = vmatpush1.msra.mxu0 %v5705
          %5726 = vmatprep.subr.mxu0 0.0
          %5727 = vmatpush1.msra.mxu0 %v5706
          %5728 = vmatprep.subr.mxu0 0.0
          %5729 = vmatpush1.msra.mxu0 %v5707
          %5730 = vmatprep.subr.mxu0 0.0
          %5731 = vmatpush1.msra.mxu0 0.0
          %5732 = vmatprep.subr.mxu0 0.0
          %5733 = vmatpush1.msra.mxu0 0.0
          %5734 = vmatprep.subr.mxu0 0.0
          %5735 = vmatpush1.msra.mxu0 0.0
          %5736 = vmatprep.subr.mxu0 0.0
          %5737 = vmatpush1.msra.mxu0 0.0
          %5738 = vmatprep.subr.mxu0 0.0
          %5739 = vmatpush1.msra.mxu0 0.0
          %5740 = vmatprep.subr.mxu0 0.0
          %5741 = vmatpush1.msra.mxu0 0.0
          %5742 = vmatprep.subr.mxu0 0.0
          %5743 = vmatpush1.msra.mxu0 0.0
          %5744 = vmatprep.subr.mxu0 0.0
          %5745 = vmatpush1.msra.mxu0 0.0
          %5746 = vmatprep.subr.mxu0 0.0
          %5747 = vmatpush1.msra.mxu0 0.0
          %5748 = vmatprep.subr.mxu0 0.0
          %5749 = vmatpush1.msra.mxu0 0.0
          %5750 = vmatprep.subr.mxu0 0.0
          %5751 = vmatpush1.msra.mxu0 0.0
          %5752 = vmatprep.subr.mxu0 0.0
          %5753 = vmatpush1.msra.mxu0 0.0
          %5754 = vmatprep.subr.mxu0 0.0
          %5755 = vmatpush1.msra.mxu0 0.0
          %5756 = vmatprep.subr.mxu0 0.0
          %5757 = vmatpush1.msra.mxu0 0.0
          %5758 = vmatprep.subr.mxu0 0.0
          %5759 = vmatpush1.msra.mxu0 0.0
          %5760 = vmatprep.subr.mxu0 0.0
          %5761 = vmatpush1.msra.mxu0 0.0
          %5762 = vmatprep.subr.mxu0 0.0
          %5763 = vmatpush1.msra.mxu0 0.0
          %5764 = vmatprep.subr.mxu0 0.0
          %5765 = vmatpush1.msra.mxu0 0.0
          %5766 = vmatprep.subr.mxu0 0.0
          %5767 = vmatpush1.msra.mxu0 0.0
          %5768 = vmatprep.subr.mxu0 0.0
          %5769 = vmatpush1.msra.mxu0 0.0
          %5770 = vmatprep.subr.mxu0 0.0
          %5771 = vmatpush1.msra.mxu0 0.0
          %5772 = vmatprep.subr.mxu0 0.0
          %5773 = vmatpush1.msra.mxu0 0.0
          %5774 = vmatprep.subr.mxu0 0.0
          %5775 = vmatpush1.msra.mxu0 0.0
          %5776 = vmatprep.subr.mxu0 0.0
          %5777 = vmatpush1.msra.mxu0 0.0
          %5778 = vmatprep.mubr.f32.mxu0 0.0
          %5779 = vmatmul.mubr.f32.gmra.mrb[0].mxu0 %v5709
          %v5780 = vpop.f32.mrb[0].mxu0
          %v5781 = vadd.f32 0.0, %v5780
          %v5782 = vpop.f32.mrb[0].mxu0
          %5783 = vmatprep.mubr.f32.mxu0 0.0
          %5784 = vmatmul.mubr.f32.gmra.mrb[0].mxu0 %v5712
          %v5785 = vpop.f32.mrb[0].mxu0
          %v5786 = vadd.f32 0.0, %v5785
          %v5787 = vpop.f32.mrb[0].mxu0
          %5788 = vdwg.mxu0
          %v5789 = vadd.f32 %v5693, %v5781
          %v5790 = vadd.f32 %v5694, %v5786
          %s5791 = sadd.s32 %s5123, 11
          %s5792 = scalar_lea.vmem [#allocation3], %s5791
          %v5793 = vld [vmem:[%s5792] sm:$0xff]
          %v5794 = vld [vmem:[%s5792 + $0x8] sm:$0x3f]
          %s5795 = scalar_lea.vmem %s5, 448
          %v5796 = vld [vmem:[%s5795] sm:$0xff]
          %v5797 = vld [vmem:[%s5795 + $0x8] sm:$0xff]
          %v5798 = vld [vmem:[%s5795 + $0x10] sm:$0xff]
          %v5799 = vld [vmem:[%s5795 + $0x18] sm:$0xff]
          %v5800 = vld [vmem:[%s5795 + $0x20] sm:$0xff]
          %v5801 = vld [vmem:[%s5795 + $0x28] sm:$0xff]
          %v5802 = vld [vmem:[%s5795 + $0x30] sm:$0xff]
          %v5803 = vld [vmem:[%s5795 + $0x38] sm:$0xff]
          %v5805 = vsel %vm5148, %v5793, 0
          %v5808 = vsel %vm5148, %v5794, 0
          %5810 = vmatprep.subr.mxu0 0.0
          %5811 = vmatpush1.msra.mxu0 %v5796
          %5812 = vmatprep.subr.mxu0 0.0
          %5813 = vmatpush1.msra.mxu0 %v5797
          %5814 = vmatprep.subr.mxu0 0.0
          %5815 = vmatpush1.msra.mxu0 %v5798
          %5816 = vmatprep.subr.mxu0 0.0
          %5817 = vmatpush1.msra.mxu0 %v5799
          %5818 = vmatprep.subr.mxu0 0.0
          %5819 = vmatpush1.msra.mxu0 %v5800
          %5820 = vmatprep.subr.mxu0 0.0
          %5821 = vmatpush1.msra.mxu0 %v5801
          %5822 = vmatprep.subr.mxu0 0.0
          %5823 = vmatpush1.msra.mxu0 %v5802
          %5824 = vmatprep.subr.mxu0 0.0
          %5825 = vmatpush1.msra.mxu0 %v5803
          %5826 = vmatprep.subr.mxu0 0.0
          %5827 = vmatpush1.msra.mxu0 0.0
          %5828 = vmatprep.subr.mxu0 0.0
          %5829 = vmatpush1.msra.mxu0 0.0
          %5830 = vmatprep.subr.mxu0 0.0
          %5831 = vmatpush1.msra.mxu0 0.0
          %5832 = vmatprep.subr.mxu0 0.0
          %5833 = vmatpush1.msra.mxu0 0.0
          %5834 = vmatprep.subr.mxu0 0.0
          %5835 = vmatpush1.msra.mxu0 0.0
          %5836 = vmatprep.subr.mxu0 0.0
          %5837 = vmatpush1.msra.mxu0 0.0
          %5838 = vmatprep.subr.mxu0 0.0
          %5839 = vmatpush1.msra.mxu0 0.0
          %5840 = vmatprep.subr.mxu0 0.0
          %5841 = vmatpush1.msra.mxu0 0.0
          %5842 = vmatprep.subr.mxu0 0.0
          %5843 = vmatpush1.msra.mxu0 0.0
          %5844 = vmatprep.subr.mxu0 0.0
          %5845 = vmatpush1.msra.mxu0 0.0
          %5846 = vmatprep.subr.mxu0 0.0
          %5847 = vmatpush1.msra.mxu0 0.0
          %5848 = vmatprep.subr.mxu0 0.0
          %5849 = vmatpush1.msra.mxu0 0.0
          %5850 = vmatprep.subr.mxu0 0.0
          %5851 = vmatpush1.msra.mxu0 0.0
          %5852 = vmatprep.subr.mxu0 0.0
          %5853 = vmatpush1.msra.mxu0 0.0
          %5854 = vmatprep.subr.mxu0 0.0
          %5855 = vmatpush1.msra.mxu0 0.0
          %5856 = vmatprep.subr.mxu0 0.0
          %5857 = vmatpush1.msra.mxu0 0.0
          %5858 = vmatprep.subr.mxu0 0.0
          %5859 = vmatpush1.msra.mxu0 0.0
          %5860 = vmatprep.subr.mxu0 0.0
          %5861 = vmatpush1.msra.mxu0 0.0
          %5862 = vmatprep.subr.mxu0 0.0
          %5863 = vmatpush1.msra.mxu0 0.0
          %5864 = vmatprep.subr.mxu0 0.0
          %5865 = vmatpush1.msra.mxu0 0.0
          %5866 = vmatprep.subr.mxu0 0.0
          %5867 = vmatpush1.msra.mxu0 0.0
          %5868 = vmatprep.subr.mxu0 0.0
          %5869 = vmatpush1.msra.mxu0 0.0
          %5870 = vmatprep.subr.mxu0 0.0
          %5871 = vmatpush1.msra.mxu0 0.0
          %5872 = vmatprep.subr.mxu0 0.0
          %5873 = vmatpush1.msra.mxu0 0.0
          %5874 = vmatprep.mubr.f32.mxu0 0.0
          %5875 = vmatmul.mubr.f32.gmra.mrb[0].mxu0 %v5805
          %v5876 = vpop.f32.mrb[0].mxu0
          %v5877 = vadd.f32 0.0, %v5876
          %v5878 = vpop.f32.mrb[0].mxu0
          %5879 = vmatprep.mubr.f32.mxu0 0.0
          %5880 = vmatmul.mubr.f32.gmra.mrb[0].mxu0 %v5808
          %v5881 = vpop.f32.mrb[0].mxu0
          %v5882 = vadd.f32 0.0, %v5881
          %v5883 = vpop.f32.mrb[0].mxu0
          %5884 = vdwg.mxu0
          %v5885 = vadd.f32 %v5789, %v5877
          %v5886 = vadd.f32 %v5790, %v5882
          %s5887 = sadd.s32 %s5123, 12
          %s5888 = scalar_lea.vmem [#allocation3], %s5887
          %v5889 = vld [vmem:[%s5888] sm:$0xff]
          %v5890 = vld [vmem:[%s5888 + $0x8] sm:$0x3f]
          %s5891 = scalar_lea.vmem %s5, 512
          %v5892 = vld [vmem:[%s5891] sm:$0xff]
          %v5893 = vld [vmem:[%s5891 + $0x8] sm:$0xff]
          %v5894 = vld [vmem:[%s5891 + $0x10] sm:$0xff]
          %v5895 = vld [vmem:[%s5891 + $0x18] sm:$0xff]
          %v5896 = vld [vmem:[%s5891 + $0x20] sm:$0xff]
          %v5897 = vld [vmem:[%s5891 + $0x28] sm:$0xff]
          %v5898 = vld [vmem:[%s5891 + $0x30] sm:$0xff]
          %v5899 = vld [vmem:[%s5891 + $0x38] sm:$0xff]
          %v5901 = vsel %vm5148, %v5889, 0
          %v5904 = vsel %vm5148, %v5890, 0
          %5906 = vmatprep.subr.mxu0 0.0
          %5907 = vmatpush1.msra.mxu0 %v5892
          %5908 = vmatprep.subr.mxu0 0.0
          %5909 = vmatpush1.msra.mxu0 %v5893
          %5910 = vmatprep.subr.mxu0 0.0
          %5911 = vmatpush1.msra.mxu0 %v5894
          %5912 = vmatprep.subr.mxu0 0.0
          %5913 = vmatpush1.msra.mxu0 %v5895
          %5914 = vmatprep.subr.mxu0 0.0
          %5915 = vmatpush1.msra.mxu0 %v5896
          %5916 = vmatprep.subr.mxu0 0.0
          %5917 = vmatpush1.msra.mxu0 %v5897
          %5918 = vmatprep.subr.mxu0 0.0
          %5919 = vmatpush1.msra.mxu0 %v5898
          %5920 = vmatprep.subr.mxu0 0.0
          %5921 = vmatpush1.msra.mxu0 %v5899
          %5922 = vmatprep.subr.mxu0 0.0
          %5923 = vmatpush1.msra.mxu0 0.0
          %5924 = vmatprep.subr.mxu0 0.0
          %5925 = vmatpush1.msra.mxu0 0.0
          %5926 = vmatprep.subr.mxu0 0.0
          %5927 = vmatpush1.msra.mxu0 0.0
          %5928 = vmatprep.subr.mxu0 0.0
          %5929 = vmatpush1.msra.mxu0 0.0
          %5930 = vmatprep.subr.mxu0 0.0
          %5931 = vmatpush1.msra.mxu0 0.0
          %5932 = vmatprep.subr.mxu0 0.0
          %5933 = vmatpush1.msra.mxu0 0.0
          %5934 = vmatprep.subr.mxu0 0.0
          %5935 = vmatpush1.msra.mxu0 0.0
          %5936 = vmatprep.subr.mxu0 0.0
          %5937 = vmatpush1.msra.mxu0 0.0
          %5938 = vmatprep.subr.mxu0 0.0
          %5939 = vmatpush1.msra.mxu0 0.0
          %5940 = vmatprep.subr.mxu0 0.0
          %5941 = vmatpush1.msra.mxu0 0.0
          %5942 = vmatprep.subr.mxu0 0.0
          %5943 = vmatpush1.msra.mxu0 0.0
          %5944 = vmatprep.subr.mxu0 0.0
          %5945 = vmatpush1.msra.mxu0 0.0
          %5946 = vmatprep.subr.mxu0 0.0
          %5947 = vmatpush1.msra.mxu0 0.0
          %5948 = vmatprep.subr.mxu0 0.0
          %5949 = vmatpush1.msra.mxu0 0.0
          %5950 = vmatprep.subr.mxu0 0.0
          %5951 = vmatpush1.msra.mxu0 0.0
          %5952 = vmatprep.subr.mxu0 0.0
          %5953 = vmatpush1.msra.mxu0 0.0
          %5954 = vmatprep.subr.mxu0 0.0
          %5955 = vmatpush1.msra.mxu0 0.0
          %5956 = vmatprep.subr.mxu0 0.0
          %5957 = vmatpush1.msra.mxu0 0.0
          %5958 = vmatprep.subr.mxu0 0.0
          %5959 = vmatpush1.msra.mxu0 0.0
          %5960 = vmatprep.subr.mxu0 0.0
          %5961 = vmatpush1.msra.mxu0 0.0
          %5962 = vmatprep.subr.mxu0 0.0
          %5963 = vmatpush1.msra.mxu0 0.0
          %5964 = vmatprep.subr.mxu0 0.0
          %5965 = vmatpush1.msra.mxu0 0.0
          %5966 = vmatprep.subr.mxu0 0.0
          %5967 = vmatpush1.msra.mxu0 0.0
          %5968 = vmatprep.subr.mxu0 0.0
          %5969 = vmatpush1.msra.mxu0 0.0
          %5970 = vmatprep.mubr.f32.mxu0 0.0
          %5971 = vmatmul.mubr.f32.gmra.mrb[0].mxu0 %v5901
          %v5972 = vpop.f32.mrb[0].mxu0
          %v5973 = vadd.f32 0.0, %v5972
          %v5974 = vpop.f32.mrb[0].mxu0
          %5975 = vmatprep.mubr.f32.mxu0 0.0
          %5976 = vmatmul.mubr.f32.gmra.mrb[0].mxu0 %v5904
          %v5977 = vpop.f32.mrb[0].mxu0
          %v5978 = vadd.f32 0.0, %v5977
          %v5979 = vpop.f32.mrb[0].mxu0
          %5980 = vdwg.mxu0
          %v5981 = vadd.f32 %v5885, %v5973
          %v5982 = vadd.f32 %v5886, %v5978
          %s5983 = sadd.s32 %s5123, 13
          %s5984 = scalar_lea.vmem [#allocation3], %s5983
          %v5985 = vld [vmem:[%s5984] sm:$0xff]
          %v5986 = vld [vmem:[%s5984 + $0x8] sm:$0x3f]
          %s5987 = scalar_lea.vmem %s5, 576
          %v5988 = vld [vmem:[%s5987] sm:$0xff]
          %v5989 = vld [vmem:[%s5987 + $0x8] sm:$0xff]
          %v5990 = vld [vmem:[%s5987 + $0x10] sm:$0xff]
          %v5991 = vld [vmem:[%s5987 + $0x18] sm:$0xff]
          %v5992 = vld [vmem:[%s5987 + $0x20] sm:$0xff]
          %v5993 = vld [vmem:[%s5987 + $0x28] sm:$0xff]
          %v5994 = vld [vmem:[%s5987 + $0x30] sm:$0xff]
          %v5995 = vld [vmem:[%s5987 + $0x38] sm:$0xff]
          %v5997 = vsel %vm5148, %v5985, 0
          %v6000 = vsel %vm5148, %v5986, 0
          %6002 = vmatprep.subr.mxu0 0.0
          %6003 = vmatpush1.msra.mxu0 %v5988
          %6004 = vmatprep.subr.mxu0 0.0
          %6005 = vmatpush1.msra.mxu0 %v5989
          %6006 = vmatprep.subr.mxu0 0.0
          %6007 = vmatpush1.msra.mxu0 %v5990
          %6008 = vmatprep.subr.mxu0 0.0
          %6009 = vmatpush1.msra.mxu0 %v5991
          %6010 = vmatprep.subr.mxu0 0.0
          %6011 = vmatpush1.msra.mxu0 %v5992
          %6012 = vmatprep.subr.mxu0 0.0
          %6013 = vmatpush1.msra.mxu0 %v5993
          %6014 = vmatprep.subr.mxu0 0.0
          %6015 = vmatpush1.msra.mxu0 %v5994
          %6016 = vmatprep.subr.mxu0 0.0
          %6017 = vmatpush1.msra.mxu0 %v5995
          %6018 = vmatprep.subr.mxu0 0.0
          %6019 = vmatpush1.msra.mxu0 0.0
          %6020 = vmatprep.subr.mxu0 0.0
          %6021 = vmatpush1.msra.mxu0 0.0
          %6022 = vmatprep.subr.mxu0 0.0
          %6023 = vmatpush1.msra.mxu0 0.0
          %6024 = vmatprep.subr.mxu0 0.0
          %6025 = vmatpush1.msra.mxu0 0.0
          %6026 = vmatprep.subr.mxu0 0.0
          %6027 = vmatpush1.msra.mxu0 0.0
          %6028 = vmatprep.subr.mxu0 0.0
          %6029 = vmatpush1.msra.mxu0 0.0
          %6030 = vmatprep.subr.mxu0 0.0
          %6031 = vmatpush1.msra.mxu0 0.0
          %6032 = vmatprep.subr.mxu0 0.0
          %6033 = vmatpush1.msra.mxu0 0.0
          %6034 = vmatprep.subr.mxu0 0.0
          %6035 = vmatpush1.msra.mxu0 0.0
          %6036 = vmatprep.subr.mxu0 0.0
          %6037 = vmatpush1.msra.mxu0 0.0
          %6038 = vmatprep.subr.mxu0 0.0
          %6039 = vmatpush1.msra.mxu0 0.0
          %6040 = vmatprep.subr.mxu0 0.0
          %6041 = vmatpush1.msra.mxu0 0.0
          %6042 = vmatprep.subr.mxu0 0.0
          %6043 = vmatpush1.msra.mxu0 0.0
          %6044 = vmatprep.subr.mxu0 0.0
          %6045 = vmatpush1.msra.mxu0 0.0
          %6046 = vmatprep.subr.mxu0 0.0
          %6047 = vmatpush1.msra.mxu0 0.0
          %6048 = vmatprep.subr.mxu0 0.0
          %6049 = vmatpush1.msra.mxu0 0.0
          %6050 = vmatprep.subr.mxu0 0.0
          %6051 = vmatpush1.msra.mxu0 0.0
          %6052 = vmatprep.subr.mxu0 0.0
          %6053 = vmatpush1.msra.mxu0 0.0
          %6054 = vmatprep.subr.mxu0 0.0
          %6055 = vmatpush1.msra.mxu0 0.0
          %6056 = vmatprep.subr.mxu0 0.0
          %6057 = vmatpush1.msra.mxu0 0.0
          %6058 = vmatprep.subr.mxu0 0.0
          %6059 = vmatpush1.msra.mxu0 0.0
          %6060 = vmatprep.subr.mxu0 0.0
          %6061 = vmatpush1.msra.mxu0 0.0
          %6062 = vmatprep.subr.mxu0 0.0
          %6063 = vmatpush1.msra.mxu0 0.0
          %6064 = vmatprep.subr.mxu0 0.0
          %6065 = vmatpush1.msra.mxu0 0.0
          %6066 = vmatprep.mubr.f32.mxu0 0.0
          %6067 = vmatmul.mubr.f32.gmra.mrb[0].mxu0 %v5997
          %v6068 = vpop.f32.mrb[0].mxu0
          %v6069 = vadd.f32 0.0, %v6068
          %v6070 = vpop.f32.mrb[0].mxu0
          %6071 = vmatprep.mubr.f32.mxu0 0.0
          %6072 = vmatmul.mubr.f32.gmra.mrb[0].mxu0 %v6000
          %v6073 = vpop.f32.mrb[0].mxu0
          %v6074 = vadd.f32 0.0, %v6073
          %v6075 = vpop.f32.mrb[0].mxu0
          %6076 = vdwg.mxu0
          %v6077 = vadd.f32 %v5981, %v6069
          %v6078 = vadd.f32 %v5982, %v6074
          %s6079 = sadd.s32 %s5123, 18
          %s6080 = scalar_lea.vmem [#allocation3], %s6079
          %v6081 = vld [vmem:[%s6080] sm:$0xff]
          %v6082 = vld [vmem:[%s6080 + $0x8] sm:$0x3f]
          %s6083 = scalar_lea.vmem %s5, 640
          %v6084 = vld [vmem:[%s6083] sm:$0xff]
          %v6085 = vld [vmem:[%s6083 + $0x8] sm:$0xff]
          %v6086 = vld [vmem:[%s6083 + $0x10] sm:$0xff]
          %v6087 = vld [vmem:[%s6083 + $0x18] sm:$0xff]
          %v6088 = vld [vmem:[%s6083 + $0x20] sm:$0xff]
          %v6089 = vld [vmem:[%s6083 + $0x28] sm:$0xff]
          %v6090 = vld [vmem:[%s6083 + $0x30] sm:$0xff]
          %v6091 = vld [vmem:[%s6083 + $0x38] sm:$0xff]
          %v6093 = vsel %vm5148, %v6081, 0
          %v6096 = vsel %vm5148, %v6082, 0
          %6098 = vmatprep.subr.mxu0 0.0
          %6099 = vmatpush1.msra.mxu0 %v6084
          %6100 = vmatprep.subr.mxu0 0.0
          %6101 = vmatpush1.msra.mxu0 %v6085
          %6102 = vmatprep.subr.mxu0 0.0
          %6103 = vmatpush1.msra.mxu0 %v6086
          %6104 = vmatprep.subr.mxu0 0.0
          %6105 = vmatpush1.msra.mxu0 %v6087
          %6106 = vmatprep.subr.mxu0 0.0
          %6107 = vmatpush1.msra.mxu0 %v6088
          %6108 = vmatprep.subr.mxu0 0.0
          %6109 = vmatpush1.msra.mxu0 %v6089
          %6110 = vmatprep.subr.mxu0 0.0
          %6111 = vmatpush1.msra.mxu0 %v6090
          %6112 = vmatprep.subr.mxu0 0.0
          %6113 = vmatpush1.msra.mxu0 %v6091
          %6114 = vmatprep.subr.mxu0 0.0
          %6115 = vmatpush1.msra.mxu0 0.0
          %6116 = vmatprep.subr.mxu0 0.0
          %6117 = vmatpush1.msra.mxu0 0.0
          %6118 = vmatprep.subr.mxu0 0.0
          %6119 = vmatpush1.msra.mxu0 0.0
          %6120 = vmatprep.subr.mxu0 0.0
          %6121 = vmatpush1.msra.mxu0 0.0
          %6122 = vmatprep.subr.mxu0 0.0
          %6123 = vmatpush1.msra.mxu0 0.0
          %6124 = vmatprep.subr.mxu0 0.0
          %6125 = vmatpush1.msra.mxu0 0.0
          %6126 = vmatprep.subr.mxu0 0.0
          %6127 = vmatpush1.msra.mxu0 0.0
          %6128 = vmatprep.subr.mxu0 0.0
          %6129 = vmatpush1.msra.mxu0 0.0
          %6130 = vmatprep.subr.mxu0 0.0
          %6131 = vmatpush1.msra.mxu0 0.0
          %6132 = vmatprep.subr.mxu0 0.0
          %6133 = vmatpush1.msra.mxu0 0.0
          %6134 = vmatprep.subr.mxu0 0.0
          %6135 = vmatpush1.msra.mxu0 0.0
          %6136 = vmatprep.subr.mxu0 0.0
          %6137 = vmatpush1.msra.mxu0 0.0
          %6138 = vmatprep.subr.mxu0 0.0
          %6139 = vmatpush1.msra.mxu0 0.0
          %6140 = vmatprep.subr.mxu0 0.0
          %6141 = vmatpush1.msra.mxu0 0.0
          %6142 = vmatprep.subr.mxu0 0.0
          %6143 = vmatpush1.msra.mxu0 0.0
          %6144 = vmatprep.subr.mxu0 0.0
          %6145 = vmatpush1.msra.mxu0 0.0
          %6146 = vmatprep.subr.mxu0 0.0
          %6147 = vmatpush1.msra.mxu0 0.0
          %6148 = vmatprep.subr.mxu0 0.0
          %6149 = vmatpush1.msra.mxu0 0.0
          %6150 = vmatprep.subr.mxu0 0.0
          %6151 = vmatpush1.msra.mxu0 0.0
          %6152 = vmatprep.subr.mxu0 0.0
          %6153 = vmatpush1.msra.mxu0 0.0
          %6154 = vmatprep.subr.mxu0 0.0
          %6155 = vmatpush1.msra.mxu0 0.0
          %6156 = vmatprep.subr.mxu0 0.0
          %6157 = vmatpush1.msra.mxu0 0.0
          %6158 = vmatprep.subr.mxu0 0.0
          %6159 = vmatpush1.msra.mxu0 0.0
          %6160 = vmatprep.subr.mxu0 0.0
          %6161 = vmatpush1.msra.mxu0 0.0
          %6162 = vmatprep.mubr.f32.mxu0 0.0
          %6163 = vmatmul.mubr.f32.gmra.mrb[0].mxu0 %v6093
          %v6164 = vpop.f32.mrb[0].mxu0
          %v6165 = vadd.f32 0.0, %v6164
          %v6166 = vpop.f32.mrb[0].mxu0
          %6167 = vmatprep.mubr.f32.mxu0 0.0
          %6168 = vmatmul.mubr.f32.gmra.mrb[0].mxu0 %v6096
          %v6169 = vpop.f32.mrb[0].mxu0
          %v6170 = vadd.f32 0.0, %v6169
          %v6171 = vpop.f32.mrb[0].mxu0
          %6172 = vdwg.mxu0
          %v6173 = vadd.f32 %v6077, %v6165
          %v6174 = vadd.f32 %v6078, %v6170
          %s6175 = sadd.s32 %s5123, 19
          %s6176 = scalar_lea.vmem [#allocation3], %s6175
          %v6177 = vld [vmem:[%s6176] sm:$0xff]
          %v6178 = vld [vmem:[%s6176 + $0x8] sm:$0x3f]
          %s6179 = scalar_lea.vmem %s5, 704
          %v6180 = vld [vmem:[%s6179] sm:$0xff]
          %v6181 = vld [vmem:[%s6179 + $0x8] sm:$0xff]
          %v6182 = vld [vmem:[%s6179 + $0x10] sm:$0xff]
          %v6183 = vld [vmem:[%s6179 + $0x18] sm:$0xff]
          %v6184 = vld [vmem:[%s6179 + $0x20] sm:$0xff]
          %v6185 = vld [vmem:[%s6179 + $0x28] sm:$0xff]
          %v6186 = vld [vmem:[%s6179 + $0x30] sm:$0xff]
          %v6187 = vld [vmem:[%s6179 + $0x38] sm:$0xff]
          %v6189 = vsel %vm5148, %v6177, 0
          %v6192 = vsel %vm5148, %v6178, 0
          %6194 = vmatprep.subr.mxu0 0.0
          %6195 = vmatpush1.msra.mxu0 %v6180
          %6196 = vmatprep.subr.mxu0 0.0
          %6197 = vmatpush1.msra.mxu0 %v6181
          %6198 = vmatprep.subr.mxu0 0.0
          %6199 = vmatpush1.msra.mxu0 %v6182
          %6200 = vmatprep.subr.mxu0 0.0
          %6201 = vmatpush1.msra.mxu0 %v6183
          %6202 = vmatprep.subr.mxu0 0.0
          %6203 = vmatpush1.msra.mxu0 %v6184
          %6204 = vmatprep.subr.mxu0 0.0
          %6205 = vmatpush1.msra.mxu0 %v6185
          %6206 = vmatprep.subr.mxu0 0.0
          %6207 = vmatpush1.msra.mxu0 %v6186
          %6208 = vmatprep.subr.mxu0 0.0
          %6209 = vmatpush1.msra.mxu0 %v6187
          %6210 = vmatprep.subr.mxu0 0.0
          %6211 = vmatpush1.msra.mxu0 0.0
          %6212 = vmatprep.subr.mxu0 0.0
          %6213 = vmatpush1.msra.mxu0 0.0
          %6214 = vmatprep.subr.mxu0 0.0
          %6215 = vmatpush1.msra.mxu0 0.0
          %6216 = vmatprep.subr.mxu0 0.0
          %6217 = vmatpush1.msra.mxu0 0.0
          %6218 = vmatprep.subr.mxu0 0.0
          %6219 = vmatpush1.msra.mxu0 0.0
          %6220 = vmatprep.subr.mxu0 0.0
          %6221 = vmatpush1.msra.mxu0 0.0
          %6222 = vmatprep.subr.mxu0 0.0
          %6223 = vmatpush1.msra.mxu0 0.0
          %6224 = vmatprep.subr.mxu0 0.0
          %6225 = vmatpush1.msra.mxu0 0.0
          %6226 = vmatprep.subr.mxu0 0.0
          %6227 = vmatpush1.msra.mxu0 0.0
          %6228 = vmatprep.subr.mxu0 0.0
          %6229 = vmatpush1.msra.mxu0 0.0
          %6230 = vmatprep.subr.mxu0 0.0
          %6231 = vmatpush1.msra.mxu0 0.0
          %6232 = vmatprep.subr.mxu0 0.0
          %6233 = vmatpush1.msra.mxu0 0.0
          %6234 = vmatprep.subr.mxu0 0.0
          %6235 = vmatpush1.msra.mxu0 0.0
          %6236 = vmatprep.subr.mxu0 0.0
          %6237 = vmatpush1.msra.mxu0 0.0
          %6238 = vmatprep.subr.mxu0 0.0
          %6239 = vmatpush1.msra.mxu0 0.0
          %6240 = vmatprep.subr.mxu0 0.0
          %6241 = vmatpush1.msra.mxu0 0.0
          %6242 = vmatprep.subr.mxu0 0.0
          %6243 = vmatpush1.msra.mxu0 0.0
          %6244 = vmatprep.subr.mxu0 0.0
          %6245 = vmatpush1.msra.mxu0 0.0
          %6246 = vmatprep.subr.mxu0 0.0
          %6247 = vmatpush1.msra.mxu0 0.0
          %6248 = vmatprep.subr.mxu0 0.0
          %6249 = vmatpush1.msra.mxu0 0.0
          %6250 = vmatprep.subr.mxu0 0.0
          %6251 = vmatpush1.msra.mxu0 0.0
          %6252 = vmatprep.subr.mxu0 0.0
          %6253 = vmatpush1.msra.mxu0 0.0
          %6254 = vmatprep.subr.mxu0 0.0
          %6255 = vmatpush1.msra.mxu0 0.0
          %6256 = vmatprep.subr.mxu0 0.0
          %6257 = vmatpush1.msra.mxu0 0.0
          %6258 = vmatprep.mubr.f32.mxu0 0.0
          %6259 = vmatmul.mubr.f32.gmra.mrb[0].mxu0 %v6189
          %v6260 = vpop.f32.mrb[0].mxu0
          %v6261 = vadd.f32 0.0, %v6260
          %v6262 = vpop.f32.mrb[0].mxu0
          %6263 = vmatprep.mubr.f32.mxu0 0.0
          %6264 = vmatmul.mubr.f32.gmra.mrb[0].mxu0 %v6192
          %v6265 = vpop.f32.mrb[0].mxu0
          %v6266 = vadd.f32 0.0, %v6265
          %v6267 = vpop.f32.mrb[0].mxu0
          %6268 = vdwg.mxu0
          %v6269 = vadd.f32 %v6173, %v6261
          %v6270 = vadd.f32 %v6174, %v6266
          %s6271 = sadd.s32 %s5123, 20
          %s6272 = scalar_lea.vmem [#allocation3], %s6271
          %v6273 = vld [vmem:[%s6272] sm:$0xff]
          %v6274 = vld [vmem:[%s6272 + $0x8] sm:$0x3f]
          %s6275 = scalar_lea.vmem %s5, 768
          %v6276 = vld [vmem:[%s6275] sm:$0xff]
          %v6277 = vld [vmem:[%s6275 + $0x8] sm:$0xff]
          %v6278 = vld [vmem:[%s6275 + $0x10] sm:$0xff]
          %v6279 = vld [vmem:[%s6275 + $0x18] sm:$0xff]
          %v6280 = vld [vmem:[%s6275 + $0x20] sm:$0xff]
          %v6281 = vld [vmem:[%s6275 + $0x28] sm:$0xff]
          %v6282 = vld [vmem:[%s6275 + $0x30] sm:$0xff]
          %v6283 = vld [vmem:[%s6275 + $0x38] sm:$0xff]
          %v6285 = vsel %vm5148, %v6273, 0
          %v6288 = vsel %vm5148, %v6274, 0
          %6290 = vmatprep.subr.mxu0 0.0
          %6291 = vmatpush1.msra.mxu0 %v6276
          %6292 = vmatprep.subr.mxu0 0.0
          %6293 = vmatpush1.msra.mxu0 %v6277
          %6294 = vmatprep.subr.mxu0 0.0
          %6295 = vmatpush1.msra.mxu0 %v6278
          %6296 = vmatprep.subr.mxu0 0.0
          %6297 = vmatpush1.msra.mxu0 %v6279
          %6298 = vmatprep.subr.mxu0 0.0
          %6299 = vmatpush1.msra.mxu0 %v6280
          %6300 = vmatprep.subr.mxu0 0.0
          %6301 = vmatpush1.msra.mxu0 %v6281
          %6302 = vmatprep.subr.mxu0 0.0
          %6303 = vmatpush1.msra.mxu0 %v6282
          %6304 = vmatprep.subr.mxu0 0.0
          %6305 = vmatpush1.msra.mxu0 %v6283
          %6306 = vmatprep.subr.mxu0 0.0
          %6307 = vmatpush1.msra.mxu0 0.0
          %6308 = vmatprep.subr.mxu0 0.0
          %6309 = vmatpush1.msra.mxu0 0.0
          %6310 = vmatprep.subr.mxu0 0.0
          %6311 = vmatpush1.msra.mxu0 0.0
          %6312 = vmatprep.subr.mxu0 0.0
          %6313 = vmatpush1.msra.mxu0 0.0
          %6314 = vmatprep.subr.mxu0 0.0
          %6315 = vmatpush1.msra.mxu0 0.0
          %6316 = vmatprep.subr.mxu0 0.0
          %6317 = vmatpush1.msra.mxu0 0.0
          %6318 = vmatprep.subr.mxu0 0.0
          %6319 = vmatpush1.msra.mxu0 0.0
          %6320 = vmatprep.subr.mxu0 0.0
          %6321 = vmatpush1.msra.mxu0 0.0
          %6322 = vmatprep.subr.mxu0 0.0
          %6323 = vmatpush1.msra.mxu0 0.0
          %6324 = vmatprep.subr.mxu0 0.0
          %6325 = vmatpush1.msra.mxu0 0.0
          %6326 = vmatprep.subr.mxu0 0.0
          %6327 = vmatpush1.msra.mxu0 0.0
          %6328 = vmatprep.subr.mxu0 0.0
          %6329 = vmatpush1.msra.mxu0 0.0
          %6330 = vmatprep.subr.mxu0 0.0
          %6331 = vmatpush1.msra.mxu0 0.0
          %6332 = vmatprep.subr.mxu0 0.0
          %6333 = vmatpush1.msra.mxu0 0.0
          %6334 = vmatprep.subr.mxu0 0.0
          %6335 = vmatpush1.msra.mxu0 0.0
          %6336 = vmatprep.subr.mxu0 0.0
          %6337 = vmatpush1.msra.mxu0 0.0
          %6338 = vmatprep.subr.mxu0 0.0
          %6339 = vmatpush1.msra.mxu0 0.0
          %6340 = vmatprep.subr.mxu0 0.0
          %6341 = vmatpush1.msra.mxu0 0.0
          %6342 = vmatprep.subr.mxu0 0.0
          %6343 = vmatpush1.msra.mxu0 0.0
          %6344 = vmatprep.subr.mxu0 0.0
          %6345 = vmatpush1.msra.mxu0 0.0
          %6346 = vmatprep.subr.mxu0 0.0
          %6347 = vmatpush1.msra.mxu0 0.0
          %6348 = vmatprep.subr.mxu0 0.0
          %6349 = vmatpush1.msra.mxu0 0.0
          %6350 = vmatprep.subr.mxu0 0.0
          %6351 = vmatpush1.msra.mxu0 0.0
          %6352 = vmatprep.subr.mxu0 0.0
          %6353 = vmatpush1.msra.mxu0 0.0
          %6354 = vmatprep.mubr.f32.mxu0 0.0
          %6355 = vmatmul.mubr.f32.gmra.mrb[0].mxu0 %v6285
          %v6356 = vpop.f32.mrb[0].mxu0
          %v6357 = vadd.f32 0.0, %v6356
          %v6358 = vpop.f32.mrb[0].mxu0
          %6359 = vmatprep.mubr.f32.mxu0 0.0
          %6360 = vmatmul.mubr.f32.gmra.mrb[0].mxu0 %v6288
          %v6361 = vpop.f32.mrb[0].mxu0
          %v6362 = vadd.f32 0.0, %v6361
          %v6363 = vpop.f32.mrb[0].mxu0
          %6364 = vdwg.mxu0
          %v6365 = vadd.f32 %v6269, %v6357
          %v6366 = vadd.f32 %v6270, %v6362
          %s6367 = sadd.s32 %s5123, 21
          %s6368 = scalar_lea.vmem [#allocation3], %s6367
          %v6369 = vld [vmem:[%s6368] sm:$0xff]
          %v6370 = vld [vmem:[%s6368 + $0x8] sm:$0x3f]
          %s6371 = scalar_lea.vmem %s5, 832
          %v6372 = vld [vmem:[%s6371] sm:$0xff]
          %v6373 = vld [vmem:[%s6371 + $0x8] sm:$0xff]
          %v6374 = vld [vmem:[%s6371 + $0x10] sm:$0xff]
          %v6375 = vld [vmem:[%s6371 + $0x18] sm:$0xff]
          %v6376 = vld [vmem:[%s6371 + $0x20] sm:$0xff]
          %v6377 = vld [vmem:[%s6371 + $0x28] sm:$0xff]
          %v6378 = vld [vmem:[%s6371 + $0x30] sm:$0xff]
          %v6379 = vld [vmem:[%s6371 + $0x38] sm:$0xff]
          %v6381 = vsel %vm5148, %v6369, 0
          %v6384 = vsel %vm5148, %v6370, 0
          %6386 = vmatprep.subr.mxu0 0.0
          %6387 = vmatpush1.msra.mxu0 %v6372
          %6388 = vmatprep.subr.mxu0 0.0
          %6389 = vmatpush1.msra.mxu0 %v6373
          %6390 = vmatprep.subr.mxu0 0.0
          %6391 = vmatpush1.msra.mxu0 %v6374
          %6392 = vmatprep.subr.mxu0 0.0
          %6393 = vmatpush1.msra.mxu0 %v6375
          %6394 = vmatprep.subr.mxu0 0.0
          %6395 = vmatpush1.msra.mxu0 %v6376
          %6396 = vmatprep.subr.mxu0 0.0
          %6397 = vmatpush1.msra.mxu0 %v6377
          %6398 = vmatprep.subr.mxu0 0.0
          %6399 = vmatpush1.msra.mxu0 %v6378
          %6400 = vmatprep.subr.mxu0 0.0
          %6401 = vmatpush1.msra.mxu0 %v6379
          %6402 = vmatprep.subr.mxu0 0.0
          %6403 = vmatpush1.msra.mxu0 0.0
          %6404 = vmatprep.subr.mxu0 0.0
          %6405 = vmatpush1.msra.mxu0 0.0
          %6406 = vmatprep.subr.mxu0 0.0
          %6407 = vmatpush1.msra.mxu0 0.0
          %6408 = vmatprep.subr.mxu0 0.0
          %6409 = vmatpush1.msra.mxu0 0.0
          %6410 = vmatprep.subr.mxu0 0.0
          %6411 = vmatpush1.msra.mxu0 0.0
          %6412 = vmatprep.subr.mxu0 0.0
          %6413 = vmatpush1.msra.mxu0 0.0
          %6414 = vmatprep.subr.mxu0 0.0
          %6415 = vmatpush1.msra.mxu0 0.0
          %6416 = vmatprep.subr.mxu0 0.0
          %6417 = vmatpush1.msra.mxu0 0.0
          %6418 = vmatprep.subr.mxu0 0.0
          %6419 = vmatpush1.msra.mxu0 0.0
          %6420 = vmatprep.subr.mxu0 0.0
          %6421 = vmatpush1.msra.mxu0 0.0
          %6422 = vmatprep.subr.mxu0 0.0
          %6423 = vmatpush1.msra.mxu0 0.0
          %6424 = vmatprep.subr.mxu0 0.0
          %6425 = vmatpush1.msra.mxu0 0.0
          %6426 = vmatprep.subr.mxu0 0.0
          %6427 = vmatpush1.msra.mxu0 0.0
          %6428 = vmatprep.subr.mxu0 0.0
          %6429 = vmatpush1.msra.mxu0 0.0
          %6430 = vmatprep.subr.mxu0 0.0
          %6431 = vmatpush1.msra.mxu0 0.0
          %6432 = vmatprep.subr.mxu0 0.0
          %6433 = vmatpush1.msra.mxu0 0.0
          %6434 = vmatprep.subr.mxu0 0.0
          %6435 = vmatpush1.msra.mxu0 0.0
          %6436 = vmatprep.subr.mxu0 0.0
          %6437 = vmatpush1.msra.mxu0 0.0
          %6438 = vmatprep.subr.mxu0 0.0
          %6439 = vmatpush1.msra.mxu0 0.0
          %6440 = vmatprep.subr.mxu0 0.0
          %6441 = vmatpush1.msra.mxu0 0.0
          %6442 = vmatprep.subr.mxu0 0.0
          %6443 = vmatpush1.msra.mxu0 0.0
          %6444 = vmatprep.subr.mxu0 0.0
          %6445 = vmatpush1.msra.mxu0 0.0
          %6446 = vmatprep.subr.mxu0 0.0
          %6447 = vmatpush1.msra.mxu0 0.0
          %6448 = vmatprep.subr.mxu0 0.0
          %6449 = vmatpush1.msra.mxu0 0.0
          %6450 = vmatprep.mubr.f32.mxu0 0.0
          %6451 = vmatmul.mubr.f32.gmra.mrb[0].mxu0 %v6381
          %v6452 = vpop.f32.mrb[0].mxu0
          %v6453 = vadd.f32 0.0, %v6452
          %v6454 = vpop.f32.mrb[0].mxu0
          %6455 = vmatprep.mubr.f32.mxu0 0.0
          %6456 = vmatmul.mubr.f32.gmra.mrb[0].mxu0 %v6384
          %v6457 = vpop.f32.mrb[0].mxu0
          %v6458 = vadd.f32 0.0, %v6457
          %v6459 = vpop.f32.mrb[0].mxu0
          %6460 = vdwg.mxu0
          %v6461 = vadd.f32 %v6365, %v6453
          %v6462 = vadd.f32 %v6366, %v6458
          %s6463 = sadd.s32 %s5123, 22
          %s6464 = scalar_lea.vmem [#allocation3], %s6463
          %v6465 = vld [vmem:[%s6464] sm:$0xff]
          %v6466 = vld [vmem:[%s6464 + $0x8] sm:$0x3f]
          %s6467 = scalar_lea.vmem %s5, 896
          %v6468 = vld [vmem:[%s6467] sm:$0xff]
          %v6469 = vld [vmem:[%s6467 + $0x8] sm:$0xff]
          %v6470 = vld [vmem:[%s6467 + $0x10] sm:$0xff]
          %v6471 = vld [vmem:[%s6467 + $0x18] sm:$0xff]
          %v6472 = vld [vmem:[%s6467 + $0x20] sm:$0xff]
          %v6473 = vld [vmem:[%s6467 + $0x28] sm:$0xff]
          %v6474 = vld [vmem:[%s6467 + $0x30] sm:$0xff]
          %v6475 = vld [vmem:[%s6467 + $0x38] sm:$0xff]
          %v6477 = vsel %vm5148, %v6465, 0
          %v6480 = vsel %vm5148, %v6466, 0
          %6482 = vmatprep.subr.mxu0 0.0
          %6483 = vmatpush1.msra.mxu0 %v6468
          %6484 = vmatprep.subr.mxu0 0.0
          %6485 = vmatpush1.msra.mxu0 %v6469
          %6486 = vmatprep.subr.mxu0 0.0
          %6487 = vmatpush1.msra.mxu0 %v6470
          %6488 = vmatprep.subr.mxu0 0.0
          %6489 = vmatpush1.msra.mxu0 %v6471
          %6490 = vmatprep.subr.mxu0 0.0
          %6491 = vmatpush1.msra.mxu0 %v6472
          %6492 = vmatprep.subr.mxu0 0.0
          %6493 = vmatpush1.msra.mxu0 %v6473
          %6494 = vmatprep.subr.mxu0 0.0
          %6495 = vmatpush1.msra.mxu0 %v6474
          %6496 = vmatprep.subr.mxu0 0.0
          %6497 = vmatpush1.msra.mxu0 %v6475
          %6498 = vmatprep.subr.mxu0 0.0
          %6499 = vmatpush1.msra.mxu0 0.0
          %6500 = vmatprep.subr.mxu0 0.0
          %6501 = vmatpush1.msra.mxu0 0.0
          %6502 = vmatprep.subr.mxu0 0.0
          %6503 = vmatpush1.msra.mxu0 0.0
          %6504 = vmatprep.subr.mxu0 0.0
          %6505 = vmatpush1.msra.mxu0 0.0
          %6506 = vmatprep.subr.mxu0 0.0
          %6507 = vmatpush1.msra.mxu0 0.0
          %6508 = vmatprep.subr.mxu0 0.0
          %6509 = vmatpush1.msra.mxu0 0.0
          %6510 = vmatprep.subr.mxu0 0.0
          %6511 = vmatpush1.msra.mxu0 0.0
          %6512 = vmatprep.subr.mxu0 0.0
          %6513 = vmatpush1.msra.mxu0 0.0
          %6514 = vmatprep.subr.mxu0 0.0
          %6515 = vmatpush1.msra.mxu0 0.0
          %6516 = vmatprep.subr.mxu0 0.0
          %6517 = vmatpush1.msra.mxu0 0.0
          %6518 = vmatprep.subr.mxu0 0.0
          %6519 = vmatpush1.msra.mxu0 0.0
          %6520 = vmatprep.subr.mxu0 0.0
          %6521 = vmatpush1.msra.mxu0 0.0
          %6522 = vmatprep.subr.mxu0 0.0
          %6523 = vmatpush1.msra.mxu0 0.0
          %6524 = vmatprep.subr.mxu0 0.0
          %6525 = vmatpush1.msra.mxu0 0.0
          %6526 = vmatprep.subr.mxu0 0.0
          %6527 = vmatpush1.msra.mxu0 0.0
          %6528 = vmatprep.subr.mxu0 0.0
          %6529 = vmatpush1.msra.mxu0 0.0
          %6530 = vmatprep.subr.mxu0 0.0
          %6531 = vmatpush1.msra.mxu0 0.0
          %6532 = vmatprep.subr.mxu0 0.0
          %6533 = vmatpush1.msra.mxu0 0.0
          %6534 = vmatprep.subr.mxu0 0.0
          %6535 = vmatpush1.msra.mxu0 0.0
          %6536 = vmatprep.subr.mxu0 0.0
          %6537 = vmatpush1.msra.mxu0 0.0
          %6538 = vmatprep.subr.mxu0 0.0
          %6539 = vmatpush1.msra.mxu0 0.0
          %6540 = vmatprep.subr.mxu0 0.0
          %6541 = vmatpush1.msra.mxu0 0.0
          %6542 = vmatprep.subr.mxu0 0.0
          %6543 = vmatpush1.msra.mxu0 0.0
          %6544 = vmatprep.subr.mxu0 0.0
          %6545 = vmatpush1.msra.mxu0 0.0
          %6546 = vmatprep.mubr.f32.mxu0 0.0
          %6547 = vmatmul.mubr.f32.gmra.mrb[0].mxu0 %v6477
          %v6548 = vpop.f32.mrb[0].mxu0
          %v6549 = vadd.f32 0.0, %v6548
          %v6550 = vpop.f32.mrb[0].mxu0
          %6551 = vmatprep.mubr.f32.mxu0 0.0
          %6552 = vmatmul.mubr.f32.gmra.mrb[0].mxu0 %v6480
          %v6553 = vpop.f32.mrb[0].mxu0
          %v6554 = vadd.f32 0.0, %v6553
          %v6555 = vpop.f32.mrb[0].mxu0
          %6556 = vdwg.mxu0
          %v6557 = vadd.f32 %v6461, %v6549
          %v6558 = vadd.f32 %v6462, %v6554
          %s6559 = sadd.s32 %s5123, 27
          %s6560 = scalar_lea.vmem [#allocation3], %s6559
          %v6561 = vld [vmem:[%s6560] sm:$0xff]
          %v6562 = vld [vmem:[%s6560 + $0x8] sm:$0x3f]
          %s6563 = scalar_lea.vmem %s5, 960
          %v6564 = vld [vmem:[%s6563] sm:$0xff]
          %v6565 = vld [vmem:[%s6563 + $0x8] sm:$0xff]
          %v6566 = vld [vmem:[%s6563 + $0x10] sm:$0xff]
          %v6567 = vld [vmem:[%s6563 + $0x18] sm:$0xff]
          %v6568 = vld [vmem:[%s6563 + $0x20] sm:$0xff]
          %v6569 = vld [vmem:[%s6563 + $0x28] sm:$0xff]
          %v6570 = vld [vmem:[%s6563 + $0x30] sm:$0xff]
          %v6571 = vld [vmem:[%s6563 + $0x38] sm:$0xff]
          %v6573 = vsel %vm5148, %v6561, 0
          %v6576 = vsel %vm5148, %v6562, 0
          %6578 = vmatprep.subr.mxu0 0.0
          %6579 = vmatpush1.msra.mxu0 %v6564
          %6580 = vmatprep.subr.mxu0 0.0
          %6581 = vmatpush1.msra.mxu0 %v6565
          %6582 = vmatprep.subr.mxu0 0.0
          %6583 = vmatpush1.msra.mxu0 %v6566
          %6584 = vmatprep.subr.mxu0 0.0
          %6585 = vmatpush1.msra.mxu0 %v6567
          %6586 = vmatprep.subr.mxu0 0.0
          %6587 = vmatpush1.msra.mxu0 %v6568
          %6588 = vmatprep.subr.mxu0 0.0
          %6589 = vmatpush1.msra.mxu0 %v6569
          %6590 = vmatprep.subr.mxu0 0.0
          %6591 = vmatpush1.msra.mxu0 %v6570
          %6592 = vmatprep.subr.mxu0 0.0
          %6593 = vmatpush1.msra.mxu0 %v6571
          %6594 = vmatprep.subr.mxu0 0.0
          %6595 = vmatpush1.msra.mxu0 0.0
          %6596 = vmatprep.subr.mxu0 0.0
          %6597 = vmatpush1.msra.mxu0 0.0
          %6598 = vmatprep.subr.mxu0 0.0
          %6599 = vmatpush1.msra.mxu0 0.0
          %6600 = vmatprep.subr.mxu0 0.0
          %6601 = vmatpush1.msra.mxu0 0.0
          %6602 = vmatprep.subr.mxu0 0.0
          %6603 = vmatpush1.msra.mxu0 0.0
          %6604 = vmatprep.subr.mxu0 0.0
          %6605 = vmatpush1.msra.mxu0 0.0
          %6606 = vmatprep.subr.mxu0 0.0
          %6607 = vmatpush1.msra.mxu0 0.0
          %6608 = vmatprep.subr.mxu0 0.0
          %6609 = vmatpush1.msra.mxu0 0.0
          %6610 = vmatprep.subr.mxu0 0.0
          %6611 = vmatpush1.msra.mxu0 0.0
          %6612 = vmatprep.subr.mxu0 0.0
          %6613 = vmatpush1.msra.mxu0 0.0
          %6614 = vmatprep.subr.mxu0 0.0
          %6615 = vmatpush1.msra.mxu0 0.0
          %6616 = vmatprep.subr.mxu0 0.0
          %6617 = vmatpush1.msra.mxu0 0.0
          %6618 = vmatprep.subr.mxu0 0.0
          %6619 = vmatpush1.msra.mxu0 0.0
          %6620 = vmatprep.subr.mxu0 0.0
          %6621 = vmatpush1.msra.mxu0 0.0
          %6622 = vmatprep.subr.mxu0 0.0
          %6623 = vmatpush1.msra.mxu0 0.0
          %6624 = vmatprep.subr.mxu0 0.0
          %6625 = vmatpush1.msra.mxu0 0.0
          %6626 = vmatprep.subr.mxu0 0.0
          %6627 = vmatpush1.msra.mxu0 0.0
          %6628 = vmatprep.subr.mxu0 0.0
          %6629 = vmatpush1.msra.mxu0 0.0
          %6630 = vmatprep.subr.mxu0 0.0
          %6631 = vmatpush1.msra.mxu0 0.0
          %6632 = vmatprep.subr.mxu0 0.0
          %6633 = vmatpush1.msra.mxu0 0.0
          %6634 = vmatprep.subr.mxu0 0.0
          %6635 = vmatpush1.msra.mxu0 0.0
          %6636 = vmatprep.subr.mxu0 0.0
          %6637 = vmatpush1.msra.mxu0 0.0
          %6638 = vmatprep.subr.mxu0 0.0
          %6639 = vmatpush1.msra.mxu0 0.0
          %6640 = vmatprep.subr.mxu0 0.0
          %6641 = vmatpush1.msra.mxu0 0.0
          %6642 = vmatprep.mubr.f32.mxu0 0.0
          %6643 = vmatmul.mubr.f32.gmra.mrb[0].mxu0 %v6573
          %v6644 = vpop.f32.mrb[0].mxu0
          %v6645 = vadd.f32 0.0, %v6644
          %v6646 = vpop.f32.mrb[0].mxu0
          %6647 = vmatprep.mubr.f32.mxu0 0.0
          %6648 = vmatmul.mubr.f32.gmra.mrb[0].mxu0 %v6576
          %v6649 = vpop.f32.mrb[0].mxu0
          %v6650 = vadd.f32 0.0, %v6649
          %v6651 = vpop.f32.mrb[0].mxu0
          %6652 = vdwg.mxu0
          %v6653 = vadd.f32 %v6557, %v6645
          %v6654 = vadd.f32 %v6558, %v6650
          %s6655 = sadd.s32 %s5123, 28
          %s6656 = scalar_lea.vmem [#allocation3], %s6655
          %v6657 = vld [vmem:[%s6656] sm:$0xff]
          %v6658 = vld [vmem:[%s6656 + $0x8] sm:$0x3f]
          %s6659 = scalar_lea.vmem %s5, 1024
          %v6660 = vld [vmem:[%s6659] sm:$0xff]
          %v6661 = vld [vmem:[%s6659 + $0x8] sm:$0xff]
          %v6662 = vld [vmem:[%s6659 + $0x10] sm:$0xff]
          %v6663 = vld [vmem:[%s6659 + $0x18] sm:$0xff]
          %v6664 = vld [vmem:[%s6659 + $0x20] sm:$0xff]
          %v6665 = vld [vmem:[%s6659 + $0x28] sm:$0xff]
          %v6666 = vld [vmem:[%s6659 + $0x30] sm:$0xff]
          %v6667 = vld [vmem:[%s6659 + $0x38] sm:$0xff]
          %v6669 = vsel %vm5148, %v6657, 0
          %v6672 = vsel %vm5148, %v6658, 0
          %6674 = vmatprep.subr.mxu0 0.0
          %6675 = vmatpush1.msra.mxu0 %v6660
          %6676 = vmatprep.subr.mxu0 0.0
          %6677 = vmatpush1.msra.mxu0 %v6661
          %6678 = vmatprep.subr.mxu0 0.0
          %6679 = vmatpush1.msra.mxu0 %v6662
          %6680 = vmatprep.subr.mxu0 0.0
          %6681 = vmatpush1.msra.mxu0 %v6663
          %6682 = vmatprep.subr.mxu0 0.0
          %6683 = vmatpush1.msra.mxu0 %v6664
          %6684 = vmatprep.subr.mxu0 0.0
          %6685 = vmatpush1.msra.mxu0 %v6665
          %6686 = vmatprep.subr.mxu0 0.0
          %6687 = vmatpush1.msra.mxu0 %v6666
          %6688 = vmatprep.subr.mxu0 0.0
          %6689 = vmatpush1.msra.mxu0 %v6667
          %6690 = vmatprep.subr.mxu0 0.0
          %6691 = vmatpush1.msra.mxu0 0.0
          %6692 = vmatprep.subr.mxu0 0.0
          %6693 = vmatpush1.msra.mxu0 0.0
          %6694 = vmatprep.subr.mxu0 0.0
          %6695 = vmatpush1.msra.mxu0 0.0
          %6696 = vmatprep.subr.mxu0 0.0
          %6697 = vmatpush1.msra.mxu0 0.0
          %6698 = vmatprep.subr.mxu0 0.0
          %6699 = vmatpush1.msra.mxu0 0.0
          %6700 = vmatprep.subr.mxu0 0.0
          %6701 = vmatpush1.msra.mxu0 0.0
          %6702 = vmatprep.subr.mxu0 0.0
          %6703 = vmatpush1.msra.mxu0 0.0
          %6704 = vmatprep.subr.mxu0 0.0
          %6705 = vmatpush1.msra.mxu0 0.0
          %6706 = vmatprep.subr.mxu0 0.0
          %6707 = vmatpush1.msra.mxu0 0.0
          %6708 = vmatprep.subr.mxu0 0.0
          %6709 = vmatpush1.msra.mxu0 0.0
          %6710 = vmatprep.subr.mxu0 0.0
          %6711 = vmatpush1.msra.mxu0 0.0
          %6712 = vmatprep.subr.mxu0 0.0
          %6713 = vmatpush1.msra.mxu0 0.0
          %6714 = vmatprep.subr.mxu0 0.0
          %6715 = vmatpush1.msra.mxu0 0.0
          %6716 = vmatprep.subr.mxu0 0.0
          %6717 = vmatpush1.msra.mxu0 0.0
          %6718 = vmatprep.subr.mxu0 0.0
          %6719 = vmatpush1.msra.mxu0 0.0
          %6720 = vmatprep.subr.mxu0 0.0
          %6721 = vmatpush1.msra.mxu0 0.0
          %6722 = vmatprep.subr.mxu0 0.0
          %6723 = vmatpush1.msra.mxu0 0.0
          %6724 = vmatprep.subr.mxu0 0.0
          %6725 = vmatpush1.msra.mxu0 0.0
          %6726 = vmatprep.subr.mxu0 0.0
          %6727 = vmatpush1.msra.mxu0 0.0
          %6728 = vmatprep.subr.mxu0 0.0
          %6729 = vmatpush1.msra.mxu0 0.0
          %6730 = vmatprep.subr.mxu0 0.0
          %6731 = vmatpush1.msra.mxu0 0.0
          %6732 = vmatprep.subr.mxu0 0.0
          %6733 = vmatpush1.msra.mxu0 0.0
          %6734 = vmatprep.subr.mxu0 0.0
          %6735 = vmatpush1.msra.mxu0 0.0
          %6736 = vmatprep.subr.mxu0 0.0
          %6737 = vmatpush1.msra.mxu0 0.0
          %6738 = vmatprep.mubr.f32.mxu0 0.0
          %6739 = vmatmul.mubr.f32.gmra.mrb[0].mxu0 %v6669
          %v6740 = vpop.f32.mrb[0].mxu0
          %v6741 = vadd.f32 0.0, %v6740
          %v6742 = vpop.f32.mrb[0].mxu0
          %6743 = vmatprep.mubr.f32.mxu0 0.0
          %6744 = vmatmul.mubr.f32.gmra.mrb[0].mxu0 %v6672
          %v6745 = vpop.f32.mrb[0].mxu0
          %v6746 = vadd.f32 0.0, %v6745
          %v6747 = vpop.f32.mrb[0].mxu0
          %6748 = vdwg.mxu0
          %v6749 = vadd.f32 %v6653, %v6741
          %v6750 = vadd.f32 %v6654, %v6746
          %s6751 = sadd.s32 %s5123, 29
          %s6752 = scalar_lea.vmem [#allocation3], %s6751
          %v6753 = vld [vmem:[%s6752] sm:$0xff]
          %v6754 = vld [vmem:[%s6752 + $0x8] sm:$0x3f]
          %s6755 = scalar_lea.vmem %s5, 1088
          %v6756 = vld [vmem:[%s6755] sm:$0xff]
          %v6757 = vld [vmem:[%s6755 + $0x8] sm:$0xff]
          %v6758 = vld [vmem:[%s6755 + $0x10] sm:$0xff]
          %v6759 = vld [vmem:[%s6755 + $0x18] sm:$0xff]
          %v6760 = vld [vmem:[%s6755 + $0x20] sm:$0xff]
          %v6761 = vld [vmem:[%s6755 + $0x28] sm:$0xff]
          %v6762 = vld [vmem:[%s6755 + $0x30] sm:$0xff]
          %v6763 = vld [vmem:[%s6755 + $0x38] sm:$0xff]
          %v6765 = vsel %vm5148, %v6753, 0
          %v6768 = vsel %vm5148, %v6754, 0
          %6770 = vmatprep.subr.mxu0 0.0
          %6771 = vmatpush1.msra.mxu0 %v6756
          %6772 = vmatprep.subr.mxu0 0.0
          %6773 = vmatpush1.msra.mxu0 %v6757
          %6774 = vmatprep.subr.mxu0 0.0
          %6775 = vmatpush1.msra.mxu0 %v6758
          %6776 = vmatprep.subr.mxu0 0.0
          %6777 = vmatpush1.msra.mxu0 %v6759
          %6778 = vmatprep.subr.mxu0 0.0
          %6779 = vmatpush1.msra.mxu0 %v6760
          %6780 = vmatprep.subr.mxu0 0.0
          %6781 = vmatpush1.msra.mxu0 %v6761
          %6782 = vmatprep.subr.mxu0 0.0
          %6783 = vmatpush1.msra.mxu0 %v6762
          %6784 = vmatprep.subr.mxu0 0.0
          %6785 = vmatpush1.msra.mxu0 %v6763
          %6786 = vmatprep.subr.mxu0 0.0
          %6787 = vmatpush1.msra.mxu0 0.0
          %6788 = vmatprep.subr.mxu0 0.0
          %6789 = vmatpush1.msra.mxu0 0.0
          %6790 = vmatprep.subr.mxu0 0.0
          %6791 = vmatpush1.msra.mxu0 0.0
          %6792 = vmatprep.subr.mxu0 0.0
          %6793 = vmatpush1.msra.mxu0 0.0
          %6794 = vmatprep.subr.mxu0 0.0
          %6795 = vmatpush1.msra.mxu0 0.0
          %6796 = vmatprep.subr.mxu0 0.0
          %6797 = vmatpush1.msra.mxu0 0.0
          %6798 = vmatprep.subr.mxu0 0.0
          %6799 = vmatpush1.msra.mxu0 0.0
          %6800 = vmatprep.subr.mxu0 0.0
          %6801 = vmatpush1.msra.mxu0 0.0
          %6802 = vmatprep.subr.mxu0 0.0
          %6803 = vmatpush1.msra.mxu0 0.0
          %6804 = vmatprep.subr.mxu0 0.0
          %6805 = vmatpush1.msra.mxu0 0.0
          %6806 = vmatprep.subr.mxu0 0.0
          %6807 = vmatpush1.msra.mxu0 0.0
          %6808 = vmatprep.subr.mxu0 0.0
          %6809 = vmatpush1.msra.mxu0 0.0
          %6810 = vmatprep.subr.mxu0 0.0
          %6811 = vmatpush1.msra.mxu0 0.0
          %6812 = vmatprep.subr.mxu0 0.0
          %6813 = vmatpush1.msra.mxu0 0.0
          %6814 = vmatprep.subr.mxu0 0.0
          %6815 = vmatpush1.msra.mxu0 0.0
          %6816 = vmatprep.subr.mxu0 0.0
          %6817 = vmatpush1.msra.mxu0 0.0
          %6818 = vmatprep.subr.mxu0 0.0
          %6819 = vmatpush1.msra.mxu0 0.0
          %6820 = vmatprep.subr.mxu0 0.0
          %6821 = vmatpush1.msra.mxu0 0.0
          %6822 = vmatprep.subr.mxu0 0.0
          %6823 = vmatpush1.msra.mxu0 0.0
          %6824 = vmatprep.subr.mxu0 0.0
          %6825 = vmatpush1.msra.mxu0 0.0
          %6826 = vmatprep.subr.mxu0 0.0
          %6827 = vmatpush1.msra.mxu0 0.0
          %6828 = vmatprep.subr.mxu0 0.0
          %6829 = vmatpush1.msra.mxu0 0.0
          %6830 = vmatprep.subr.mxu0 0.0
          %6831 = vmatpush1.msra.mxu0 0.0
          %6832 = vmatprep.subr.mxu0 0.0
          %6833 = vmatpush1.msra.mxu0 0.0
          %6834 = vmatprep.mubr.f32.mxu0 0.0
          %6835 = vmatmul.mubr.f32.gmra.mrb[0].mxu0 %v6765
          %v6836 = vpop.f32.mrb[0].mxu0
          %v6837 = vadd.f32 0.0, %v6836
          %v6838 = vpop.f32.mrb[0].mxu0
          %6839 = vmatprep.mubr.f32.mxu0 0.0
          %6840 = vmatmul.mubr.f32.gmra.mrb[0].mxu0 %v6768
          %v6841 = vpop.f32.mrb[0].mxu0
          %v6842 = vadd.f32 0.0, %v6841
          %v6843 = vpop.f32.mrb[0].mxu0
          %6844 = vdwg.mxu0
          %v6845 = vadd.f32 %v6749, %v6837
          %v6846 = vadd.f32 %v6750, %v6842
          %s6847 = sadd.s32 %s5123, 30
          %s6848 = scalar_lea.vmem [#allocation3], %s6847
          %v6849 = vld [vmem:[%s6848] sm:$0xff]
          %v6850 = vld [vmem:[%s6848 + $0x8] sm:$0x3f]
          %s6851 = scalar_lea.vmem %s5, 1152
          %v6852 = vld [vmem:[%s6851] sm:$0xff]
          %v6853 = vld [vmem:[%s6851 + $0x8] sm:$0xff]
          %v6854 = vld [vmem:[%s6851 + $0x10] sm:$0xff]
          %v6855 = vld [vmem:[%s6851 + $0x18] sm:$0xff]
          %v6856 = vld [vmem:[%s6851 + $0x20] sm:$0xff]
          %v6857 = vld [vmem:[%s6851 + $0x28] sm:$0xff]
          %v6858 = vld [vmem:[%s6851 + $0x30] sm:$0xff]
          %v6859 = vld [vmem:[%s6851 + $0x38] sm:$0xff]
          %v6861 = vsel %vm5148, %v6849, 0
          %v6864 = vsel %vm5148, %v6850, 0
          %6866 = vmatprep.subr.mxu0 0.0
          %6867 = vmatpush1.msra.mxu0 %v6852
          %6868 = vmatprep.subr.mxu0 0.0
          %6869 = vmatpush1.msra.mxu0 %v6853
          %6870 = vmatprep.subr.mxu0 0.0
          %6871 = vmatpush1.msra.mxu0 %v6854
          %6872 = vmatprep.subr.mxu0 0.0
          %6873 = vmatpush1.msra.mxu0 %v6855
          %6874 = vmatprep.subr.mxu0 0.0
          %6875 = vmatpush1.msra.mxu0 %v6856
          %6876 = vmatprep.subr.mxu0 0.0
          %6877 = vmatpush1.msra.mxu0 %v6857
          %6878 = vmatprep.subr.mxu0 0.0
          %6879 = vmatpush1.msra.mxu0 %v6858
          %6880 = vmatprep.subr.mxu0 0.0
          %6881 = vmatpush1.msra.mxu0 %v6859
          %6882 = vmatprep.subr.mxu0 0.0
          %6883 = vmatpush1.msra.mxu0 0.0
          %6884 = vmatprep.subr.mxu0 0.0
          %6885 = vmatpush1.msra.mxu0 0.0
          %6886 = vmatprep.subr.mxu0 0.0
          %6887 = vmatpush1.msra.mxu0 0.0
          %6888 = vmatprep.subr.mxu0 0.0
          %6889 = vmatpush1.msra.mxu0 0.0
          %6890 = vmatprep.subr.mxu0 0.0
          %6891 = vmatpush1.msra.mxu0 0.0
          %6892 = vmatprep.subr.mxu0 0.0
          %6893 = vmatpush1.msra.mxu0 0.0
          %6894 = vmatprep.subr.mxu0 0.0
          %6895 = vmatpush1.msra.mxu0 0.0
          %6896 = vmatprep.subr.mxu0 0.0
          %6897 = vmatpush1.msra.mxu0 0.0
          %6898 = vmatprep.subr.mxu0 0.0
          %6899 = vmatpush1.msra.mxu0 0.0
          %6900 = vmatprep.subr.mxu0 0.0
          %6901 = vmatpush1.msra.mxu0 0.0
          %6902 = vmatprep.subr.mxu0 0.0
          %6903 = vmatpush1.msra.mxu0 0.0
          %6904 = vmatprep.subr.mxu0 0.0
          %6905 = vmatpush1.msra.mxu0 0.0
          %6906 = vmatprep.subr.mxu0 0.0
          %6907 = vmatpush1.msra.mxu0 0.0
          %6908 = vmatprep.subr.mxu0 0.0
          %6909 = vmatpush1.msra.mxu0 0.0
          %6910 = vmatprep.subr.mxu0 0.0
          %6911 = vmatpush1.msra.mxu0 0.0
          %6912 = vmatprep.subr.mxu0 0.0
          %6913 = vmatpush1.msra.mxu0 0.0
          %6914 = vmatprep.subr.mxu0 0.0
          %6915 = vmatpush1.msra.mxu0 0.0
          %6916 = vmatprep.subr.mxu0 0.0
          %6917 = vmatpush1.msra.mxu0 0.0
          %6918 = vmatprep.subr.mxu0 0.0
          %6919 = vmatpush1.msra.mxu0 0.0
          %6920 = vmatprep.subr.mxu0 0.0
          %6921 = vmatpush1.msra.mxu0 0.0
          %6922 = vmatprep.subr.mxu0 0.0
          %6923 = vmatpush1.msra.mxu0 0.0
          %6924 = vmatprep.subr.mxu0 0.0
          %6925 = vmatpush1.msra.mxu0 0.0
          %6926 = vmatprep.subr.mxu0 0.0
          %6927 = vmatpush1.msra.mxu0 0.0
          %6928 = vmatprep.subr.mxu0 0.0
          %6929 = vmatpush1.msra.mxu0 0.0
          %6930 = vmatprep.mubr.f32.mxu0 0.0
          %6931 = vmatmul.mubr.f32.gmra.mrb[0].mxu0 %v6861
          %v6932 = vpop.f32.mrb[0].mxu0
          %v6933 = vadd.f32 0.0, %v6932
          %v6934 = vpop.f32.mrb[0].mxu0
          %6935 = vmatprep.mubr.f32.mxu0 0.0
          %6936 = vmatmul.mubr.f32.gmra.mrb[0].mxu0 %v6864
          %v6937 = vpop.f32.mrb[0].mxu0
          %v6938 = vadd.f32 0.0, %v6937
          %v6939 = vpop.f32.mrb[0].mxu0
          %6940 = vdwg.mxu0
          %v6941 = vadd.f32 %v6845, %v6933
          %v6942 = vadd.f32 %v6846, %v6938
          %s6943 = sadd.s32 %s5123, 31
          %s6944 = scalar_lea.vmem [#allocation3], %s6943
          %v6945 = vld [vmem:[%s6944] sm:$0xff]
          %v6946 = vld [vmem:[%s6944 + $0x8] sm:$0x3f]
          %s6947 = scalar_lea.vmem %s5, 1216
          %v6948 = vld [vmem:[%s6947] sm:$0xff]
          %v6949 = vld [vmem:[%s6947 + $0x8] sm:$0xff]
          %v6950 = vld [vmem:[%s6947 + $0x10] sm:$0xff]
          %v6951 = vld [vmem:[%s6947 + $0x18] sm:$0xff]
          %v6952 = vld [vmem:[%s6947 + $0x20] sm:$0xff]
          %v6953 = vld [vmem:[%s6947 + $0x28] sm:$0xff]
          %v6954 = vld [vmem:[%s6947 + $0x30] sm:$0xff]
          %v6955 = vld [vmem:[%s6947 + $0x38] sm:$0xff]
          %v6957 = vsel %vm5148, %v6945, 0
          %v6960 = vsel %vm5148, %v6946, 0
          %6962 = vmatprep.subr.mxu0 0.0
          %6963 = vmatpush1.msra.mxu0 %v6948
          %6964 = vmatprep.subr.mxu0 0.0
          %6965 = vmatpush1.msra.mxu0 %v6949
          %6966 = vmatprep.subr.mxu0 0.0
          %6967 = vmatpush1.msra.mxu0 %v6950
          %6968 = vmatprep.subr.mxu0 0.0
          %6969 = vmatpush1.msra.mxu0 %v6951
          %6970 = vmatprep.subr.mxu0 0.0
          %6971 = vmatpush1.msra.mxu0 %v6952
          %6972 = vmatprep.subr.mxu0 0.0
          %6973 = vmatpush1.msra.mxu0 %v6953
          %6974 = vmatprep.subr.mxu0 0.0
          %6975 = vmatpush1.msra.mxu0 %v6954
          %6976 = vmatprep.subr.mxu0 0.0
          %6977 = vmatpush1.msra.mxu0 %v6955
          %6978 = vmatprep.subr.mxu0 0.0
          %6979 = vmatpush1.msra.mxu0 0.0
          %6980 = vmatprep.subr.mxu0 0.0
          %6981 = vmatpush1.msra.mxu0 0.0
          %6982 = vmatprep.subr.mxu0 0.0
          %6983 = vmatpush1.msra.mxu0 0.0
          %6984 = vmatprep.subr.mxu0 0.0
          %6985 = vmatpush1.msra.mxu0 0.0
          %6986 = vmatprep.subr.mxu0 0.0
          %6987 = vmatpush1.msra.mxu0 0.0
          %6988 = vmatprep.subr.mxu0 0.0
          %6989 = vmatpush1.msra.mxu0 0.0
          %6990 = vmatprep.subr.mxu0 0.0
          %6991 = vmatpush1.msra.mxu0 0.0
          %6992 = vmatprep.subr.mxu0 0.0
          %6993 = vmatpush1.msra.mxu0 0.0
          %6994 = vmatprep.subr.mxu0 0.0
          %6995 = vmatpush1.msra.mxu0 0.0
          %6996 = vmatprep.subr.mxu0 0.0
          %6997 = vmatpush1.msra.mxu0 0.0
          %6998 = vmatprep.subr.mxu0 0.0
          %6999 = vmatpush1.msra.mxu0 0.0
          %7000 = vmatprep.subr.mxu0 0.0
          %7001 = vmatpush1.msra.mxu0 0.0
          %7002 = vmatprep.subr.mxu0 0.0
          %7003 = vmatpush1.msra.mxu0 0.0
          %7004 = vmatprep.subr.mxu0 0.0
          %7005 = vmatpush1.msra.mxu0 0.0
          %7006 = vmatprep.subr.mxu0 0.0
          %7007 = vmatpush1.msra.mxu0 0.0
          %7008 = vmatprep.subr.mxu0 0.0
          %7009 = vmatpush1.msra.mxu0 0.0
          %7010 = vmatprep.subr.mxu0 0.0
          %7011 = vmatpush1.msra.mxu0 0.0
          %7012 = vmatprep.subr.mxu0 0.0
          %7013 = vmatpush1.msra.mxu0 0.0
          %7014 = vmatprep.subr.mxu0 0.0
          %7015 = vmatpush1.msra.mxu0 0.0
          %7016 = vmatprep.subr.mxu0 0.0
          %7017 = vmatpush1.msra.mxu0 0.0
          %7018 = vmatprep.subr.mxu0 0.0
          %7019 = vmatpush1.msra.mxu0 0.0
          %7020 = vmatprep.subr.mxu0 0.0
          %7021 = vmatpush1.msra.mxu0 0.0
          %7022 = vmatprep.subr.mxu0 0.0
          %7023 = vmatpush1.msra.mxu0 0.0
          %7024 = vmatprep.subr.mxu0 0.0
          %7025 = vmatpush1.msra.mxu0 0.0
          %7026 = vmatprep.mubr.f32.mxu0 0.0
          %7027 = vmatmul.mubr.f32.gmra.mrb[0].mxu0 %v6957
          %v7028 = vpop.f32.mrb[0].mxu0
          %v7029 = vadd.f32 0.0, %v7028
          %v7030 = vpop.f32.mrb[0].mxu0
          %7031 = vmatprep.mubr.f32.mxu0 0.0
          %7032 = vmatmul.mubr.f32.gmra.mrb[0].mxu0 %v6960
          %v7033 = vpop.f32.mrb[0].mxu0
          %v7034 = vadd.f32 0.0, %v7033
          %v7035 = vpop.f32.mrb[0].mxu0
          %7036 = vdwg.mxu0
          %v7037 = vadd.f32 %v6941, %v7029
          %v7038 = vadd.f32 %v6942, %v7034
          %s7039 = sadd.s32 %s5123, 36
          %s7040 = scalar_lea.vmem [#allocation3], %s7039
          %v7041 = vld [vmem:[%s7040] sm:$0xff]
          %v7042 = vld [vmem:[%s7040 + $0x8] sm:$0x3f]
          %s7043 = scalar_lea.vmem %s5, 1280
          %v7044 = vld [vmem:[%s7043] sm:$0xff]
          %v7045 = vld [vmem:[%s7043 + $0x8] sm:$0xff]
          %v7046 = vld [vmem:[%s7043 + $0x10] sm:$0xff]
          %v7047 = vld [vmem:[%s7043 + $0x18] sm:$0xff]
          %v7048 = vld [vmem:[%s7043 + $0x20] sm:$0xff]
          %v7049 = vld [vmem:[%s7043 + $0x28] sm:$0xff]
          %v7050 = vld [vmem:[%s7043 + $0x30] sm:$0xff]
          %v7051 = vld [vmem:[%s7043 + $0x38] sm:$0xff]
          %v7053 = vsel %vm5148, %v7041, 0
          %v7056 = vsel %vm5148, %v7042, 0
          %7058 = vmatprep.subr.mxu0 0.0
          %7059 = vmatpush1.msra.mxu0 %v7044
          %7060 = vmatprep.subr.mxu0 0.0
          %7061 = vmatpush1.msra.mxu0 %v7045
          %7062 = vmatprep.subr.mxu0 0.0
          %7063 = vmatpush1.msra.mxu0 %v7046
          %7064 = vmatprep.subr.mxu0 0.0
          %7065 = vmatpush1.msra.mxu0 %v7047
          %7066 = vmatprep.subr.mxu0 0.0
          %7067 = vmatpush1.msra.mxu0 %v7048
          %7068 = vmatprep.subr.mxu0 0.0
          %7069 = vmatpush1.msra.mxu0 %v7049
          %7070 = vmatprep.subr.mxu0 0.0
          %7071 = vmatpush1.msra.mxu0 %v7050
          %7072 = vmatprep.subr.mxu0 0.0
          %7073 = vmatpush1.msra.mxu0 %v7051
          %7074 = vmatprep.subr.mxu0 0.0
          %7075 = vmatpush1.msra.mxu0 0.0
          %7076 = vmatprep.subr.mxu0 0.0
          %7077 = vmatpush1.msra.mxu0 0.0
          %7078 = vmatprep.subr.mxu0 0.0
          %7079 = vmatpush1.msra.mxu0 0.0
          %7080 = vmatprep.subr.mxu0 0.0
          %7081 = vmatpush1.msra.mxu0 0.0
          %7082 = vmatprep.subr.mxu0 0.0
          %7083 = vmatpush1.msra.mxu0 0.0
          %7084 = vmatprep.subr.mxu0 0.0
          %7085 = vmatpush1.msra.mxu0 0.0
          %7086 = vmatprep.subr.mxu0 0.0
          %7087 = vmatpush1.msra.mxu0 0.0
          %7088 = vmatprep.subr.mxu0 0.0
          %7089 = vmatpush1.msra.mxu0 0.0
          %7090 = vmatprep.subr.mxu0 0.0
          %7091 = vmatpush1.msra.mxu0 0.0
          %7092 = vmatprep.subr.mxu0 0.0
          %7093 = vmatpush1.msra.mxu0 0.0
          %7094 = vmatprep.subr.mxu0 0.0
          %7095 = vmatpush1.msra.mxu0 0.0
          %7096 = vmatprep.subr.mxu0 0.0
          %7097 = vmatpush1.msra.mxu0 0.0
          %7098 = vmatprep.subr.mxu0 0.0
          %7099 = vmatpush1.msra.mxu0 0.0
          %7100 = vmatprep.subr.mxu0 0.0
          %7101 = vmatpush1.msra.mxu0 0.0
          %7102 = vmatprep.subr.mxu0 0.0
          %7103 = vmatpush1.msra.mxu0 0.0
          %7104 = vmatprep.subr.mxu0 0.0
          %7105 = vmatpush1.msra.mxu0 0.0
          %7106 = vmatprep.subr.mxu0 0.0
          %7107 = vmatpush1.msra.mxu0 0.0
          %7108 = vmatprep.subr.mxu0 0.0
          %7109 = vmatpush1.msra.mxu0 0.0
          %7110 = vmatprep.subr.mxu0 0.0
          %7111 = vmatpush1.msra.mxu0 0.0
          %7112 = vmatprep.subr.mxu0 0.0
          %7113 = vmatpush1.msra.mxu0 0.0
          %7114 = vmatprep.subr.mxu0 0.0
          %7115 = vmatpush1.msra.mxu0 0.0
          %7116 = vmatprep.subr.mxu0 0.0
          %7117 = vmatpush1.msra.mxu0 0.0
          %7118 = vmatprep.subr.mxu0 0.0
          %7119 = vmatpush1.msra.mxu0 0.0
          %7120 = vmatprep.subr.mxu0 0.0
          %7121 = vmatpush1.msra.mxu0 0.0
          %7122 = vmatprep.mubr.f32.mxu0 0.0
          %7123 = vmatmul.mubr.f32.gmra.mrb[0].mxu0 %v7053
          %v7124 = vpop.f32.mrb[0].mxu0
          %v7125 = vadd.f32 0.0, %v7124
          %v7126 = vpop.f32.mrb[0].mxu0
          %7127 = vmatprep.mubr.f32.mxu0 0.0
          %7128 = vmatmul.mubr.f32.gmra.mrb[0].mxu0 %v7056
          %v7129 = vpop.f32.mrb[0].mxu0
          %v7130 = vadd.f32 0.0, %v7129
          %v7131 = vpop.f32.mrb[0].mxu0
          %7132 = vdwg.mxu0
          %v7133 = vadd.f32 %v7037, %v7125
          %v7134 = vadd.f32 %v7038, %v7130
          %s7135 = sadd.s32 %s5123, 37
          %s7136 = scalar_lea.vmem [#allocation3], %s7135
          %v7137 = vld [vmem:[%s7136] sm:$0xff]
          %v7138 = vld [vmem:[%s7136 + $0x8] sm:$0x3f]
          %s7139 = scalar_lea.vmem %s5, 1344
          %v7140 = vld [vmem:[%s7139] sm:$0xff]
          %v7141 = vld [vmem:[%s7139 + $0x8] sm:$0xff]
          %v7142 = vld [vmem:[%s7139 + $0x10] sm:$0xff]
          %v7143 = vld [vmem:[%s7139 + $0x18] sm:$0xff]
          %v7144 = vld [vmem:[%s7139 + $0x20] sm:$0xff]
          %v7145 = vld [vmem:[%s7139 + $0x28] sm:$0xff]
          %v7146 = vld [vmem:[%s7139 + $0x30] sm:$0xff]
          %v7147 = vld [vmem:[%s7139 + $0x38] sm:$0xff]
          %v7149 = vsel %vm5148, %v7137, 0
          %v7152 = vsel %vm5148, %v7138, 0
          %7154 = vmatprep.subr.mxu0 0.0
          %7155 = vmatpush1.msra.mxu0 %v7140
          %7156 = vmatprep.subr.mxu0 0.0
          %7157 = vmatpush1.msra.mxu0 %v7141
          %7158 = vmatprep.subr.mxu0 0.0
          %7159 = vmatpush1.msra.mxu0 %v7142
          %7160 = vmatprep.subr.mxu0 0.0
          %7161 = vmatpush1.msra.mxu0 %v7143
          %7162 = vmatprep.subr.mxu0 0.0
          %7163 = vmatpush1.msra.mxu0 %v7144
          %7164 = vmatprep.subr.mxu0 0.0
          %7165 = vmatpush1.msra.mxu0 %v7145
          %7166 = vmatprep.subr.mxu0 0.0
          %7167 = vmatpush1.msra.mxu0 %v7146
          %7168 = vmatprep.subr.mxu0 0.0
          %7169 = vmatpush1.msra.mxu0 %v7147
          %7170 = vmatprep.subr.mxu0 0.0
          %7171 = vmatpush1.msra.mxu0 0.0
          %7172 = vmatprep.subr.mxu0 0.0
          %7173 = vmatpush1.msra.mxu0 0.0
          %7174 = vmatprep.subr.mxu0 0.0
          %7175 = vmatpush1.msra.mxu0 0.0
          %7176 = vmatprep.subr.mxu0 0.0
          %7177 = vmatpush1.msra.mxu0 0.0
          %7178 = vmatprep.subr.mxu0 0.0
          %7179 = vmatpush1.msra.mxu0 0.0
          %7180 = vmatprep.subr.mxu0 0.0
          %7181 = vmatpush1.msra.mxu0 0.0
          %7182 = vmatprep.subr.mxu0 0.0
          %7183 = vmatpush1.msra.mxu0 0.0
          %7184 = vmatprep.subr.mxu0 0.0
          %7185 = vmatpush1.msra.mxu0 0.0
          %7186 = vmatprep.subr.mxu0 0.0
          %7187 = vmatpush1.msra.mxu0 0.0
          %7188 = vmatprep.subr.mxu0 0.0
          %7189 = vmatpush1.msra.mxu0 0.0
          %7190 = vmatprep.subr.mxu0 0.0
          %7191 = vmatpush1.msra.mxu0 0.0
          %7192 = vmatprep.subr.mxu0 0.0
          %7193 = vmatpush1.msra.mxu0 0.0
          %7194 = vmatprep.subr.mxu0 0.0
          %7195 = vmatpush1.msra.mxu0 0.0
          %7196 = vmatprep.subr.mxu0 0.0
          %7197 = vmatpush1.msra.mxu0 0.0
          %7198 = vmatprep.subr.mxu0 0.0
          %7199 = vmatpush1.msra.mxu0 0.0
          %7200 = vmatprep.subr.mxu0 0.0
          %7201 = vmatpush1.msra.mxu0 0.0
          %7202 = vmatprep.subr.mxu0 0.0
          %7203 = vmatpush1.msra.mxu0 0.0
          %7204 = vmatprep.subr.mxu0 0.0
          %7205 = vmatpush1.msra.mxu0 0.0
          %7206 = vmatprep.subr.mxu0 0.0
          %7207 = vmatpush1.msra.mxu0 0.0
          %7208 = vmatprep.subr.mxu0 0.0
          %7209 = vmatpush1.msra.mxu0 0.0
          %7210 = vmatprep.subr.mxu0 0.0
          %7211 = vmatpush1.msra.mxu0 0.0
          %7212 = vmatprep.subr.mxu0 0.0
          %7213 = vmatpush1.msra.mxu0 0.0
          %7214 = vmatprep.subr.mxu0 0.0
          %7215 = vmatpush1.msra.mxu0 0.0
          %7216 = vmatprep.subr.mxu0 0.0
          %7217 = vmatpush1.msra.mxu0 0.0
          %7218 = vmatprep.mubr.f32.mxu0 0.0
          %7219 = vmatmul.mubr.f32.gmra.mrb[0].mxu0 %v7149
          %v7220 = vpop.f32.mrb[0].mxu0
          %v7221 = vadd.f32 0.0, %v7220
          %v7222 = vpop.f32.mrb[0].mxu0
          %7223 = vmatprep.mubr.f32.mxu0 0.0
          %7224 = vmatmul.mubr.f32.gmra.mrb[0].mxu0 %v7152
          %v7225 = vpop.f32.mrb[0].mxu0
          %v7226 = vadd.f32 0.0, %v7225
          %v7227 = vpop.f32.mrb[0].mxu0
          %7228 = vdwg.mxu0
          %v7229 = vadd.f32 %v7133, %v7221
          %v7230 = vadd.f32 %v7134, %v7226
          %s7231 = sadd.s32 %s5123, 38
          %s7232 = scalar_lea.vmem [#allocation3], %s7231
          %v7233 = vld [vmem:[%s7232] sm:$0xff]
          %v7234 = vld [vmem:[%s7232 + $0x8] sm:$0x3f]
          %s7235 = scalar_lea.vmem %s5, 1408
          %v7236 = vld [vmem:[%s7235] sm:$0xff]
          %v7237 = vld [vmem:[%s7235 + $0x8] sm:$0xff]
          %v7238 = vld [vmem:[%s7235 + $0x10] sm:$0xff]
          %v7239 = vld [vmem:[%s7235 + $0x18] sm:$0xff]
          %v7240 = vld [vmem:[%s7235 + $0x20] sm:$0xff]
          %v7241 = vld [vmem:[%s7235 + $0x28] sm:$0xff]
          %v7242 = vld [vmem:[%s7235 + $0x30] sm:$0xff]
          %v7243 = vld [vmem:[%s7235 + $0x38] sm:$0xff]
          %v7245 = vsel %vm5148, %v7233, 0
          %v7248 = vsel %vm5148, %v7234, 0
          %7250 = vmatprep.subr.mxu0 0.0
          %7251 = vmatpush1.msra.mxu0 %v7236
          %7252 = vmatprep.subr.mxu0 0.0
          %7253 = vmatpush1.msra.mxu0 %v7237
          %7254 = vmatprep.subr.mxu0 0.0
          %7255 = vmatpush1.msra.mxu0 %v7238
          %7256 = vmatprep.subr.mxu0 0.0
          %7257 = vmatpush1.msra.mxu0 %v7239
          %7258 = vmatprep.subr.mxu0 0.0
          %7259 = vmatpush1.msra.mxu0 %v7240
          %7260 = vmatprep.subr.mxu0 0.0
          %7261 = vmatpush1.msra.mxu0 %v7241
          %7262 = vmatprep.subr.mxu0 0.0
          %7263 = vmatpush1.msra.mxu0 %v7242
          %7264 = vmatprep.subr.mxu0 0.0
          %7265 = vmatpush1.msra.mxu0 %v7243
          %7266 = vmatprep.subr.mxu0 0.0
          %7267 = vmatpush1.msra.mxu0 0.0
          %7268 = vmatprep.subr.mxu0 0.0
          %7269 = vmatpush1.msra.mxu0 0.0
          %7270 = vmatprep.subr.mxu0 0.0
          %7271 = vmatpush1.msra.mxu0 0.0
          %7272 = vmatprep.subr.mxu0 0.0
          %7273 = vmatpush1.msra.mxu0 0.0
          %7274 = vmatprep.subr.mxu0 0.0
          %7275 = vmatpush1.msra.mxu0 0.0
          %7276 = vmatprep.subr.mxu0 0.0
          %7277 = vmatpush1.msra.mxu0 0.0
          %7278 = vmatprep.subr.mxu0 0.0
          %7279 = vmatpush1.msra.mxu0 0.0
          %7280 = vmatprep.subr.mxu0 0.0
          %7281 = vmatpush1.msra.mxu0 0.0
          %7282 = vmatprep.subr.mxu0 0.0
          %7283 = vmatpush1.msra.mxu0 0.0
          %7284 = vmatprep.subr.mxu0 0.0
          %7285 = vmatpush1.msra.mxu0 0.0
          %7286 = vmatprep.subr.mxu0 0.0
          %7287 = vmatpush1.msra.mxu0 0.0
          %7288 = vmatprep.subr.mxu0 0.0
          %7289 = vmatpush1.msra.mxu0 0.0
          %7290 = vmatprep.subr.mxu0 0.0
          %7291 = vmatpush1.msra.mxu0 0.0
          %7292 = vmatprep.subr.mxu0 0.0
          %7293 = vmatpush1.msra.mxu0 0.0
          %7294 = vmatprep.subr.mxu0 0.0
          %7295 = vmatpush1.msra.mxu0 0.0
          %7296 = vmatprep.subr.mxu0 0.0
          %7297 = vmatpush1.msra.mxu0 0.0
          %7298 = vmatprep.subr.mxu0 0.0
          %7299 = vmatpush1.msra.mxu0 0.0
          %7300 = vmatprep.subr.mxu0 0.0
          %7301 = vmatpush1.msra.mxu0 0.0
          %7302 = vmatprep.subr.mxu0 0.0
          %7303 = vmatpush1.msra.mxu0 0.0
          %7304 = vmatprep.subr.mxu0 0.0
          %7305 = vmatpush1.msra.mxu0 0.0
          %7306 = vmatprep.subr.mxu0 0.0
          %7307 = vmatpush1.msra.mxu0 0.0
          %7308 = vmatprep.subr.mxu0 0.0
          %7309 = vmatpush1.msra.mxu0 0.0
          %7310 = vmatprep.subr.mxu0 0.0
          %7311 = vmatpush1.msra.mxu0 0.0
          %7312 = vmatprep.subr.mxu0 0.0
          %7313 = vmatpush1.msra.mxu0 0.0
          %7314 = vmatprep.mubr.f32.mxu0 0.0
          %7315 = vmatmul.mubr.f32.gmra.mrb[0].mxu0 %v7245
          %v7316 = vpop.f32.mrb[0].mxu0
          %v7317 = vadd.f32 0.0, %v7316
          %v7318 = vpop.f32.mrb[0].mxu0
          %7319 = vmatprep.mubr.f32.mxu0 0.0
          %7320 = vmatmul.mubr.f32.gmra.mrb[0].mxu0 %v7248
          %v7321 = vpop.f32.mrb[0].mxu0
          %v7322 = vadd.f32 0.0, %v7321
          %v7323 = vpop.f32.mrb[0].mxu0
          %7324 = vdwg.mxu0
          %v7325 = vadd.f32 %v7229, %v7317
          %v7326 = vadd.f32 %v7230, %v7322
          %s7327 = sadd.s32 %s5123, 39
          %s7328 = scalar_lea.vmem [#allocation3], %s7327
          %v7329 = vld [vmem:[%s7328] sm:$0xff]
          %v7330 = vld [vmem:[%s7328 + $0x8] sm:$0x3f]
          %s7331 = scalar_lea.vmem %s5, 1472
          %v7332 = vld [vmem:[%s7331] sm:$0xff]
          %v7333 = vld [vmem:[%s7331 + $0x8] sm:$0xff]
          %v7334 = vld [vmem:[%s7331 + $0x10] sm:$0xff]
          %v7335 = vld [vmem:[%s7331 + $0x18] sm:$0xff]
          %v7336 = vld [vmem:[%s7331 + $0x20] sm:$0xff]
          %v7337 = vld [vmem:[%s7331 + $0x28] sm:$0xff]
          %v7338 = vld [vmem:[%s7331 + $0x30] sm:$0xff]
          %v7339 = vld [vmem:[%s7331 + $0x38] sm:$0xff]
          %v7341 = vsel %vm5148, %v7329, 0
          %v7344 = vsel %vm5148, %v7330, 0
          %7346 = vmatprep.subr.mxu0 0.0
          %7347 = vmatpush1.msra.mxu0 %v7332
          %7348 = vmatprep.subr.mxu0 0.0
          %7349 = vmatpush1.msra.mxu0 %v7333
          %7350 = vmatprep.subr.mxu0 0.0
          %7351 = vmatpush1.msra.mxu0 %v7334
          %7352 = vmatprep.subr.mxu0 0.0
          %7353 = vmatpush1.msra.mxu0 %v7335
          %7354 = vmatprep.subr.mxu0 0.0
          %7355 = vmatpush1.msra.mxu0 %v7336
          %7356 = vmatprep.subr.mxu0 0.0
          %7357 = vmatpush1.msra.mxu0 %v7337
          %7358 = vmatprep.subr.mxu0 0.0
          %7359 = vmatpush1.msra.mxu0 %v7338
          %7360 = vmatprep.subr.mxu0 0.0
          %7361 = vmatpush1.msra.mxu0 %v7339
          %7362 = vmatprep.subr.mxu0 0.0
          %7363 = vmatpush1.msra.mxu0 0.0
          %7364 = vmatprep.subr.mxu0 0.0
          %7365 = vmatpush1.msra.mxu0 0.0
          %7366 = vmatprep.subr.mxu0 0.0
          %7367 = vmatpush1.msra.mxu0 0.0
          %7368 = vmatprep.subr.mxu0 0.0
          %7369 = vmatpush1.msra.mxu0 0.0
          %7370 = vmatprep.subr.mxu0 0.0
          %7371 = vmatpush1.msra.mxu0 0.0
          %7372 = vmatprep.subr.mxu0 0.0
          %7373 = vmatpush1.msra.mxu0 0.0
          %7374 = vmatprep.subr.mxu0 0.0
          %7375 = vmatpush1.msra.mxu0 0.0
          %7376 = vmatprep.subr.mxu0 0.0
          %7377 = vmatpush1.msra.mxu0 0.0
          %7378 = vmatprep.subr.mxu0 0.0
          %7379 = vmatpush1.msra.mxu0 0.0
          %7380 = vmatprep.subr.mxu0 0.0
          %7381 = vmatpush1.msra.mxu0 0.0
          %7382 = vmatprep.subr.mxu0 0.0
          %7383 = vmatpush1.msra.mxu0 0.0
          %7384 = vmatprep.subr.mxu0 0.0
          %7385 = vmatpush1.msra.mxu0 0.0
          %7386 = vmatprep.subr.mxu0 0.0
          %7387 = vmatpush1.msra.mxu0 0.0
          %7388 = vmatprep.subr.mxu0 0.0
          %7389 = vmatpush1.msra.mxu0 0.0
          %7390 = vmatprep.subr.mxu0 0.0
          %7391 = vmatpush1.msra.mxu0 0.0
          %7392 = vmatprep.subr.mxu0 0.0
          %7393 = vmatpush1.msra.mxu0 0.0
          %7394 = vmatprep.subr.mxu0 0.0
          %7395 = vmatpush1.msra.mxu0 0.0
          %7396 = vmatprep.subr.mxu0 0.0
          %7397 = vmatpush1.msra.mxu0 0.0
          %7398 = vmatprep.subr.mxu0 0.0
          %7399 = vmatpush1.msra.mxu0 0.0
          %7400 = vmatprep.subr.mxu0 0.0
          %7401 = vmatpush1.msra.mxu0 0.0
          %7402 = vmatprep.subr.mxu0 0.0
          %7403 = vmatpush1.msra.mxu0 0.0
          %7404 = vmatprep.subr.mxu0 0.0
          %7405 = vmatpush1.msra.mxu0 0.0
          %7406 = vmatprep.subr.mxu0 0.0
          %7407 = vmatpush1.msra.mxu0 0.0
          %7408 = vmatprep.subr.mxu0 0.0
          %7409 = vmatpush1.msra.mxu0 0.0
          %7410 = vmatprep.mubr.f32.mxu0 0.0
          %7411 = vmatmul.mubr.f32.gmra.mrb[0].mxu0 %v7341
          %v7412 = vpop.f32.mrb[0].mxu0
          %v7413 = vadd.f32 0.0, %v7412
          %v7414 = vpop.f32.mrb[0].mxu0
          %7415 = vmatprep.mubr.f32.mxu0 0.0
          %7416 = vmatmul.mubr.f32.gmra.mrb[0].mxu0 %v7344
          %v7417 = vpop.f32.mrb[0].mxu0
          %v7418 = vadd.f32 0.0, %v7417
          %v7419 = vpop.f32.mrb[0].mxu0
          %7420 = vdwg.mxu0
          %v7421 = vadd.f32 %v7325, %v7413
          %v7422 = vadd.f32 %v7326, %v7418
          %s7423 = sadd.s32 %s5123, 40
          %s7424 = scalar_lea.vmem [#allocation3], %s7423
          %v7425 = vld [vmem:[%s7424] sm:$0xff]
          %v7426 = vld [vmem:[%s7424 + $0x8] sm:$0x3f]
          %s7427 = scalar_lea.vmem %s5, 1536
          %v7428 = vld [vmem:[%s7427] sm:$0xff]
          %v7429 = vld [vmem:[%s7427 + $0x8] sm:$0xff]
          %v7430 = vld [vmem:[%s7427 + $0x10] sm:$0xff]
          %v7431 = vld [vmem:[%s7427 + $0x18] sm:$0xff]
          %v7432 = vld [vmem:[%s7427 + $0x20] sm:$0xff]
          %v7433 = vld [vmem:[%s7427 + $0x28] sm:$0xff]
          %v7434 = vld [vmem:[%s7427 + $0x30] sm:$0xff]
          %v7435 = vld [vmem:[%s7427 + $0x38] sm:$0xff]
          %v7437 = vsel %vm5148, %v7425, 0
          %v7440 = vsel %vm5148, %v7426, 0
          %7442 = vmatprep.subr.mxu0 0.0
          %7443 = vmatpush1.msra.mxu0 %v7428
          %7444 = vmatprep.subr.mxu0 0.0
          %7445 = vmatpush1.msra.mxu0 %v7429
          %7446 = vmatprep.subr.mxu0 0.0
          %7447 = vmatpush1.msra.mxu0 %v7430
          %7448 = vmatprep.subr.mxu0 0.0
          %7449 = vmatpush1.msra.mxu0 %v7431
          %7450 = vmatprep.subr.mxu0 0.0
          %7451 = vmatpush1.msra.mxu0 %v7432
          %7452 = vmatprep.subr.mxu0 0.0
          %7453 = vmatpush1.msra.mxu0 %v7433
          %7454 = vmatprep.subr.mxu0 0.0
          %7455 = vmatpush1.msra.mxu0 %v7434
          %7456 = vmatprep.subr.mxu0 0.0
          %7457 = vmatpush1.msra.mxu0 %v7435
          %7458 = vmatprep.subr.mxu0 0.0
          %7459 = vmatpush1.msra.mxu0 0.0
          %7460 = vmatprep.subr.mxu0 0.0
          %7461 = vmatpush1.msra.mxu0 0.0
          %7462 = vmatprep.subr.mxu0 0.0
          %7463 = vmatpush1.msra.mxu0 0.0
          %7464 = vmatprep.subr.mxu0 0.0
          %7465 = vmatpush1.msra.mxu0 0.0
          %7466 = vmatprep.subr.mxu0 0.0
          %7467 = vmatpush1.msra.mxu0 0.0
          %7468 = vmatprep.subr.mxu0 0.0
          %7469 = vmatpush1.msra.mxu0 0.0
          %7470 = vmatprep.subr.mxu0 0.0
          %7471 = vmatpush1.msra.mxu0 0.0
          %7472 = vmatprep.subr.mxu0 0.0
          %7473 = vmatpush1.msra.mxu0 0.0
          %7474 = vmatprep.subr.mxu0 0.0
          %7475 = vmatpush1.msra.mxu0 0.0
          %7476 = vmatprep.subr.mxu0 0.0
          %7477 = vmatpush1.msra.mxu0 0.0
          %7478 = vmatprep.subr.mxu0 0.0
          %7479 = vmatpush1.msra.mxu0 0.0
          %7480 = vmatprep.subr.mxu0 0.0
          %7481 = vmatpush1.msra.mxu0 0.0
          %7482 = vmatprep.subr.mxu0 0.0
          %7483 = vmatpush1.msra.mxu0 0.0
          %7484 = vmatprep.subr.mxu0 0.0
          %7485 = vmatpush1.msra.mxu0 0.0
          %7486 = vmatprep.subr.mxu0 0.0
          %7487 = vmatpush1.msra.mxu0 0.0
          %7488 = vmatprep.subr.mxu0 0.0
          %7489 = vmatpush1.msra.mxu0 0.0
          %7490 = vmatprep.subr.mxu0 0.0
          %7491 = vmatpush1.msra.mxu0 0.0
          %7492 = vmatprep.subr.mxu0 0.0
          %7493 = vmatpush1.msra.mxu0 0.0
          %7494 = vmatprep.subr.mxu0 0.0
          %7495 = vmatpush1.msra.mxu0 0.0
          %7496 = vmatprep.subr.mxu0 0.0
          %7497 = vmatpush1.msra.mxu0 0.0
          %7498 = vmatprep.subr.mxu0 0.0
          %7499 = vmatpush1.msra.mxu0 0.0
          %7500 = vmatprep.subr.mxu0 0.0
          %7501 = vmatpush1.msra.mxu0 0.0
          %7502 = vmatprep.subr.mxu0 0.0
          %7503 = vmatpush1.msra.mxu0 0.0
          %7504 = vmatprep.subr.mxu0 0.0
          %7505 = vmatpush1.msra.mxu0 0.0
          %7506 = vmatprep.mubr.f32.mxu0 0.0
          %7507 = vmatmul.mubr.f32.gmra.mrb[0].mxu0 %v7437
          %v7508 = vpop.f32.mrb[0].mxu0
          %v7509 = vadd.f32 0.0, %v7508
          %v7510 = vpop.f32.mrb[0].mxu0
          %7511 = vmatprep.mubr.f32.mxu0 0.0
          %7512 = vmatmul.mubr.f32.gmra.mrb[0].mxu0 %v7440
          %v7513 = vpop.f32.mrb[0].mxu0
          %v7514 = vadd.f32 0.0, %v7513
          %v7515 = vpop.f32.mrb[0].mxu0
          %7516 = vdwg.mxu0
          %v7517 = vadd.f32 %v7421, %v7509
          %v7518 = vadd.f32 %v7422, %v7514
          %v7520 = vlaneseq
          %v7521 = vshrl.u32 %v7520, 7
          %v7522 = vsub.s32 0, %v7521
          %v7523 = vrot.slane %v5116, %v7522
          %v7525 = vadd.f32 %v7517, %v7523
          %v7526 = vadd.f32 %v7518, %v7523
          %v7527 = vmax.f32 %v7525, 0.0
          %v7528 = vmax.f32 %v7526, 0.0
          %v7530 = vrot.slane %v7528, 1
          %v7532 = vmax.f32 %v7527, %v7530
          %vm7533 = vcmask 31744
          %v7535 = vsel %vm7533, %v399, 0
          %vm7537 = vcmask 1043456
          %v7539 = vsel %vm7537, %v7532, 0
          %7541 = vmatprep.subr.mxu0 0.0
          %7542 = vmatpush1.msra.mxu0 %v7539
          %7543 = vmatprep.subr.mxu0 0.0
          %7544 = vmatpush1.msra.mxu0 0.0
          %7545 = vmatprep.subr.mxu0 0.0
          %7546 = vmatpush1.msra.mxu0 0.0
          %7547 = vmatprep.subr.mxu0 0.0
          %7548 = vmatpush1.msra.mxu0 0.0
          %7549 = vmatprep.subr.mxu0 0.0
          %7550 = vmatpush1.msra.mxu0 0.0
          %7551 = vmatprep.subr.mxu0 0.0
          %7552 = vmatpush1.msra.mxu0 0.0
          %7553 = vmatprep.subr.mxu0 0.0
          %7554 = vmatpush1.msra.mxu0 0.0
          %7555 = vmatprep.subr.mxu0 0.0
          %7556 = vmatpush1.msra.mxu0 0.0
          %7557 = vmatprep.subr.mxu0 0.0
          %7558 = vmatpush1.msra.mxu0 0.0
          %7559 = vmatprep.subr.mxu0 0.0
          %7560 = vmatpush1.msra.mxu0 0.0
          %7561 = vmatprep.subr.mxu0 0.0
          %7562 = vmatpush1.msra.mxu0 0.0
          %7563 = vmatprep.subr.mxu0 0.0
          %7564 = vmatpush1.msra.mxu0 0.0
          %7565 = vmatprep.subr.mxu0 0.0
          %7566 = vmatpush1.msra.mxu0 0.0
          %7567 = vmatprep.subr.mxu0 0.0
          %7568 = vmatpush1.msra.mxu0 0.0
          %7569 = vmatprep.subr.mxu0 0.0
          %7570 = vmatpush1.msra.mxu0 0.0
          %7571 = vmatprep.subr.mxu0 0.0
          %7572 = vmatpush1.msra.mxu0 0.0
          %7573 = vmatprep.subr.mxu0 0.0
          %7574 = vmatpush1.msra.mxu0 0.0
          %7575 = vmatprep.subr.mxu0 0.0
          %7576 = vmatpush1.msra.mxu0 0.0
          %7577 = vmatprep.subr.mxu0 0.0
          %7578 = vmatpush1.msra.mxu0 0.0
          %7579 = vmatprep.subr.mxu0 0.0
          %7580 = vmatpush1.msra.mxu0 0.0
          %7581 = vmatprep.subr.mxu0 0.0
          %7582 = vmatpush1.msra.mxu0 0.0
          %7583 = vmatprep.subr.mxu0 0.0
          %7584 = vmatpush1.msra.mxu0 0.0
          %7585 = vmatprep.subr.mxu0 0.0
          %7586 = vmatpush1.msra.mxu0 0.0
          %7587 = vmatprep.subr.mxu0 0.0
          %7588 = vmatpush1.msra.mxu0 0.0
          %7589 = vmatprep.subr.mxu0 0.0
          %7590 = vmatpush1.msra.mxu0 0.0
          %7591 = vmatprep.subr.mxu0 0.0
          %7592 = vmatpush1.msra.mxu0 0.0
          %7593 = vmatprep.subr.mxu0 0.0
          %7594 = vmatpush1.msra.mxu0 0.0
          %7595 = vmatprep.subr.mxu0 0.0
          %7596 = vmatpush1.msra.mxu0 0.0
          %7597 = vmatprep.subr.mxu0 0.0
          %7598 = vmatpush1.msra.mxu0 0.0
          %7599 = vmatprep.subr.mxu0 0.0
          %7600 = vmatpush1.msra.mxu0 0.0
          %7601 = vmatprep.subr.mxu0 0.0
          %7602 = vmatpush1.msra.mxu0 0.0
          %7603 = vmatprep.subr.mxu0 0.0
          %7604 = vmatpush1.msra.mxu0 0.0
          %7605 = vmatprep.mubr.f32.mxu0 0.0
          %7606 = vmatmul.mubr.f32.gmra.mrb[0].mxu0 %v7535
          %v7607 = vpop.f32.mrb[0].mxu0
          %v7608 = vadd.f32 0.0, %v7607
          %v7609 = vpop.f32.mrb[0].mxu0
          %7610 = vdwg.mxu0
          %v7612 = vsel %vm7533, %v411, 0
          %7614 = vmatprep.subr.mxu0 0.0
          %7615 = vmatpush1.msra.mxu0 %v7539
          %7616 = vmatprep.subr.mxu0 0.0
          %7617 = vmatpush1.msra.mxu0 0.0
          %7618 = vmatprep.subr.mxu0 0.0
          %7619 = vmatpush1.msra.mxu0 0.0
          %7620 = vmatprep.subr.mxu0 0.0
          %7621 = vmatpush1.msra.mxu0 0.0
          %7622 = vmatprep.subr.mxu0 0.0
          %7623 = vmatpush1.msra.mxu0 0.0
          %7624 = vmatprep.subr.mxu0 0.0
          %7625 = vmatpush1.msra.mxu0 0.0
          %7626 = vmatprep.subr.mxu0 0.0
          %7627 = vmatpush1.msra.mxu0 0.0
          %7628 = vmatprep.subr.mxu0 0.0
          %7629 = vmatpush1.msra.mxu0 0.0
          %7630 = vmatprep.subr.mxu0 0.0
          %7631 = vmatpush1.msra.mxu0 0.0
          %7632 = vmatprep.subr.mxu0 0.0
          %7633 = vmatpush1.msra.mxu0 0.0
          %7634 = vmatprep.subr.mxu0 0.0
          %7635 = vmatpush1.msra.mxu0 0.0
          %7636 = vmatprep.subr.mxu0 0.0
          %7637 = vmatpush1.msra.mxu0 0.0
          %7638 = vmatprep.subr.mxu0 0.0
          %7639 = vmatpush1.msra.mxu0 0.0
          %7640 = vmatprep.subr.mxu0 0.0
          %7641 = vmatpush1.msra.mxu0 0.0
          %7642 = vmatprep.subr.mxu0 0.0
          %7643 = vmatpush1.msra.mxu0 0.0
          %7644 = vmatprep.subr.mxu0 0.0
          %7645 = vmatpush1.msra.mxu0 0.0
          %7646 = vmatprep.subr.mxu0 0.0
          %7647 = vmatpush1.msra.mxu0 0.0
          %7648 = vmatprep.subr.mxu0 0.0
          %7649 = vmatpush1.msra.mxu0 0.0
          %7650 = vmatprep.subr.mxu0 0.0
          %7651 = vmatpush1.msra.mxu0 0.0
          %7652 = vmatprep.subr.mxu0 0.0
          %7653 = vmatpush1.msra.mxu0 0.0
          %7654 = vmatprep.subr.mxu0 0.0
          %7655 = vmatpush1.msra.mxu0 0.0
          %7656 = vmatprep.subr.mxu0 0.0
          %7657 = vmatpush1.msra.mxu0 0.0
          %7658 = vmatprep.subr.mxu0 0.0
          %7659 = vmatpush1.msra.mxu0 0.0
          %7660 = vmatprep.subr.mxu0 0.0
          %7661 = vmatpush1.msra.mxu0 0.0
          %7662 = vmatprep.subr.mxu0 0.0
          %7663 = vmatpush1.msra.mxu0 0.0
          %7664 = vmatprep.subr.mxu0 0.0
          %7665 = vmatpush1.msra.mxu0 0.0
          %7666 = vmatprep.subr.mxu0 0.0
          %7667 = vmatpush1.msra.mxu0 0.0
          %7668 = vmatprep.subr.mxu0 0.0
          %7669 = vmatpush1.msra.mxu0 0.0
          %7670 = vmatprep.subr.mxu0 0.0
          %7671 = vmatpush1.msra.mxu0 0.0
          %7672 = vmatprep.subr.mxu0 0.0
          %7673 = vmatpush1.msra.mxu0 0.0
          %7674 = vmatprep.subr.mxu0 0.0
          %7675 = vmatpush1.msra.mxu0 0.0
          %7676 = vmatprep.subr.mxu0 0.0
          %7677 = vmatpush1.msra.mxu0 0.0
          %7678 = vmatprep.mubr.f32.mxu0 0.0
          %7679 = vmatmul.mubr.f32.gmra.mrb[0].mxu0 %v7612
          %v7680 = vpop.f32.mrb[0].mxu0
          %v7681 = vadd.f32 0.0, %v7680
          %v7682 = vpop.f32.mrb[0].mxu0
          %7683 = vdwg.mxu0
          %v7684 = vmax.f32 %v7608, %v7681
          %s7685 = smul.u32 %s5118, 2
          %s7686 = scalar_lea.vmem [#allocation4], %s7685
          %7687 = vst [vmem:[%s7686] sm:$0x3] %v7684
        $region83: #{net_forward.1} parent=63 // loop_footer
          %s5122 = sadd.s32 1, %s5118
        $region84: #{net_forward.1} parent=63 // loop_footer_branch
          %5117 = sbr.rel target = $region80
        $region85: #{net_forward.1} parent=63 // loop_exit
          _
        %v7688 = vld [vmem:[#allocation4] sm:$0xf]
        %v7689 = vld [vmem:[%s8] sm:$0xf]
        %v7690 = vld [vmem:[%s7] sm:$0xff]
        %v7691 = vld [vmem:[%s7 + $0x8] sm:$0xff]
        %v7692 = vld [vmem:[%s7 + $0x10] sm:$0xff]
        %v7693 = vld [vmem:[%s7 + $0x18] sm:$0xff]
        %v7694 = vld [vmem:[%s7 + $0x20] sm:$0xff]
        %v7695 = vld [vmem:[%s7 + $0x28] sm:$0xff]
        %v7696 = vld [vmem:[%s7 + $0x30] sm:$0xff]
        %v7697 = vld [vmem:[%s7 + $0x38] sm:$0xff]
        %v7698 = vld [vmem:[%s7 + $0x40] sm:$0xff]
        %v7699 = vld [vmem:[%s7 + $0x48] sm:$0xff]
        %v7700 = vld [vmem:[%s7 + $0x50] sm:$0xff]
        %v7701 = vld [vmem:[%s7 + $0x58] sm:$0xff]
        %v7702 = vld [vmem:[%s7 + $0x60] sm:$0xff]
        %v7703 = vld [vmem:[%s7 + $0x68] sm:$0xff]
        %v7704 = vld [vmem:[%s7 + $0x70] sm:$0xff]
        %v7705 = vld [vmem:[%s7 + $0x78] sm:$0xff]
        %v7706 = vld [vmem:[%s7 + $0x80] sm:$0xff]
        %v7707 = vld [vmem:[%s7 + $0x88] sm:$0xff]
        %v7708 = vld [vmem:[%s7 + $0x90] sm:$0xff]
        %v7709 = vld [vmem:[%s7 + $0x98] sm:$0xff]
        %v7710 = vld [vmem:[%s7 + $0xa0] sm:$0xff]
        %v7711 = vld [vmem:[%s7 + $0xa8] sm:$0xff]
        %v7712 = vld [vmem:[%s7 + $0xb0] sm:$0xff]
        %v7713 = vld [vmem:[%s7 + $0xb8] sm:$0xff]
        %v7714 = vld [vmem:[%s7 + $0xc0] sm:$0xff]
        %v7715 = vld [vmem:[%s7 + $0xc8] sm:$0xff]
        %v7716 = vld [vmem:[%s7 + $0xd0] sm:$0xff]
        %v7717 = vld [vmem:[%s7 + $0xd8] sm:$0xff]
        %v7718 = vld [vmem:[%s7 + $0xe0] sm:$0xff]
        %v7719 = vld [vmem:[%s7 + $0xe8] sm:$0xff]
        %v7720 = vld [vmem:[%s7 + $0xf0] sm:$0xff]
        %v7721 = vld [vmem:[%s7 + $0xf8] sm:$0xff]
        %v7722 = vld [vmem:[%s7 + $0x100] sm:$0xff]
        %v7723 = vld [vmem:[%s7 + $0x108] sm:$0xff]
        %v7724 = vld [vmem:[%s7 + $0x110] sm:$0xff]
        %v7725 = vld [vmem:[%s7 + $0x118] sm:$0xff]
        %v7726 = vld [vmem:[%s7 + $0x120] sm:$0xff]
        %v7727 = vld [vmem:[%s7 + $0x128] sm:$0xff]
        %v7728 = vld [vmem:[%s7 + $0x130] sm:$0xff]
        %v7729 = vld [vmem:[%s7 + $0x138] sm:$0xff]
        %v7730 = vld [vmem:[%s7 + $0x140] sm:$0xff]
        %v7731 = vld [vmem:[%s7 + $0x148] sm:$0xff]
        %v7732 = vld [vmem:[%s7 + $0x150] sm:$0xff]
        %v7733 = vld [vmem:[%s7 + $0x158] sm:$0xff]
        %v7734 = vld [vmem:[%s7 + $0x160] sm:$0xff]
        %v7735 = vld [vmem:[%s7 + $0x168] sm:$0xff]
        %v7736 = vld [vmem:[%s7 + $0x170] sm:$0xff]
        %v7737 = vld [vmem:[%s7 + $0x178] sm:$0xff]
        %v7738 = vld [vmem:[%s7 + $0x180] sm:$0xff]
        %v7739 = vld [vmem:[%s7 + $0x188] sm:$0xff]
        %v7740 = vld [vmem:[%s7 + $0x190] sm:$0xff]
        %v7741 = vld [vmem:[%s7 + $0x198] sm:$0xff]
        %v7742 = vld [vmem:[%s7 + $0x1a0] sm:$0xff]
        %v7743 = vld [vmem:[%s7 + $0x1a8] sm:$0xff]
        %v7744 = vld [vmem:[%s7 + $0x1b0] sm:$0xff]
        %v7745 = vld [vmem:[%s7 + $0x1b8] sm:$0xff]
        %v7746 = vld [vmem:[%s7 + $0x1c0] sm:$0xff]
        %v7747 = vld [vmem:[%s7 + $0x1c8] sm:$0xff]
        %v7748 = vld [vmem:[%s7 + $0x1d0] sm:$0xff]
        %v7749 = vld [vmem:[%s7 + $0x1d8] sm:$0xff]
        %v7750 = vld [vmem:[%s7 + $0x1e0] sm:$0xff]
        %v7751 = vld [vmem:[%s7 + $0x1e8] sm:$0xff]
        %v7752 = vld [vmem:[%s7 + $0x1f0] sm:$0xff]
        %v7753 = vld [vmem:[%s7 + $0x1f8] sm:$0xff]
        %7754 = vmatprep.subr.mxu0 %v7691
        %7755 = vmatpush1.msra.mxu0 %v7690
        %7756 = vmatprep.subr.mxu0 %v7695
        %7757 = vmatpush1.msra.mxu0 %v7694
        %7758 = vmatprep.subr.mxu0 %v7699
        %7759 = vmatpush1.msra.mxu0 %v7698
        %7760 = vmatprep.subr.mxu0 %v7703
        %7761 = vmatpush1.msra.mxu0 %v7702
        %7762 = vmatprep.subr.mxu0 %v7707
        %7763 = vmatpush1.msra.mxu0 %v7706
        %7764 = vmatprep.subr.mxu0 %v7711
        %7765 = vmatpush1.msra.mxu0 %v7710
        %7766 = vmatprep.subr.mxu0 %v7715
        %7767 = vmatpush1.msra.mxu0 %v7714
        %7768 = vmatprep.subr.mxu0 %v7719
        %7769 = vmatpush1.msra.mxu0 %v7718
        %7770 = vmatprep.subr.mxu0 %v7723
        %7771 = vmatpush1.msra.mxu0 %v7722
        %7772 = vmatprep.subr.mxu0 %v7727
        %7773 = vmatpush1.msra.mxu0 %v7726
        %7774 = vmatprep.subr.mxu0 %v7731
        %7775 = vmatpush1.msra.mxu0 %v7730
        %7776 = vmatprep.subr.mxu0 %v7735
        %7777 = vmatpush1.msra.mxu0 %v7734
        %7778 = vmatprep.subr.mxu0 %v7739
        %7779 = vmatpush1.msra.mxu0 %v7738
        %7780 = vmatprep.subr.mxu0 %v7743
        %7781 = vmatpush1.msra.mxu0 %v7742
        %7782 = vmatprep.subr.mxu0 %v7747
        %7783 = vmatpush1.msra.mxu0 %v7746
        %7784 = vmatprep.subr.mxu0 %v7751
        %7785 = vmatpush1.msra.mxu0 %v7750
        %7786 = vmatprep.subr.mxu0 0.0
        %7787 = vmatpush1.msra.mxu0 0.0
        %7788 = vmatprep.subr.mxu0 0.0
        %7789 = vmatpush1.msra.mxu0 0.0
        %7790 = vmatprep.subr.mxu0 0.0
        %7791 = vmatpush1.msra.mxu0 0.0
        %7792 = vmatprep.subr.mxu0 0.0
        %7793 = vmatpush1.msra.mxu0 0.0
        %7794 = vmatprep.subr.mxu0 0.0
        %7795 = vmatpush1.msra.mxu0 0.0
        %7796 = vmatprep.subr.mxu0 0.0
        %7797 = vmatpush1.msra.mxu0 0.0
        %7798 = vmatprep.subr.mxu0 0.0
        %7799 = vmatpush1.msra.mxu0 0.0
        %7800 = vmatprep.subr.mxu0 0.0
        %7801 = vmatpush1.msra.mxu0 0.0
        %7802 = vmatprep.subr.mxu0 0.0
        %7803 = vmatpush1.msra.mxu0 0.0
        %7804 = vmatprep.subr.mxu0 0.0
        %7805 = vmatpush1.msra.mxu0 0.0
        %7806 = vmatprep.subr.mxu0 0.0
        %7807 = vmatpush1.msra.mxu0 0.0
        %7808 = vmatprep.subr.mxu0 0.0
        %7809 = vmatpush1.msra.mxu0 0.0
        %7810 = vmatprep.subr.mxu0 0.0
        %7811 = vmatpush1.msra.mxu0 0.0
        %7812 = vmatprep.subr.mxu0 0.0
        %7813 = vmatpush1.msra.mxu0 0.0
        %7814 = vmatprep.subr.mxu0 0.0
        %7815 = vmatpush1.msra.mxu0 0.0
        %7816 = vmatprep.subr.mxu0 0.0
        %7817 = vmatpush1.msra.mxu0 0.0
        %7818 = vmatprep.mubr.f32.mxu0 0.0
        %7819 = vmatmul.mubr.f32.gmra.mrb[0].mxu0 %v7688
        %v7820 = vpop.f32.mrb[0].mxu0
        %v7821 = vadd.f32 0.0, %v7820
        %v7822 = vpop.f32.mrb[0].mxu0
        %v7823 = vadd.f32 0.0, %v7822
        %7824 = vdwg.mxu0
        %7825 = vmatprep.subr.mxu0 %v7693
        %7826 = vmatpush1.msra.mxu0 %v7692
        %7827 = vmatprep.subr.mxu0 %v7697
        %7828 = vmatpush1.msra.mxu0 %v7696
        %7829 = vmatprep.subr.mxu0 %v7701
        %7830 = vmatpush1.msra.mxu0 %v7700
        %7831 = vmatprep.subr.mxu0 %v7705
        %7832 = vmatpush1.msra.mxu0 %v7704
        %7833 = vmatprep.subr.mxu0 %v7709
        %7834 = vmatpush1.msra.mxu0 %v7708
        %7835 = vmatprep.subr.mxu0 %v7713
        %7836 = vmatpush1.msra.mxu0 %v7712
        %7837 = vmatprep.subr.mxu0 %v7717
        %7838 = vmatpush1.msra.mxu0 %v7716
        %7839 = vmatprep.subr.mxu0 %v7721
        %7840 = vmatpush1.msra.mxu0 %v7720
        %7841 = vmatprep.subr.mxu0 %v7725
        %7842 = vmatpush1.msra.mxu0 %v7724
        %7843 = vmatprep.subr.mxu0 %v7729
        %7844 = vmatpush1.msra.mxu0 %v7728
        %7845 = vmatprep.subr.mxu0 %v7733
        %7846 = vmatpush1.msra.mxu0 %v7732
        %7847 = vmatprep.subr.mxu0 %v7737
        %7848 = vmatpush1.msra.mxu0 %v7736
        %7849 = vmatprep.subr.mxu0 %v7741
        %7850 = vmatpush1.msra.mxu0 %v7740
        %7851 = vmatprep.subr.mxu0 %v7745
        %7852 = vmatpush1.msra.mxu0 %v7744
        %7853 = vmatprep.subr.mxu0 %v7749
        %7854 = vmatpush1.msra.mxu0 %v7748
        %7855 = vmatprep.subr.mxu0 %v7753
        %7856 = vmatpush1.msra.mxu0 %v7752
        %7857 = vmatprep.subr.mxu0 0.0
        %7858 = vmatpush1.msra.mxu0 0.0
        %7859 = vmatprep.subr.mxu0 0.0
        %7860 = vmatpush1.msra.mxu0 0.0
        %7861 = vmatprep.subr.mxu0 0.0
        %7862 = vmatpush1.msra.mxu0 0.0
        %7863 = vmatprep.subr.mxu0 0.0
        %7864 = vmatpush1.msra.mxu0 0.0
        %7865 = vmatprep.subr.mxu0 0.0
        %7866 = vmatpush1.msra.mxu0 0.0
        %7867 = vmatprep.subr.mxu0 0.0
        %7868 = vmatpush1.msra.mxu0 0.0
        %7869 = vmatprep.subr.mxu0 0.0
        %7870 = vmatpush1.msra.mxu0 0.0
        %7871 = vmatprep.subr.mxu0 0.0
        %7872 = vmatpush1.msra.mxu0 0.0
        %7873 = vmatprep.subr.mxu0 0.0
        %7874 = vmatpush1.msra.mxu0 0.0
        %7875 = vmatprep.subr.mxu0 0.0
        %7876 = vmatpush1.msra.mxu0 0.0
        %7877 = vmatprep.subr.mxu0 0.0
        %7878 = vmatpush1.msra.mxu0 0.0
        %7879 = vmatprep.subr.mxu0 0.0
        %7880 = vmatpush1.msra.mxu0 0.0
        %7881 = vmatprep.subr.mxu0 0.0
        %7882 = vmatpush1.msra.mxu0 0.0
        %7883 = vmatprep.subr.mxu0 0.0
        %7884 = vmatpush1.msra.mxu0 0.0
        %7885 = vmatprep.subr.mxu0 0.0
        %7886 = vmatpush1.msra.mxu0 0.0
        %7887 = vmatprep.subr.mxu0 0.0
        %7888 = vmatpush1.msra.mxu0 0.0
        %7889 = vmatprep.mubr.f32.mxu0 0.0
        %7890 = vmatmul.mubr.f32.gmra.mrb[0].mxu0 %v7688
        %v7891 = vpop.f32.mrb[0].mxu0
        %v7892 = vadd.f32 0.0, %v7891
        %v7893 = vpop.f32.mrb[0].mxu0
        %v7894 = vadd.f32 0.0, %v7893
        %7895 = vdwg.mxu0
        %v7900 = vcombine.low %v7821, %v7823
        %v7901 = vcombine.low %v7892, %v7894
        %v7903 = vunpack.c.l.s4 1966171168
        %v7904 = vunpack.c.0.s8 %v7903
        %v7905 = vlaneseq
        %v7906 = vshrl.u32 %v7905, 7
        %v7907 = vsub.s32 %v7904, %v7906
        %v7908 = vrot.slane %v7900, %v7907
        %v7910 = vunpack.c.l.s4 1966171168
        %v7911 = vunpack.c.0.s8 %v7910
        %v7912 = vlaneseq
        %v7913 = vshrl.u32 %v7912, 7
        %v7914 = vsub.s32 %v7911, %v7913
        %v7915 = vrot.slane %v7901, %v7914
        %v7916 = vcombine.low %v7908, %v7915
        %v7918 = vunpack.c.l.s4 1966171168
        %v7919 = vunpack.c.0.s8 %v7918
        %v7920 = vlaneseq
        %v7921 = vshrl.u32 %v7920, 7
        %v7922 = vsub.s32 %v7919, %v7921
        %v7923 = vrot.slane %v7916, %v7922
        %v7925 = vadd.f32 %v7689, %v7923
        %s7926 = scalar_lea.vmem %s7, 512
        %v7927 = vld [vmem:[%s7926] sm:$0xff]
        %v7928 = vld [vmem:[%s7926 + $0x8] sm:$0xff]
        %v7929 = vld [vmem:[%s7926 + $0x10] sm:$0xff]
        %v7930 = vld [vmem:[%s7926 + $0x18] sm:$0xff]
        %v7931 = vld [vmem:[%s7926 + $0x20] sm:$0xff]
        %v7932 = vld [vmem:[%s7926 + $0x28] sm:$0xff]
        %v7933 = vld [vmem:[%s7926 + $0x30] sm:$0xff]
        %v7934 = vld [vmem:[%s7926 + $0x38] sm:$0xff]
        %v7935 = vld [vmem:[%s7926 + $0x40] sm:$0xff]
        %v7936 = vld [vmem:[%s7926 + $0x48] sm:$0xff]
        %v7937 = vld [vmem:[%s7926 + $0x50] sm:$0xff]
        %v7938 = vld [vmem:[%s7926 + $0x58] sm:$0xff]
        %v7939 = vld [vmem:[%s7926 + $0x60] sm:$0xff]
        %v7940 = vld [vmem:[%s7926 + $0x68] sm:$0xff]
        %v7941 = vld [vmem:[%s7926 + $0x70] sm:$0xff]
        %v7942 = vld [vmem:[%s7926 + $0x78] sm:$0xff]
        %v7943 = vld [vmem:[%s7926 + $0x80] sm:$0xff]
        %v7944 = vld [vmem:[%s7926 + $0x88] sm:$0xff]
        %v7945 = vld [vmem:[%s7926 + $0x90] sm:$0xff]
        %v7946 = vld [vmem:[%s7926 + $0x98] sm:$0xff]
        %v7947 = vld [vmem:[%s7926 + $0xa0] sm:$0xff]
        %v7948 = vld [vmem:[%s7926 + $0xa8] sm:$0xff]
        %v7949 = vld [vmem:[%s7926 + $0xb0] sm:$0xff]
        %v7950 = vld [vmem:[%s7926 + $0xb8] sm:$0xff]
        %v7951 = vld [vmem:[%s7926 + $0xc0] sm:$0xff]
        %v7952 = vld [vmem:[%s7926 + $0xc8] sm:$0xff]
        %v7953 = vld [vmem:[%s7926 + $0xd0] sm:$0xff]
        %v7954 = vld [vmem:[%s7926 + $0xd8] sm:$0xff]
        %v7955 = vld [vmem:[%s7926 + $0xe0] sm:$0xff]
        %v7956 = vld [vmem:[%s7926 + $0xe8] sm:$0xff]
        %v7957 = vld [vmem:[%s7926 + $0xf0] sm:$0xff]
        %v7958 = vld [vmem:[%s7926 + $0xf8] sm:$0xff]
        %v7959 = vld [vmem:[%s7926 + $0x100] sm:$0xff]
        %v7960 = vld [vmem:[%s7926 + $0x108] sm:$0xff]
        %v7961 = vld [vmem:[%s7926 + $0x110] sm:$0xff]
        %v7962 = vld [vmem:[%s7926 + $0x118] sm:$0xff]
        %v7963 = vld [vmem:[%s7926 + $0x120] sm:$0xff]
        %v7964 = vld [vmem:[%s7926 + $0x128] sm:$0xff]
        %v7965 = vld [vmem:[%s7926 + $0x130] sm:$0xff]
        %v7966 = vld [vmem:[%s7926 + $0x138] sm:$0xff]
        %v7967 = vld [vmem:[%s7926 + $0x140] sm:$0xff]
        %v7968 = vld [vmem:[%s7926 + $0x148] sm:$0xff]
        %v7969 = vld [vmem:[%s7926 + $0x150] sm:$0xff]
        %v7970 = vld [vmem:[%s7926 + $0x158] sm:$0xff]
        %v7971 = vld [vmem:[%s7926 + $0x160] sm:$0xff]
        %v7972 = vld [vmem:[%s7926 + $0x168] sm:$0xff]
        %v7973 = vld [vmem:[%s7926 + $0x170] sm:$0xff]
        %v7974 = vld [vmem:[%s7926 + $0x178] sm:$0xff]
        %v7975 = vld [vmem:[%s7926 + $0x180] sm:$0xff]
        %v7976 = vld [vmem:[%s7926 + $0x188] sm:$0xff]
        %v7977 = vld [vmem:[%s7926 + $0x190] sm:$0xff]
        %v7978 = vld [vmem:[%s7926 + $0x198] sm:$0xff]
        %v7979 = vld [vmem:[%s7926 + $0x1a0] sm:$0xff]
        %v7980 = vld [vmem:[%s7926 + $0x1a8] sm:$0xff]
        %v7981 = vld [vmem:[%s7926 + $0x1b0] sm:$0xff]
        %v7982 = vld [vmem:[%s7926 + $0x1b8] sm:$0xff]
        %v7983 = vld [vmem:[%s7926 + $0x1c0] sm:$0xff]
        %v7984 = vld [vmem:[%s7926 + $0x1c8] sm:$0xff]
        %v7985 = vld [vmem:[%s7926 + $0x1d0] sm:$0xff]
        %v7986 = vld [vmem:[%s7926 + $0x1d8] sm:$0xff]
        %v7987 = vld [vmem:[%s7926 + $0x1e0] sm:$0xff]
        %v7988 = vld [vmem:[%s7926 + $0x1e8] sm:$0xff]
        %v7989 = vld [vmem:[%s7926 + $0x1f0] sm:$0xff]
        %v7990 = vld [vmem:[%s7926 + $0x1f8] sm:$0xff]
        %v7992 = vrot.slane %v7688, 1
        %7994 = vmatprep.subr.mxu0 %v7928
        %7995 = vmatpush1.msra.mxu0 %v7927
        %7996 = vmatprep.subr.mxu0 %v7932
        %7997 = vmatpush1.msra.mxu0 %v7931
        %7998 = vmatprep.subr.mxu0 %v7936
        %7999 = vmatpush1.msra.mxu0 %v7935
        %8000 = vmatprep.subr.mxu0 %v7940
        %8001 = vmatpush1.msra.mxu0 %v7939
        %8002 = vmatprep.subr.mxu0 %v7944
        %8003 = vmatpush1.msra.mxu0 %v7943
        %8004 = vmatprep.subr.mxu0 %v7948
        %8005 = vmatpush1.msra.mxu0 %v7947
        %8006 = vmatprep.subr.mxu0 %v7952
        %8007 = vmatpush1.msra.mxu0 %v7951
        %8008 = vmatprep.subr.mxu0 %v7956
        %8009 = vmatpush1.msra.mxu0 %v7955
        %8010 = vmatprep.subr.mxu0 %v7960
        %8011 = vmatpush1.msra.mxu0 %v7959
        %8012 = vmatprep.subr.mxu0 %v7964
        %8013 = vmatpush1.msra.mxu0 %v7963
        %8014 = vmatprep.subr.mxu0 %v7968
        %8015 = vmatpush1.msra.mxu0 %v7967
        %8016 = vmatprep.subr.mxu0 %v7972
        %8017 = vmatpush1.msra.mxu0 %v7971
        %8018 = vmatprep.subr.mxu0 %v7976
        %8019 = vmatpush1.msra.mxu0 %v7975
        %8020 = vmatprep.subr.mxu0 %v7980
        %8021 = vmatpush1.msra.mxu0 %v7979
        %8022 = vmatprep.subr.mxu0 %v7984
        %8023 = vmatpush1.msra.mxu0 %v7983
        %8024 = vmatprep.subr.mxu0 %v7988
        %8025 = vmatpush1.msra.mxu0 %v7987
        %8026 = vmatprep.subr.mxu0 0.0
        %8027 = vmatpush1.msra.mxu0 0.0
        %8028 = vmatprep.subr.mxu0 0.0
        %8029 = vmatpush1.msra.mxu0 0.0
        %8030 = vmatprep.subr.mxu0 0.0
        %8031 = vmatpush1.msra.mxu0 0.0
        %8032 = vmatprep.subr.mxu0 0.0
        %8033 = vmatpush1.msra.mxu0 0.0
        %8034 = vmatprep.subr.mxu0 0.0
        %8035 = vmatpush1.msra.mxu0 0.0
        %8036 = vmatprep.subr.mxu0 0.0
        %8037 = vmatpush1.msra.mxu0 0.0
        %8038 = vmatprep.subr.mxu0 0.0
        %8039 = vmatpush1.msra.mxu0 0.0
        %8040 = vmatprep.subr.mxu0 0.0
        %8041 = vmatpush1.msra.mxu0 0.0
        %8042 = vmatprep.subr.mxu0 0.0
        %8043 = vmatpush1.msra.mxu0 0.0
        %8044 = vmatprep.subr.mxu0 0.0
        %8045 = vmatpush1.msra.mxu0 0.0
        %8046 = vmatprep.subr.mxu0 0.0
        %8047 = vmatpush1.msra.mxu0 0.0
        %8048 = vmatprep.subr.mxu0 0.0
        %8049 = vmatpush1.msra.mxu0 0.0
        %8050 = vmatprep.subr.mxu0 0.0
        %8051 = vmatpush1.msra.mxu0 0.0
        %8052 = vmatprep.subr.mxu0 0.0
        %8053 = vmatpush1.msra.mxu0 0.0
        %8054 = vmatprep.subr.mxu0 0.0
        %8055 = vmatpush1.msra.mxu0 0.0
        %8056 = vmatprep.subr.mxu0 0.0
        %8057 = vmatpush1.msra.mxu0 0.0
        %8058 = vmatprep.mubr.f32.mxu0 0.0
        %8059 = vmatmul.mubr.f32.gmra.mrb[0].mxu0 %v7992
        %v8060 = vpop.f32.mrb[0].mxu0
        %v8061 = vadd.f32 0.0, %v8060
        %v8062 = vpop.f32.mrb[0].mxu0
        %v8063 = vadd.f32 0.0, %v8062
        %8064 = vdwg.mxu0
        %8065 = vmatprep.subr.mxu0 %v7930
        %8066 = vmatpush1.msra.mxu0 %v7929
        %8067 = vmatprep.subr.mxu0 %v7934
        %8068 = vmatpush1.msra.mxu0 %v7933
        %8069 = vmatprep.subr.mxu0 %v7938
        %8070 = vmatpush1.msra.mxu0 %v7937
        %8071 = vmatprep.subr.mxu0 %v7942
        %8072 = vmatpush1.msra.mxu0 %v7941
        %8073 = vmatprep.subr.mxu0 %v7946
        %8074 = vmatpush1.msra.mxu0 %v7945
        %8075 = vmatprep.subr.mxu0 %v7950
        %8076 = vmatpush1.msra.mxu0 %v7949
        %8077 = vmatprep.subr.mxu0 %v7954
        %8078 = vmatpush1.msra.mxu0 %v7953
        %8079 = vmatprep.subr.mxu0 %v7958
        %8080 = vmatpush1.msra.mxu0 %v7957
        %8081 = vmatprep.subr.mxu0 %v7962
        %8082 = vmatpush1.msra.mxu0 %v7961
        %8083 = vmatprep.subr.mxu0 %v7966
        %8084 = vmatpush1.msra.mxu0 %v7965
        %8085 = vmatprep.subr.mxu0 %v7970
        %8086 = vmatpush1.msra.mxu0 %v7969
        %8087 = vmatprep.subr.mxu0 %v7974
        %8088 = vmatpush1.msra.mxu0 %v7973
        %8089 = vmatprep.subr.mxu0 %v7978
        %8090 = vmatpush1.msra.mxu0 %v7977
        %8091 = vmatprep.subr.mxu0 %v7982
        %8092 = vmatpush1.msra.mxu0 %v7981
        %8093 = vmatprep.subr.mxu0 %v7986
        %8094 = vmatpush1.msra.mxu0 %v7985
        %8095 = vmatprep.subr.mxu0 %v7990
        %8096 = vmatpush1.msra.mxu0 %v7989
        %8097 = vmatprep.subr.mxu0 0.0
        %8098 = vmatpush1.msra.mxu0 0.0
        %8099 = vmatprep.subr.mxu0 0.0
        %8100 = vmatpush1.msra.mxu0 0.0
        %8101 = vmatprep.subr.mxu0 0.0
        %8102 = vmatpush1.msra.mxu0 0.0
        %8103 = vmatprep.subr.mxu0 0.0
        %8104 = vmatpush1.msra.mxu0 0.0
        %8105 = vmatprep.subr.mxu0 0.0
        %8106 = vmatpush1.msra.mxu0 0.0
        %8107 = vmatprep.subr.mxu0 0.0
        %8108 = vmatpush1.msra.mxu0 0.0
        %8109 = vmatprep.subr.mxu0 0.0
        %8110 = vmatpush1.msra.mxu0 0.0
        %8111 = vmatprep.subr.mxu0 0.0
        %8112 = vmatpush1.msra.mxu0 0.0
        %8113 = vmatprep.subr.mxu0 0.0
        %8114 = vmatpush1.msra.mxu0 0.0
        %8115 = vmatprep.subr.mxu0 0.0
        %8116 = vmatpush1.msra.mxu0 0.0
        %8117 = vmatprep.subr.mxu0 0.0
        %8118 = vmatpush1.msra.mxu0 0.0
        %8119 = vmatprep.subr.mxu0 0.0
        %8120 = vmatpush1.msra.mxu0 0.0
        %8121 = vmatprep.subr.mxu0 0.0
        %8122 = vmatpush1.msra.mxu0 0.0
        %8123 = vmatprep.subr.mxu0 0.0
        %8124 = vmatpush1.msra.mxu0 0.0
        %8125 = vmatprep.subr.mxu0 0.0
        %8126 = vmatpush1.msra.mxu0 0.0
        %8127 = vmatprep.subr.mxu0 0.0
        %8128 = vmatpush1.msra.mxu0 0.0
        %8129 = vmatprep.mubr.f32.mxu0 0.0
        %8130 = vmatmul.mubr.f32.gmra.mrb[0].mxu0 %v7992
        %v8131 = vpop.f32.mrb[0].mxu0
        %v8132 = vadd.f32 0.0, %v8131
        %v8133 = vpop.f32.mrb[0].mxu0
        %v8134 = vadd.f32 0.0, %v8133
        %8135 = vdwg.mxu0
        %v8140 = vcombine.low %v8061, %v8063
        %v8141 = vcombine.low %v8132, %v8134
        %v8143 = vunpack.c.l.s4 1966171168
        %v8144 = vunpack.c.0.s8 %v8143
        %v8145 = vlaneseq
        %v8146 = vshrl.u32 %v8145, 7
        %v8147 = vsub.s32 %v8144, %v8146
        %v8148 = vrot.slane %v8140, %v8147
        %v8150 = vunpack.c.l.s4 1966171168
        %v8151 = vunpack.c.0.s8 %v8150
        %v8152 = vlaneseq
        %v8153 = vshrl.u32 %v8152, 7
        %v8154 = vsub.s32 %v8151, %v8153
        %v8155 = vrot.slane %v8141, %v8154
        %v8156 = vcombine.low %v8148, %v8155
        %v8158 = vunpack.c.l.s4 1966171168
        %v8159 = vunpack.c.0.s8 %v8158
        %v8160 = vlaneseq
        %v8161 = vshrl.u32 %v8160, 7
        %v8162 = vsub.s32 %v8159, %v8161
        %v8163 = vrot.slane %v8156, %v8162
        %v8165 = vadd.f32 %v7925, %v8163
        %s8166 = scalar_lea.vmem %s7, 1024
        %v8167 = vld [vmem:[%s8166] sm:$0xff]
        %v8168 = vld [vmem:[%s8166 + $0x8] sm:$0xff]
        %v8169 = vld [vmem:[%s8166 + $0x10] sm:$0xff]
        %v8170 = vld [vmem:[%s8166 + $0x18] sm:$0xff]
        %v8171 = vld [vmem:[%s8166 + $0x20] sm:$0xff]
        %v8172 = vld [vmem:[%s8166 + $0x28] sm:$0xff]
        %v8173 = vld [vmem:[%s8166 + $0x30] sm:$0xff]
        %v8174 = vld [vmem:[%s8166 + $0x38] sm:$0xff]
        %v8175 = vld [vmem:[%s8166 + $0x40] sm:$0xff]
        %v8176 = vld [vmem:[%s8166 + $0x48] sm:$0xff]
        %v8177 = vld [vmem:[%s8166 + $0x50] sm:$0xff]
        %v8178 = vld [vmem:[%s8166 + $0x58] sm:$0xff]
        %v8179 = vld [vmem:[%s8166 + $0x60] sm:$0xff]
        %v8180 = vld [vmem:[%s8166 + $0x68] sm:$0xff]
        %v8181 = vld [vmem:[%s8166 + $0x70] sm:$0xff]
        %v8182 = vld [vmem:[%s8166 + $0x78] sm:$0xff]
        %v8183 = vld [vmem:[%s8166 + $0x80] sm:$0xff]
        %v8184 = vld [vmem:[%s8166 + $0x88] sm:$0xff]
        %v8185 = vld [vmem:[%s8166 + $0x90] sm:$0xff]
        %v8186 = vld [vmem:[%s8166 + $0x98] sm:$0xff]
        %v8187 = vld [vmem:[%s8166 + $0xa0] sm:$0xff]
        %v8188 = vld [vmem:[%s8166 + $0xa8] sm:$0xff]
        %v8189 = vld [vmem:[%s8166 + $0xb0] sm:$0xff]
        %v8190 = vld [vmem:[%s8166 + $0xb8] sm:$0xff]
        %v8191 = vld [vmem:[%s8166 + $0xc0] sm:$0xff]
        %v8192 = vld [vmem:[%s8166 + $0xc8] sm:$0xff]
        %v8193 = vld [vmem:[%s8166 + $0xd0] sm:$0xff]
        %v8194 = vld [vmem:[%s8166 + $0xd8] sm:$0xff]
        %v8195 = vld [vmem:[%s8166 + $0xe0] sm:$0xff]
        %v8196 = vld [vmem:[%s8166 + $0xe8] sm:$0xff]
        %v8197 = vld [vmem:[%s8166 + $0xf0] sm:$0xff]
        %v8198 = vld [vmem:[%s8166 + $0xf8] sm:$0xff]
        %v8199 = vld [vmem:[%s8166 + $0x100] sm:$0xff]
        %v8200 = vld [vmem:[%s8166 + $0x108] sm:$0xff]
        %v8201 = vld [vmem:[%s8166 + $0x110] sm:$0xff]
        %v8202 = vld [vmem:[%s8166 + $0x118] sm:$0xff]
        %v8203 = vld [vmem:[%s8166 + $0x120] sm:$0xff]
        %v8204 = vld [vmem:[%s8166 + $0x128] sm:$0xff]
        %v8205 = vld [vmem:[%s8166 + $0x130] sm:$0xff]
        %v8206 = vld [vmem:[%s8166 + $0x138] sm:$0xff]
        %v8207 = vld [vmem:[%s8166 + $0x140] sm:$0xff]
        %v8208 = vld [vmem:[%s8166 + $0x148] sm:$0xff]
        %v8209 = vld [vmem:[%s8166 + $0x150] sm:$0xff]
        %v8210 = vld [vmem:[%s8166 + $0x158] sm:$0xff]
        %v8211 = vld [vmem:[%s8166 + $0x160] sm:$0xff]
        %v8212 = vld [vmem:[%s8166 + $0x168] sm:$0xff]
        %v8213 = vld [vmem:[%s8166 + $0x170] sm:$0xff]
        %v8214 = vld [vmem:[%s8166 + $0x178] sm:$0xff]
        %v8215 = vld [vmem:[%s8166 + $0x180] sm:$0xff]
        %v8216 = vld [vmem:[%s8166 + $0x188] sm:$0xff]
        %v8217 = vld [vmem:[%s8166 + $0x190] sm:$0xff]
        %v8218 = vld [vmem:[%s8166 + $0x198] sm:$0xff]
        %v8219 = vld [vmem:[%s8166 + $0x1a0] sm:$0xff]
        %v8220 = vld [vmem:[%s8166 + $0x1a8] sm:$0xff]
        %v8221 = vld [vmem:[%s8166 + $0x1b0] sm:$0xff]
        %v8222 = vld [vmem:[%s8166 + $0x1b8] sm:$0xff]
        %v8223 = vld [vmem:[%s8166 + $0x1c0] sm:$0xff]
        %v8224 = vld [vmem:[%s8166 + $0x1c8] sm:$0xff]
        %v8225 = vld [vmem:[%s8166 + $0x1d0] sm:$0xff]
        %v8226 = vld [vmem:[%s8166 + $0x1d8] sm:$0xff]
        %v8227 = vld [vmem:[%s8166 + $0x1e0] sm:$0xff]
        %v8228 = vld [vmem:[%s8166 + $0x1e8] sm:$0xff]
        %v8229 = vld [vmem:[%s8166 + $0x1f0] sm:$0xff]
        %v8230 = vld [vmem:[%s8166 + $0x1f8] sm:$0xff]
        %v8231 = vrot.slane %v7688, 2
        %8233 = vmatprep.subr.mxu0 %v8168
        %8234 = vmatpush1.msra.mxu0 %v8167
        %8235 = vmatprep.subr.mxu0 %v8172
        %8236 = vmatpush1.msra.mxu0 %v8171
        %8237 = vmatprep.subr.mxu0 %v8176
        %8238 = vmatpush1.msra.mxu0 %v8175
        %8239 = vmatprep.subr.mxu0 %v8180
        %8240 = vmatpush1.msra.mxu0 %v8179
        %8241 = vmatprep.subr.mxu0 %v8184
        %8242 = vmatpush1.msra.mxu0 %v8183
        %8243 = vmatprep.subr.mxu0 %v8188
        %8244 = vmatpush1.msra.mxu0 %v8187
        %8245 = vmatprep.subr.mxu0 %v8192
        %8246 = vmatpush1.msra.mxu0 %v8191
        %8247 = vmatprep.subr.mxu0 %v8196
        %8248 = vmatpush1.msra.mxu0 %v8195
        %8249 = vmatprep.subr.mxu0 %v8200
        %8250 = vmatpush1.msra.mxu0 %v8199
        %8251 = vmatprep.subr.mxu0 %v8204
        %8252 = vmatpush1.msra.mxu0 %v8203
        %8253 = vmatprep.subr.mxu0 %v8208
        %8254 = vmatpush1.msra.mxu0 %v8207
        %8255 = vmatprep.subr.mxu0 %v8212
        %8256 = vmatpush1.msra.mxu0 %v8211
        %8257 = vmatprep.subr.mxu0 %v8216
        %8258 = vmatpush1.msra.mxu0 %v8215
        %8259 = vmatprep.subr.mxu0 %v8220
        %8260 = vmatpush1.msra.mxu0 %v8219
        %8261 = vmatprep.subr.mxu0 %v8224
        %8262 = vmatpush1.msra.mxu0 %v8223
        %8263 = vmatprep.subr.mxu0 %v8228
        %8264 = vmatpush1.msra.mxu0 %v8227
        %8265 = vmatprep.subr.mxu0 0.0
        %8266 = vmatpush1.msra.mxu0 0.0
        %8267 = vmatprep.subr.mxu0 0.0
        %8268 = vmatpush1.msra.mxu0 0.0
        %8269 = vmatprep.subr.mxu0 0.0
        %8270 = vmatpush1.msra.mxu0 0.0
        %8271 = vmatprep.subr.mxu0 0.0
        %8272 = vmatpush1.msra.mxu0 0.0
        %8273 = vmatprep.subr.mxu0 0.0
        %8274 = vmatpush1.msra.mxu0 0.0
        %8275 = vmatprep.subr.mxu0 0.0
        %8276 = vmatpush1.msra.mxu0 0.0
        %8277 = vmatprep.subr.mxu0 0.0
        %8278 = vmatpush1.msra.mxu0 0.0
        %8279 = vmatprep.subr.mxu0 0.0
        %8280 = vmatpush1.msra.mxu0 0.0
        %8281 = vmatprep.subr.mxu0 0.0
        %8282 = vmatpush1.msra.mxu0 0.0
        %8283 = vmatprep.subr.mxu0 0.0
        %8284 = vmatpush1.msra.mxu0 0.0
        %8285 = vmatprep.subr.mxu0 0.0
        %8286 = vmatpush1.msra.mxu0 0.0
        %8287 = vmatprep.subr.mxu0 0.0
        %8288 = vmatpush1.msra.mxu0 0.0
        %8289 = vmatprep.subr.mxu0 0.0
        %8290 = vmatpush1.msra.mxu0 0.0
        %8291 = vmatprep.subr.mxu0 0.0
        %8292 = vmatpush1.msra.mxu0 0.0
        %8293 = vmatprep.subr.mxu0 0.0
        %8294 = vmatpush1.msra.mxu0 0.0
        %8295 = vmatprep.subr.mxu0 0.0
        %8296 = vmatpush1.msra.mxu0 0.0
        %8297 = vmatprep.mubr.f32.mxu0 0.0
        %8298 = vmatmul.mubr.f32.gmra.mrb[0].mxu0 %v8231
        %v8299 = vpop.f32.mrb[0].mxu0
        %v8300 = vadd.f32 0.0, %v8299
        %v8301 = vpop.f32.mrb[0].mxu0
        %v8302 = vadd.f32 0.0, %v8301
        %8303 = vdwg.mxu0
        %8304 = vmatprep.subr.mxu0 %v8170
        %8305 = vmatpush1.msra.mxu0 %v8169
        %8306 = vmatprep.subr.mxu0 %v8174
        %8307 = vmatpush1.msra.mxu0 %v8173
        %8308 = vmatprep.subr.mxu0 %v8178
        %8309 = vmatpush1.msra.mxu0 %v8177
        %8310 = vmatprep.subr.mxu0 %v8182
        %8311 = vmatpush1.msra.mxu0 %v8181
        %8312 = vmatprep.subr.mxu0 %v8186
        %8313 = vmatpush1.msra.mxu0 %v8185
        %8314 = vmatprep.subr.mxu0 %v8190
        %8315 = vmatpush1.msra.mxu0 %v8189
        %8316 = vmatprep.subr.mxu0 %v8194
        %8317 = vmatpush1.msra.mxu0 %v8193
        %8318 = vmatprep.subr.mxu0 %v8198
        %8319 = vmatpush1.msra.mxu0 %v8197
        %8320 = vmatprep.subr.mxu0 %v8202
        %8321 = vmatpush1.msra.mxu0 %v8201
        %8322 = vmatprep.subr.mxu0 %v8206
        %8323 = vmatpush1.msra.mxu0 %v8205
        %8324 = vmatprep.subr.mxu0 %v8210
        %8325 = vmatpush1.msra.mxu0 %v8209
        %8326 = vmatprep.subr.mxu0 %v8214
        %8327 = vmatpush1.msra.mxu0 %v8213
        %8328 = vmatprep.subr.mxu0 %v8218
        %8329 = vmatpush1.msra.mxu0 %v8217
        %8330 = vmatprep.subr.mxu0 %v8222
        %8331 = vmatpush1.msra.mxu0 %v8221
        %8332 = vmatprep.subr.mxu0 %v8226
        %8333 = vmatpush1.msra.mxu0 %v8225
        %8334 = vmatprep.subr.mxu0 %v8230
        %8335 = vmatpush1.msra.mxu0 %v8229
        %8336 = vmatprep.subr.mxu0 0.0
        %8337 = vmatpush1.msra.mxu0 0.0
        %8338 = vmatprep.subr.mxu0 0.0
        %8339 = vmatpush1.msra.mxu0 0.0
        %8340 = vmatprep.subr.mxu0 0.0
        %8341 = vmatpush1.msra.mxu0 0.0
        %8342 = vmatprep.subr.mxu0 0.0
        %8343 = vmatpush1.msra.mxu0 0.0
        %8344 = vmatprep.subr.mxu0 0.0
        %8345 = vmatpush1.msra.mxu0 0.0
        %8346 = vmatprep.subr.mxu0 0.0
        %8347 = vmatpush1.msra.mxu0 0.0
        %8348 = vmatprep.subr.mxu0 0.0
        %8349 = vmatpush1.msra.mxu0 0.0
        %8350 = vmatprep.subr.mxu0 0.0
        %8351 = vmatpush1.msra.mxu0 0.0
        %8352 = vmatprep.subr.mxu0 0.0
        %8353 = vmatpush1.msra.mxu0 0.0
        %8354 = vmatprep.subr.mxu0 0.0
        %8355 = vmatpush1.msra.mxu0 0.0
        %8356 = vmatprep.subr.mxu0 0.0
        %8357 = vmatpush1.msra.mxu0 0.0
        %8358 = vmatprep.subr.mxu0 0.0
        %8359 = vmatpush1.msra.mxu0 0.0
        %8360 = vmatprep.subr.mxu0 0.0
        %8361 = vmatpush1.msra.mxu0 0.0
        %8362 = vmatprep.subr.mxu0 0.0
        %8363 = vmatpush1.msra.mxu0 0.0
        %8364 = vmatprep.subr.mxu0 0.0
        %8365 = vmatpush1.msra.mxu0 0.0
        %8366 = vmatprep.subr.mxu0 0.0
        %8367 = vmatpush1.msra.mxu0 0.0
        %8368 = vmatprep.mubr.f32.mxu0 0.0
        %8369 = vmatmul.mubr.f32.gmra.mrb[0].mxu0 %v8231
        %v8370 = vpop.f32.mrb[0].mxu0
        %v8371 = vadd.f32 0.0, %v8370
        %v8372 = vpop.f32.mrb[0].mxu0
        %v8373 = vadd.f32 0.0, %v8372
        %8374 = vdwg.mxu0
        %v8379 = vcombine.low %v8300, %v8302
        %v8380 = vcombine.low %v8371, %v8373
        %v8382 = vunpack.c.l.s4 1966171168
        %v8383 = vunpack.c.0.s8 %v8382
        %v8384 = vlaneseq
        %v8385 = vshrl.u32 %v8384, 7
        %v8386 = vsub.s32 %v8383, %v8385
        %v8387 = vrot.slane %v8379, %v8386
        %v8389 = vunpack.c.l.s4 1966171168
        %v8390 = vunpack.c.0.s8 %v8389
        %v8391 = vlaneseq
        %v8392 = vshrl.u32 %v8391, 7
        %v8393 = vsub.s32 %v8390, %v8392
        %v8394 = vrot.slane %v8380, %v8393
        %v8395 = vcombine.low %v8387, %v8394
        %v8397 = vunpack.c.l.s4 1966171168
        %v8398 = vunpack.c.0.s8 %v8397
        %v8399 = vlaneseq
        %v8400 = vshrl.u32 %v8399, 7
        %v8401 = vsub.s32 %v8398, %v8400
        %v8402 = vrot.slane %v8395, %v8401
        %v8404 = vadd.f32 %v8165, %v8402
        %s8405 = scalar_lea.vmem %s7, 1536
        %v8406 = vld [vmem:[%s8405] sm:$0xff]
        %v8407 = vld [vmem:[%s8405 + $0x8] sm:$0xff]
        %v8408 = vld [vmem:[%s8405 + $0x10] sm:$0xff]
        %v8409 = vld [vmem:[%s8405 + $0x18] sm:$0xff]
        %v8410 = vld [vmem:[%s8405 + $0x20] sm:$0xff]
        %v8411 = vld [vmem:[%s8405 + $0x28] sm:$0xff]
        %v8412 = vld [vmem:[%s8405 + $0x30] sm:$0xff]
        %v8413 = vld [vmem:[%s8405 + $0x38] sm:$0xff]
        %v8414 = vld [vmem:[%s8405 + $0x40] sm:$0xff]
        %v8415 = vld [vmem:[%s8405 + $0x48] sm:$0xff]
        %v8416 = vld [vmem:[%s8405 + $0x50] sm:$0xff]
        %v8417 = vld [vmem:[%s8405 + $0x58] sm:$0xff]
        %v8418 = vld [vmem:[%s8405 + $0x60] sm:$0xff]
        %v8419 = vld [vmem:[%s8405 + $0x68] sm:$0xff]
        %v8420 = vld [vmem:[%s8405 + $0x70] sm:$0xff]
        %v8421 = vld [vmem:[%s8405 + $0x78] sm:$0xff]
        %v8422 = vld [vmem:[%s8405 + $0x80] sm:$0xff]
        %v8423 = vld [vmem:[%s8405 + $0x88] sm:$0xff]
        %v8424 = vld [vmem:[%s8405 + $0x90] sm:$0xff]
        %v8425 = vld [vmem:[%s8405 + $0x98] sm:$0xff]
        %v8426 = vld [vmem:[%s8405 + $0xa0] sm:$0xff]
        %v8427 = vld [vmem:[%s8405 + $0xa8] sm:$0xff]
        %v8428 = vld [vmem:[%s8405 + $0xb0] sm:$0xff]
        %v8429 = vld [vmem:[%s8405 + $0xb8] sm:$0xff]
        %v8430 = vld [vmem:[%s8405 + $0xc0] sm:$0xff]
        %v8431 = vld [vmem:[%s8405 + $0xc8] sm:$0xff]
        %v8432 = vld [vmem:[%s8405 + $0xd0] sm:$0xff]
        %v8433 = vld [vmem:[%s8405 + $0xd8] sm:$0xff]
        %v8434 = vld [vmem:[%s8405 + $0xe0] sm:$0xff]
        %v8435 = vld [vmem:[%s8405 + $0xe8] sm:$0xff]
        %v8436 = vld [vmem:[%s8405 + $0xf0] sm:$0xff]
        %v8437 = vld [vmem:[%s8405 + $0xf8] sm:$0xff]
        %v8438 = vld [vmem:[%s8405 + $0x100] sm:$0xff]
        %v8439 = vld [vmem:[%s8405 + $0x108] sm:$0xff]
        %v8440 = vld [vmem:[%s8405 + $0x110] sm:$0xff]
        %v8441 = vld [vmem:[%s8405 + $0x118] sm:$0xff]
        %v8442 = vld [vmem:[%s8405 + $0x120] sm:$0xff]
        %v8443 = vld [vmem:[%s8405 + $0x128] sm:$0xff]
        %v8444 = vld [vmem:[%s8405 + $0x130] sm:$0xff]
        %v8445 = vld [vmem:[%s8405 + $0x138] sm:$0xff]
        %v8446 = vld [vmem:[%s8405 + $0x140] sm:$0xff]
        %v8447 = vld [vmem:[%s8405 + $0x148] sm:$0xff]
        %v8448 = vld [vmem:[%s8405 + $0x150] sm:$0xff]
        %v8449 = vld [vmem:[%s8405 + $0x158] sm:$0xff]
        %v8450 = vld [vmem:[%s8405 + $0x160] sm:$0xff]
        %v8451 = vld [vmem:[%s8405 + $0x168] sm:$0xff]
        %v8452 = vld [vmem:[%s8405 + $0x170] sm:$0xff]
        %v8453 = vld [vmem:[%s8405 + $0x178] sm:$0xff]
        %v8454 = vld [vmem:[%s8405 + $0x180] sm:$0xff]
        %v8455 = vld [vmem:[%s8405 + $0x188] sm:$0xff]
        %v8456 = vld [vmem:[%s8405 + $0x190] sm:$0xff]
        %v8457 = vld [vmem:[%s8405 + $0x198] sm:$0xff]
        %v8458 = vld [vmem:[%s8405 + $0x1a0] sm:$0xff]
        %v8459 = vld [vmem:[%s8405 + $0x1a8] sm:$0xff]
        %v8460 = vld [vmem:[%s8405 + $0x1b0] sm:$0xff]
        %v8461 = vld [vmem:[%s8405 + $0x1b8] sm:$0xff]
        %v8462 = vld [vmem:[%s8405 + $0x1c0] sm:$0xff]
        %v8463 = vld [vmem:[%s8405 + $0x1c8] sm:$0xff]
        %v8464 = vld [vmem:[%s8405 + $0x1d0] sm:$0xff]
        %v8465 = vld [vmem:[%s8405 + $0x1d8] sm:$0xff]
        %v8466 = vld [vmem:[%s8405 + $0x1e0] sm:$0xff]
        %v8467 = vld [vmem:[%s8405 + $0x1e8] sm:$0xff]
        %v8468 = vld [vmem:[%s8405 + $0x1f0] sm:$0xff]
        %v8469 = vld [vmem:[%s8405 + $0x1f8] sm:$0xff]
        %v8470 = vrot.slane %v7688, 3
        %8472 = vmatprep.subr.mxu0 %v8407
        %8473 = vmatpush1.msra.mxu0 %v8406
        %8474 = vmatprep.subr.mxu0 %v8411
        %8475 = vmatpush1.msra.mxu0 %v8410
        %8476 = vmatprep.subr.mxu0 %v8415
        %8477 = vmatpush1.msra.mxu0 %v8414
        %8478 = vmatprep.subr.mxu0 %v8419
        %8479 = vmatpush1.msra.mxu0 %v8418
        %8480 = vmatprep.subr.mxu0 %v8423
        %8481 = vmatpush1.msra.mxu0 %v8422
        %8482 = vmatprep.subr.mxu0 %v8427
        %8483 = vmatpush1.msra.mxu0 %v8426
        %8484 = vmatprep.subr.mxu0 %v8431
        %8485 = vmatpush1.msra.mxu0 %v8430
        %8486 = vmatprep.subr.mxu0 %v8435
        %8487 = vmatpush1.msra.mxu0 %v8434
        %8488 = vmatprep.subr.mxu0 %v8439
        %8489 = vmatpush1.msra.mxu0 %v8438
        %8490 = vmatprep.subr.mxu0 %v8443
        %8491 = vmatpush1.msra.mxu0 %v8442
        %8492 = vmatprep.subr.mxu0 %v8447
        %8493 = vmatpush1.msra.mxu0 %v8446
        %8494 = vmatprep.subr.mxu0 %v8451
        %8495 = vmatpush1.msra.mxu0 %v8450
        %8496 = vmatprep.subr.mxu0 %v8455
        %8497 = vmatpush1.msra.mxu0 %v8454
        %8498 = vmatprep.subr.mxu0 %v8459
        %8499 = vmatpush1.msra.mxu0 %v8458
        %8500 = vmatprep.subr.mxu0 %v8463
        %8501 = vmatpush1.msra.mxu0 %v8462
        %8502 = vmatprep.subr.mxu0 %v8467
        %8503 = vmatpush1.msra.mxu0 %v8466
        %8504 = vmatprep.subr.mxu0 0.0
        %8505 = vmatpush1.msra.mxu0 0.0
        %8506 = vmatprep.subr.mxu0 0.0
        %8507 = vmatpush1.msra.mxu0 0.0
        %8508 = vmatprep.subr.mxu0 0.0
        %8509 = vmatpush1.msra.mxu0 0.0
        %8510 = vmatprep.subr.mxu0 0.0
        %8511 = vmatpush1.msra.mxu0 0.0
        %8512 = vmatprep.subr.mxu0 0.0
        %8513 = vmatpush1.msra.mxu0 0.0
        %8514 = vmatprep.subr.mxu0 0.0
        %8515 = vmatpush1.msra.mxu0 0.0
        %8516 = vmatprep.subr.mxu0 0.0
        %8517 = vmatpush1.msra.mxu0 0.0
        %8518 = vmatprep.subr.mxu0 0.0
        %8519 = vmatpush1.msra.mxu0 0.0
        %8520 = vmatprep.subr.mxu0 0.0
        %8521 = vmatpush1.msra.mxu0 0.0
        %8522 = vmatprep.subr.mxu0 0.0
        %8523 = vmatpush1.msra.mxu0 0.0
        %8524 = vmatprep.subr.mxu0 0.0
        %8525 = vmatpush1.msra.mxu0 0.0
        %8526 = vmatprep.subr.mxu0 0.0
        %8527 = vmatpush1.msra.mxu0 0.0
        %8528 = vmatprep.subr.mxu0 0.0
        %8529 = vmatpush1.msra.mxu0 0.0
        %8530 = vmatprep.subr.mxu0 0.0
        %8531 = vmatpush1.msra.mxu0 0.0
        %8532 = vmatprep.subr.mxu0 0.0
        %8533 = vmatpush1.msra.mxu0 0.0
        %8534 = vmatprep.subr.mxu0 0.0
        %8535 = vmatpush1.msra.mxu0 0.0
        %8536 = vmatprep.mubr.f32.mxu0 0.0
        %8537 = vmatmul.mubr.f32.gmra.mrb[0].mxu0 %v8470
        %v8538 = vpop.f32.mrb[0].mxu0
        %v8539 = vadd.f32 0.0, %v8538
        %v8540 = vpop.f32.mrb[0].mxu0
        %v8541 = vadd.f32 0.0, %v8540
        %8542 = vdwg.mxu0
        %8543 = vmatprep.subr.mxu0 %v8409
        %8544 = vmatpush1.msra.mxu0 %v8408
        %8545 = vmatprep.subr.mxu0 %v8413
        %8546 = vmatpush1.msra.mxu0 %v8412
        %8547 = vmatprep.subr.mxu0 %v8417
        %8548 = vmatpush1.msra.mxu0 %v8416
        %8549 = vmatprep.subr.mxu0 %v8421
        %8550 = vmatpush1.msra.mxu0 %v8420
        %8551 = vmatprep.subr.mxu0 %v8425
        %8552 = vmatpush1.msra.mxu0 %v8424
        %8553 = vmatprep.subr.mxu0 %v8429
        %8554 = vmatpush1.msra.mxu0 %v8428
        %8555 = vmatprep.subr.mxu0 %v8433
        %8556 = vmatpush1.msra.mxu0 %v8432
        %8557 = vmatprep.subr.mxu0 %v8437
        %8558 = vmatpush1.msra.mxu0 %v8436
        %8559 = vmatprep.subr.mxu0 %v8441
        %8560 = vmatpush1.msra.mxu0 %v8440
        %8561 = vmatprep.subr.mxu0 %v8445
        %8562 = vmatpush1.msra.mxu0 %v8444
        %8563 = vmatprep.subr.mxu0 %v8449
        %8564 = vmatpush1.msra.mxu0 %v8448
        %8565 = vmatprep.subr.mxu0 %v8453
        %8566 = vmatpush1.msra.mxu0 %v8452
        %8567 = vmatprep.subr.mxu0 %v8457
        %8568 = vmatpush1.msra.mxu0 %v8456
        %8569 = vmatprep.subr.mxu0 %v8461
        %8570 = vmatpush1.msra.mxu0 %v8460
        %8571 = vmatprep.subr.mxu0 %v8465
        %8572 = vmatpush1.msra.mxu0 %v8464
        %8573 = vmatprep.subr.mxu0 %v8469
        %8574 = vmatpush1.msra.mxu0 %v8468
        %8575 = vmatprep.subr.mxu0 0.0
        %8576 = vmatpush1.msra.mxu0 0.0
        %8577 = vmatprep.subr.mxu0 0.0
        %8578 = vmatpush1.msra.mxu0 0.0
        %8579 = vmatprep.subr.mxu0 0.0
        %8580 = vmatpush1.msra.mxu0 0.0
        %8581 = vmatprep.subr.mxu0 0.0
        %8582 = vmatpush1.msra.mxu0 0.0
        %8583 = vmatprep.subr.mxu0 0.0
        %8584 = vmatpush1.msra.mxu0 0.0
        %8585 = vmatprep.subr.mxu0 0.0
        %8586 = vmatpush1.msra.mxu0 0.0
        %8587 = vmatprep.subr.mxu0 0.0
        %8588 = vmatpush1.msra.mxu0 0.0
        %8589 = vmatprep.subr.mxu0 0.0
        %8590 = vmatpush1.msra.mxu0 0.0
        %8591 = vmatprep.subr.mxu0 0.0
        %8592 = vmatpush1.msra.mxu0 0.0
        %8593 = vmatprep.subr.mxu0 0.0
        %8594 = vmatpush1.msra.mxu0 0.0
        %8595 = vmatprep.subr.mxu0 0.0
        %8596 = vmatpush1.msra.mxu0 0.0
        %8597 = vmatprep.subr.mxu0 0.0
        %8598 = vmatpush1.msra.mxu0 0.0
        %8599 = vmatprep.subr.mxu0 0.0
        %8600 = vmatpush1.msra.mxu0 0.0
        %8601 = vmatprep.subr.mxu0 0.0
        %8602 = vmatpush1.msra.mxu0 0.0
        %8603 = vmatprep.subr.mxu0 0.0
        %8604 = vmatpush1.msra.mxu0 0.0
        %8605 = vmatprep.subr.mxu0 0.0
        %8606 = vmatpush1.msra.mxu0 0.0
        %8607 = vmatprep.mubr.f32.mxu0 0.0
        %8608 = vmatmul.mubr.f32.gmra.mrb[0].mxu0 %v8470
        %v8609 = vpop.f32.mrb[0].mxu0
        %v8610 = vadd.f32 0.0, %v8609
        %v8611 = vpop.f32.mrb[0].mxu0
        %v8612 = vadd.f32 0.0, %v8611
        %8613 = vdwg.mxu0
        %v8618 = vcombine.low %v8539, %v8541
        %v8619 = vcombine.low %v8610, %v8612
        %v8621 = vunpack.c.l.s4 1966171168
        %v8622 = vunpack.c.0.s8 %v8621
        %v8623 = vlaneseq
        %v8624 = vshrl.u32 %v8623, 7
        %v8625 = vsub.s32 %v8622, %v8624
        %v8626 = vrot.slane %v8618, %v8625
        %v8628 = vunpack.c.l.s4 1966171168
        %v8629 = vunpack.c.0.s8 %v8628
        %v8630 = vlaneseq
        %v8631 = vshrl.u32 %v8630, 7
        %v8632 = vsub.s32 %v8629, %v8631
        %v8633 = vrot.slane %v8619, %v8632
        %v8634 = vcombine.low %v8626, %v8633
        %v8636 = vunpack.c.l.s4 1966171168
        %v8637 = vunpack.c.0.s8 %v8636
        %v8638 = vlaneseq
        %v8639 = vshrl.u32 %v8638, 7
        %v8640 = vsub.s32 %v8637, %v8639
        %v8641 = vrot.slane %v8634, %v8640
        %v8643 = vadd.f32 %v8404, %v8641
        %v8644 = vmax.f32 %v8643, 0.0
        %v8645 = vld [vmem:[%s9] sm:$0xff]
        %v8646 = vld [vmem:[%s9 + $0x8] sm:$0xff]
        %v8647 = vld [vmem:[%s9 + $0x10] sm:$0xff]
        %v8648 = vld [vmem:[%s9 + $0x18] sm:$0xff]
        %v8649 = vld [vmem:[%s9 + $0x20] sm:$0xff]
        %v8650 = vld [vmem:[%s9 + $0x28] sm:$0xff]
        %v8651 = vld [vmem:[%s9 + $0x30] sm:$0xff]
        %v8652 = vld [vmem:[%s9 + $0x38] sm:$0xff]
        %v8653 = vld [vmem:[%s9 + $0x40] sm:$0xff]
        %v8654 = vld [vmem:[%s9 + $0x48] sm:$0xff]
        %v8655 = vld [vmem:[%s9 + $0x50] sm:$0xff]
        %v8656 = vld [vmem:[%s9 + $0x58] sm:$0xff]
        %v8657 = vld [vmem:[%s9 + $0x60] sm:$0xff]
        %v8658 = vld [vmem:[%s9 + $0x68] sm:$0xff]
        %v8659 = vld [vmem:[%s9 + $0x70] sm:$0xff]
        %v8660 = vld [vmem:[%s9 + $0x78] sm:$0xff]
        %v8661 = vld [vmem:[%s9 + $0x80] sm:$0xff]
        %v8662 = vld [vmem:[%s9 + $0x88] sm:$0xff]
        %v8663 = vld [vmem:[%s9 + $0x90] sm:$0xff]
        %v8664 = vld [vmem:[%s9 + $0x98] sm:$0xff]
        %v8665 = vld [vmem:[%s9 + $0xa0] sm:$0xff]
        %v8666 = vld [vmem:[%s9 + $0xa8] sm:$0xff]
        %v8667 = vld [vmem:[%s9 + $0xb0] sm:$0xff]
        %v8668 = vld [vmem:[%s9 + $0xb8] sm:$0xff]
        %v8669 = vld [vmem:[%s9 + $0xc0] sm:$0xff]
        %v8670 = vld [vmem:[%s9 + $0xc8] sm:$0xff]
        %v8671 = vld [vmem:[%s9 + $0xd0] sm:$0xff]
        %v8672 = vld [vmem:[%s9 + $0xd8] sm:$0xff]
        %v8673 = vld [vmem:[%s9 + $0xe0] sm:$0xff]
        %v8674 = vld [vmem:[%s9 + $0xe8] sm:$0xff]
        %v8675 = vld [vmem:[%s9 + $0xf0] sm:$0xff]
        %v8676 = vld [vmem:[%s9 + $0xf8] sm:$0xff]
        %v8677 = vld [vmem:[%s9 + $0x100] sm:$0xff]
        %v8678 = vld [vmem:[%s9 + $0x108] sm:$0xff]
        %v8679 = vld [vmem:[%s9 + $0x110] sm:$0xff]
        %v8680 = vld [vmem:[%s9 + $0x118] sm:$0xff]
        %v8681 = vld [vmem:[%s9 + $0x120] sm:$0xff]
        %v8682 = vld [vmem:[%s9 + $0x128] sm:$0xff]
        %v8683 = vld [vmem:[%s9 + $0x130] sm:$0xff]
        %v8684 = vld [vmem:[%s9 + $0x138] sm:$0xff]
        %v8685 = vld [vmem:[%s9 + $0x140] sm:$0xff]
        %v8686 = vld [vmem:[%s9 + $0x148] sm:$0xff]
        %v8687 = vld [vmem:[%s9 + $0x150] sm:$0xff]
        %v8688 = vld [vmem:[%s9 + $0x158] sm:$0xff]
        %v8689 = vld [vmem:[%s9 + $0x160] sm:$0xff]
        %v8690 = vld [vmem:[%s9 + $0x168] sm:$0xff]
        %v8691 = vld [vmem:[%s9 + $0x170] sm:$0xff]
        %v8692 = vld [vmem:[%s9 + $0x178] sm:$0xff]
        %v8693 = vld [vmem:[%s9 + $0x180] sm:$0xff]
        %v8694 = vld [vmem:[%s9 + $0x188] sm:$0xff]
        %v8695 = vld [vmem:[%s9 + $0x190] sm:$0xff]
        %v8696 = vld [vmem:[%s9 + $0x198] sm:$0xff]
        %v8697 = vld [vmem:[%s9 + $0x1a0] sm:$0xff]
        %v8698 = vld [vmem:[%s9 + $0x1a8] sm:$0xff]
        %v8699 = vld [vmem:[%s9 + $0x1b0] sm:$0xff]
        %v8700 = vld [vmem:[%s9 + $0x1b8] sm:$0xff]
        %v8701 = vld [vmem:[%s9 + $0x1c0] sm:$0xff]
        %v8702 = vld [vmem:[%s9 + $0x1c8] sm:$0xff]
        %v8703 = vld [vmem:[%s9 + $0x1d0] sm:$0xff]
        %v8704 = vld [vmem:[%s9 + $0x1d8] sm:$0xff]
        %v8705 = vld [vmem:[%s9 + $0x1e0] sm:$0xff]
        %v8706 = vld [vmem:[%s9 + $0x1e8] sm:$0xff]
        %v8707 = vld [vmem:[%s9 + $0x1f0] sm:$0xff]
        %v8708 = vld [vmem:[%s9 + $0x1f8] sm:$0xff]
        %v8709 = vld [vmem:[%s10] sm:$0x1]
        %v8711 = vlaneseq
        %v8712 = vshrl.u32 %v8711, 7
        %v8713 = vsub.s32 0, %v8712
        %v8714 = vrot.slane %v8644, %v8713
        %v8715 = vlaneseq
        %v8716 = vshrl.u32 %v8715, 7
        %v8717 = vsub.s32 1, %v8716
        %v8718 = vrot.slane %v8644, %v8717
        %v8719 = vlaneseq
        %v8720 = vshrl.u32 %v8719, 7
        %v8721 = vsub.s32 2, %v8720
        %v8722 = vrot.slane %v8644, %v8721
        %v8723 = vlaneseq
        %v8724 = vshrl.u32 %v8723, 7
        %v8725 = vsub.s32 3, %v8724
        %v8726 = vrot.slane %v8644, %v8725
        %8731 = vmatprep.subr.mxu0 0.0
        %8732 = vmatpush1.msra.mxu0 %v8645
        %8733 = vmatprep.subr.mxu0 0.0
        %8734 = vmatpush1.msra.mxu0 %v8646
        %8735 = vmatprep.subr.mxu0 0.0
        %8736 = vmatpush1.msra.mxu0 %v8647
        %8737 = vmatprep.subr.mxu0 0.0
        %8738 = vmatpush1.msra.mxu0 %v8648
        %8739 = vmatprep.subr.mxu0 0.0
        %8740 = vmatpush1.msra.mxu0 %v8649
        %8741 = vmatprep.subr.mxu0 0.0
        %8742 = vmatpush1.msra.mxu0 %v8650
        %8743 = vmatprep.subr.mxu0 0.0
        %8744 = vmatpush1.msra.mxu0 %v8651
        %8745 = vmatprep.subr.mxu0 0.0
        %8746 = vmatpush1.msra.mxu0 %v8652
        %8747 = vmatprep.subr.mxu0 0.0
        %8748 = vmatpush1.msra.mxu0 %v8653
        %8749 = vmatprep.subr.mxu0 0.0
        %8750 = vmatpush1.msra.mxu0 %v8654
        %8751 = vmatprep.subr.mxu0 0.0
        %8752 = vmatpush1.msra.mxu0 %v8655
        %8753 = vmatprep.subr.mxu0 0.0
        %8754 = vmatpush1.msra.mxu0 %v8656
        %8755 = vmatprep.subr.mxu0 0.0
        %8756 = vmatpush1.msra.mxu0 %v8657
        %8757 = vmatprep.subr.mxu0 0.0
        %8758 = vmatpush1.msra.mxu0 %v8658
        %8759 = vmatprep.subr.mxu0 0.0
        %8760 = vmatpush1.msra.mxu0 %v8659
        %8761 = vmatprep.subr.mxu0 0.0
        %8762 = vmatpush1.msra.mxu0 %v8660
        %8763 = vmatprep.subr.mxu0 0.0
        %8764 = vmatpush1.msra.mxu0 %v8661
        %8765 = vmatprep.subr.mxu0 0.0
        %8766 = vmatpush1.msra.mxu0 %v8662
        %8767 = vmatprep.subr.mxu0 0.0
        %8768 = vmatpush1.msra.mxu0 %v8663
        %8769 = vmatprep.subr.mxu0 0.0
        %8770 = vmatpush1.msra.mxu0 %v8664
        %8771 = vmatprep.subr.mxu0 0.0
        %8772 = vmatpush1.msra.mxu0 %v8665
        %8773 = vmatprep.subr.mxu0 0.0
        %8774 = vmatpush1.msra.mxu0 %v8666
        %8775 = vmatprep.subr.mxu0 0.0
        %8776 = vmatpush1.msra.mxu0 %v8667
        %8777 = vmatprep.subr.mxu0 0.0
        %8778 = vmatpush1.msra.mxu0 %v8668
        %8779 = vmatprep.subr.mxu0 0.0
        %8780 = vmatpush1.msra.mxu0 %v8669
        %8781 = vmatprep.subr.mxu0 0.0
        %8782 = vmatpush1.msra.mxu0 %v8670
        %8783 = vmatprep.subr.mxu0 0.0
        %8784 = vmatpush1.msra.mxu0 %v8671
        %8785 = vmatprep.subr.mxu0 0.0
        %8786 = vmatpush1.msra.mxu0 %v8672
        %8787 = vmatprep.subr.mxu0 0.0
        %8788 = vmatpush1.msra.mxu0 %v8673
        %8789 = vmatprep.subr.mxu0 0.0
        %8790 = vmatpush1.msra.mxu0 %v8674
        %8791 = vmatprep.subr.mxu0 0.0
        %8792 = vmatpush1.msra.mxu0 %v8675
        %8793 = vmatprep.subr.mxu0 0.0
        %8794 = vmatpush1.msra.mxu0 %v8676
        %8795 = vmatprep.mubr.f32.mxu0 %v8718
        %8796 = vmatmul.mubr.f32.gmra.mrb[0].mxu0 %v8714
        %v8797 = vpop.f32.mrb[0].mxu0
        %v8798 = vadd.f32 %v8709, %v8797
        %v8799 = vpop.f32.mrb[0].mxu0
        %8800 = vdwg.mxu0
        %8801 = vmatprep.subr.mxu0 0.0
        %8802 = vmatpush1.msra.mxu0 %v8677
        %8803 = vmatprep.subr.mxu0 0.0
        %8804 = vmatpush1.msra.mxu0 %v8678
        %8805 = vmatprep.subr.mxu0 0.0
        %8806 = vmatpush1.msra.mxu0 %v8679
        %8807 = vmatprep.subr.mxu0 0.0
        %8808 = vmatpush1.msra.mxu0 %v8680
        %8809 = vmatprep.subr.mxu0 0.0
        %8810 = vmatpush1.msra.mxu0 %v8681
        %8811 = vmatprep.subr.mxu0 0.0
        %8812 = vmatpush1.msra.mxu0 %v8682
        %8813 = vmatprep.subr.mxu0 0.0
        %8814 = vmatpush1.msra.mxu0 %v8683
        %8815 = vmatprep.subr.mxu0 0.0
        %8816 = vmatpush1.msra.mxu0 %v8684
        %8817 = vmatprep.subr.mxu0 0.0
        %8818 = vmatpush1.msra.mxu0 %v8685
        %8819 = vmatprep.subr.mxu0 0.0
        %8820 = vmatpush1.msra.mxu0 %v8686
        %8821 = vmatprep.subr.mxu0 0.0
        %8822 = vmatpush1.msra.mxu0 %v8687
        %8823 = vmatprep.subr.mxu0 0.0
        %8824 = vmatpush1.msra.mxu0 %v8688
        %8825 = vmatprep.subr.mxu0 0.0
        %8826 = vmatpush1.msra.mxu0 %v8689
        %8827 = vmatprep.subr.mxu0 0.0
        %8828 = vmatpush1.msra.mxu0 %v8690
        %8829 = vmatprep.subr.mxu0 0.0
        %8830 = vmatpush1.msra.mxu0 %v8691
        %8831 = vmatprep.subr.mxu0 0.0
        %8832 = vmatpush1.msra.mxu0 %v8692
        %8833 = vmatprep.subr.mxu0 0.0
        %8834 = vmatpush1.msra.mxu0 %v8693
        %8835 = vmatprep.subr.mxu0 0.0
        %8836 = vmatpush1.msra.mxu0 %v8694
        %8837 = vmatprep.subr.mxu0 0.0
        %8838 = vmatpush1.msra.mxu0 %v8695
        %8839 = vmatprep.subr.mxu0 0.0
        %8840 = vmatpush1.msra.mxu0 %v8696
        %8841 = vmatprep.subr.mxu0 0.0
        %8842 = vmatpush1.msra.mxu0 %v8697
        %8843 = vmatprep.subr.mxu0 0.0
        %8844 = vmatpush1.msra.mxu0 %v8698
        %8845 = vmatprep.subr.mxu0 0.0
        %8846 = vmatpush1.msra.mxu0 %v8699
        %8847 = vmatprep.subr.mxu0 0.0
        %8848 = vmatpush1.msra.mxu0 %v8700
        %8849 = vmatprep.subr.mxu0 0.0
        %8850 = vmatpush1.msra.mxu0 %v8701
        %8851 = vmatprep.subr.mxu0 0.0
        %8852 = vmatpush1.msra.mxu0 %v8702
        %8853 = vmatprep.subr.mxu0 0.0
        %8854 = vmatpush1.msra.mxu0 %v8703
        %8855 = vmatprep.subr.mxu0 0.0
        %8856 = vmatpush1.msra.mxu0 %v8704
        %8857 = vmatprep.subr.mxu0 0.0
        %8858 = vmatpush1.msra.mxu0 %v8705
        %8859 = vmatprep.subr.mxu0 0.0
        %8860 = vmatpush1.msra.mxu0 %v8706
        %8861 = vmatprep.subr.mxu0 0.0
        %8862 = vmatpush1.msra.mxu0 %v8707
        %8863 = vmatprep.subr.mxu0 0.0
        %8864 = vmatpush1.msra.mxu0 %v8708
        %8865 = vmatprep.mubr.f32.mxu0 %v8726
        %8866 = vmatmul.mubr.f32.gmra.mrb[0].mxu0 %v8722
        %v8867 = vpop.f32.mrb[0].mxu0
        %v8868 = vadd.f32 %v8798, %v8867
        %v8869 = vpop.f32.mrb[0].mxu0
        %8870 = vdwg.mxu0
        %8871 = vst [vmem:[%s378] sm:$0x1] %v8868
        %s8872 = sand.u32 %s269, 1
        %s8873 = scalar_lea.sflag [#allocation6], %s8872
        %s8874 = sand.u32 %s269, 1
        %s8875 = scalar_lea.vmem [#allocation5], %s8874
        // Predicated region
        $region86: #{net_forward.1} parent=63 // pred_check
          %p8876 = pneg %p279
        $region87: #{net_forward.1} parent=63 // pred_check_branch
          %8878 = sbr.rel (%p8876) target = $region89
        $region88: #{net_forward.1} parent=63 // pred_region
          %s8880 = ssub.s32 16, 16
          %8881 = vsyncadd %s8873, %s8880
          %s8882 = smul.addr %s25, 16
          %s8883 = scalar_lea.hbm %s11, %s8882
          %s8885 = sshll.u32 %s8875, 4
          %s8886 = int_to_ptr.vmem [resolvable:$true] %s8885
          %8888 = dma.vmem_to_hbm [thread:$0]  %s8886, 16, %s8883, %s8873
        $region89: #{net_forward.1} parent=63 // pred_fallthru
          _
      $region64: #{net_forward.1} parent=5 // pred_fallthru
        _
      %p8889 = scmp.le.s32.totalorder 2, %s20
      // Predicated region
      $region90: #{net_forward.1} parent=5 // pred_check
        %p8890 = pneg %p8889
      $region91: #{net_forward.1} parent=5 // pred_check_branch
        %8892 = sbr.rel (%p8890) target = $region93
      $region92: #{net_forward.1} parent=5 // pred_region
        %s8893 = ssub.s32 %s20, 2
        // Predicated region
        $region94: #{net_forward.1} parent=92 // pred_check
          %p8894 = pneg %p285
        $region95: #{net_forward.1} parent=92 // pred_check_branch
          %8896 = sbr.rel (%p8894) target = $region97
        $region96: #{net_forward.1} parent=92 // pred_region
          %s8897 = sand.u32 %s270, 1
          %s8898 = scalar_lea.sflag [#allocation6], %s8897
          %s8899 = sand.u32 %s270, 1
          %s8900 = scalar_lea.vmem [#allocation5], %s8899
          %8901 = dma.done %s8898, 16
        $region97: #{net_forward.1} parent=92 // pred_fallthru
          _
      $region93: #{net_forward.1} parent=5 // pred_fallthru
        _
    $region6: #{net_forward.1} parent=1 // loop_footer
      %s24 = sadd.s32 1, %s20
    $region7: #{net_forward.1} parent=1 // loop_footer_branch
      %19 = sbr.rel target = $region3
    $region8: #{net_forward.1} parent=1 // loop_exit
      _
    %8902 = vsyncpa [#allocation6], 1
    %s8903 = scalar_lea.sflag [#allocation6], 1
    %8904 = vsyncpa %s8903, 1

</llo_original>
